<compile_context>
chip_gen: v6e
topology: v6e:2x2x1
jax: 0.10.0
libtpu: 0.0.40
codegen_flags: <defaults>
</compile_context>

<pallas_src>
import math
import functools

import jax
import jax.numpy as jnp
from jax.experimental import pallas as pl
from jax.experimental.pallas import tpu as pltpu

# ---------------- scaled-down T5 config (small shapes) ----------------
VOCAB = 32128            # real vocab so the `>= 32100` prompt-token logic is meaningful
VOCAB_PAD = 32768        # zero-padded so the lm-head vocab tile divides evenly
TV = 4096                # lm-head / CE vocab tile -> 8 grid steps
NEW_VOCAB = 2 + 2 * 2 * 2 * 2   # = 18, size of new_embed
NEW_TOKEN_START = 32100
D_MODEL = 32
N_HEADS = 4
D_KV = 8
INNER = N_HEADS * D_KV   # 32
D_FF = 64
N_LAYERS = 2             # encoder layers == decoder layers
REL_BUCKETS = 32
REL_MAX_DIST = 128
EPS = 1e-6
NEG_INF = -1e9
PAD_ID = 0               # decoder_start_token_id == pad_token_id == 0

_ARB1 = pltpu.CompilerParams(dimension_semantics=("arbitrary",))


# ============================ Pallas kernels ============================

def matmul_kernel(a_ref, b_ref, o_ref):
    o_ref[...] = jnp.dot(a_ref[...], b_ref[...],
                         preferred_element_type=jnp.float32).astype(o_ref.dtype)


def matmul_add_kernel(x_ref, w_ref, r_ref, o_ref):
    # out = residual + x @ w   (attention output projection + residual, fused)
    o_ref[...] = r_ref[...] + jnp.dot(x_ref[...], w_ref[...],
                                      preferred_element_type=jnp.float32)


def rmsnorm_kernel(x_ref, w_ref, o_ref, *, eps):
    x = x_ref[...].astype(jnp.float32)
    var = jnp.mean(x * x, axis=-1, keepdims=True)
    o_ref[...] = (x * jax.lax.rsqrt(var + eps)) * w_ref[...]


def ln_matmul_kernel(x_ref, ln_ref, w_ref, o_ref, *, eps):
    # out = rmsnorm(x) @ w   (T5 pre-norm + projection, fused)
    x = x_ref[...].astype(jnp.float32)
    var = jnp.mean(x * x, axis=-1, keepdims=True)
    xn = (x * jax.lax.rsqrt(var + eps)) * ln_ref[...]
    o_ref[...] = jnp.dot(xn, w_ref[...],
                         preferred_element_type=jnp.float32).astype(o_ref.dtype)


def ln_ffn_kernel(x_ref, ln_ref, wi_ref, wo_ref, o_ref, *, eps):
    # out = x + relu(rmsnorm(x) @ wi) @ wo   (T5 dense_relu_dense block, fused)
    x = x_ref[...].astype(jnp.float32)
    var = jnp.mean(x * x, axis=-1, keepdims=True)
    xn = (x * jax.lax.rsqrt(var + eps)) * ln_ref[...]
    h = jnp.maximum(jnp.dot(xn, wi_ref[...], preferred_element_type=jnp.float32), 0.0)
    o_ref[...] = x + jnp.dot(h, wo_ref[...], preferred_element_type=jnp.float32)


def attn_kernel(q_ref, k_ref, v_ref, pb_ref, mk_ref, o_ref, *, n_heads):
    # All B*H heads handled in one grid step (batched einsum).
    # pb_ref: positional bias broadcastable as (1, H?, Sq?, Sk)
    # mk_ref: additive attention mask broadcastable as (B?, 1, Sq?, Sk)
    q = q_ref[...]                               # (B*H, Sq, dk)
    k = k_ref[...]                               # (B*H, Sk, dk)
    v = v_ref[...]                               # (B*H, Sk, dk)
    BH, Sq, _ = q.shape
    Sk = k.shape[1]
    B = BH // n_heads
    # T5 attention: no 1/sqrt(dk) scaling
    scores = jnp.einsum('bqd,bkd->bqk', q, k, preferred_element_type=jnp.float32)
    bias = pb_ref[...][None, :, :, :] + mk_ref[...][:, None, :, :]
    scores = (scores.reshape(B, n_heads, Sq, Sk) + bias).reshape(BH, Sq, Sk)
    scores = scores - jnp.max(scores, axis=-1, keepdims=True)
    p = jnp.exp(scores)
    p = p / jnp.sum(p, axis=-1, keepdims=True)
    o_ref[...] = jnp.einsum('bqk,bkd->bqd', p, v,
                            preferred_element_type=jnp.float32).astype(o_ref.dtype)


def lmhead_ce_kernel(x_ref, ln_ref, w_ref, labels_ref, loss_ref,
                     m_sc, l_sc, lbl_sc, *, eps, scale, vocab):
    # Fused: decoder final rmsnorm + d_model**-0.5 scale + tied lm_head matmul
    # + cross-entropy with online (tiled-over-vocab) logsumexp.
    j = pl.program_id(0)
    tv = w_ref.shape[0]

    @pl.when(j == 0)
    def _():
        m_sc[...] = jnp.full_like(m_sc, -jnp.inf)
        l_sc[...] = jnp.zeros_like(l_sc)
        lbl_sc[...] = jnp.zeros_like(lbl_sc)

    x = x_ref[...].astype(jnp.float32)                       # (R, D)
    var = jnp.mean(x * x, axis=-1, keepdims=True)
    xn = (x * jax.lax.rsqrt(var + eps)) * ln_ref[...] * scale
    xn = xn.astype(jnp.bfloat16)

    # contract against the transposed embedding tile without materializing shared.T
    logits = jax.lax.dot_general(xn, w_ref[...], (((1,), (1,)), ((), ())),
                                 preferred_element_type=jnp.float32)   # (R, tv) f32

    labels = labels_ref[...]                                 # (R, 1) int32
    col = jax.lax.broadcasted_iota(jnp.int32, logits.shape, 1) + j * tv
    logits_m = jnp.where(col < vocab, logits, NEG_INF)       # mask zero-padded vocab rows

    m_prev = m_sc[...]
    m_new = jnp.maximum(m_prev, jnp.max(logits_m, axis=-1, keepdims=True))
    alpha = jnp.exp(m_prev - m_new)
    l_sc[...] = alpha * l_sc[...] + jnp.sum(jnp.exp(logits_m - m_new),
                                            axis=-1, keepdims=True)
    m_sc[...] = m_new
    # each label column lives in exactly one vocab tile -> plain accumulation
    lbl_sc[...] = lbl_sc[...] + jnp.sum(jnp.where(col == labels, logits, 0.0),
                                        axis=-1, keepdims=True)

    @pl.when(j == pl.num_programs(0) - 1)
    def _():
        lse = m_sc[...] + jnp.log(l_sc[...])
        valid = (labels != -100).astype(jnp.float32)         # ignore_index = -100
        ce = (lse - lbl_sc[...]) * valid
        loss = jnp.sum(ce) / jnp.maximum(jnp.sum(valid), 1.0)
        loss_ref[...] = jnp.reshape(loss, (1, 1))


# ============================ Pallas wrappers ============================

def pallas_linear(x, w):
    """x: (B, S, Din), w: (Din, Dout) -> (B, S, Dout) f32."""
    B, S, Din = x.shape
    N = w.shape[1]
    out = pl.pallas_call(
        matmul_kernel,
        out_shape=jax.ShapeDtypeStruct((B * S, N), jnp.float32),
        grid=(1,),
        in_specs=[pl.BlockSpec((B * S, Din), lambda i: (0, 0)),
                  pl.BlockSpec((Din, N), lambda i: (0, 0))],
        out_specs=pl.BlockSpec((B * S, N), lambda i: (0, 0)),
        compiler_params=_ARB1,
    )(x.reshape(B * S, Din), w)
    return out.reshape(B, S, N)


def matmul_add(x, w, residual):
    """residual + x @ w, x: (B,S,Din), w: (Din,Dout), residual: (B,S,Dout)."""
    B, S, Din = x.shape
    Dout = w.shape[1]
    out = pl.pallas_call(
        matmul_add_kernel,
        out_shape=jax.ShapeDtypeStruct((B * S, Dout), jnp.float32),
        grid=(1,),
        in_specs=[pl.BlockSpec((B * S, Din), lambda i: (0, 0)),
                  pl.BlockSpec((Din, Dout), lambda i: (0, 0)),
                  pl.BlockSpec((B * S, Dout), lambda i: (0, 0))],
        out_specs=pl.BlockSpec((B * S, Dout), lambda i: (0, 0)),
        compiler_params=_ARB1,
    )(x.reshape(B * S, Din), w, residual.reshape(B * S, Dout))
    return out.reshape(B, S, Dout)


def rmsnorm(x, w):
    B, S, D = x.shape
    out = pl.pallas_call(
        functools.partial(rmsnorm_kernel, eps=EPS),
        out_shape=jax.ShapeDtypeStruct((B * S, D), jnp.float32),
        grid=(1,),
        in_specs=[pl.BlockSpec((B * S, D), lambda i: (0, 0)),
                  pl.BlockSpec((1, D), lambda i: (0, 0))],
        out_specs=pl.BlockSpec((B * S, D), lambda i: (0, 0)),
        compiler_params=_ARB1,
    )(x.reshape(B * S, D), w.reshape(1, D))
    return out.reshape(B, S, D)


def ln_matmul(x, ln_w, w):
    """rmsnorm(x) @ w fused. x: (B,S,D), w: (D,N)."""
    B, S, D = x.shape
    N = w.shape[1]
    out = pl.pallas_call(
        functools.partial(ln_matmul_kernel, eps=EPS),
        out_shape=jax.ShapeDtypeStruct((B * S, N), jnp.float32),
        grid=(1,),
        in_specs=[pl.BlockSpec((B * S, D), lambda i: (0, 0)),
                  pl.BlockSpec((1, D), lambda i: (0, 0)),
                  pl.BlockSpec((D, N), lambda i: (0, 0))],
        out_specs=pl.BlockSpec((B * S, N), lambda i: (0, 0)),
        compiler_params=_ARB1,
    )(x.reshape(B * S, D), ln_w.reshape(1, D), w)
    return out.reshape(B, S, N)


def ln_ffn(x, ln_w, wi, wo):
    """x + relu(rmsnorm(x)@wi)@wo fused."""
    B, S, D = x.shape
    out = pl.pallas_call(
        functools.partial(ln_ffn_kernel, eps=EPS),
        out_shape=jax.ShapeDtypeStruct((B * S, D), jnp.float32),
        grid=(1,),
        in_specs=[pl.BlockSpec((B * S, D), lambda i: (0, 0)),
                  pl.BlockSpec((1, D), lambda i: (0, 0)),
                  pl.BlockSpec((D, D_FF), lambda i: (0, 0)),
                  pl.BlockSpec((D_FF, D), lambda i: (0, 0))],
        out_specs=pl.BlockSpec((B * S, D), lambda i: (0, 0)),
        compiler_params=_ARB1,
    )(x.reshape(B * S, D), ln_w.reshape(1, D), wi, wo)
    return out.reshape(B, S, D)


def pallas_attention(q, k, v, pos_bias, mask_bias):
    """q/k/v: (B*H, S, D_KV); pos_bias/mask_bias: small 3-D additive biases
    broadcastable to (H, Sq, Sk) and (B, Sq, Sk) respectively."""
    BH, Sq, dk = q.shape
    Sk = k.shape[1]
    return pl.pallas_call(
        functools.partial(attn_kernel, n_heads=N_HEADS),
        out_shape=jax.ShapeDtypeStruct((BH, Sq, dk), jnp.float32),
        grid=(1,),
        in_specs=[pl.BlockSpec((BH, Sq, dk), lambda i: (0, 0, 0)),
                  pl.BlockSpec((BH, Sk, dk), lambda i: (0, 0, 0)),
                  pl.BlockSpec((BH, Sk, dk), lambda i: (0, 0, 0)),
                  pl.BlockSpec(pos_bias.shape, lambda i: (0, 0, 0)),
                  pl.BlockSpec(mask_bias.shape, lambda i: (0, 0, 0))],
        out_specs=pl.BlockSpec((BH, Sq, dk), lambda i: (0, 0, 0)),
        compiler_params=_ARB1,
    )(q, k, v, pos_bias, mask_bias)


def fused_lm_head_ce(dec_hidden, dec_final_ln, lm_w_bf16, labels):
    """Decoder final LN + tie-scale + lm_head (vocab-tiled, bf16) + CE loss."""
    B, S, D = dec_hidden.shape
    R = B * S
    VP = lm_w_bf16.shape[0]
    assert VP % TV == 0
    out = pl.pallas_call(
        functools.partial(lmhead_ce_kernel, eps=EPS,
                          scale=D_MODEL ** -0.5, vocab=VOCAB),
        out_shape=jax.ShapeDtypeStruct((1, 1), jnp.float32),
        grid=(VP // TV,),
        in_specs=[pl.BlockSpec((R, D), lambda j: (0, 0)),
                  pl.BlockSpec((1, D), lambda j: (0, 0)),
                  pl.BlockSpec((TV, D), lambda j: (j, 0)),
                  pl.BlockSpec((R, 1), lambda j: (0, 0))],
        out_specs=pl.BlockSpec((1, 1), lambda j: (0, 0)),
        scratch_shapes=[pltpu.VMEM((R, 1), jnp.float32),
                        pltpu.VMEM((R, 1), jnp.float32),
                        pltpu.VMEM((R, 1), jnp.float32)],
        compiler_params=_ARB1,   # vocab axis carries the online-softmax accumulators
    )(dec_hidden.reshape(R, D), dec_final_ln.reshape(1, D),
      lm_w_bf16, labels.reshape(R, 1).astype(jnp.int32))
    return out[0, 0]


# ============================ plain-JAX glue ============================

def _relative_position_bucket(relative_position, bidirectional, num_buckets, max_distance):
    relative_buckets = jnp.zeros_like(relative_position)
    if bidirectional:
        num_buckets //= 2
        relative_buckets = relative_buckets + (relative_position > 0).astype(jnp.int32) * num_buckets
        relative_position = jnp.abs(relative_position)
    else:
        relative_position = -jnp.minimum(relative_position, 0)
    max_exact = num_buckets // 2
    is_small = relative_position < max_exact
    rp_f = jnp.maximum(relative_position, 1).astype(jnp.float32)
    rp_if_large = max_exact + (
        jnp.log(rp_f / max_exact) / math.log(max_distance / max_exact)
        * (num_buckets - max_exact)
    ).astype(jnp.int32)
    rp_if_large = jnp.minimum(rp_if_large, num_buckets - 1)
    return relative_buckets + jnp.where(is_small, relative_position, rp_if_large)


def compute_bias(q_len, k_len, bidirectional, rel_emb):
    context = jnp.arange(q_len)[:, None]
    memory = jnp.arange(k_len)[None, :]
    rel_pos = memory - context
    buckets = _relative_position_bucket(rel_pos, bidirectional, REL_BUCKETS, REL_MAX_DIST)
    values = jnp.take(rel_emb, buckets, axis=0)        # (q, k, H)
    return jnp.transpose(values, (2, 0, 1))            # (H, q, k)


def embed_input(shared, new_embed, input_ids):
    # CustomT5Stack.embed_input: ids >= 32100 use new_embed(id - 32100),
    # others use the shared embedding (the placeholder "2" is overwritten anyway).
    is_new = input_ids >= NEW_TOKEN_START
    safe_ids = jnp.where(is_new, 2, input_ids)
    raw = jnp.take(shared, safe_ids, axis=0)
    new_ids = jnp.clip(input_ids - NEW_TOKEN_START, 0, NEW_VOCAB - 1)
    new = jnp.take(new_embed, new_ids, axis=0)
    return jnp.where(is_new[..., None], new, raw)


def shift_right(labels):
    # T5._shift_right with decoder_start_token_id = pad_token_id = 0
    shifted = jnp.roll(labels, 1, axis=-1)
    shifted = shifted.at[:, 0].set(PAD_ID)
    return jnp.where(shifted == -100, PAD_ID, shifted)


def _to_heads(x):
    B, S, _ = x.shape
    return x.reshape(B, S, N_HEADS, D_KV).transpose(0, 2, 1, 3).reshape(B * N_HEADS, S, D_KV)


def _from_heads(x, B, S):
    return x.reshape(B, N_HEADS, S, D_KV).transpose(0, 2, 1, 3).reshape(B, S, INNER)


def self_attention(hidden, ln_w, p, pos_bias, mask_bias):
    B, S, _ = hidden.shape
    qkv = ln_matmul(hidden, ln_w, p['wqkv'])                     # fused LN + QKV proj
    q, k, v = jnp.split(qkv, 3, axis=-1)
    attn = pallas_attention(_to_heads(q), _to_heads(k), _to_heads(v),
                            pos_bias, mask_bias)
    return matmul_add(_from_heads(attn, B, S), p['wo'], hidden)  # out proj + residual


def cross_attention(hidden, enc_hidden, ln_w, p, mask_bias, zero_bias):
    B, S, _ = hidden.shape
    q = ln_matmul(hidden, ln_w, p['wq'])                         # fused LN + Q proj
    kv = pallas_linear(enc_hidden, p['wkv'])                     # K|V proj in one call
    k, v = jnp.split(kv, 2, axis=-1)
    attn = pallas_attention(_to_heads(q), _to_heads(k), _to_heads(v),
                            zero_bias, mask_bias)
    return matmul_add(_from_heads(attn, B, S), p['wo'], hidden)


def encode(params, input_ids, attention_mask):
    B, S = input_ids.shape
    hidden = embed_input(params['shared'], params['new_embed'], input_ids)
    mask_bias = ((1.0 - attention_mask.astype(jnp.float32)) * NEG_INF)[:, None, :]  # (B,1,S)
    pos_bias = compute_bias(S, S, True, params['enc_rel_bias'])                     # (H,S,S)
    for lp in params['enc_layers']:
        hidden = self_attention(hidden, lp['ln_sa'], lp['sa'], pos_bias, mask_bias)
        hidden = ln_ffn(hidden, lp['ln_ff'], lp['wi'], lp['wo_ff'])
    return rmsnorm(hidden, params['enc_final_ln'])


def decode(params, dec_input_ids, enc_hidden, enc_mask):
    B, S = dec_input_ids.shape
    Se = enc_hidden.shape[1]
    hidden = embed_input(params['shared'], params['new_embed'], dec_input_ids)
    causal = ((1.0 - jnp.tril(jnp.ones((S, S), jnp.float32))) * NEG_INF)[None]      # (1,S,S)
    pos_bias = compute_bias(S, S, False, params['dec_rel_bias'])                    # (H,S,S)
    cross_mask = ((1.0 - enc_mask.astype(jnp.float32)) * NEG_INF)[:, None, :]       # (B,1,Se)
    zero_bias = jnp.zeros((1, 1, 1), jnp.float32)        # cross-attn has no position bias
    for lp in params['dec_layers']:
        hidden = self_attention(hidden, lp['ln_sa'], lp['sa'], pos_bias, causal)
        hidden = cross_attention(hidden, enc_hidden, lp['ln_ca'], lp['ca'],
                                 cross_mask, zero_bias)
        hidden = ln_ffn(hidden, lp['ln_ff'], lp['wi'], lp['wo_ff'])
    return hidden   # final LN fused into the lm-head/CE kernel


def knowledge_pretrainer_forward(params, input_ids, attention_mask, labels):
    """Matches KnowledgePretrainer.forward: returns ({'total_loss': loss},)."""
    enc_hidden = encode(params, input_ids, attention_mask)
    dec_input_ids = shift_right(labels)
    dec_hidden = decode(params, dec_input_ids, enc_hidden, attention_mask)
    loss = fused_lm_head_ce(dec_hidden, params['dec_final_ln'],
                            params['lm_head'], labels)
    return ({'total_loss': loss},)


# ============================ parameter init ============================

def init_params(key):
    keys = iter(jax.random.split(key, 128))

    def nrm(shape, scale=0.05):
        return jax.random.normal(next(keys), shape, dtype=jnp.float32) * scale

    def self_attn_params():
        return {'wqkv': nrm((D_MODEL, 3 * INNER)), 'wo': nrm((INNER, D_MODEL))}

    def cross_attn_params():
        return {'wq': nrm((D_MODEL, INNER)), 'wkv': nrm((D_MODEL, 2 * INNER)),
                'wo': nrm((INNER, D_MODEL))}

    shared = nrm((VOCAB, D_MODEL), 1.0)
    params = {
        'shared': shared,
        # tied lm_head: zero-padded to VOCAB_PAD rows, stored bf16 (one-time copy at
        # init; padded columns are masked to -inf inside the CE kernel)
        'lm_head': jnp.pad(shared, ((0, VOCAB_PAD - VOCAB), (0, 0))).astype(jnp.bfloat16),
        'new_embed': nrm((NEW_VOCAB, D_MODEL), 1.0),
        'enc_rel_bias': nrm((REL_BUCKETS, N_HEADS), 0.1),
        'dec_rel_bias': nrm((REL_BUCKETS, N_HEADS), 0.1),
        'enc_final_ln': jnp.ones((D_MODEL,), jnp.float32),
        'dec_final_ln': jnp.ones((D_MODEL,), jnp.float32),
        'enc_layers': [],
        'dec_layers': [],
    }
    for _ in range(N_LAYERS):
        params['enc_layers'].append({
            'ln_sa': jnp.ones((D_MODEL,), jnp.float32),
            'sa': self_attn_params(),
            'ln_ff': jnp.ones((D_MODEL,), jnp.float32),
            'wi': nrm((D_MODEL, D_FF)),
            'wo_ff': nrm((D_FF, D_MODEL)),
        })
    for _ in range(N_LAYERS):
        params['dec_layers'].append({
            'ln_sa': jnp.ones((D_MODEL,), jnp.float32),
            'sa': self_attn_params(),
            'ln_ca': jnp.ones((D_MODEL,), jnp.float32),
            'ca': cross_attn_params(),
            'ln_ff': jnp.ones((D_MODEL,), jnp.float32),
            'wi': nrm((D_MODEL, D_FF)),
            'wo_ff': nrm((D_FF, D_MODEL)),
        })
    return params


# ================================ main ================================

if __name__ == "__main__":
    key = jax.random.PRNGKey(0)
    pkey, ikey, lkey = jax.random.split(key, 3)
    params = init_params(pkey)

    B, S = 2, 8
    input_ids = jax.random.randint(ikey, (B, S), 0, 1000, dtype=jnp.int32)
    # prepend some prompt tokens >= 32100 to exercise the new_embed path
    input_ids = input_ids.at[:, :3].set(jnp.array([32100, 32101, 32105], jnp.int32))
    attention_mask = jnp.ones((B, S), jnp.int32).at[1, -2:].set(0)
    labels = jax.random.randint(lkey, (B, S), 0, VOCAB, dtype=jnp.int32)

    fwd = jax.jit(knowledge_pretrainer_forward)
    (out,) = fwd(params, input_ids, attention_mask, labels)
    loss = jax.block_until_ready(out['total_loss'])
    assert bool(jnp.isfinite(loss))
    print("KERNEL_OK")
</pallas_src>

<mosaic_0001>
module attributes {stable_mosaic.version = 11 : i64} {
  func.func @ln_matmul_kernel(%arg0: i32, %arg1: memref<16x32xf32, #tpu.memory_space<vmem>>, %arg2: memref<1x32xf32, #tpu.memory_space<vmem>>, %arg3: memref<32x96xf32, #tpu.memory_space<vmem>>, %arg4: memref<16x96xf32, #tpu.memory_space<vmem>>) attributes {dimension_semantics = [#tpu.dimension_semantics<arbitrary>], iteration_bounds = array<i64: 1>, scalar_prefetch = 0 : i64, scratch_operands = 0 : i64, tpu.core_type = #tpu.core_type<tc>, window_params = [{pipeline_mode = #tpu.pipeline_mode<synchronous>, transform_indices = @transform_0, window_bounds = array<i64: 16, 32>}, {pipeline_mode = #tpu.pipeline_mode<synchronous>, transform_indices = @transform_1, window_bounds = array<i64: 1, 32>}, {pipeline_mode = #tpu.pipeline_mode<synchronous>, transform_indices = @transform_2, window_bounds = array<i64: 32, 96>}, {pipeline_mode = #tpu.pipeline_mode<synchronous>, transform_indices = @transform_3, window_bounds = array<i64: 16, 96>}]} {
    %c0 = arith.constant 0 : index
    %c0_0 = arith.constant 0 : index
    %0 = vector.load %arg1[%c0, %c0_0] : memref<16x32xf32, #tpu.memory_space<vmem>>, vector<16x32xf32>
    %1 = arith.mulf %0, %0 : vector<16x32xf32>
    %cst = arith.constant dense<0.000000e+00> : vector<16xf32>
    %2 = vector.multi_reduction <add>, %1, %cst [1] : vector<16x32xf32> to vector<16xf32>
    %3 = vector.shape_cast %2 : vector<16xf32> to vector<16x1xf32>
    %cst_1 = arith.constant 3.200000e+01 : f32
    %4 = vector.broadcast %cst_1 : f32 to vector<16x1xf32>
    %5 = arith.divf %3, %4 : vector<16x1xf32>
    %cst_2 = arith.constant 9.99999997E-7 : f32
    %6 = vector.broadcast %cst_2 : f32 to vector<16x1xf32>
    %7 = arith.addf %5, %6 : vector<16x1xf32>
    %8 = math.rsqrt %7 : vector<16x1xf32>
    %9 = vector.broadcast %8 : vector<16x1xf32> to vector<16x32xf32>
    %10 = arith.mulf %0, %9 : vector<16x32xf32>
    %c0_3 = arith.constant 0 : index
    %c0_4 = arith.constant 0 : index
    %11 = vector.load %arg2[%c0_3, %c0_4] : memref<1x32xf32, #tpu.memory_space<vmem>>, vector<1x32xf32>
    %12 = vector.broadcast %11 : vector<1x32xf32> to vector<16x32xf32>
    %13 = arith.mulf %10, %12 : vector<16x32xf32>
    %c0_5 = arith.constant 0 : index
    %c0_6 = arith.constant 0 : index
    %14 = vector.load %arg3[%c0_5, %c0_6] : memref<32x96xf32, #tpu.memory_space<vmem>>, vector<32x96xf32>
    %cst_7 = arith.constant dense<0.000000e+00> : vector<16x96xf32>
    %15 = tpu.matmul %13, %14, %cst_7 {dimension_numbers = #tpu.dot_dimension_numbers<[1], [0], [0], [1], [0, 0, 1, 1], [], []>} : vector<16x32xf32>, vector<32x96xf32>, vector<16x96xf32> -> vector<16x96xf32>
    %c0_8 = arith.constant 0 : index
    %c0_9 = arith.constant 0 : index
    %16 = vector.load %arg4[%c0_8, %c0_9] : memref<16x96xf32, #tpu.memory_space<vmem>>, vector<16x96xf32>
    tpu.vector_store %arg4[%c0_8, %c0_9], %15 {strides = array<i32>} : memref<16x96xf32, #tpu.memory_space<vmem>>, vector<16x96xf32>,
    return
  }
  func.func @transform_0(%arg0: i32) -> (i32, i32) {
    %c0_i32 = arith.constant 0 : i32
    %c0_i32_0 = arith.constant 0 : i32
    %c0_i32_1 = arith.constant 0 : i32
    return %c0_i32, %c0_i32_0 : i32, i32
  }
  func.func @transform_1(%arg0: i32) -> (i32, i32) {
    %c0_i32 = arith.constant 0 : i32
    %c0_i32_0 = arith.constant 0 : i32
    %c0_i32_1 = arith.constant 0 : i32
    return %c0_i32, %c0_i32_0 : i32, i32
  }
  func.func @transform_2(%arg0: i32) -> (i32, i32) {
    %c0_i32 = arith.constant 0 : i32
    %c0_i32_0 = arith.constant 0 : i32
    %c0_i32_1 = arith.constant 0 : i32
    return %c0_i32, %c0_i32_0 : i32, i32
  }
  func.func @transform_3(%arg0: i32) -> (i32, i32) {
    %c0_i32 = arith.constant 0 : i32
    %c0_i32_0 = arith.constant 0 : i32
    %c0_i32_1 = arith.constant 0 : i32
    return %c0_i32, %c0_i32_0 : i32, i32
  }
}

module attributes {stable_mosaic.version = 11 : i64} {
  func.func @attn_kernel(%arg0: i32, %arg1: memref<8x8x8xf32, #tpu.memory_space<vmem>>, %arg2: memref<8x8x8xf32, #tpu.memory_space<vmem>>, %arg3: memref<8x8x8xf32, #tpu.memory_space<vmem>>, %arg4: memref<4x8x8xf32, #tpu.memory_space<vmem>>, %arg5: memref<1x8x8xf32, #tpu.memory_space<vmem>>, %arg6: memref<8x8x8xf32, #tpu.memory_space<vmem>>) attributes {dimension_semantics = [#tpu.dimension_semantics<arbitrary>], iteration_bounds = array<i64: 1>, scalar_prefetch = 0 : i64, scratch_operands = 0 : i64, tpu.core_type = #tpu.core_type<tc>, window_params = [{pipeline_mode = #tpu.pipeline_mode<synchronous>, transform_indices = @transform_0, window_bounds = array<i64: 8, 8, 8>}, {pipeline_mode = #tpu.pipeline_mode<synchronous>, transform_indices = @transform_1, window_bounds = array<i64: 8, 8, 8>}, {pipeline_mode = #tpu.pipeline_mode<synchronous>, transform_indices = @transform_2, window_bounds = array<i64: 8, 8, 8>}, {pipeline_mode = #tpu.pipeline_mode<synchronous>, transform_indices = @transform_3, window_bounds = array<i64: 4, 8, 8>}, {pipeline_mode = #tpu.pipeline_mode<synchronous>, transform_indices = @transform_4, window_bounds = array<i64: 1, 8, 8>}, {pipeline_mode = #tpu.pipeline_mode<synchronous>, transform_indices = @transform_5, window_bounds = array<i64: 8, 8, 8>}]} {
    %c0 = arith.constant 0 : index
    %c0_0 = arith.constant 0 : index
    %c0_1 = arith.constant 0 : index
    %0 = vector.load %arg1[%c0, %c0_0, %c0_1] : memref<8x8x8xf32, #tpu.memory_space<vmem>>, vector<8x8x8xf32>
    %c0_2 = arith.constant 0 : index
    %c0_3 = arith.constant 0 : index
    %c0_4 = arith.constant 0 : index
    %1 = vector.load %arg2[%c0_2, %c0_3, %c0_4] : memref<8x8x8xf32, #tpu.memory_space<vmem>>, vector<8x8x8xf32>
    %c0_5 = arith.constant 0 : index
    %c0_6 = arith.constant 0 : index
    %c0_7 = arith.constant 0 : index
    %2 = vector.load %arg3[%c0_5, %c0_6, %c0_7] : memref<8x8x8xf32, #tpu.memory_space<vmem>>, vector<8x8x8xf32>
    "tpu.trace_start"() <{level = 10 : i32, message = "bqd,bkd->bqk"}> : () -> ()
    %cst = arith.constant dense<0.000000e+00> : vector<8x8x8xf32>
    %3 = tpu.matmul %0, %1, %cst {dimension_numbers = #tpu.dot_dimension_numbers<[2], [2], [1], [1], [0, 0, 0, 1, 1, 1], [0], [0]>} : vector<8x8x8xf32>, vector<8x8x8xf32>, vector<8x8x8xf32> -> vector<8x8x8xf32>
    "tpu.trace_stop"() : () -> ()
    %c0_8 = arith.constant 0 : index
    %c0_9 = arith.constant 0 : index
    %c0_10 = arith.constant 0 : index
    %4 = vector.load %arg4[%c0_8, %c0_9, %c0_10] : memref<4x8x8xf32, #tpu.memory_space<vmem>>, vector<4x8x8xf32>
    %5 = vector.shape_cast %4 : vector<4x8x8xf32> to vector<1x4x8x8xf32>
    %c0_11 = arith.constant 0 : index
    %c0_12 = arith.constant 0 : index
    %c0_13 = arith.constant 0 : index
    %6 = vector.load %arg5[%c0_11, %c0_12, %c0_13] : memref<1x8x8xf32, #tpu.memory_space<vmem>>, vector<1x8x8xf32>
    %7 = vector.shape_cast %6 : vector<1x8x8xf32> to vector<1x1x8x8xf32>
    %8 = vector.broadcast %7 : vector<1x1x8x8xf32> to vector<1x4x8x8xf32>
    %9 = arith.addf %5, %8 : vector<1x4x8x8xf32>
    %10 = vector.shape_cast %3 : vector<8x8x8xf32> to vector<2x4x8x8xf32>
    %11 = vector.broadcast %9 : vector<1x4x8x8xf32> to vector<2x4x8x8xf32>
    %12 = arith.addf %10, %11 : vector<2x4x8x8xf32>
    %13 = vector.shape_cast %12 : vector<2x4x8x8xf32> to vector<8x8x8xf32>
    %cst_14 = arith.constant dense<0xFF800000> : vector<8x8xf32>
    %14 = vector.multi_reduction <maximumf>, %13, %cst_14 [2] : vector<8x8x8xf32> to vector<8x8xf32>
    %15 = vector.shape_cast %14 : vector<8x8xf32> to vector<8x8x1xf32>
    %16 = vector.broadcast %15 : vector<8x8x1xf32> to vector<8x8x8xf32>
    %17 = arith.subf %13, %16 : vector<8x8x8xf32>
    %18 = math.exp %17 : vector<8x8x8xf32>
    %cst_15 = arith.constant dense<0.000000e+00> : vector<8x8xf32>
    %19 = vector.multi_reduction <add>, %18, %cst_15 [2] : vector<8x8x8xf32> to vector<8x8xf32>
    %20 = vector.shape_cast %19 : vector<8x8xf32> to vector<8x8x1xf32>
    %21 = vector.broadcast %20 : vector<8x8x1xf32> to vector<8x8x8xf32>
    %22 = arith.divf %18, %21 : vector<8x8x8xf32>
    "tpu.trace_start"() <{level = 10 : i32, message = "bqk,bkd->bqd"}> : () -> ()
    %cst_16 = arith.constant dense<0.000000e+00> : vector<8x8x8xf32>
    %23 = tpu.matmul %22, %2, %cst_16 {dimension_numbers = #tpu.dot_dimension_numbers<[2], [1], [1], [2], [0, 0, 0, 1, 1, 2], [0], [0]>} : vector<8x8x8xf32>, vector<8x8x8xf32>, vector<8x8x8xf32> -> vector<8x8x8xf32>
    "tpu.trace_stop"() : () -> ()
    %c0_17 = arith.constant 0 : index
    %c0_18 = arith.constant 0 : index
    %c0_19 = arith.constant 0 : index
    %24 = vector.load %arg6[%c0_17, %c0_18, %c0_19] : memref<8x8x8xf32, #tpu.memory_space<vmem>>, vector<8x8x8xf32>
    tpu.vector_store %arg6[%c0_17, %c0_18, %c0_19], %23 {strides = array<i32>} : memref<8x8x8xf32, #tpu.memory_space<vmem>>, vector<8x8x8xf32>,
    return
  }
  func.func @transform_0(%arg0: i32) -> (i32, i32, i32) {
    %c0_i32 = arith.constant 0 : i32
    %c0_i32_0 = arith.constant 0 : i32
    %c0_i32_1 = arith.constant 0 : i32
    %c0_i32_2 = arith.constant 0 : i32
    return %c0_i32, %c0_i32_0, %c0_i32_1 : i32, i32, i32
  }
  func.func @transform_1(%arg0: i32) -> (i32, i32, i32) {
    %c0_i32 = arith.constant 0 : i32
    %c0_i32_0 = arith.constant 0 : i32
    %c0_i32_1 = arith.constant 0 : i32
    %c0_i32_2 = arith.constant 0 : i32
    return %c0_i32, %c0_i32_0, %c0_i32_1 : i32, i32, i32
  }
  func.func @transform_2(%arg0: i32) -> (i32, i32, i32) {
    %c0_i32 = arith.constant 0 : i32
    %c0_i32_0 = arith.constant 0 : i32
    %c0_i32_1 = arith.constant 0 : i32
    %c0_i32_2 = arith.constant 0 : i32
    return %c0_i32, %c0_i32_0, %c0_i32_1 : i32, i32, i32
  }
  func.func @transform_3(%arg0: i32) -> (i32, i32, i32) {
    %c0_i32 = arith.constant 0 : i32
    %c0_i32_0 = arith.constant 0 : i32
    %c0_i32_1 = arith.constant 0 : i32
    %c0_i32_2 = arith.constant 0 : i32
    return %c0_i32, %c0_i32_0, %c0_i32_1 : i32, i32, i32
  }
  func.func @transform_4(%arg0: i32) -> (i32, i32, i32) {
    %c0_i32 = arith.constant 0 : i32
    %c0_i32_0 = arith.constant 0 : i32
    %c0_i32_1 = arith.constant 0 : i32
    %c0_i32_2 = arith.constant 0 : i32
    return %c0_i32, %c0_i32_0, %c0_i32_1 : i32, i32, i32
  }
  func.func @transform_5(%arg0: i32) -> (i32, i32, i32) {
    %c0_i32 = arith.constant 0 : i32
    %c0_i32_0 = arith.constant 0 : i32
    %c0_i32_1 = arith.constant 0 : i32
    %c0_i32_2 = arith.constant 0 : i32
    return %c0_i32, %c0_i32_0, %c0_i32_1 : i32, i32, i32
  }
}

module attributes {stable_mosaic.version = 11 : i64} {
  func.func @matmul_add_kernel(%arg0: i32, %arg1: memref<16x32xf32, #tpu.memory_space<vmem>>, %arg2: memref<32x32xf32, #tpu.memory_space<vmem>>, %arg3: memref<16x32xf32, #tpu.memory_space<vmem>>, %arg4: memref<16x32xf32, #tpu.memory_space<vmem>>) attributes {dimension_semantics = [#tpu.dimension_semantics<arbitrary>], iteration_bounds = array<i64: 1>, scalar_prefetch = 0 : i64, scratch_operands = 0 : i64, tpu.core_type = #tpu.core_type<tc>, window_params = [{pipeline_mode = #tpu.pipeline_mode<synchronous>, transform_indices = @transform_0, window_bounds = array<i64: 16, 32>}, {pipeline_mode = #tpu.pipeline_mode<synchronous>, transform_indices = @transform_1, window_bounds = array<i64: 32, 32>}, {pipeline_mode = #tpu.pipeline_mode<synchronous>, transform_indices = @transform_2, window_bounds = array<i64: 16, 32>}, {pipeline_mode = #tpu.pipeline_mode<synchronous>, transform_indices = @transform_3, window_bounds = array<i64: 16, 32>}]} {
    %c0 = arith.constant 0 : index
    %c0_0 = arith.constant 0 : index
    %0 = vector.load %arg3[%c0, %c0_0] : memref<16x32xf32, #tpu.memory_space<vmem>>, vector<16x32xf32>
    %c0_1 = arith.constant 0 : index
    %c0_2 = arith.constant 0 : index
    %1 = vector.load %arg1[%c0_1, %c0_2] : memref<16x32xf32, #tpu.memory_space<vmem>>, vector<16x32xf32>
    %c0_3 = arith.constant 0 : index
    %c0_4 = arith.constant 0 : index
    %2 = vector.load %arg2[%c0_3, %c0_4] : memref<32x32xf32, #tpu.memory_space<vmem>>, vector<32x32xf32>
    %cst = arith.constant dense<0.000000e+00> : vector<16x32xf32>
    %3 = tpu.matmul %1, %2, %cst {dimension_numbers = #tpu.dot_dimension_numbers<[1], [0], [0], [1], [0, 0, 1, 1], [], []>} : vector<16x32xf32>, vector<32x32xf32>, vector<16x32xf32> -> vector<16x32xf32>
    %4 = arith.addf %0, %3 : vector<16x32xf32>
    %c0_5 = arith.constant 0 : index
    %c0_6 = arith.constant 0 : index
    %5 = vector.load %arg4[%c0_5, %c0_6] : memref<16x32xf32, #tpu.memory_space<vmem>>, vector<16x32xf32>
    tpu.vector_store %arg4[%c0_5, %c0_6], %4 {strides = array<i32>} : memref<16x32xf32, #tpu.memory_space<vmem>>, vector<16x32xf32>,
    return
  }
  func.func @transform_0(%arg0: i32) -> (i32, i32) {
    %c0_i32 = arith.constant 0 : i32
    %c0_i32_0 = arith.constant 0 : i32
    %c0_i32_1 = arith.constant 0 : i32
    return %c0_i32, %c0_i32_0 : i32, i32
  }
  func.func @transform_1(%arg0: i32) -> (i32, i32) {
    %c0_i32 = arith.constant 0 : i32
    %c0_i32_0 = arith.constant 0 : i32
    %c0_i32_1 = arith.constant 0 : i32
    return %c0_i32, %c0_i32_0 : i32, i32
  }
  func.func @transform_2(%arg0: i32) -> (i32, i32) {
    %c0_i32 = arith.constant 0 : i32
    %c0_i32_0 = arith.constant 0 : i32
    %c0_i32_1 = arith.constant 0 : i32
    return %c0_i32, %c0_i32_0 : i32, i32
  }
  func.func @transform_3(%arg0: i32) -> (i32, i32) {
    %c0_i32 = arith.constant 0 : i32
    %c0_i32_0 = arith.constant 0 : i32
    %c0_i32_1 = arith.constant 0 : i32
    return %c0_i32, %c0_i32_0 : i32, i32
  }
}

module attributes {stable_mosaic.version = 11 : i64} {
  func.func @ln_matmul_kernel(%arg0: i32, %arg1: memref<16x32xf32, #tpu.memory_space<vmem>>, %arg2: memref<1x32xf32, #tpu.memory_space<vmem>>, %arg3: memref<32x32xf32, #tpu.memory_space<vmem>>, %arg4: memref<16x32xf32, #tpu.memory_space<vmem>>) attributes {dimension_semantics = [#tpu.dimension_semantics<arbitrary>], iteration_bounds = array<i64: 1>, scalar_prefetch = 0 : i64, scratch_operands = 0 : i64, tpu.core_type = #tpu.core_type<tc>, window_params = [{pipeline_mode = #tpu.pipeline_mode<synchronous>, transform_indices = @transform_0, window_bounds = array<i64: 16, 32>}, {pipeline_mode = #tpu.pipeline_mode<synchronous>, transform_indices = @transform_1, window_bounds = array<i64: 1, 32>}, {pipeline_mode = #tpu.pipeline_mode<synchronous>, transform_indices = @transform_2, window_bounds = array<i64: 32, 32>}, {pipeline_mode = #tpu.pipeline_mode<synchronous>, transform_indices = @transform_3, window_bounds = array<i64: 16, 32>}]} {
    %c0 = arith.constant 0 : index
    %c0_0 = arith.constant 0 : index
    %0 = vector.load %arg1[%c0, %c0_0] : memref<16x32xf32, #tpu.memory_space<vmem>>, vector<16x32xf32>
    %1 = arith.mulf %0, %0 : vector<16x32xf32>
    %cst = arith.constant dense<0.000000e+00> : vector<16xf32>
    %2 = vector.multi_reduction <add>, %1, %cst [1] : vector<16x32xf32> to vector<16xf32>
    %3 = vector.shape_cast %2 : vector<16xf32> to vector<16x1xf32>
    %cst_1 = arith.constant 3.200000e+01 : f32
    %4 = vector.broadcast %cst_1 : f32 to vector<16x1xf32>
    %5 = arith.divf %3, %4 : vector<16x1xf32>
    %cst_2 = arith.constant 9.99999997E-7 : f32
    %6 = vector.broadcast %cst_2 : f32 to vector<16x1xf32>
    %7 = arith.addf %5, %6 : vector<16x1xf32>
    %8 = math.rsqrt %7 : vector<16x1xf32>
    %9 = vector.broadcast %8 : vector<16x1xf32> to vector<16x32xf32>
    %10 = arith.mulf %0, %9 : vector<16x32xf32>
    %c0_3 = arith.constant 0 : index
    %c0_4 = arith.constant 0 : index
    %11 = vector.load %arg2[%c0_3, %c0_4] : memref<1x32xf32, #tpu.memory_space<vmem>>, vector<1x32xf32>
    %12 = vector.broadcast %11 : vector<1x32xf32> to vector<16x32xf32>
    %13 = arith.mulf %10, %12 : vector<16x32xf32>
    %c0_5 = arith.constant 0 : index
    %c0_6 = arith.constant 0 : index
    %14 = vector.load %arg3[%c0_5, %c0_6] : memref<32x32xf32, #tpu.memory_space<vmem>>, vector<32x32xf32>
    %cst_7 = arith.constant dense<0.000000e+00> : vector<16x32xf32>
    %15 = tpu.matmul %13, %14, %cst_7 {dimension_numbers = #tpu.dot_dimension_numbers<[1], [0], [0], [1], [0, 0, 1, 1], [], []>} : vector<16x32xf32>, vector<32x32xf32>, vector<16x32xf32> -> vector<16x32xf32>
    %c0_8 = arith.constant 0 : index
    %c0_9 = arith.constant 0 : index
    %16 = vector.load %arg4[%c0_8, %c0_9] : memref<16x32xf32, #tpu.memory_space<vmem>>, vector<16x32xf32>
    tpu.vector_store %arg4[%c0_8, %c0_9], %15 {strides = array<i32>} : memref<16x32xf32, #tpu.memory_space<vmem>>, vector<16x32xf32>,
    return
  }
  func.func @transform_0(%arg0: i32) -> (i32, i32) {
    %c0_i32 = arith.constant 0 : i32
    %c0_i32_0 = arith.constant 0 : i32
    %c0_i32_1 = arith.constant 0 : i32
    return %c0_i32, %c0_i32_0 : i32, i32
  }
  func.func @transform_1(%arg0: i32) -> (i32, i32) {
    %c0_i32 = arith.constant 0 : i32
    %c0_i32_0 = arith.constant 0 : i32
    %c0_i32_1 = arith.constant 0 : i32
    return %c0_i32, %c0_i32_0 : i32, i32
  }
  func.func @transform_2(%arg0: i32) -> (i32, i32) {
    %c0_i32 = arith.constant 0 : i32
    %c0_i32_0 = arith.constant 0 : i32
    %c0_i32_1 = arith.constant 0 : i32
    return %c0_i32, %c0_i32_0 : i32, i32
  }
  func.func @transform_3(%arg0: i32) -> (i32, i32) {
    %c0_i32 = arith.constant 0 : i32
    %c0_i32_0 = arith.constant 0 : i32
    %c0_i32_1 = arith.constant 0 : i32
    return %c0_i32, %c0_i32_0 : i32, i32
  }
}

module attributes {stable_mosaic.version = 11 : i64} {
  func.func @attn_kernel(%arg0: i32, %arg1: memref<8x8x8xf32, #tpu.memory_space<vmem>>, %arg2: memref<8x8x8xf32, #tpu.memory_space<vmem>>, %arg3: memref<8x8x8xf32, #tpu.memory_space<vmem>>, %arg4: memref<4x8x8xf32, #tpu.memory_space<vmem>>, %arg5: memref<2x1x8xf32, #tpu.memory_space<vmem>>, %arg6: memref<8x8x8xf32, #tpu.memory_space<vmem>>) attributes {dimension_semantics = [#tpu.dimension_semantics<arbitrary>], iteration_bounds = array<i64: 1>, scalar_prefetch = 0 : i64, scratch_operands = 0 : i64, tpu.core_type = #tpu.core_type<tc>, window_params = [{pipeline_mode = #tpu.pipeline_mode<synchronous>, transform_indices = @transform_0, window_bounds = array<i64: 8, 8, 8>}, {pipeline_mode = #tpu.pipeline_mode<synchronous>, transform_indices = @transform_1, window_bounds = array<i64: 8, 8, 8>}, {pipeline_mode = #tpu.pipeline_mode<synchronous>, transform_indices = @transform_2, window_bounds = array<i64: 8, 8, 8>}, {pipeline_mode = #tpu.pipeline_mode<synchronous>, transform_indices = @transform_3, window_bounds = array<i64: 4, 8, 8>}, {pipeline_mode = #tpu.pipeline_mode<synchronous>, transform_indices = @transform_4, window_bounds = array<i64: 2, 1, 8>}, {pipeline_mode = #tpu.pipeline_mode<synchronous>, transform_indices = @transform_5, window_bounds = array<i64: 8, 8, 8>}]} {
    %c0 = arith.constant 0 : index
    %c0_0 = arith.constant 0 : index
    %c0_1 = arith.constant 0 : index
    %0 = vector.load %arg1[%c0, %c0_0, %c0_1] : memref<8x8x8xf32, #tpu.memory_space<vmem>>, vector<8x8x8xf32>
    %c0_2 = arith.constant 0 : index
    %c0_3 = arith.constant 0 : index
    %c0_4 = arith.constant 0 : index
    %1 = vector.load %arg2[%c0_2, %c0_3, %c0_4] : memref<8x8x8xf32, #tpu.memory_space<vmem>>, vector<8x8x8xf32>
    %c0_5 = arith.constant 0 : index
    %c0_6 = arith.constant 0 : index
    %c0_7 = arith.constant 0 : index
    %2 = vector.load %arg3[%c0_5, %c0_6, %c0_7] : memref<8x8x8xf32, #tpu.memory_space<vmem>>, vector<8x8x8xf32>
    "tpu.trace_start"() <{level = 10 : i32, message = "bqd,bkd->bqk"}> : () -> ()
    %cst = arith.constant dense<0.000000e+00> : vector<8x8x8xf32>
    %3 = tpu.matmul %0, %1, %cst {dimension_numbers = #tpu.dot_dimension_numbers<[2], [2], [1], [1], [0, 0, 0, 1, 1, 1], [0], [0]>} : vector<8x8x8xf32>, vector<8x8x8xf32>, vector<8x8x8xf32> -> vector<8x8x8xf32>
    "tpu.trace_stop"() : () -> ()
    %c0_8 = arith.constant 0 : index
    %c0_9 = arith.constant 0 : index
    %c0_10 = arith.constant 0 : index
    %4 = vector.load %arg4[%c0_8, %c0_9, %c0_10] : memref<4x8x8xf32, #tpu.memory_space<vmem>>, vector<4x8x8xf32>
    %5 = vector.shape_cast %4 : vector<4x8x8xf32> to vector<1x4x8x8xf32>
    %c0_11 = arith.constant 0 : index
    %c0_12 = arith.constant 0 : index
    %c0_13 = arith.constant 0 : index
    %6 = vector.load %arg5[%c0_11, %c0_12, %c0_13] : memref<2x1x8xf32, #tpu.memory_space<vmem>>, vector<2x1x8xf32>
    %7 = vector.shape_cast %6 : vector<2x1x8xf32> to vector<2x1x1x8xf32>
    %8 = vector.broadcast %5 : vector<1x4x8x8xf32> to vector<2x4x8x8xf32>
    %9 = vector.broadcast %7 : vector<2x1x1x8xf32> to vector<2x4x8x8xf32>
    %10 = arith.addf %8, %9 : vector<2x4x8x8xf32>
    %11 = vector.shape_cast %3 : vector<8x8x8xf32> to vector<2x4x8x8xf32>
    %12 = arith.addf %11, %10 : vector<2x4x8x8xf32>
    %13 = vector.shape_cast %12 : vector<2x4x8x8xf32> to vector<8x8x8xf32>
    %cst_14 = arith.constant dense<0xFF800000> : vector<8x8xf32>
    %14 = vector.multi_reduction <maximumf>, %13, %cst_14 [2] : vector<8x8x8xf32> to vector<8x8xf32>
    %15 = vector.shape_cast %14 : vector<8x8xf32> to vector<8x8x1xf32>
    %16 = vector.broadcast %15 : vector<8x8x1xf32> to vector<8x8x8xf32>
    %17 = arith.subf %13, %16 : vector<8x8x8xf32>
    %18 = math.exp %17 : vector<8x8x8xf32>
    %cst_15 = arith.constant dense<0.000000e+00> : vector<8x8xf32>
    %19 = vector.multi_reduction <add>, %18, %cst_15 [2] : vector<8x8x8xf32> to vector<8x8xf32>
    %20 = vector.shape_cast %19 : vector<8x8xf32> to vector<8x8x1xf32>
    %21 = vector.broadcast %20 : vector<8x8x1xf32> to vector<8x8x8xf32>
    %22 = arith.divf %18, %21 : vector<8x8x8xf32>
    "tpu.trace_start"() <{level = 10 : i32, message = "bqk,bkd->bqd"}> : () -> ()
    %cst_16 = arith.constant dense<0.000000e+00> : vector<8x8x8xf32>
    %23 = tpu.matmul %22, %2, %cst_16 {dimension_numbers = #tpu.dot_dimension_numbers<[2], [1], [1], [2], [0, 0, 0, 1, 1, 2], [0], [0]>} : vector<8x8x8xf32>, vector<8x8x8xf32>, vector<8x8x8xf32> -> vector<8x8x8xf32>
    "tpu.trace_stop"() : () -> ()
    %c0_17 = arith.constant 0 : index
    %c0_18 = arith.constant 0 : index
    %c0_19 = arith.constant 0 : index
    %24 = vector.load %arg6[%c0_17, %c0_18, %c0_19] : memref<8x8x8xf32, #tpu.memory_space<vmem>>, vector<8x8x8xf32>
    tpu.vector_store %arg6[%c0_17, %c0_18, %c0_19], %23 {strides = array<i32>} : memref<8x8x8xf32, #tpu.memory_space<vmem>>, vector<8x8x8xf32>,
    return
  }
  func.func @transform_0(%arg0: i32) -> (i32, i32, i32) {
    %c0_i32 = arith.constant 0 : i32
    %c0_i32_0 = arith.constant 0 : i32
    %c0_i32_1 = arith.constant 0 : i32
    %c0_i32_2 = arith.constant 0 : i32
    return %c0_i32, %c0_i32_0, %c0_i32_1 : i32, i32, i32
  }
  func.func @transform_1(%arg0: i32) -> (i32, i32, i32) {
    %c0_i32 = arith.constant 0 : i32
    %c0_i32_0 = arith.constant 0 : i32
    %c0_i32_1 = arith.constant 0 : i32
    %c0_i32_2 = arith.constant 0 : i32
    return %c0_i32, %c0_i32_0, %c0_i32_1 : i32, i32, i32
  }
  func.func @transform_2(%arg0: i32) -> (i32, i32, i32) {
    %c0_i32 = arith.constant 0 : i32
    %c0_i32_0 = arith.constant 0 : i32
    %c0_i32_1 = arith.constant 0 : i32
    %c0_i32_2 = arith.constant 0 : i32
    return %c0_i32, %c0_i32_0, %c0_i32_1 : i32, i32, i32
  }
  func.func @transform_3(%arg0: i32) -> (i32, i32, i32) {
    %c0_i32 = arith.constant 0 : i32
    %c0_i32_0 = arith.constant 0 : i32
    %c0_i32_1 = arith.constant 0 : i32
    %c0_i32_2 = arith.constant 0 : i32
    return %c0_i32, %c0_i32_0, %c0_i32_1 : i32, i32, i32
  }
  func.func @transform_4(%arg0: i32) -> (i32, i32, i32) {
    %c0_i32 = arith.constant 0 : i32
    %c0_i32_0 = arith.constant 0 : i32
    %c0_i32_1 = arith.constant 0 : i32
    %c0_i32_2 = arith.constant 0 : i32
    return %c0_i32, %c0_i32_0, %c0_i32_1 : i32, i32, i32
  }
  func.func @transform_5(%arg0: i32) -> (i32, i32, i32) {
    %c0_i32 = arith.constant 0 : i32
    %c0_i32_0 = arith.constant 0 : i32
    %c0_i32_1 = arith.constant 0 : i32
    %c0_i32_2 = arith.constant 0 : i32
    return %c0_i32, %c0_i32_0, %c0_i32_1 : i32, i32, i32
  }
}

module attributes {stable_mosaic.version = 11 : i64} {
  func.func @ln_ffn_kernel(%arg0: i32, %arg1: memref<16x32xf32, #tpu.memory_space<vmem>>, %arg2: memref<1x32xf32, #tpu.memory_space<vmem>>, %arg3: memref<32x64xf32, #tpu.memory_space<vmem>>, %arg4: memref<64x32xf32, #tpu.memory_space<vmem>>, %arg5: memref<16x32xf32, #tpu.memory_space<vmem>>) attributes {dimension_semantics = [#tpu.dimension_semantics<arbitrary>], iteration_bounds = array<i64: 1>, scalar_prefetch = 0 : i64, scratch_operands = 0 : i64, tpu.core_type = #tpu.core_type<tc>, window_params = [{pipeline_mode = #tpu.pipeline_mode<synchronous>, transform_indices = @transform_0, window_bounds = array<i64: 16, 32>}, {pipeline_mode = #tpu.pipeline_mode<synchronous>, transform_indices = @transform_1, window_bounds = array<i64: 1, 32>}, {pipeline_mode = #tpu.pipeline_mode<synchronous>, transform_indices = @transform_2, window_bounds = array<i64: 32, 64>}, {pipeline_mode = #tpu.pipeline_mode<synchronous>, transform_indices = @transform_3, window_bounds = array<i64: 64, 32>}, {pipeline_mode = #tpu.pipeline_mode<synchronous>, transform_indices = @transform_4, window_bounds = array<i64: 16, 32>}]} {
    %c0 = arith.constant 0 : index
    %c0_0 = arith.constant 0 : index
    %0 = vector.load %arg1[%c0, %c0_0] : memref<16x32xf32, #tpu.memory_space<vmem>>, vector<16x32xf32>
    %1 = arith.mulf %0, %0 : vector<16x32xf32>
    %cst = arith.constant dense<0.000000e+00> : vector<16xf32>
    %2 = vector.multi_reduction <add>, %1, %cst [1] : vector<16x32xf32> to vector<16xf32>
    %3 = vector.shape_cast %2 : vector<16xf32> to vector<16x1xf32>
    %cst_1 = arith.constant 3.200000e+01 : f32
    %4 = vector.broadcast %cst_1 : f32 to vector<16x1xf32>
    %5 = arith.divf %3, %4 : vector<16x1xf32>
    %cst_2 = arith.constant 9.99999997E-7 : f32
    %6 = vector.broadcast %cst_2 : f32 to vector<16x1xf32>
    %7 = arith.addf %5, %6 : vector<16x1xf32>
    %8 = math.rsqrt %7 : vector<16x1xf32>
    %9 = vector.broadcast %8 : vector<16x1xf32> to vector<16x32xf32>
    %10 = arith.mulf %0, %9 : vector<16x32xf32>
    %c0_3 = arith.constant 0 : index
    %c0_4 = arith.constant 0 : index
    %11 = vector.load %arg2[%c0_3, %c0_4] : memref<1x32xf32, #tpu.memory_space<vmem>>, vector<1x32xf32>
    %12 = vector.broadcast %11 : vector<1x32xf32> to vector<16x32xf32>
    %13 = arith.mulf %10, %12 : vector<16x32xf32>
    %c0_5 = arith.constant 0 : index
    %c0_6 = arith.constant 0 : index
    %14 = vector.load %arg3[%c0_5, %c0_6] : memref<32x64xf32, #tpu.memory_space<vmem>>, vector<32x64xf32>
    %cst_7 = arith.constant dense<0.000000e+00> : vector<16x64xf32>
    %15 = tpu.matmul %13, %14, %cst_7 {dimension_numbers = #tpu.dot_dimension_numbers<[1], [0], [0], [1], [0, 0, 1, 1], [], []>} : vector<16x32xf32>, vector<32x64xf32>, vector<16x64xf32> -> vector<16x64xf32>
    %cst_8 = arith.constant 0.000000e+00 : f32
    %16 = vector.broadcast %cst_8 : f32 to vector<16x64xf32>
    %17 = arith.maximumf %15, %16 : vector<16x64xf32>
    %c0_9 = arith.constant 0 : index
    %c0_10 = arith.constant 0 : index
    %18 = vector.load %arg4[%c0_9, %c0_10] : memref<64x32xf32, #tpu.memory_space<vmem>>, vector<64x32xf32>
    %cst_11 = arith.constant dense<0.000000e+00> : vector<16x32xf32>
    %19 = tpu.matmul %17, %18, %cst_11 {dimension_numbers = #tpu.dot_dimension_numbers<[1], [0], [0], [1], [0, 0, 1, 1], [], []>} : vector<16x64xf32>, vector<64x32xf32>, vector<16x32xf32> -> vector<16x32xf32>
    %20 = arith.addf %0, %19 : vector<16x32xf32>
    %c0_12 = arith.constant 0 : index
    %c0_13 = arith.constant 0 : index
    %21 = vector.load %arg5[%c0_12, %c0_13] : memref<16x32xf32, #tpu.memory_space<vmem>>, vector<16x32xf32>
    tpu.vector_store %arg5[%c0_12, %c0_13], %20 {strides = array<i32>} : memref<16x32xf32, #tpu.memory_space<vmem>>, vector<16x32xf32>,
    return
  }
  func.func @transform_0(%arg0: i32) -> (i32, i32) {
    %c0_i32 = arith.constant 0 : i32
    %c0_i32_0 = arith.constant 0 : i32
    %c0_i32_1 = arith.constant 0 : i32
    return %c0_i32, %c0_i32_0 : i32, i32
  }
  func.func @transform_1(%arg0: i32) -> (i32, i32) {
    %c0_i32 = arith.constant 0 : i32
    %c0_i32_0 = arith.constant 0 : i32
    %c0_i32_1 = arith.constant 0 : i32
    return %c0_i32, %c0_i32_0 : i32, i32
  }
  func.func @transform_2(%arg0: i32) -> (i32, i32) {
    %c0_i32 = arith.constant 0 : i32
    %c0_i32_0 = arith.constant 0 : i32
    %c0_i32_1 = arith.constant 0 : i32
    return %c0_i32, %c0_i32_0 : i32, i32
  }
  func.func @transform_3(%arg0: i32) -> (i32, i32) {
    %c0_i32 = arith.constant 0 : i32
    %c0_i32_0 = arith.constant 0 : i32
    %c0_i32_1 = arith.constant 0 : i32
    return %c0_i32, %c0_i32_0 : i32, i32
  }
  func.func @transform_4(%arg0: i32) -> (i32, i32) {
    %c0_i32 = arith.constant 0 : i32
    %c0_i32_0 = arith.constant 0 : i32
    %c0_i32_1 = arith.constant 0 : i32
    return %c0_i32, %c0_i32_0 : i32, i32
  }
}

module attributes {stable_mosaic.version = 11 : i64} {
  func.func @rmsnorm_kernel(%arg0: i32, %arg1: memref<16x32xf32, #tpu.memory_space<vmem>>, %arg2: memref<1x32xf32, #tpu.memory_space<vmem>>, %arg3: memref<16x32xf32, #tpu.memory_space<vmem>>) attributes {dimension_semantics = [#tpu.dimension_semantics<arbitrary>], iteration_bounds = array<i64: 1>, scalar_prefetch = 0 : i64, scratch_operands = 0 : i64, tpu.core_type = #tpu.core_type<tc>, window_params = [{pipeline_mode = #tpu.pipeline_mode<synchronous>, transform_indices = @transform_0, window_bounds = array<i64: 16, 32>}, {pipeline_mode = #tpu.pipeline_mode<synchronous>, transform_indices = @transform_1, window_bounds = array<i64: 1, 32>}, {pipeline_mode = #tpu.pipeline_mode<synchronous>, transform_indices = @transform_2, window_bounds = array<i64: 16, 32>}]} {
    %c0 = arith.constant 0 : index
    %c0_0 = arith.constant 0 : index
    %0 = vector.load %arg1[%c0, %c0_0] : memref<16x32xf32, #tpu.memory_space<vmem>>, vector<16x32xf32>
    %1 = arith.mulf %0, %0 : vector<16x32xf32>
    %cst = arith.constant dense<0.000000e+00> : vector<16xf32>
    %2 = vector.multi_reduction <add>, %1, %cst [1] : vector<16x32xf32> to vector<16xf32>
    %3 = vector.shape_cast %2 : vector<16xf32> to vector<16x1xf32>
    %cst_1 = arith.constant 3.200000e+01 : f32
    %4 = vector.broadcast %cst_1 : f32 to vector<16x1xf32>
    %5 = arith.divf %3, %4 : vector<16x1xf32>
    %cst_2 = arith.constant 9.99999997E-7 : f32
    %6 = vector.broadcast %cst_2 : f32 to vector<16x1xf32>
    %7 = arith.addf %5, %6 : vector<16x1xf32>
    %8 = math.rsqrt %7 : vector<16x1xf32>
    %9 = vector.broadcast %8 : vector<16x1xf32> to vector<16x32xf32>
    %10 = arith.mulf %0, %9 : vector<16x32xf32>
    %c0_3 = arith.constant 0 : index
    %c0_4 = arith.constant 0 : index
    %11 = vector.load %arg2[%c0_3, %c0_4] : memref<1x32xf32, #tpu.memory_space<vmem>>, vector<1x32xf32>
    %12 = vector.broadcast %11 : vector<1x32xf32> to vector<16x32xf32>
    %13 = arith.mulf %10, %12 : vector<16x32xf32>
    %c0_5 = arith.constant 0 : index
    %c0_6 = arith.constant 0 : index
    %14 = vector.load %arg3[%c0_5, %c0_6] : memref<16x32xf32, #tpu.memory_space<vmem>>, vector<16x32xf32>
    tpu.vector_store %arg3[%c0_5, %c0_6], %13 {strides = array<i32>} : memref<16x32xf32, #tpu.memory_space<vmem>>, vector<16x32xf32>,
    return
  }
  func.func @transform_0(%arg0: i32) -> (i32, i32) {
    %c0_i32 = arith.constant 0 : i32
    %c0_i32_0 = arith.constant 0 : i32
    %c0_i32_1 = arith.constant 0 : i32
    return %c0_i32, %c0_i32_0 : i32, i32
  }
  func.func @transform_1(%arg0: i32) -> (i32, i32) {
    %c0_i32 = arith.constant 0 : i32
    %c0_i32_0 = arith.constant 0 : i32
    %c0_i32_1 = arith.constant 0 : i32
    return %c0_i32, %c0_i32_0 : i32, i32
  }
  func.func @transform_2(%arg0: i32) -> (i32, i32) {
    %c0_i32 = arith.constant 0 : i32
    %c0_i32_0 = arith.constant 0 : i32
    %c0_i32_1 = arith.constant 0 : i32
    return %c0_i32, %c0_i32_0 : i32, i32
  }
}

module attributes {stable_mosaic.version = 11 : i64} {
  func.func @matmul_kernel(%arg0: i32, %arg1: memref<16x32xf32, #tpu.memory_space<vmem>>, %arg2: memref<32x64xf32, #tpu.memory_space<vmem>>, %arg3: memref<16x64xf32, #tpu.memory_space<vmem>>) attributes {dimension_semantics = [#tpu.dimension_semantics<arbitrary>], iteration_bounds = array<i64: 1>, scalar_prefetch = 0 : i64, scratch_operands = 0 : i64, tpu.core_type = #tpu.core_type<tc>, window_params = [{pipeline_mode = #tpu.pipeline_mode<synchronous>, transform_indices = @transform_0, window_bounds = array<i64: 16, 32>}, {pipeline_mode = #tpu.pipeline_mode<synchronous>, transform_indices = @transform_1, window_bounds = array<i64: 32, 64>}, {pipeline_mode = #tpu.pipeline_mode<synchronous>, transform_indices = @transform_2, window_bounds = array<i64: 16, 64>}]} {
    %c0 = arith.constant 0 : index
    %c0_0 = arith.constant 0 : index
    %0 = vector.load %arg1[%c0, %c0_0] : memref<16x32xf32, #tpu.memory_space<vmem>>, vector<16x32xf32>
    %c0_1 = arith.constant 0 : index
    %c0_2 = arith.constant 0 : index
    %1 = vector.load %arg2[%c0_1, %c0_2] : memref<32x64xf32, #tpu.memory_space<vmem>>, vector<32x64xf32>
    %cst = arith.constant dense<0.000000e+00> : vector<16x64xf32>
    %2 = tpu.matmul %0, %1, %cst {dimension_numbers = #tpu.dot_dimension_numbers<[1], [0], [0], [1], [0, 0, 1, 1], [], []>} : vector<16x32xf32>, vector<32x64xf32>, vector<16x64xf32> -> vector<16x64xf32>
    %c0_3 = arith.constant 0 : index
    %c0_4 = arith.constant 0 : index
    %3 = vector.load %arg3[%c0_3, %c0_4] : memref<16x64xf32, #tpu.memory_space<vmem>>, vector<16x64xf32>
    tpu.vector_store %arg3[%c0_3, %c0_4], %2 {strides = array<i32>} : memref<16x64xf32, #tpu.memory_space<vmem>>, vector<16x64xf32>,
    return
  }
  func.func @transform_0(%arg0: i32) -> (i32, i32) {
    %c0_i32 = arith.constant 0 : i32
    %c0_i32_0 = arith.constant 0 : i32
    %c0_i32_1 = arith.constant 0 : i32
    return %c0_i32, %c0_i32_0 : i32, i32
  }
  func.func @transform_1(%arg0: i32) -> (i32, i32) {
    %c0_i32 = arith.constant 0 : i32
    %c0_i32_0 = arith.constant 0 : i32
    %c0_i32_1 = arith.constant 0 : i32
    return %c0_i32, %c0_i32_0 : i32, i32
  }
  func.func @transform_2(%arg0: i32) -> (i32, i32) {
    %c0_i32 = arith.constant 0 : i32
    %c0_i32_0 = arith.constant 0 : i32
    %c0_i32_1 = arith.constant 0 : i32
    return %c0_i32, %c0_i32_0 : i32, i32
  }
}

module attributes {stable_mosaic.version = 11 : i64} {
  func.func @attn_kernel(%arg0: i32, %arg1: memref<8x8x8xf32, #tpu.memory_space<vmem>>, %arg2: memref<8x8x8xf32, #tpu.memory_space<vmem>>, %arg3: memref<8x8x8xf32, #tpu.memory_space<vmem>>, %arg4: memref<1x1x1xf32, #tpu.memory_space<vmem>>, %arg5: memref<2x1x8xf32, #tpu.memory_space<vmem>>, %arg6: memref<8x8x8xf32, #tpu.memory_space<vmem>>) attributes {dimension_semantics = [#tpu.dimension_semantics<arbitrary>], iteration_bounds = array<i64: 1>, scalar_prefetch = 0 : i64, scratch_operands = 0 : i64, tpu.core_type = #tpu.core_type<tc>, window_params = [{pipeline_mode = #tpu.pipeline_mode<synchronous>, transform_indices = @transform_0, window_bounds = array<i64: 8, 8, 8>}, {pipeline_mode = #tpu.pipeline_mode<synchronous>, transform_indices = @transform_1, window_bounds = array<i64: 8, 8, 8>}, {pipeline_mode = #tpu.pipeline_mode<synchronous>, transform_indices = @transform_2, window_bounds = array<i64: 8, 8, 8>}, {pipeline_mode = #tpu.pipeline_mode<synchronous>, transform_indices = @transform_3, window_bounds = array<i64: 1, 1, 1>}, {pipeline_mode = #tpu.pipeline_mode<synchronous>, transform_indices = @transform_4, window_bounds = array<i64: 2, 1, 8>}, {pipeline_mode = #tpu.pipeline_mode<synchronous>, transform_indices = @transform_5, window_bounds = array<i64: 8, 8, 8>}]} {
    %c0 = arith.constant 0 : index
    %c0_0 = arith.constant 0 : index
    %c0_1 = arith.constant 0 : index
    %0 = vector.load %arg1[%c0, %c0_0, %c0_1] : memref<8x8x8xf32, #tpu.memory_space<vmem>>, vector<8x8x8xf32>
    %c0_2 = arith.constant 0 : index
    %c0_3 = arith.constant 0 : index
    %c0_4 = arith.constant 0 : index
    %1 = vector.load %arg2[%c0_2, %c0_3, %c0_4] : memref<8x8x8xf32, #tpu.memory_space<vmem>>, vector<8x8x8xf32>
    %c0_5 = arith.constant 0 : index
    %c0_6 = arith.constant 0 : index
    %c0_7 = arith.constant 0 : index
    %2 = vector.load %arg3[%c0_5, %c0_6, %c0_7] : memref<8x8x8xf32, #tpu.memory_space<vmem>>, vector<8x8x8xf32>
    "tpu.trace_start"() <{level = 10 : i32, message = "bqd,bkd->bqk"}> : () -> ()
    %cst = arith.constant dense<0.000000e+00> : vector<8x8x8xf32>
    %3 = tpu.matmul %0, %1, %cst {dimension_numbers = #tpu.dot_dimension_numbers<[2], [2], [1], [1], [0, 0, 0, 1, 1, 1], [0], [0]>} : vector<8x8x8xf32>, vector<8x8x8xf32>, vector<8x8x8xf32> -> vector<8x8x8xf32>
    "tpu.trace_stop"() : () -> ()
    %c0_8 = arith.constant 0 : index
    %c0_9 = arith.constant 0 : index
    %c0_10 = arith.constant 0 : index
    %4 = vector.load %arg4[%c0_8, %c0_9, %c0_10] : memref<1x1x1xf32, #tpu.memory_space<vmem>>, vector<1x1x1xf32>
    %5 = vector.shape_cast %4 : vector<1x1x1xf32> to vector<1x1x1x1xf32>
    %c0_11 = arith.constant 0 : index
    %c0_12 = arith.constant 0 : index
    %c0_13 = arith.constant 0 : index
    %6 = vector.load %arg5[%c0_11, %c0_12, %c0_13] : memref<2x1x8xf32, #tpu.memory_space<vmem>>, vector<2x1x8xf32>
    %7 = vector.shape_cast %6 : vector<2x1x8xf32> to vector<2x1x1x8xf32>
    %8 = vector.broadcast %5 : vector<1x1x1x1xf32> to vector<2x1x1x8xf32>
    %9 = arith.addf %8, %7 : vector<2x1x1x8xf32>
    %10 = vector.shape_cast %3 : vector<8x8x8xf32> to vector<2x4x8x8xf32>
    %11 = vector.broadcast %9 : vector<2x1x1x8xf32> to vector<2x4x8x8xf32>
    %12 = arith.addf %10, %11 : vector<2x4x8x8xf32>
    %13 = vector.shape_cast %12 : vector<2x4x8x8xf32> to vector<8x8x8xf32>
    %cst_14 = arith.constant dense<0xFF800000> : vector<8x8xf32>
    %14 = vector.multi_reduction <maximumf>, %13, %cst_14 [2] : vector<8x8x8xf32> to vector<8x8xf32>
    %15 = vector.shape_cast %14 : vector<8x8xf32> to vector<8x8x1xf32>
    %16 = vector.broadcast %15 : vector<8x8x1xf32> to vector<8x8x8xf32>
    %17 = arith.subf %13, %16 : vector<8x8x8xf32>
    %18 = math.exp %17 : vector<8x8x8xf32>
    %cst_15 = arith.constant dense<0.000000e+00> : vector<8x8xf32>
    %19 = vector.multi_reduction <add>, %18, %cst_15 [2] : vector<8x8x8xf32> to vector<8x8xf32>
    %20 = vector.shape_cast %19 : vector<8x8xf32> to vector<8x8x1xf32>
    %21 = vector.broadcast %20 : vector<8x8x1xf32> to vector<8x8x8xf32>
    %22 = arith.divf %18, %21 : vector<8x8x8xf32>
    "tpu.trace_start"() <{level = 10 : i32, message = "bqk,bkd->bqd"}> : () -> ()
    %cst_16 = arith.constant dense<0.000000e+00> : vector<8x8x8xf32>
    %23 = tpu.matmul %22, %2, %cst_16 {dimension_numbers = #tpu.dot_dimension_numbers<[2], [1], [1], [2], [0, 0, 0, 1, 1, 2], [0], [0]>} : vector<8x8x8xf32>, vector<8x8x8xf32>, vector<8x8x8xf32> -> vector<8x8x8xf32>
    "tpu.trace_stop"() : () -> ()
    %c0_17 = arith.constant 0 : index
    %c0_18 = arith.constant 0 : index
    %c0_19 = arith.constant 0 : index
    %24 = vector.load %arg6[%c0_17, %c0_18, %c0_19] : memref<8x8x8xf32, #tpu.memory_space<vmem>>, vector<8x8x8xf32>
    tpu.vector_store %arg6[%c0_17, %c0_18, %c0_19], %23 {strides = array<i32>} : memref<8x8x8xf32, #tpu.memory_space<vmem>>, vector<8x8x8xf32>,
    return
  }
  func.func @transform_0(%arg0: i32) -> (i32, i32, i32) {
    %c0_i32 = arith.constant 0 : i32
    %c0_i32_0 = arith.constant 0 : i32
    %c0_i32_1 = arith.constant 0 : i32
    %c0_i32_2 = arith.constant 0 : i32
    return %c0_i32, %c0_i32_0, %c0_i32_1 : i32, i32, i32
  }
  func.func @transform_1(%arg0: i32) -> (i32, i32, i32) {
    %c0_i32 = arith.constant 0 : i32
    %c0_i32_0 = arith.constant 0 : i32
    %c0_i32_1 = arith.constant 0 : i32
    %c0_i32_2 = arith.constant 0 : i32
    return %c0_i32, %c0_i32_0, %c0_i32_1 : i32, i32, i32
  }
  func.func @transform_2(%arg0: i32) -> (i32, i32, i32) {
    %c0_i32 = arith.constant 0 : i32
    %c0_i32_0 = arith.constant 0 : i32
    %c0_i32_1 = arith.constant 0 : i32
    %c0_i32_2 = arith.constant 0 : i32
    return %c0_i32, %c0_i32_0, %c0_i32_1 : i32, i32, i32
  }
  func.func @transform_3(%arg0: i32) -> (i32, i32, i32) {
    %c0_i32 = arith.constant 0 : i32
    %c0_i32_0 = arith.constant 0 : i32
    %c0_i32_1 = arith.constant 0 : i32
    %c0_i32_2 = arith.constant 0 : i32
    return %c0_i32, %c0_i32_0, %c0_i32_1 : i32, i32, i32
  }
  func.func @transform_4(%arg0: i32) -> (i32, i32, i32) {
    %c0_i32 = arith.constant 0 : i32
    %c0_i32_0 = arith.constant 0 : i32
    %c0_i32_1 = arith.constant 0 : i32
    %c0_i32_2 = arith.constant 0 : i32
    return %c0_i32, %c0_i32_0, %c0_i32_1 : i32, i32, i32
  }
  func.func @transform_5(%arg0: i32) -> (i32, i32, i32) {
    %c0_i32 = arith.constant 0 : i32
    %c0_i32_0 = arith.constant 0 : i32
    %c0_i32_1 = arith.constant 0 : i32
    %c0_i32_2 = arith.constant 0 : i32
    return %c0_i32, %c0_i32_0, %c0_i32_1 : i32, i32, i32
  }
}

module attributes {stable_mosaic.version = 11 : i64} {
  func.func @ln_ffn_kernel(%arg0: i32, %arg1: memref<16x32xf32, #tpu.memory_space<vmem>>, %arg2: memref<1x32xf32, #tpu.memory_space<vmem>>, %arg3: memref<32x64xf32, #tpu.memory_space<vmem>>, %arg4: memref<64x32xf32, #tpu.memory_space<vmem>>, %arg5: memref<16x32xf32, #tpu.memory_space<vmem>>) attributes {dimension_semantics = [#tpu.dimension_semantics<arbitrary>], iteration_bounds = array<i64: 1>, scalar_prefetch = 0 : i64, scratch_operands = 0 : i64, tpu.core_type = #tpu.core_type<tc>, window_params = [{pipeline_mode = #tpu.pipeline_mode<synchronous>, transform_indices = @transform_0, window_bounds = array<i64: 16, 32>}, {pipeline_mode = #tpu.pipeline_mode<synchronous>, transform_indices = @transform_1, window_bounds = array<i64: 1, 32>}, {pipeline_mode = #tpu.pipeline_mode<synchronous>, transform_indices = @transform_2, window_bounds = array<i64: 32, 64>}, {pipeline_mode = #tpu.pipeline_mode<synchronous>, transform_indices = @transform_3, window_bounds = array<i64: 64, 32>}, {pipeline_mode = #tpu.pipeline_mode<synchronous>, transform_indices = @transform_4, window_bounds = array<i64: 16, 32>}]} {
    %c0 = arith.constant 0 : index
    %c0_0 = arith.constant 0 : index
    %0 = vector.load %arg1[%c0, %c0_0] : memref<16x32xf32, #tpu.memory_space<vmem>>, vector<16x32xf32>
    %1 = arith.mulf %0, %0 : vector<16x32xf32>
    %cst = arith.constant dense<0.000000e+00> : vector<16xf32>
    %2 = vector.multi_reduction <add>, %1, %cst [1] : vector<16x32xf32> to vector<16xf32>
    %3 = vector.shape_cast %2 : vector<16xf32> to vector<16x1xf32>
    %cst_1 = arith.constant 3.200000e+01 : f32
    %4 = vector.broadcast %cst_1 : f32 to vector<16x1xf32>
    %5 = arith.divf %3, %4 : vector<16x1xf32>
    %cst_2 = arith.constant 9.99999997E-7 : f32
    %6 = vector.broadcast %cst_2 : f32 to vector<16x1xf32>
    %7 = arith.addf %5, %6 : vector<16x1xf32>
    %8 = math.rsqrt %7 : vector<16x1xf32>
    %9 = vector.broadcast %8 : vector<16x1xf32> to vector<16x32xf32>
    %10 = arith.mulf %0, %9 : vector<16x32xf32>
    %c0_3 = arith.constant 0 : index
    %c0_4 = arith.constant 0 : index
    %11 = vector.load %arg2[%c0_3, %c0_4] : memref<1x32xf32, #tpu.memory_space<vmem>>, vector<1x32xf32>
    %12 = vector.broadcast %11 : vector<1x32xf32> to vector<16x32xf32>
    %13 = arith.mulf %10, %12 : vector<16x32xf32>
    %c0_5 = arith.constant 0 : index
    %c0_6 = arith.constant 0 : index
    %14 = vector.load %arg3[%c0_5, %c0_6] : memref<32x64xf32, #tpu.memory_space<vmem>>, vector<32x64xf32>
    %cst_7 = arith.constant dense<0.000000e+00> : vector<16x64xf32>
    %15 = tpu.matmul %13, %14, %cst_7 {dimension_numbers = #tpu.dot_dimension_numbers<[1], [0], [0], [1], [0, 0, 1, 1], [], []>} : vector<16x32xf32>, vector<32x64xf32>, vector<16x64xf32> -> vector<16x64xf32>
    %cst_8 = arith.constant 0.000000e+00 : f32
    %16 = vector.broadcast %cst_8 : f32 to vector<16x64xf32>
    %17 = arith.maximumf %15, %16 : vector<16x64xf32>
    %c0_9 = arith.constant 0 : index
    %c0_10 = arith.constant 0 : index
    %18 = vector.load %arg4[%c0_9, %c0_10] : memref<64x32xf32, #tpu.memory_space<vmem>>, vector<64x32xf32>
    %cst_11 = arith.constant dense<0.000000e+00> : vector<16x32xf32>
    %19 = tpu.matmul %17, %18, %cst_11 {dimension_numbers = #tpu.dot_dimension_numbers<[1], [0], [0], [1], [0, 0, 1, 1], [], []>} : vector<16x64xf32>, vector<64x32xf32>, vector<16x32xf32> -> vector<16x32xf32>
    %20 = arith.addf %0, %19 : vector<16x32xf32>
    %c0_12 = arith.constant 0 : index
    %c0_13 = arith.constant 0 : index
    %21 = vector.load %arg5[%c0_12, %c0_13] : memref<16x32xf32, #tpu.memory_space<vmem>>, vector<16x32xf32>
    tpu.vector_store %arg5[%c0_12, %c0_13], %20 {strides = array<i32>} : memref<16x32xf32, #tpu.memory_space<vmem>>, vector<16x32xf32>,
    return
  }
  func.func @transform_0(%arg0: i32) -> (i32, i32) {
    %c0_i32 = arith.constant 0 : i32
    %c0_i32_0 = arith.constant 0 : i32
    %c0_i32_1 = arith.constant 0 : i32
    return %c0_i32, %c0_i32_0 : i32, i32
  }
  func.func @transform_1(%arg0: i32) -> (i32, i32) {
    %c0_i32 = arith.constant 0 : i32
    %c0_i32_0 = arith.constant 0 : i32
    %c0_i32_1 = arith.constant 0 : i32
    return %c0_i32, %c0_i32_0 : i32, i32
  }
  func.func @transform_2(%arg0: i32) -> (i32, i32) {
    %c0_i32 = arith.constant 0 : i32
    %c0_i32_0 = arith.constant 0 : i32
    %c0_i32_1 = arith.constant 0 : i32
    return %c0_i32, %c0_i32_0 : i32, i32
  }
  func.func @transform_3(%arg0: i32) -> (i32, i32) {
    %c0_i32 = arith.constant 0 : i32
    %c0_i32_0 = arith.constant 0 : i32
    %c0_i32_1 = arith.constant 0 : i32
    return %c0_i32, %c0_i32_0 : i32, i32
  }
  func.func @transform_4(%arg0: i32) -> (i32, i32) {
    %c0_i32 = arith.constant 0 : i32
    %c0_i32_0 = arith.constant 0 : i32
    %c0_i32_1 = arith.constant 0 : i32
    return %c0_i32, %c0_i32_0 : i32, i32
  }
}

module attributes {stable_mosaic.version = 11 : i64} {
  func.func @lmhead_ce_kernel(%arg0: i32, %arg1: memref<16x32xf32, #tpu.memory_space<vmem>>, %arg2: memref<1x32xf32, #tpu.memory_space<vmem>>, %arg3: memref<4096x32xbf16, #tpu.memory_space<vmem>>, %arg4: memref<16x1xi32, #tpu.memory_space<vmem>>, %arg5: memref<1x1xf32, #tpu.memory_space<vmem>>, %arg6: memref<16x1xf32, #tpu.memory_space<vmem>>, %arg7: memref<16x1xf32, #tpu.memory_space<vmem>>, %arg8: memref<16x1xf32, #tpu.memory_space<vmem>>) attributes {dimension_semantics = [#tpu.dimension_semantics<arbitrary>], iteration_bounds = array<i64: 8>, scalar_prefetch = 0 : i64, scratch_operands = 3 : i64, tpu.core_type = #tpu.core_type<tc>, window_params = [{pipeline_mode = #tpu.pipeline_mode<synchronous>, transform_indices = @transform_0, window_bounds = array<i64: 16, 32>}, {pipeline_mode = #tpu.pipeline_mode<synchronous>, transform_indices = @transform_1, window_bounds = array<i64: 1, 32>}, {transform_indices = @transform_2, window_bounds = array<i64: 4096, 32>}, {pipeline_mode = #tpu.pipeline_mode<synchronous>, transform_indices = @transform_3, window_bounds = array<i64: 16, 1>}, {pipeline_mode = #tpu.pipeline_mode<synchronous>, transform_indices = @transform_4, window_bounds = array<i64: 1, 1>}]} {
    %c0_i32 = arith.constant 0 : i32
    %0 = arith.cmpi eq, %arg0, %c0_i32 : i32
    %1 = arith.extui %0 : i1 to i32
    %c0_i32_0 = arith.constant 0 : i32
    %2 = arith.cmpi ne, %1, %c0_i32_0 : i32
    scf.if %2 {
      %cst_30 = arith.constant 0xFF800000 : f32
      %59 = vector.broadcast %cst_30 : f32 to vector<16x1xf32>
      %c0_31 = arith.constant 0 : index
      %c0_32 = arith.constant 0 : index
      %60 = vector.load %arg6[%c0_31, %c0_32] : memref<16x1xf32, #tpu.memory_space<vmem>>, vector<16x1xf32>
      tpu.vector_store %arg6[%c0_31, %c0_32], %59 {strides = array<i32>} : memref<16x1xf32, #tpu.memory_space<vmem>>, vector<16x1xf32>,
      %cst_33 = arith.constant 0.000000e+00 : f32
      %61 = vector.broadcast %cst_33 : f32 to vector<16x1xf32>
      %c0_34 = arith.constant 0 : index
      %c0_35 = arith.constant 0 : index
      %62 = vector.load %arg7[%c0_34, %c0_35] : memref<16x1xf32, #tpu.memory_space<vmem>>, vector<16x1xf32>
      tpu.vector_store %arg7[%c0_34, %c0_35], %61 {strides = array<i32>} : memref<16x1xf32, #tpu.memory_space<vmem>>, vector<16x1xf32>,
      %cst_36 = arith.constant 0.000000e+00 : f32
      %63 = vector.broadcast %cst_36 : f32 to vector<16x1xf32>
      %c0_37 = arith.constant 0 : index
      %c0_38 = arith.constant 0 : index
      %64 = vector.load %arg8[%c0_37, %c0_38] : memref<16x1xf32, #tpu.memory_space<vmem>>, vector<16x1xf32>
      tpu.vector_store %arg8[%c0_37, %c0_38], %63 {strides = array<i32>} : memref<16x1xf32, #tpu.memory_space<vmem>>, vector<16x1xf32>,
    } else {
    }
    %c0 = arith.constant 0 : index
    %c0_1 = arith.constant 0 : index
    %3 = vector.load %arg1[%c0, %c0_1] : memref<16x32xf32, #tpu.memory_space<vmem>>, vector<16x32xf32>
    %4 = arith.mulf %3, %3 : vector<16x32xf32>
    %cst = arith.constant dense<0.000000e+00> : vector<16xf32>
    %5 = vector.multi_reduction <add>, %4, %cst [1] : vector<16x32xf32> to vector<16xf32>
    %6 = vector.shape_cast %5 : vector<16xf32> to vector<16x1xf32>
    %cst_2 = arith.constant 3.200000e+01 : f32
    %7 = vector.broadcast %cst_2 : f32 to vector<16x1xf32>
    %8 = arith.divf %6, %7 : vector<16x1xf32>
    %cst_3 = arith.constant 9.99999997E-7 : f32
    %9 = vector.broadcast %cst_3 : f32 to vector<16x1xf32>
    %10 = arith.addf %8, %9 : vector<16x1xf32>
    %11 = math.rsqrt %10 : vector<16x1xf32>
    %12 = vector.broadcast %11 : vector<16x1xf32> to vector<16x32xf32>
    %13 = arith.mulf %3, %12 : vector<16x32xf32>
    %c0_4 = arith.constant 0 : index
    %c0_5 = arith.constant 0 : index
    %14 = vector.load %arg2[%c0_4, %c0_5] : memref<1x32xf32, #tpu.memory_space<vmem>>, vector<1x32xf32>
    %15 = vector.broadcast %14 : vector<1x32xf32> to vector<16x32xf32>
    %16 = arith.mulf %13, %15 : vector<16x32xf32>
    %cst_6 = arith.constant 0.176776692 : f32
    %17 = vector.broadcast %cst_6 : f32 to vector<16x32xf32>
    %18 = arith.mulf %16, %17 : vector<16x32xf32>
    %19 = arith.truncf %18 : vector<16x32xf32> to vector<16x32xbf16>
    %c0_7 = arith.constant 0 : index
    %c0_8 = arith.constant 0 : index
    %20 = vector.load %arg3[%c0_7, %c0_8] : memref<4096x32xbf16, #tpu.memory_space<vmem>>, vector<4096x32xbf16>
    %cst_9 = arith.constant dense<0.000000e+00> : vector<16x4096xf32>
    %21 = tpu.matmul %19, %20, %cst_9 {dimension_numbers = #tpu.dot_dimension_numbers<[1], [1], [0], [0], [0, 0, 1, 0], [], []>} : vector<16x32xbf16>, vector<4096x32xbf16>, vector<16x4096xf32> -> vector<16x4096xf32>
    %c0_10 = arith.constant 0 : index
    %c0_11 = arith.constant 0 : index
    %22 = vector.load %arg4[%c0_10, %c0_11] : memref<16x1xi32, #tpu.memory_space<vmem>>, vector<16x1xi32>
    %23 = tpu.iota {dimensions = array<i32: 1>} : vector<16x4096xi32>
    %c4096_i32 = arith.constant 4096 : i32
    %24 = arith.muli %arg0, %c4096_i32 : i32
    %25 = vector.broadcast %24 : i32 to vector<16x4096xi32>
    %26 = arith.addi %23, %25 : vector<16x4096xi32>
    %c32128_i32 = arith.constant 32128 : i32
    %27 = vector.broadcast %c32128_i32 : i32 to vector<16x4096xi32>
    %28 = arith.cmpi slt, %26, %27 : vector<16x4096xi32>
    %cst_12 = arith.constant -1.000000e+09 : f32
    %29 = vector.broadcast %cst_12 : f32 to vector<16x4096xf32>
    %30 = arith.select %28, %21, %29 : vector<16x4096xi1>, vector<16x4096xf32>
    %c0_13 = arith.constant 0 : index
    %c0_14 = arith.constant 0 : index
    %31 = vector.load %arg6[%c0_13, %c0_14] : memref<16x1xf32, #tpu.memory_space<vmem>>, vector<16x1xf32>
    %cst_15 = arith.constant dense<0xFF800000> : vector<16xf32>
    %32 = vector.multi_reduction <maximumf>, %30, %cst_15 [1] : vector<16x4096xf32> to vector<16xf32>
    %33 = vector.shape_cast %32 : vector<16xf32> to vector<16x1xf32>
    %34 = arith.maximumf %31, %33 : vector<16x1xf32>
    %35 = arith.subf %31, %34 : vector<16x1xf32>
    %36 = math.exp %35 : vector<16x1xf32>
    %c0_16 = arith.constant 0 : index
    %c0_17 = arith.constant 0 : index
    %37 = vector.load %arg7[%c0_16, %c0_17] : memref<16x1xf32, #tpu.memory_space<vmem>>, vector<16x1xf32>
    %38 = arith.mulf %36, %37 : vector<16x1xf32>
    %39 = vector.broadcast %34 : vector<16x1xf32> to vector<16x4096xf32>
    %40 = arith.subf %30, %39 : vector<16x4096xf32>
    %41 = math.exp %40 : vector<16x4096xf32>
    %cst_18 = arith.constant dense<0.000000e+00> : vector<16xf32>
    %42 = vector.multi_reduction <add>, %41, %cst_18 [1] : vector<16x4096xf32> to vector<16xf32>
    %43 = vector.shape_cast %42 : vector<16xf32> to vector<16x1xf32>
    %44 = arith.addf %38, %43 : vector<16x1xf32>
    %c0_19 = arith.constant 0 : index
    %c0_20 = arith.constant 0 : index
    %45 = vector.load %arg7[%c0_19, %c0_20] : memref<16x1xf32, #tpu.memory_space<vmem>>, vector<16x1xf32>
    tpu.vector_store %arg7[%c0_19, %c0_20], %44 {strides = array<i32>} : memref<16x1xf32, #tpu.memory_space<vmem>>, vector<16x1xf32>,
    %c0_21 = arith.constant 0 : index
    %c0_22 = arith.constant 0 : index
    %46 = vector.load %arg6[%c0_21, %c0_22] : memref<16x1xf32, #tpu.memory_space<vmem>>, vector<16x1xf32>
    tpu.vector_store %arg6[%c0_21, %c0_22], %34 {strides = array<i32>} : memref<16x1xf32, #tpu.memory_space<vmem>>, vector<16x1xf32>,
    %c0_23 = arith.constant 0 : index
    %c0_24 = arith.constant 0 : index
    %47 = vector.load %arg8[%c0_23, %c0_24] : memref<16x1xf32, #tpu.memory_space<vmem>>, vector<16x1xf32>
    %48 = vector.broadcast %22 : vector<16x1xi32> to vector<16x4096xi32>
    %49 = arith.cmpi eq, %26, %48 : vector<16x4096xi32>
    %cst_25 = arith.constant 0.000000e+00 : f32
    %50 = vector.broadcast %cst_25 : f32 to vector<16x4096xf32>
    %51 = arith.select %49, %21, %50 : vector<16x4096xi1>, vector<16x4096xf32>
    %cst_26 = arith.constant dense<0.000000e+00> : vector<16xf32>
    %52 = vector.multi_reduction <add>, %51, %cst_26 [1] : vector<16x4096xf32> to vector<16xf32>
    %53 = vector.shape_cast %52 : vector<16xf32> to vector<16x1xf32>
    %54 = arith.addf %47, %53 : vector<16x1xf32>
    %c0_27 = arith.constant 0 : index
    %c0_28 = arith.constant 0 : index
    %55 = vector.load %arg8[%c0_27, %c0_28] : memref<16x1xf32, #tpu.memory_space<vmem>>, vector<16x1xf32>
    tpu.vector_store %arg8[%c0_27, %c0_28], %54 {strides = array<i32>} : memref<16x1xf32, #tpu.memory_space<vmem>>, vector<16x1xf32>,
    %c7_i32 = arith.constant 7 : i32
    %56 = arith.cmpi eq, %arg0, %c7_i32 : i32
    %57 = arith.extui %56 : i1 to i32
    %c0_i32_29 = arith.constant 0 : i32
    %58 = arith.cmpi ne, %57, %c0_i32_29 : i32
    scf.if %58 {
      %c0_30 = arith.constant 0 : index
      %c0_31 = arith.constant 0 : index
      %59 = vector.load %arg6[%c0_30, %c0_31] : memref<16x1xf32, #tpu.memory_space<vmem>>, vector<16x1xf32>
      %c0_32 = arith.constant 0 : index
      %c0_33 = arith.constant 0 : index
      %60 = vector.load %arg7[%c0_32, %c0_33] : memref<16x1xf32, #tpu.memory_space<vmem>>, vector<16x1xf32>
      %61 = math.log %60 : vector<16x1xf32>
      %62 = arith.addf %59, %61 : vector<16x1xf32>
      %c-100_i32 = arith.constant -100 : i32
      %63 = vector.broadcast %c-100_i32 : i32 to vector<16x1xi32>
      %64 = arith.cmpi ne, %22, %63 : vector<16x1xi32>
      %65 = arith.extui %64 : vector<16x1xi1> to vector<16x1xi32>
      %66 = arith.sitofp %65 : vector<16x1xi32> to vector<16x1xf32>
      %c0_34 = arith.constant 0 : index
      %c0_35 = arith.constant 0 : index
      %67 = vector.load %arg8[%c0_34, %c0_35] : memref<16x1xf32, #tpu.memory_space<vmem>>, vector<16x1xf32>
      %68 = arith.subf %62, %67 : vector<16x1xf32>
      %69 = arith.mulf %68, %66 : vector<16x1xf32>
      %70 = vector.shape_cast %69 : vector<16x1xf32> to vector<1x16x1xf32>
      %cst_36 = arith.constant dense<0.000000e+00> : vector<1xf32>
      %71 = vector.multi_reduction <add>, %70, %cst_36 [1, 2] : vector<1x16x1xf32> to vector<1xf32>
      %72 = vector.shape_cast %71 : vector<1xf32> to vector<1x1x1xf32>
      %73 = vector.extract %72[0, 0, 0] : f32 from vector<1x1x1xf32>
      %74 = vector.shape_cast %66 : vector<16x1xf32> to vector<1x16x1xf32>
      %cst_37 = arith.constant dense<0.000000e+00> : vector<1xf32>
      %75 = vector.multi_reduction <add>, %74, %cst_37 [1, 2] : vector<1x16x1xf32> to vector<1xf32>
      %76 = vector.shape_cast %75 : vector<1xf32> to vector<1x1x1xf32>
      %77 = vector.extract %76[0, 0, 0] : f32 from vector<1x1x1xf32>
      %cst_38 = arith.constant 1.000000e+00 : f32
      %78 = arith.maximumf %77, %cst_38 : f32
      %79 = arith.divf %73, %78 : f32
      %80 = vector.broadcast %79 : f32 to vector<1x1xf32>
      %c0_39 = arith.constant 0 : index
      %c0_40 = arith.constant 0 : index
      %81 = vector.load %arg5[%c0_39, %c0_40] : memref<1x1xf32, #tpu.memory_space<vmem>>, vector<1x1xf32>
      tpu.vector_store %arg5[%c0_39, %c0_40], %80 {strides = array<i32>} : memref<1x1xf32, #tpu.memory_space<vmem>>, vector<1x1xf32>,
    } else {
    }
    return
  }
  func.func @transform_0(%arg0: i32) -> (i32, i32) {
    %c0_i32 = arith.constant 0 : i32
    %c0_i32_0 = arith.constant 0 : i32
    %c0_i32_1 = arith.constant 0 : i32
    return %c0_i32, %c0_i32_0 : i32, i32
  }
  func.func @transform_1(%arg0: i32) -> (i32, i32) {
    %c0_i32 = arith.constant 0 : i32
    %c0_i32_0 = arith.constant 0 : i32
    %c0_i32_1 = arith.constant 0 : i32
    return %c0_i32, %c0_i32_0 : i32, i32
  }
  func.func @transform_2(%arg0: i32) -> (i32, i32) {
    %c0_i32 = arith.constant 0 : i32
    %c0_i32_0 = arith.constant 0 : i32
    return %arg0, %c0_i32 : i32, i32
  }
  func.func @transform_3(%arg0: i32) -> (i32, i32) {
    %c0_i32 = arith.constant 0 : i32
    %c0_i32_0 = arith.constant 0 : i32
    %c0_i32_1 = arith.constant 0 : i32
    return %c0_i32, %c0_i32_0 : i32, i32
  }
  func.func @transform_4(%arg0: i32) -> (i32, i32) {
    %c0_i32 = arith.constant 0 : i32
    %c0_i32_0 = arith.constant 0 : i32
    %c0_i32_1 = arith.constant 0 : i32
    return %c0_i32, %c0_i32_0 : i32, i32
  }
}

</mosaic_0001>

<llo_original>
// kernel: knowledge_pretrainer_forward.35
$region0: #{knowledge_pretrainer_forward.35}
  #allocation0 [shape = 'u32[]', space=smem, size = 0x4, offset = 0x4, fixed_abs, tag = 'smem constant byte address 0x4 - core index']
  #allocation1 [shape = 'u32[144,128]{1,0:T(1,128)}', space=vmem, size = 0x12000, scoped, tag = 'internal scratch']
  %s0 = inlined_call_operand.vmem [shape: f32[16,32], index: 0, kind: input, shape index: {}]
  %s1 = inlined_call_operand.vmem [shape: f32[1,32], index: 1, kind: input, shape index: {}]
  %s2 = inlined_call_operand.vmem [shape: f32[32,96], index: 2, kind: input, shape index: {}]
  %s3 = inlined_call_operand.vmem [shape: f32[16,96], index: 3, kind: output, shape index: {}]
  %s4 = sld [smem:[#allocation0]]
  $region22: #{knowledge_pretrainer_forward.35} parent=0
    _
  %s6 = ssub.s32 1, %s4
  %s7 = scalar_select 0, %s6, %s4
  // Predicated region
  $region2: #{knowledge_pretrainer_forward.35} parent=0 // pred_check
    _
  $region3: #{knowledge_pretrainer_forward.35} parent=0 // pred_check_branch
    %9 = sbr.rel (0) target = $region5
  $region4: #{knowledge_pretrainer_forward.35} parent=0 // pred_region
    _
  $region5: #{knowledge_pretrainer_forward.35} parent=0 // pred_fallthru
    _
  // Predicated region
  $region6: #{knowledge_pretrainer_forward.35} parent=0 // pred_check
    _
  $region7: #{knowledge_pretrainer_forward.35} parent=0 // pred_check_branch
    %11 = sbr.rel (0) target = $region9
  $region8: #{knowledge_pretrainer_forward.35} parent=0 // pred_region
    _
  $region9: #{knowledge_pretrainer_forward.35} parent=0 // pred_fallthru
    _
  // Predicated region
  $region10: #{knowledge_pretrainer_forward.35} parent=0 // pred_check
    _
  $region11: #{knowledge_pretrainer_forward.35} parent=0 // pred_check_branch
    %13 = sbr.rel (0) target = $region13
  $region12: #{knowledge_pretrainer_forward.35} parent=0 // pred_region
    _
  $region13: #{knowledge_pretrainer_forward.35} parent=0 // pred_fallthru
    _
  %v14 = vld [vmem:[%s0] sm:$0xff]
  %v15 = vld [vmem:[%s0 + $0x8] sm:$0xff]
  %v16 = vmul.f32 %v14, %v14
  %v17 = vmul.f32 %v15, %v15
  %vm18 = vcmask 261120
  %v19 = vsel %vm18, %v16, 0.0
  %20 = vadd.xlane.f32.xlu0 %v19
  %v21 = vpop.xlane.xlu0 %20
  %v22 = vsel %vm18, %v17, 0.0
  %23 = vadd.xlane.f32.xlu0 %v22
  %v24 = vpop.xlane.xlu0 %23
  %v25 = vrcp.pop 32.0
  %v26 = vmul.f32 %v21, %v25
  %v27 = vmul.f32 %v24, %v25
  %v28 = vadd.f32 %v26, 1e-06
  %v29 = vadd.f32 %v27, 1e-06
  %v30 = vrsqrt.pop %v28
  %v31 = vrsqrt.pop %v29
  %v32 = vmul.f32 %v14, %v30
  %v33 = vmul.f32 %v15, %v31
  %v34 = vld [vmem:[%s1] sm:$0x1]
  %v36 = vlaneseq
  %v37 = vshrl.u32 %v36, 7
  %v38 = vsub.s32 0, %v37
  %v39 = vrot.slane %v34, %v38
  %v41 = vmul.f32 %v32, %v39
  %v42 = vmul.f32 %v33, %v39
  %v43 = vld [vmem:[%s2] sm:$0xff]
  %v44 = vld [vmem:[%s2 + $0x8] sm:$0xff]
  %v45 = vld [vmem:[%s2 + $0x10] sm:$0xff]
  %v46 = vld [vmem:[%s2 + $0x18] sm:$0xff]
  %v48 = vsel %vm18, %v41, 0
  %v51 = vsel %vm18, %v42, 0
  %53 = vmatprep.subr.mxu0 0.0
  %54 = vmatpush1.msra.mxu0 0.0
  %55 = vmatprep.subr.mxu0 0.0
  %56 = vmatpush1.msra.mxu0 0.0
  %57 = vmatprep.subr.mxu0 0.0
  %58 = vmatpush1.msra.mxu0 0.0
  %59 = vmatprep.subr.mxu0 0.0
  %60 = vmatpush1.msra.mxu0 0.0
  %61 = vmatprep.subr.mxu0 0.0
  %62 = vmatpush1.msra.mxu0 0.0
  %63 = vmatprep.subr.mxu0 0.0
  %64 = vmatpush1.msra.mxu0 0.0
  %65 = vmatprep.subr.mxu0 0.0
  %66 = vmatpush1.msra.mxu0 0.0
  %67 = vmatprep.subr.mxu0 0.0
  %68 = vmatpush1.msra.mxu0 0.0
  %69 = vmatprep.subr.mxu0 0.0
  %70 = vmatpush1.msra.mxu0 0.0
  %71 = vmatprep.subr.mxu0 0.0
  %72 = vmatpush1.msra.mxu0 0.0
  %73 = vmatprep.subr.mxu0 0.0
  %74 = vmatpush1.msra.mxu0 0.0
  %75 = vmatprep.subr.mxu0 0.0
  %76 = vmatpush1.msra.mxu0 0.0
  %77 = vmatprep.subr.mxu0 0.0
  %78 = vmatpush1.msra.mxu0 %v46
  %79 = vmatprep.subr.mxu0 0.0
  %80 = vmatpush1.msra.mxu0 %v45
  %81 = vmatprep.subr.mxu0 0.0
  %82 = vmatpush1.msra.mxu0 %v44
  %83 = vmatprep.subr.mxu0 0.0
  %84 = vmatpush1.msra.mxu0 %v43
  %85 = vmatprep.subr.mxu0 0.0
  %86 = vmatpush2.msra.mxu0 0.0
  %87 = vmatprep.subr.mxu0 0.0
  %88 = vmatpush2.msra.mxu0 0.0
  %89 = vmatprep.subr.mxu0 0.0
  %90 = vmatpush2.msra.mxu0 0.0
  %91 = vmatprep.subr.mxu0 0.0
  %92 = vmatpush2.msra.mxu0 0.0
  %93 = vmatprep.subr.mxu0 0.0
  %94 = vmatpush2.msra.mxu0 0.0
  %95 = vmatprep.subr.mxu0 0.0
  %96 = vmatpush2.msra.mxu0 0.0
  %97 = vmatprep.subr.mxu0 0.0
  %98 = vmatpush2.msra.mxu0 0.0
  %99 = vmatprep.subr.mxu0 0.0
  %100 = vmatpush2.msra.mxu0 0.0
  %101 = vmatprep.subr.mxu0 0.0
  %102 = vmatpush2.msra.mxu0 0.0
  %103 = vmatprep.subr.mxu0 0.0
  %104 = vmatpush2.msra.mxu0 0.0
  %105 = vmatprep.subr.mxu0 0.0
  %106 = vmatpush2.msra.mxu0 0.0
  %107 = vmatprep.subr.mxu0 0.0
  %108 = vmatpush2.msra.mxu0 0.0
  %109 = vmatprep.subr.mxu0 0.0
  %110 = vmatpush2.msra.mxu0 0.0
  %111 = vmatprep.subr.mxu0 0.0
  %112 = vmatpush2.msra.mxu0 0.0
  %113 = vmatprep.subr.mxu0 0.0
  %114 = vmatpush2.msra.mxu0 0.0
  %115 = vmatprep.subr.mxu0 0.0
  %116 = vmatpush2.msra.mxu0 0.0
  %117 = vmatprep.mubr.f32.mxu0 0.0
  %118 = vmatmul.mubr.f32.gmra.mxu0 %v48
  %v119 = vpop.f32.mrf.mxu0
  %v120 = vadd.f32 0.0, %v119
  %v121 = vpop.f32.mrf.mxu0
  %122 = vmatprep.mubr.f32.mxu0 0.0
  %123 = vmatmul.mubr.f32.gmra.mxu0 %v51
  %v124 = vpop.f32.mrf.mxu0
  %v125 = vadd.f32 0.0, %v124
  %v126 = vpop.f32.mrf.mxu0
  %127 = vdwg.mxu0
  %vm128 = vcmask 785408
  %129 = vst.msk [vmem:[%s3] sm:$0xff] %vm128, %v120
  %130 = vst.msk [vmem:[%s3 + $0x8] sm:$0xff] %vm128, %v125
  // Predicated region
  $region14: #{knowledge_pretrainer_forward.35} parent=0 // pred_check
    _
  $region15: #{knowledge_pretrainer_forward.35} parent=0 // pred_check_branch
    %132 = sbr.rel (0) target = $region17
  $region16: #{knowledge_pretrainer_forward.35} parent=0 // pred_region
    _
  $region17: #{knowledge_pretrainer_forward.35} parent=0 // pred_fallthru
    _
  // Predicated region
  $region18: #{knowledge_pretrainer_forward.35} parent=0 // pred_check
    _
  $region19: #{knowledge_pretrainer_forward.35} parent=0 // pred_check_branch
    %134 = sbr.rel (0) target = $region21
  $region20: #{knowledge_pretrainer_forward.35} parent=0 // pred_region
    _
  $region21: #{knowledge_pretrainer_forward.35} parent=0 // pred_fallthru
    _

// kernel: knowledge_pretrainer_forward.37
$region0: #{knowledge_pretrainer_forward.37}
  #allocation0 [shape = 'u32[]', space=smem, size = 0x4, offset = 0x4, fixed_abs, tag = 'smem constant byte address 0x4 - core index']
  #allocation1 [shape = 'u32[144,128]{1,0:T(1,128)}', space=vmem, size = 0x12000, scoped, tag = 'internal scratch']
  %s0 = inlined_call_operand.vmem [shape: f32[16,32], index: 0, kind: input, shape index: {}]
  %s1 = inlined_call_operand.vmem [shape: f32[32,32], index: 1, kind: input, shape index: {}]
  %s2 = inlined_call_operand.vmem [shape: f32[16,32], index: 2, kind: input, shape index: {}]
  %s3 = inlined_call_operand.vmem [shape: f32[16,32], index: 3, kind: output, shape index: {}]
  %s4 = sld [smem:[#allocation0]]
  $region22: #{knowledge_pretrainer_forward.37} parent=0
    _
  %s6 = ssub.s32 1, %s4
  %s7 = scalar_select 0, %s6, %s4
  // Predicated region
  $region2: #{knowledge_pretrainer_forward.37} parent=0 // pred_check
    _
  $region3: #{knowledge_pretrainer_forward.37} parent=0 // pred_check_branch
    %9 = sbr.rel (0) target = $region5
  $region4: #{knowledge_pretrainer_forward.37} parent=0 // pred_region
    _
  $region5: #{knowledge_pretrainer_forward.37} parent=0 // pred_fallthru
    _
  // Predicated region
  $region6: #{knowledge_pretrainer_forward.37} parent=0 // pred_check
    _
  $region7: #{knowledge_pretrainer_forward.37} parent=0 // pred_check_branch
    %11 = sbr.rel (0) target = $region9
  $region8: #{knowledge_pretrainer_forward.37} parent=0 // pred_region
    _
  $region9: #{knowledge_pretrainer_forward.37} parent=0 // pred_fallthru
    _
  // Predicated region
  $region10: #{knowledge_pretrainer_forward.37} parent=0 // pred_check
    _
  $region11: #{knowledge_pretrainer_forward.37} parent=0 // pred_check_branch
    %13 = sbr.rel (0) target = $region13
  $region12: #{knowledge_pretrainer_forward.37} parent=0 // pred_region
    _
  $region13: #{knowledge_pretrainer_forward.37} parent=0 // pred_fallthru
    _
  %v14 = vld [vmem:[%s2] sm:$0xff]
  %v15 = vld [vmem:[%s2 + $0x8] sm:$0xff]
  %v16 = vld [vmem:[%s0] sm:$0xff]
  %v17 = vld [vmem:[%s0 + $0x8] sm:$0xff]
  %v18 = vld [vmem:[%s1] sm:$0xff]
  %v19 = vld [vmem:[%s1 + $0x8] sm:$0xff]
  %v20 = vld [vmem:[%s1 + $0x10] sm:$0xff]
  %v21 = vld [vmem:[%s1 + $0x18] sm:$0xff]
  %vm22 = vcmask 261120
  %v24 = vsel %vm22, %v16, 0
  %v27 = vsel %vm22, %v17, 0
  %29 = vmatprep.subr.mxu0 0.0
  %30 = vmatpush1.msra.mxu0 0.0
  %31 = vmatprep.subr.mxu0 0.0
  %32 = vmatpush1.msra.mxu0 0.0
  %33 = vmatprep.subr.mxu0 0.0
  %34 = vmatpush1.msra.mxu0 0.0
  %35 = vmatprep.subr.mxu0 0.0
  %36 = vmatpush1.msra.mxu0 0.0
  %37 = vmatprep.subr.mxu0 0.0
  %38 = vmatpush1.msra.mxu0 0.0
  %39 = vmatprep.subr.mxu0 0.0
  %40 = vmatpush1.msra.mxu0 0.0
  %41 = vmatprep.subr.mxu0 0.0
  %42 = vmatpush1.msra.mxu0 0.0
  %43 = vmatprep.subr.mxu0 0.0
  %44 = vmatpush1.msra.mxu0 0.0
  %45 = vmatprep.subr.mxu0 0.0
  %46 = vmatpush1.msra.mxu0 0.0
  %47 = vmatprep.subr.mxu0 0.0
  %48 = vmatpush1.msra.mxu0 0.0
  %49 = vmatprep.subr.mxu0 0.0
  %50 = vmatpush1.msra.mxu0 0.0
  %51 = vmatprep.subr.mxu0 0.0
  %52 = vmatpush1.msra.mxu0 0.0
  %53 = vmatprep.subr.mxu0 0.0
  %54 = vmatpush1.msra.mxu0 %v21
  %55 = vmatprep.subr.mxu0 0.0
  %56 = vmatpush1.msra.mxu0 %v20
  %57 = vmatprep.subr.mxu0 0.0
  %58 = vmatpush1.msra.mxu0 %v19
  %59 = vmatprep.subr.mxu0 0.0
  %60 = vmatpush1.msra.mxu0 %v18
  %61 = vmatprep.subr.mxu0 0.0
  %62 = vmatpush2.msra.mxu0 0.0
  %63 = vmatprep.subr.mxu0 0.0
  %64 = vmatpush2.msra.mxu0 0.0
  %65 = vmatprep.subr.mxu0 0.0
  %66 = vmatpush2.msra.mxu0 0.0
  %67 = vmatprep.subr.mxu0 0.0
  %68 = vmatpush2.msra.mxu0 0.0
  %69 = vmatprep.subr.mxu0 0.0
  %70 = vmatpush2.msra.mxu0 0.0
  %71 = vmatprep.subr.mxu0 0.0
  %72 = vmatpush2.msra.mxu0 0.0
  %73 = vmatprep.subr.mxu0 0.0
  %74 = vmatpush2.msra.mxu0 0.0
  %75 = vmatprep.subr.mxu0 0.0
  %76 = vmatpush2.msra.mxu0 0.0
  %77 = vmatprep.subr.mxu0 0.0
  %78 = vmatpush2.msra.mxu0 0.0
  %79 = vmatprep.subr.mxu0 0.0
  %80 = vmatpush2.msra.mxu0 0.0
  %81 = vmatprep.subr.mxu0 0.0
  %82 = vmatpush2.msra.mxu0 0.0
  %83 = vmatprep.subr.mxu0 0.0
  %84 = vmatpush2.msra.mxu0 0.0
  %85 = vmatprep.subr.mxu0 0.0
  %86 = vmatpush2.msra.mxu0 0.0
  %87 = vmatprep.subr.mxu0 0.0
  %88 = vmatpush2.msra.mxu0 0.0
  %89 = vmatprep.subr.mxu0 0.0
  %90 = vmatpush2.msra.mxu0 0.0
  %91 = vmatprep.subr.mxu0 0.0
  %92 = vmatpush2.msra.mxu0 0.0
  %93 = vmatprep.mubr.f32.mxu0 0.0
  %94 = vmatmul.mubr.f32.gmra.mxu0 %v24
  %v95 = vpop.f32.mrf.mxu0
  %v96 = vadd.f32 0.0, %v95
  %v97 = vpop.f32.mrf.mxu0
  %98 = vmatprep.mubr.f32.mxu0 0.0
  %99 = vmatmul.mubr.f32.gmra.mxu0 %v27
  %v100 = vpop.f32.mrf.mxu0
  %v101 = vadd.f32 0.0, %v100
  %v102 = vpop.f32.mrf.mxu0
  %103 = vdwg.mxu0
  %v104 = vadd.f32 %v14, %v96
  %v105 = vadd.f32 %v15, %v101
  %106 = vst.msk [vmem:[%s3] sm:$0xff] %vm22, %v104
  %107 = vst.msk [vmem:[%s3 + $0x8] sm:$0xff] %vm22, %v105
  // Predicated region
  $region14: #{knowledge_pretrainer_forward.37} parent=0 // pred_check
    _
  $region15: #{knowledge_pretrainer_forward.37} parent=0 // pred_check_branch
    %109 = sbr.rel (0) target = $region17
  $region16: #{knowledge_pretrainer_forward.37} parent=0 // pred_region
    _
  $region17: #{knowledge_pretrainer_forward.37} parent=0 // pred_fallthru
    _
  // Predicated region
  $region18: #{knowledge_pretrainer_forward.37} parent=0 // pred_check
    _
  $region19: #{knowledge_pretrainer_forward.37} parent=0 // pred_check_branch
    %111 = sbr.rel (0) target = $region21
  $region20: #{knowledge_pretrainer_forward.37} parent=0 // pred_region
    _
  $region21: #{knowledge_pretrainer_forward.37} parent=0 // pred_fallthru
    _

// kernel: knowledge_pretrainer_forward.38
$region0: #{knowledge_pretrainer_forward.38}
  #allocation0 [shape = 'u32[]', space=smem, size = 0x4, offset = 0x4, fixed_abs, tag = 'smem constant byte address 0x4 - core index']
  #allocation1 [shape = 'u32[144,128]{1,0:T(1,128)}', space=vmem, size = 0x12000, scoped, tag = 'internal scratch']
  %s0 = inlined_call_operand.vmem [shape: f32[16,32], index: 0, kind: input, shape index: {}]
  %s1 = inlined_call_operand.vmem [shape: f32[1,32], index: 1, kind: input, shape index: {}]
  %s2 = inlined_call_operand.vmem [shape: f32[32,32], index: 2, kind: input, shape index: {}]
  %s3 = inlined_call_operand.vmem [shape: f32[16,32], index: 3, kind: output, shape index: {}]
  %s4 = sld [smem:[#allocation0]]
  $region22: #{knowledge_pretrainer_forward.38} parent=0
    _
  %s6 = ssub.s32 1, %s4
  %s7 = scalar_select 0, %s6, %s4
  // Predicated region
  $region2: #{knowledge_pretrainer_forward.38} parent=0 // pred_check
    _
  $region3: #{knowledge_pretrainer_forward.38} parent=0 // pred_check_branch
    %9 = sbr.rel (0) target = $region5
  $region4: #{knowledge_pretrainer_forward.38} parent=0 // pred_region
    _
  $region5: #{knowledge_pretrainer_forward.38} parent=0 // pred_fallthru
    _
  // Predicated region
  $region6: #{knowledge_pretrainer_forward.38} parent=0 // pred_check
    _
  $region7: #{knowledge_pretrainer_forward.38} parent=0 // pred_check_branch
    %11 = sbr.rel (0) target = $region9
  $region8: #{knowledge_pretrainer_forward.38} parent=0 // pred_region
    _
  $region9: #{knowledge_pretrainer_forward.38} parent=0 // pred_fallthru
    _
  // Predicated region
  $region10: #{knowledge_pretrainer_forward.38} parent=0 // pred_check
    _
  $region11: #{knowledge_pretrainer_forward.38} parent=0 // pred_check_branch
    %13 = sbr.rel (0) target = $region13
  $region12: #{knowledge_pretrainer_forward.38} parent=0 // pred_region
    _
  $region13: #{knowledge_pretrainer_forward.38} parent=0 // pred_fallthru
    _
  %v14 = vld [vmem:[%s0] sm:$0xff]
  %v15 = vld [vmem:[%s0 + $0x8] sm:$0xff]
  %v16 = vmul.f32 %v14, %v14
  %v17 = vmul.f32 %v15, %v15
  %vm18 = vcmask 261120
  %v19 = vsel %vm18, %v16, 0.0
  %20 = vadd.xlane.f32.xlu0 %v19
  %v21 = vpop.xlane.xlu0 %20
  %v22 = vsel %vm18, %v17, 0.0
  %23 = vadd.xlane.f32.xlu0 %v22
  %v24 = vpop.xlane.xlu0 %23
  %v25 = vrcp.pop 32.0
  %v26 = vmul.f32 %v21, %v25
  %v27 = vmul.f32 %v24, %v25
  %v28 = vadd.f32 %v26, 1e-06
  %v29 = vadd.f32 %v27, 1e-06
  %v30 = vrsqrt.pop %v28
  %v31 = vrsqrt.pop %v29
  %v32 = vmul.f32 %v14, %v30
  %v33 = vmul.f32 %v15, %v31
  %v34 = vld [vmem:[%s1] sm:$0x1]
  %v36 = vlaneseq
  %v37 = vshrl.u32 %v36, 7
  %v38 = vsub.s32 0, %v37
  %v39 = vrot.slane %v34, %v38
  %v41 = vmul.f32 %v32, %v39
  %v42 = vmul.f32 %v33, %v39
  %v43 = vld [vmem:[%s2] sm:$0xff]
  %v44 = vld [vmem:[%s2 + $0x8] sm:$0xff]
  %v45 = vld [vmem:[%s2 + $0x10] sm:$0xff]
  %v46 = vld [vmem:[%s2 + $0x18] sm:$0xff]
  %v48 = vsel %vm18, %v41, 0
  %v51 = vsel %vm18, %v42, 0
  %53 = vmatprep.subr.mxu0 0.0
  %54 = vmatpush1.msra.mxu0 0.0
  %55 = vmatprep.subr.mxu0 0.0
  %56 = vmatpush1.msra.mxu0 0.0
  %57 = vmatprep.subr.mxu0 0.0
  %58 = vmatpush1.msra.mxu0 0.0
  %59 = vmatprep.subr.mxu0 0.0
  %60 = vmatpush1.msra.mxu0 0.0
  %61 = vmatprep.subr.mxu0 0.0
  %62 = vmatpush1.msra.mxu0 0.0
  %63 = vmatprep.subr.mxu0 0.0
  %64 = vmatpush1.msra.mxu0 0.0
  %65 = vmatprep.subr.mxu0 0.0
  %66 = vmatpush1.msra.mxu0 0.0
  %67 = vmatprep.subr.mxu0 0.0
  %68 = vmatpush1.msra.mxu0 0.0
  %69 = vmatprep.subr.mxu0 0.0
  %70 = vmatpush1.msra.mxu0 0.0
  %71 = vmatprep.subr.mxu0 0.0
  %72 = vmatpush1.msra.mxu0 0.0
  %73 = vmatprep.subr.mxu0 0.0
  %74 = vmatpush1.msra.mxu0 0.0
  %75 = vmatprep.subr.mxu0 0.0
  %76 = vmatpush1.msra.mxu0 0.0
  %77 = vmatprep.subr.mxu0 0.0
  %78 = vmatpush1.msra.mxu0 %v46
  %79 = vmatprep.subr.mxu0 0.0
  %80 = vmatpush1.msra.mxu0 %v45
  %81 = vmatprep.subr.mxu0 0.0
  %82 = vmatpush1.msra.mxu0 %v44
  %83 = vmatprep.subr.mxu0 0.0
  %84 = vmatpush1.msra.mxu0 %v43
  %85 = vmatprep.subr.mxu0 0.0
  %86 = vmatpush2.msra.mxu0 0.0
  %87 = vmatprep.subr.mxu0 0.0
  %88 = vmatpush2.msra.mxu0 0.0
  %89 = vmatprep.subr.mxu0 0.0
  %90 = vmatpush2.msra.mxu0 0.0
  %91 = vmatprep.subr.mxu0 0.0
  %92 = vmatpush2.msra.mxu0 0.0
  %93 = vmatprep.subr.mxu0 0.0
  %94 = vmatpush2.msra.mxu0 0.0
  %95 = vmatprep.subr.mxu0 0.0
  %96 = vmatpush2.msra.mxu0 0.0
  %97 = vmatprep.subr.mxu0 0.0
  %98 = vmatpush2.msra.mxu0 0.0
  %99 = vmatprep.subr.mxu0 0.0
  %100 = vmatpush2.msra.mxu0 0.0
  %101 = vmatprep.subr.mxu0 0.0
  %102 = vmatpush2.msra.mxu0 0.0
  %103 = vmatprep.subr.mxu0 0.0
  %104 = vmatpush2.msra.mxu0 0.0
  %105 = vmatprep.subr.mxu0 0.0
  %106 = vmatpush2.msra.mxu0 0.0
  %107 = vmatprep.subr.mxu0 0.0
  %108 = vmatpush2.msra.mxu0 0.0
  %109 = vmatprep.subr.mxu0 0.0
  %110 = vmatpush2.msra.mxu0 0.0
  %111 = vmatprep.subr.mxu0 0.0
  %112 = vmatpush2.msra.mxu0 0.0
  %113 = vmatprep.subr.mxu0 0.0
  %114 = vmatpush2.msra.mxu0 0.0
  %115 = vmatprep.subr.mxu0 0.0
  %116 = vmatpush2.msra.mxu0 0.0
  %117 = vmatprep.mubr.f32.mxu0 0.0
  %118 = vmatmul.mubr.f32.gmra.mxu0 %v48
  %v119 = vpop.f32.mrf.mxu0
  %v120 = vadd.f32 0.0, %v119
  %v121 = vpop.f32.mrf.mxu0
  %122 = vmatprep.mubr.f32.mxu0 0.0
  %123 = vmatmul.mubr.f32.gmra.mxu0 %v51
  %v124 = vpop.f32.mrf.mxu0
  %v125 = vadd.f32 0.0, %v124
  %v126 = vpop.f32.mrf.mxu0
  %127 = vdwg.mxu0
  %128 = vst.msk [vmem:[%s3] sm:$0xff] %vm18, %v120
  %129 = vst.msk [vmem:[%s3 + $0x8] sm:$0xff] %vm18, %v125
  // Predicated region
  $region14: #{knowledge_pretrainer_forward.38} parent=0 // pred_check
    _
  $region15: #{knowledge_pretrainer_forward.38} parent=0 // pred_check_branch
    %131 = sbr.rel (0) target = $region17
  $region16: #{knowledge_pretrainer_forward.38} parent=0 // pred_region
    _
  $region17: #{knowledge_pretrainer_forward.38} parent=0 // pred_fallthru
    _
  // Predicated region
  $region18: #{knowledge_pretrainer_forward.38} parent=0 // pred_check
    _
  $region19: #{knowledge_pretrainer_forward.38} parent=0 // pred_check_branch
    %133 = sbr.rel (0) target = $region21
  $region20: #{knowledge_pretrainer_forward.38} parent=0 // pred_region
    _
  $region21: #{knowledge_pretrainer_forward.38} parent=0 // pred_fallthru
    _

// kernel: knowledge_pretrainer_forward.36
$region0: #{knowledge_pretrainer_forward.36}
  #allocation0 [shape = 'u32[]', space=smem, size = 0x4, offset = 0x4, fixed_abs, tag = 'smem constant byte address 0x4 - core index']
  #allocation1 [shape = 'u32[144,128]{1,0:T(1,128)}', space=vmem, size = 0x12000, scoped, tag = 'internal scratch']
  %s0 = inlined_call_operand.vmem [shape: f32[8,8,8], index: 0, kind: input, shape index: {}]
  %s1 = inlined_call_operand.vmem [shape: f32[8,8,8], index: 1, kind: input, shape index: {}]
  %s2 = inlined_call_operand.vmem [shape: f32[8,8,8], index: 2, kind: input, shape index: {}]
  %s3 = inlined_call_operand.vmem [shape: f32[4,8,8], index: 3, kind: input, shape index: {}]
  %s4 = inlined_call_operand.vmem [shape: f32[1,8,8], index: 4, kind: input, shape index: {}]
  %s5 = inlined_call_operand.vmem [shape: f32[8,8,8], index: 5, kind: output, shape index: {}]
  %s6 = sld [smem:[#allocation0]]
  $region30: #{knowledge_pretrainer_forward.36} parent=0
    _
  %s8 = ssub.s32 1, %s6
  %s9 = scalar_select 0, %s8, %s6
  // Predicated region
  $region2: #{knowledge_pretrainer_forward.36} parent=0 // pred_check
    _
  $region3: #{knowledge_pretrainer_forward.36} parent=0 // pred_check_branch
    %11 = sbr.rel (0) target = $region5
  $region4: #{knowledge_pretrainer_forward.36} parent=0 // pred_region
    _
  $region5: #{knowledge_pretrainer_forward.36} parent=0 // pred_fallthru
    _
  // Predicated region
  $region6: #{knowledge_pretrainer_forward.36} parent=0 // pred_check
    _
  $region7: #{knowledge_pretrainer_forward.36} parent=0 // pred_check_branch
    %13 = sbr.rel (0) target = $region9
  $region8: #{knowledge_pretrainer_forward.36} parent=0 // pred_region
    _
  $region9: #{knowledge_pretrainer_forward.36} parent=0 // pred_fallthru
    _
  // Predicated region
  $region10: #{knowledge_pretrainer_forward.36} parent=0 // pred_check
    _
  $region11: #{knowledge_pretrainer_forward.36} parent=0 // pred_check_branch
    %15 = sbr.rel (0) target = $region13
  $region12: #{knowledge_pretrainer_forward.36} parent=0 // pred_region
    _
  $region13: #{knowledge_pretrainer_forward.36} parent=0 // pred_fallthru
    _
  // Predicated region
  $region14: #{knowledge_pretrainer_forward.36} parent=0 // pred_check
    _
  $region15: #{knowledge_pretrainer_forward.36} parent=0 // pred_check_branch
    %17 = sbr.rel (0) target = $region17
  $region16: #{knowledge_pretrainer_forward.36} parent=0 // pred_region
    _
  $region17: #{knowledge_pretrainer_forward.36} parent=0 // pred_fallthru
    _
  // Predicated region
  $region18: #{knowledge_pretrainer_forward.36} parent=0 // pred_check
    _
  $region19: #{knowledge_pretrainer_forward.36} parent=0 // pred_check_branch
    %19 = sbr.rel (0) target = $region21
  $region20: #{knowledge_pretrainer_forward.36} parent=0 // pred_region
    _
  $region21: #{knowledge_pretrainer_forward.36} parent=0 // pred_fallthru
    _
  %v20 = vld [vmem:[%s0] sm:$0xff]
  %v21 = vld [vmem:[%s0 + $0x8] sm:$0xff]
  %v22 = vld [vmem:[%s0 + $0x10] sm:$0xff]
  %v23 = vld [vmem:[%s0 + $0x18] sm:$0xff]
  %v24 = vld [vmem:[%s0 + $0x20] sm:$0xff]
  %v25 = vld [vmem:[%s0 + $0x28] sm:$0xff]
  %v26 = vld [vmem:[%s0 + $0x30] sm:$0xff]
  %v27 = vld [vmem:[%s0 + $0x38] sm:$0xff]
  %v28 = vld [vmem:[%s1] sm:$0xff]
  %v29 = vld [vmem:[%s1 + $0x8] sm:$0xff]
  %v30 = vld [vmem:[%s1 + $0x10] sm:$0xff]
  %v31 = vld [vmem:[%s1 + $0x18] sm:$0xff]
  %v32 = vld [vmem:[%s1 + $0x20] sm:$0xff]
  %v33 = vld [vmem:[%s1 + $0x28] sm:$0xff]
  %v34 = vld [vmem:[%s1 + $0x30] sm:$0xff]
  %v35 = vld [vmem:[%s1 + $0x38] sm:$0xff]
  %v36 = vld [vmem:[%s2] sm:$0xff]
  %v37 = vld [vmem:[%s2 + $0x8] sm:$0xff]
  %v38 = vld [vmem:[%s2 + $0x10] sm:$0xff]
  %v39 = vld [vmem:[%s2 + $0x18] sm:$0xff]
  %v40 = vld [vmem:[%s2 + $0x20] sm:$0xff]
  %v41 = vld [vmem:[%s2 + $0x28] sm:$0xff]
  %v42 = vld [vmem:[%s2 + $0x30] sm:$0xff]
  %v43 = vld [vmem:[%s2 + $0x38] sm:$0xff]
  %vm44 = vcmask 64512
  %v46 = vsel %vm44, %v20, 0
  %v49 = vsel %vm44, %v28, 0
  %51 = vmatprep.subr.mxu0 0.0
  %52 = vmatpush1.xpose.msra.mxu0 0.0
  %53 = vmatprep.subr.mxu0 0.0
  %54 = vmatpush1.xpose.msra.mxu0 0.0
  %55 = vmatprep.subr.mxu0 0.0
  %56 = vmatpush1.xpose.msra.mxu0 0.0
  %57 = vmatprep.subr.mxu0 0.0
  %58 = vmatpush1.xpose.msra.mxu0 0.0
  %59 = vmatprep.subr.mxu0 0.0
  %60 = vmatpush1.xpose.msra.mxu0 0.0
  %61 = vmatprep.subr.mxu0 0.0
  %62 = vmatpush1.xpose.msra.mxu0 0.0
  %63 = vmatprep.subr.mxu0 0.0
  %64 = vmatpush1.xpose.msra.mxu0 0.0
  %65 = vmatprep.subr.mxu0 0.0
  %66 = vmatpush1.xpose.msra.mxu0 0.0
  %67 = vmatprep.subr.mxu0 0.0
  %68 = vmatpush1.xpose.msra.mxu0 0.0
  %69 = vmatprep.subr.mxu0 0.0
  %70 = vmatpush1.xpose.msra.mxu0 0.0
  %71 = vmatprep.subr.mxu0 0.0
  %72 = vmatpush1.xpose.msra.mxu0 0.0
  %73 = vmatprep.subr.mxu0 0.0
  %74 = vmatpush1.xpose.msra.mxu0 0.0
  %75 = vmatprep.subr.mxu0 0.0
  %76 = vmatpush1.xpose.msra.mxu0 0.0
  %77 = vmatprep.subr.mxu0 0.0
  %78 = vmatpush1.xpose.msra.mxu0 0.0
  %79 = vmatprep.subr.mxu0 0.0
  %80 = vmatpush1.xpose.msra.mxu0 0.0
  %81 = vmatprep.subr.mxu0 0.0
  %82 = vmatpush1.xpose.msra.mxu0 %v49
  %83 = vmatprep.subr.mxu0 0.0
  %84 = vmatpush2.xpose.msra.mxu0 0.0
  %85 = vmatprep.subr.mxu0 0.0
  %86 = vmatpush2.xpose.msra.mxu0 0.0
  %87 = vmatprep.subr.mxu0 0.0
  %88 = vmatpush2.xpose.msra.mxu0 0.0
  %89 = vmatprep.subr.mxu0 0.0
  %90 = vmatpush2.xpose.msra.mxu0 0.0
  %91 = vmatprep.subr.mxu0 0.0
  %92 = vmatpush2.xpose.msra.mxu0 0.0
  %93 = vmatprep.subr.mxu0 0.0
  %94 = vmatpush2.xpose.msra.mxu0 0.0
  %95 = vmatprep.subr.mxu0 0.0
  %96 = vmatpush2.xpose.msra.mxu0 0.0
  %97 = vmatprep.subr.mxu0 0.0
  %98 = vmatpush2.xpose.msra.mxu0 0.0
  %99 = vmatprep.subr.mxu0 0.0
  %100 = vmatpush2.xpose.msra.mxu0 0.0
  %101 = vmatprep.subr.mxu0 0.0
  %102 = vmatpush2.xpose.msra.mxu0 0.0
  %103 = vmatprep.subr.mxu0 0.0
  %104 = vmatpush2.xpose.msra.mxu0 0.0
  %105 = vmatprep.subr.mxu0 0.0
  %106 = vmatpush2.xpose.msra.mxu0 0.0
  %107 = vmatprep.subr.mxu0 0.0
  %108 = vmatpush2.xpose.msra.mxu0 0.0
  %109 = vmatprep.subr.mxu0 0.0
  %110 = vmatpush2.xpose.msra.mxu0 0.0
  %111 = vmatprep.subr.mxu0 0.0
  %112 = vmatpush2.xpose.msra.mxu0 0.0
  %113 = vmatprep.subr.mxu0 0.0
  %114 = vmatpush2.xpose.msra.mxu0 0.0
  %115 = vmatprep.mubr.f32.mxu0 0.0
  %116 = vmatmul.mubr.f32.gmra.mxu0 %v46
  %v117 = vpop.f32.mrf.mxu0
  %v118 = vadd.f32 0.0, %v117
  %v119 = vpop.f32.mrf.mxu0
  %120 = vdwg.mxu0
  %v122 = vsel %vm44, %v21, 0
  %v125 = vsel %vm44, %v29, 0
  %127 = vmatprep.subr.mxu0 0.0
  %128 = vmatpush1.xpose.msra.mxu0 0.0
  %129 = vmatprep.subr.mxu0 0.0
  %130 = vmatpush1.xpose.msra.mxu0 0.0
  %131 = vmatprep.subr.mxu0 0.0
  %132 = vmatpush1.xpose.msra.mxu0 0.0
  %133 = vmatprep.subr.mxu0 0.0
  %134 = vmatpush1.xpose.msra.mxu0 0.0
  %135 = vmatprep.subr.mxu0 0.0
  %136 = vmatpush1.xpose.msra.mxu0 0.0
  %137 = vmatprep.subr.mxu0 0.0
  %138 = vmatpush1.xpose.msra.mxu0 0.0
  %139 = vmatprep.subr.mxu0 0.0
  %140 = vmatpush1.xpose.msra.mxu0 0.0
  %141 = vmatprep.subr.mxu0 0.0
  %142 = vmatpush1.xpose.msra.mxu0 0.0
  %143 = vmatprep.subr.mxu0 0.0
  %144 = vmatpush1.xpose.msra.mxu0 0.0
  %145 = vmatprep.subr.mxu0 0.0
  %146 = vmatpush1.xpose.msra.mxu0 0.0
  %147 = vmatprep.subr.mxu0 0.0
  %148 = vmatpush1.xpose.msra.mxu0 0.0
  %149 = vmatprep.subr.mxu0 0.0
  %150 = vmatpush1.xpose.msra.mxu0 0.0
  %151 = vmatprep.subr.mxu0 0.0
  %152 = vmatpush1.xpose.msra.mxu0 0.0
  %153 = vmatprep.subr.mxu0 0.0
  %154 = vmatpush1.xpose.msra.mxu0 0.0
  %155 = vmatprep.subr.mxu0 0.0
  %156 = vmatpush1.xpose.msra.mxu0 0.0
  %157 = vmatprep.subr.mxu0 0.0
  %158 = vmatpush1.xpose.msra.mxu0 %v125
  %159 = vmatprep.subr.mxu0 0.0
  %160 = vmatpush2.xpose.msra.mxu0 0.0
  %161 = vmatprep.subr.mxu0 0.0
  %162 = vmatpush2.xpose.msra.mxu0 0.0
  %163 = vmatprep.subr.mxu0 0.0
  %164 = vmatpush2.xpose.msra.mxu0 0.0
  %165 = vmatprep.subr.mxu0 0.0
  %166 = vmatpush2.xpose.msra.mxu0 0.0
  %167 = vmatprep.subr.mxu0 0.0
  %168 = vmatpush2.xpose.msra.mxu0 0.0
  %169 = vmatprep.subr.mxu0 0.0
  %170 = vmatpush2.xpose.msra.mxu0 0.0
  %171 = vmatprep.subr.mxu0 0.0
  %172 = vmatpush2.xpose.msra.mxu0 0.0
  %173 = vmatprep.subr.mxu0 0.0
  %174 = vmatpush2.xpose.msra.mxu0 0.0
  %175 = vmatprep.subr.mxu0 0.0
  %176 = vmatpush2.xpose.msra.mxu0 0.0
  %177 = vmatprep.subr.mxu0 0.0
  %178 = vmatpush2.xpose.msra.mxu0 0.0
  %179 = vmatprep.subr.mxu0 0.0
  %180 = vmatpush2.xpose.msra.mxu0 0.0
  %181 = vmatprep.subr.mxu0 0.0
  %182 = vmatpush2.xpose.msra.mxu0 0.0
  %183 = vmatprep.subr.mxu0 0.0
  %184 = vmatpush2.xpose.msra.mxu0 0.0
  %185 = vmatprep.subr.mxu0 0.0
  %186 = vmatpush2.xpose.msra.mxu0 0.0
  %187 = vmatprep.subr.mxu0 0.0
  %188 = vmatpush2.xpose.msra.mxu0 0.0
  %189 = vmatprep.subr.mxu0 0.0
  %190 = vmatpush2.xpose.msra.mxu0 0.0
  %191 = vmatprep.mubr.f32.mxu0 0.0
  %192 = vmatmul.mubr.f32.gmra.mxu0 %v122
  %v193 = vpop.f32.mrf.mxu0
  %v194 = vadd.f32 0.0, %v193
  %v195 = vpop.f32.mrf.mxu0
  %196 = vdwg.mxu0
  %v198 = vsel %vm44, %v22, 0
  %v201 = vsel %vm44, %v30, 0
  %203 = vmatprep.subr.mxu0 0.0
  %204 = vmatpush1.xpose.msra.mxu0 0.0
  %205 = vmatprep.subr.mxu0 0.0
  %206 = vmatpush1.xpose.msra.mxu0 0.0
  %207 = vmatprep.subr.mxu0 0.0
  %208 = vmatpush1.xpose.msra.mxu0 0.0
  %209 = vmatprep.subr.mxu0 0.0
  %210 = vmatpush1.xpose.msra.mxu0 0.0
  %211 = vmatprep.subr.mxu0 0.0
  %212 = vmatpush1.xpose.msra.mxu0 0.0
  %213 = vmatprep.subr.mxu0 0.0
  %214 = vmatpush1.xpose.msra.mxu0 0.0
  %215 = vmatprep.subr.mxu0 0.0
  %216 = vmatpush1.xpose.msra.mxu0 0.0
  %217 = vmatprep.subr.mxu0 0.0
  %218 = vmatpush1.xpose.msra.mxu0 0.0
  %219 = vmatprep.subr.mxu0 0.0
  %220 = vmatpush1.xpose.msra.mxu0 0.0
  %221 = vmatprep.subr.mxu0 0.0
  %222 = vmatpush1.xpose.msra.mxu0 0.0
  %223 = vmatprep.subr.mxu0 0.0
  %224 = vmatpush1.xpose.msra.mxu0 0.0
  %225 = vmatprep.subr.mxu0 0.0
  %226 = vmatpush1.xpose.msra.mxu0 0.0
  %227 = vmatprep.subr.mxu0 0.0
  %228 = vmatpush1.xpose.msra.mxu0 0.0
  %229 = vmatprep.subr.mxu0 0.0
  %230 = vmatpush1.xpose.msra.mxu0 0.0
  %231 = vmatprep.subr.mxu0 0.0
  %232 = vmatpush1.xpose.msra.mxu0 0.0
  %233 = vmatprep.subr.mxu0 0.0
  %234 = vmatpush1.xpose.msra.mxu0 %v201
  %235 = vmatprep.subr.mxu0 0.0
  %236 = vmatpush2.xpose.msra.mxu0 0.0
  %237 = vmatprep.subr.mxu0 0.0
  %238 = vmatpush2.xpose.msra.mxu0 0.0
  %239 = vmatprep.subr.mxu0 0.0
  %240 = vmatpush2.xpose.msra.mxu0 0.0
  %241 = vmatprep.subr.mxu0 0.0
  %242 = vmatpush2.xpose.msra.mxu0 0.0
  %243 = vmatprep.subr.mxu0 0.0
  %244 = vmatpush2.xpose.msra.mxu0 0.0
  %245 = vmatprep.subr.mxu0 0.0
  %246 = vmatpush2.xpose.msra.mxu0 0.0
  %247 = vmatprep.subr.mxu0 0.0
  %248 = vmatpush2.xpose.msra.mxu0 0.0
  %249 = vmatprep.subr.mxu0 0.0
  %250 = vmatpush2.xpose.msra.mxu0 0.0
  %251 = vmatprep.subr.mxu0 0.0
  %252 = vmatpush2.xpose.msra.mxu0 0.0
  %253 = vmatprep.subr.mxu0 0.0
  %254 = vmatpush2.xpose.msra.mxu0 0.0
  %255 = vmatprep.subr.mxu0 0.0
  %256 = vmatpush2.xpose.msra.mxu0 0.0
  %257 = vmatprep.subr.mxu0 0.0
  %258 = vmatpush2.xpose.msra.mxu0 0.0
  %259 = vmatprep.subr.mxu0 0.0
  %260 = vmatpush2.xpose.msra.mxu0 0.0
  %261 = vmatprep.subr.mxu0 0.0
  %262 = vmatpush2.xpose.msra.mxu0 0.0
  %263 = vmatprep.subr.mxu0 0.0
  %264 = vmatpush2.xpose.msra.mxu0 0.0
  %265 = vmatprep.subr.mxu0 0.0
  %266 = vmatpush2.xpose.msra.mxu0 0.0
  %267 = vmatprep.mubr.f32.mxu0 0.0
  %268 = vmatmul.mubr.f32.gmra.mxu0 %v198
  %v269 = vpop.f32.mrf.mxu0
  %v270 = vadd.f32 0.0, %v269
  %v271 = vpop.f32.mrf.mxu0
  %272 = vdwg.mxu0
  %v274 = vsel %vm44, %v23, 0
  %v277 = vsel %vm44, %v31, 0
  %279 = vmatprep.subr.mxu0 0.0
  %280 = vmatpush1.xpose.msra.mxu0 0.0
  %281 = vmatprep.subr.mxu0 0.0
  %282 = vmatpush1.xpose.msra.mxu0 0.0
  %283 = vmatprep.subr.mxu0 0.0
  %284 = vmatpush1.xpose.msra.mxu0 0.0
  %285 = vmatprep.subr.mxu0 0.0
  %286 = vmatpush1.xpose.msra.mxu0 0.0
  %287 = vmatprep.subr.mxu0 0.0
  %288 = vmatpush1.xpose.msra.mxu0 0.0
  %289 = vmatprep.subr.mxu0 0.0
  %290 = vmatpush1.xpose.msra.mxu0 0.0
  %291 = vmatprep.subr.mxu0 0.0
  %292 = vmatpush1.xpose.msra.mxu0 0.0
  %293 = vmatprep.subr.mxu0 0.0
  %294 = vmatpush1.xpose.msra.mxu0 0.0
  %295 = vmatprep.subr.mxu0 0.0
  %296 = vmatpush1.xpose.msra.mxu0 0.0
  %297 = vmatprep.subr.mxu0 0.0
  %298 = vmatpush1.xpose.msra.mxu0 0.0
  %299 = vmatprep.subr.mxu0 0.0
  %300 = vmatpush1.xpose.msra.mxu0 0.0
  %301 = vmatprep.subr.mxu0 0.0
  %302 = vmatpush1.xpose.msra.mxu0 0.0
  %303 = vmatprep.subr.mxu0 0.0
  %304 = vmatpush1.xpose.msra.mxu0 0.0
  %305 = vmatprep.subr.mxu0 0.0
  %306 = vmatpush1.xpose.msra.mxu0 0.0
  %307 = vmatprep.subr.mxu0 0.0
  %308 = vmatpush1.xpose.msra.mxu0 0.0
  %309 = vmatprep.subr.mxu0 0.0
  %310 = vmatpush1.xpose.msra.mxu0 %v277
  %311 = vmatprep.subr.mxu0 0.0
  %312 = vmatpush2.xpose.msra.mxu0 0.0
  %313 = vmatprep.subr.mxu0 0.0
  %314 = vmatpush2.xpose.msra.mxu0 0.0
  %315 = vmatprep.subr.mxu0 0.0
  %316 = vmatpush2.xpose.msra.mxu0 0.0
  %317 = vmatprep.subr.mxu0 0.0
  %318 = vmatpush2.xpose.msra.mxu0 0.0
  %319 = vmatprep.subr.mxu0 0.0
  %320 = vmatpush2.xpose.msra.mxu0 0.0
  %321 = vmatprep.subr.mxu0 0.0
  %322 = vmatpush2.xpose.msra.mxu0 0.0
  %323 = vmatprep.subr.mxu0 0.0
  %324 = vmatpush2.xpose.msra.mxu0 0.0
  %325 = vmatprep.subr.mxu0 0.0
  %326 = vmatpush2.xpose.msra.mxu0 0.0
  %327 = vmatprep.subr.mxu0 0.0
  %328 = vmatpush2.xpose.msra.mxu0 0.0
  %329 = vmatprep.subr.mxu0 0.0
  %330 = vmatpush2.xpose.msra.mxu0 0.0
  %331 = vmatprep.subr.mxu0 0.0
  %332 = vmatpush2.xpose.msra.mxu0 0.0
  %333 = vmatprep.subr.mxu0 0.0
  %334 = vmatpush2.xpose.msra.mxu0 0.0
  %335 = vmatprep.subr.mxu0 0.0
  %336 = vmatpush2.xpose.msra.mxu0 0.0
  %337 = vmatprep.subr.mxu0 0.0
  %338 = vmatpush2.xpose.msra.mxu0 0.0
  %339 = vmatprep.subr.mxu0 0.0
  %340 = vmatpush2.xpose.msra.mxu0 0.0
  %341 = vmatprep.subr.mxu0 0.0
  %342 = vmatpush2.xpose.msra.mxu0 0.0
  %343 = vmatprep.mubr.f32.mxu0 0.0
  %344 = vmatmul.mubr.f32.gmra.mxu0 %v274
  %v345 = vpop.f32.mrf.mxu0
  %v346 = vadd.f32 0.0, %v345
  %v347 = vpop.f32.mrf.mxu0
  %348 = vdwg.mxu0
  %v350 = vsel %vm44, %v24, 0
  %v353 = vsel %vm44, %v32, 0
  %355 = vmatprep.subr.mxu0 0.0
  %356 = vmatpush1.xpose.msra.mxu0 0.0
  %357 = vmatprep.subr.mxu0 0.0
  %358 = vmatpush1.xpose.msra.mxu0 0.0
  %359 = vmatprep.subr.mxu0 0.0
  %360 = vmatpush1.xpose.msra.mxu0 0.0
  %361 = vmatprep.subr.mxu0 0.0
  %362 = vmatpush1.xpose.msra.mxu0 0.0
  %363 = vmatprep.subr.mxu0 0.0
  %364 = vmatpush1.xpose.msra.mxu0 0.0
  %365 = vmatprep.subr.mxu0 0.0
  %366 = vmatpush1.xpose.msra.mxu0 0.0
  %367 = vmatprep.subr.mxu0 0.0
  %368 = vmatpush1.xpose.msra.mxu0 0.0
  %369 = vmatprep.subr.mxu0 0.0
  %370 = vmatpush1.xpose.msra.mxu0 0.0
  %371 = vmatprep.subr.mxu0 0.0
  %372 = vmatpush1.xpose.msra.mxu0 0.0
  %373 = vmatprep.subr.mxu0 0.0
  %374 = vmatpush1.xpose.msra.mxu0 0.0
  %375 = vmatprep.subr.mxu0 0.0
  %376 = vmatpush1.xpose.msra.mxu0 0.0
  %377 = vmatprep.subr.mxu0 0.0
  %378 = vmatpush1.xpose.msra.mxu0 0.0
  %379 = vmatprep.subr.mxu0 0.0
  %380 = vmatpush1.xpose.msra.mxu0 0.0
  %381 = vmatprep.subr.mxu0 0.0
  %382 = vmatpush1.xpose.msra.mxu0 0.0
  %383 = vmatprep.subr.mxu0 0.0
  %384 = vmatpush1.xpose.msra.mxu0 0.0
  %385 = vmatprep.subr.mxu0 0.0
  %386 = vmatpush1.xpose.msra.mxu0 %v353
  %387 = vmatprep.subr.mxu0 0.0
  %388 = vmatpush2.xpose.msra.mxu0 0.0
  %389 = vmatprep.subr.mxu0 0.0
  %390 = vmatpush2.xpose.msra.mxu0 0.0
  %391 = vmatprep.subr.mxu0 0.0
  %392 = vmatpush2.xpose.msra.mxu0 0.0
  %393 = vmatprep.subr.mxu0 0.0
  %394 = vmatpush2.xpose.msra.mxu0 0.0
  %395 = vmatprep.subr.mxu0 0.0
  %396 = vmatpush2.xpose.msra.mxu0 0.0
  %397 = vmatprep.subr.mxu0 0.0
  %398 = vmatpush2.xpose.msra.mxu0 0.0
  %399 = vmatprep.subr.mxu0 0.0
  %400 = vmatpush2.xpose.msra.mxu0 0.0
  %401 = vmatprep.subr.mxu0 0.0
  %402 = vmatpush2.xpose.msra.mxu0 0.0
  %403 = vmatprep.subr.mxu0 0.0
  %404 = vmatpush2.xpose.msra.mxu0 0.0
  %405 = vmatprep.subr.mxu0 0.0
  %406 = vmatpush2.xpose.msra.mxu0 0.0
  %407 = vmatprep.subr.mxu0 0.0
  %408 = vmatpush2.xpose.msra.mxu0 0.0
  %409 = vmatprep.subr.mxu0 0.0
  %410 = vmatpush2.xpose.msra.mxu0 0.0
  %411 = vmatprep.subr.mxu0 0.0
  %412 = vmatpush2.xpose.msra.mxu0 0.0
  %413 = vmatprep.subr.mxu0 0.0
  %414 = vmatpush2.xpose.msra.mxu0 0.0
  %415 = vmatprep.subr.mxu0 0.0
  %416 = vmatpush2.xpose.msra.mxu0 0.0
  %417 = vmatprep.subr.mxu0 0.0
  %418 = vmatpush2.xpose.msra.mxu0 0.0
  %419 = vmatprep.mubr.f32.mxu0 0.0
  %420 = vmatmul.mubr.f32.gmra.mxu0 %v350
  %v421 = vpop.f32.mrf.mxu0
  %v422 = vadd.f32 0.0, %v421
  %v423 = vpop.f32.mrf.mxu0
  %424 = vdwg.mxu0
  %v426 = vsel %vm44, %v25, 0
  %v429 = vsel %vm44, %v33, 0
  %431 = vmatprep.subr.mxu0 0.0
  %432 = vmatpush1.xpose.msra.mxu0 0.0
  %433 = vmatprep.subr.mxu0 0.0
  %434 = vmatpush1.xpose.msra.mxu0 0.0
  %435 = vmatprep.subr.mxu0 0.0
  %436 = vmatpush1.xpose.msra.mxu0 0.0
  %437 = vmatprep.subr.mxu0 0.0
  %438 = vmatpush1.xpose.msra.mxu0 0.0
  %439 = vmatprep.subr.mxu0 0.0
  %440 = vmatpush1.xpose.msra.mxu0 0.0
  %441 = vmatprep.subr.mxu0 0.0
  %442 = vmatpush1.xpose.msra.mxu0 0.0
  %443 = vmatprep.subr.mxu0 0.0
  %444 = vmatpush1.xpose.msra.mxu0 0.0
  %445 = vmatprep.subr.mxu0 0.0
  %446 = vmatpush1.xpose.msra.mxu0 0.0
  %447 = vmatprep.subr.mxu0 0.0
  %448 = vmatpush1.xpose.msra.mxu0 0.0
  %449 = vmatprep.subr.mxu0 0.0
  %450 = vmatpush1.xpose.msra.mxu0 0.0
  %451 = vmatprep.subr.mxu0 0.0
  %452 = vmatpush1.xpose.msra.mxu0 0.0
  %453 = vmatprep.subr.mxu0 0.0
  %454 = vmatpush1.xpose.msra.mxu0 0.0
  %455 = vmatprep.subr.mxu0 0.0
  %456 = vmatpush1.xpose.msra.mxu0 0.0
  %457 = vmatprep.subr.mxu0 0.0
  %458 = vmatpush1.xpose.msra.mxu0 0.0
  %459 = vmatprep.subr.mxu0 0.0
  %460 = vmatpush1.xpose.msra.mxu0 0.0
  %461 = vmatprep.subr.mxu0 0.0
  %462 = vmatpush1.xpose.msra.mxu0 %v429
  %463 = vmatprep.subr.mxu0 0.0
  %464 = vmatpush2.xpose.msra.mxu0 0.0
  %465 = vmatprep.subr.mxu0 0.0
  %466 = vmatpush2.xpose.msra.mxu0 0.0
  %467 = vmatprep.subr.mxu0 0.0
  %468 = vmatpush2.xpose.msra.mxu0 0.0
  %469 = vmatprep.subr.mxu0 0.0
  %470 = vmatpush2.xpose.msra.mxu0 0.0
  %471 = vmatprep.subr.mxu0 0.0
  %472 = vmatpush2.xpose.msra.mxu0 0.0
  %473 = vmatprep.subr.mxu0 0.0
  %474 = vmatpush2.xpose.msra.mxu0 0.0
  %475 = vmatprep.subr.mxu0 0.0
  %476 = vmatpush2.xpose.msra.mxu0 0.0
  %477 = vmatprep.subr.mxu0 0.0
  %478 = vmatpush2.xpose.msra.mxu0 0.0
  %479 = vmatprep.subr.mxu0 0.0
  %480 = vmatpush2.xpose.msra.mxu0 0.0
  %481 = vmatprep.subr.mxu0 0.0
  %482 = vmatpush2.xpose.msra.mxu0 0.0
  %483 = vmatprep.subr.mxu0 0.0
  %484 = vmatpush2.xpose.msra.mxu0 0.0
  %485 = vmatprep.subr.mxu0 0.0
  %486 = vmatpush2.xpose.msra.mxu0 0.0
  %487 = vmatprep.subr.mxu0 0.0
  %488 = vmatpush2.xpose.msra.mxu0 0.0
  %489 = vmatprep.subr.mxu0 0.0
  %490 = vmatpush2.xpose.msra.mxu0 0.0
  %491 = vmatprep.subr.mxu0 0.0
  %492 = vmatpush2.xpose.msra.mxu0 0.0
  %493 = vmatprep.subr.mxu0 0.0
  %494 = vmatpush2.xpose.msra.mxu0 0.0
  %495 = vmatprep.mubr.f32.mxu0 0.0
  %496 = vmatmul.mubr.f32.gmra.mxu0 %v426
  %v497 = vpop.f32.mrf.mxu0
  %v498 = vadd.f32 0.0, %v497
  %v499 = vpop.f32.mrf.mxu0
  %500 = vdwg.mxu0
  %v502 = vsel %vm44, %v26, 0
  %v505 = vsel %vm44, %v34, 0
  %507 = vmatprep.subr.mxu0 0.0
  %508 = vmatpush1.xpose.msra.mxu0 0.0
  %509 = vmatprep.subr.mxu0 0.0
  %510 = vmatpush1.xpose.msra.mxu0 0.0
  %511 = vmatprep.subr.mxu0 0.0
  %512 = vmatpush1.xpose.msra.mxu0 0.0
  %513 = vmatprep.subr.mxu0 0.0
  %514 = vmatpush1.xpose.msra.mxu0 0.0
  %515 = vmatprep.subr.mxu0 0.0
  %516 = vmatpush1.xpose.msra.mxu0 0.0
  %517 = vmatprep.subr.mxu0 0.0
  %518 = vmatpush1.xpose.msra.mxu0 0.0
  %519 = vmatprep.subr.mxu0 0.0
  %520 = vmatpush1.xpose.msra.mxu0 0.0
  %521 = vmatprep.subr.mxu0 0.0
  %522 = vmatpush1.xpose.msra.mxu0 0.0
  %523 = vmatprep.subr.mxu0 0.0
  %524 = vmatpush1.xpose.msra.mxu0 0.0
  %525 = vmatprep.subr.mxu0 0.0
  %526 = vmatpush1.xpose.msra.mxu0 0.0
  %527 = vmatprep.subr.mxu0 0.0
  %528 = vmatpush1.xpose.msra.mxu0 0.0
  %529 = vmatprep.subr.mxu0 0.0
  %530 = vmatpush1.xpose.msra.mxu0 0.0
  %531 = vmatprep.subr.mxu0 0.0
  %532 = vmatpush1.xpose.msra.mxu0 0.0
  %533 = vmatprep.subr.mxu0 0.0
  %534 = vmatpush1.xpose.msra.mxu0 0.0
  %535 = vmatprep.subr.mxu0 0.0
  %536 = vmatpush1.xpose.msra.mxu0 0.0
  %537 = vmatprep.subr.mxu0 0.0
  %538 = vmatpush1.xpose.msra.mxu0 %v505
  %539 = vmatprep.subr.mxu0 0.0
  %540 = vmatpush2.xpose.msra.mxu0 0.0
  %541 = vmatprep.subr.mxu0 0.0
  %542 = vmatpush2.xpose.msra.mxu0 0.0
  %543 = vmatprep.subr.mxu0 0.0
  %544 = vmatpush2.xpose.msra.mxu0 0.0
  %545 = vmatprep.subr.mxu0 0.0
  %546 = vmatpush2.xpose.msra.mxu0 0.0
  %547 = vmatprep.subr.mxu0 0.0
  %548 = vmatpush2.xpose.msra.mxu0 0.0
  %549 = vmatprep.subr.mxu0 0.0
  %550 = vmatpush2.xpose.msra.mxu0 0.0
  %551 = vmatprep.subr.mxu0 0.0
  %552 = vmatpush2.xpose.msra.mxu0 0.0
  %553 = vmatprep.subr.mxu0 0.0
  %554 = vmatpush2.xpose.msra.mxu0 0.0
  %555 = vmatprep.subr.mxu0 0.0
  %556 = vmatpush2.xpose.msra.mxu0 0.0
  %557 = vmatprep.subr.mxu0 0.0
  %558 = vmatpush2.xpose.msra.mxu0 0.0
  %559 = vmatprep.subr.mxu0 0.0
  %560 = vmatpush2.xpose.msra.mxu0 0.0
  %561 = vmatprep.subr.mxu0 0.0
  %562 = vmatpush2.xpose.msra.mxu0 0.0
  %563 = vmatprep.subr.mxu0 0.0
  %564 = vmatpush2.xpose.msra.mxu0 0.0
  %565 = vmatprep.subr.mxu0 0.0
  %566 = vmatpush2.xpose.msra.mxu0 0.0
  %567 = vmatprep.subr.mxu0 0.0
  %568 = vmatpush2.xpose.msra.mxu0 0.0
  %569 = vmatprep.subr.mxu0 0.0
  %570 = vmatpush2.xpose.msra.mxu0 0.0
  %571 = vmatprep.mubr.f32.mxu0 0.0
  %572 = vmatmul.mubr.f32.gmra.mxu0 %v502
  %v573 = vpop.f32.mrf.mxu0
  %v574 = vadd.f32 0.0, %v573
  %v575 = vpop.f32.mrf.mxu0
  %576 = vdwg.mxu0
  %v578 = vsel %vm44, %v27, 0
  %v581 = vsel %vm44, %v35, 0
  %583 = vmatprep.subr.mxu0 0.0
  %584 = vmatpush1.xpose.msra.mxu0 0.0
  %585 = vmatprep.subr.mxu0 0.0
  %586 = vmatpush1.xpose.msra.mxu0 0.0
  %587 = vmatprep.subr.mxu0 0.0
  %588 = vmatpush1.xpose.msra.mxu0 0.0
  %589 = vmatprep.subr.mxu0 0.0
  %590 = vmatpush1.xpose.msra.mxu0 0.0
  %591 = vmatprep.subr.mxu0 0.0
  %592 = vmatpush1.xpose.msra.mxu0 0.0
  %593 = vmatprep.subr.mxu0 0.0
  %594 = vmatpush1.xpose.msra.mxu0 0.0
  %595 = vmatprep.subr.mxu0 0.0
  %596 = vmatpush1.xpose.msra.mxu0 0.0
  %597 = vmatprep.subr.mxu0 0.0
  %598 = vmatpush1.xpose.msra.mxu0 0.0
  %599 = vmatprep.subr.mxu0 0.0
  %600 = vmatpush1.xpose.msra.mxu0 0.0
  %601 = vmatprep.subr.mxu0 0.0
  %602 = vmatpush1.xpose.msra.mxu0 0.0
  %603 = vmatprep.subr.mxu0 0.0
  %604 = vmatpush1.xpose.msra.mxu0 0.0
  %605 = vmatprep.subr.mxu0 0.0
  %606 = vmatpush1.xpose.msra.mxu0 0.0
  %607 = vmatprep.subr.mxu0 0.0
  %608 = vmatpush1.xpose.msra.mxu0 0.0
  %609 = vmatprep.subr.mxu0 0.0
  %610 = vmatpush1.xpose.msra.mxu0 0.0
  %611 = vmatprep.subr.mxu0 0.0
  %612 = vmatpush1.xpose.msra.mxu0 0.0
  %613 = vmatprep.subr.mxu0 0.0
  %614 = vmatpush1.xpose.msra.mxu0 %v581
  %615 = vmatprep.subr.mxu0 0.0
  %616 = vmatpush2.xpose.msra.mxu0 0.0
  %617 = vmatprep.subr.mxu0 0.0
  %618 = vmatpush2.xpose.msra.mxu0 0.0
  %619 = vmatprep.subr.mxu0 0.0
  %620 = vmatpush2.xpose.msra.mxu0 0.0
  %621 = vmatprep.subr.mxu0 0.0
  %622 = vmatpush2.xpose.msra.mxu0 0.0
  %623 = vmatprep.subr.mxu0 0.0
  %624 = vmatpush2.xpose.msra.mxu0 0.0
  %625 = vmatprep.subr.mxu0 0.0
  %626 = vmatpush2.xpose.msra.mxu0 0.0
  %627 = vmatprep.subr.mxu0 0.0
  %628 = vmatpush2.xpose.msra.mxu0 0.0
  %629 = vmatprep.subr.mxu0 0.0
  %630 = vmatpush2.xpose.msra.mxu0 0.0
  %631 = vmatprep.subr.mxu0 0.0
  %632 = vmatpush2.xpose.msra.mxu0 0.0
  %633 = vmatprep.subr.mxu0 0.0
  %634 = vmatpush2.xpose.msra.mxu0 0.0
  %635 = vmatprep.subr.mxu0 0.0
  %636 = vmatpush2.xpose.msra.mxu0 0.0
  %637 = vmatprep.subr.mxu0 0.0
  %638 = vmatpush2.xpose.msra.mxu0 0.0
  %639 = vmatprep.subr.mxu0 0.0
  %640 = vmatpush2.xpose.msra.mxu0 0.0
  %641 = vmatprep.subr.mxu0 0.0
  %642 = vmatpush2.xpose.msra.mxu0 0.0
  %643 = vmatprep.subr.mxu0 0.0
  %644 = vmatpush2.xpose.msra.mxu0 0.0
  %645 = vmatprep.subr.mxu0 0.0
  %646 = vmatpush2.xpose.msra.mxu0 0.0
  %647 = vmatprep.mubr.f32.mxu0 0.0
  %648 = vmatmul.mubr.f32.gmra.mxu0 %v578
  %v649 = vpop.f32.mrf.mxu0
  %v650 = vadd.f32 0.0, %v649
  %v651 = vpop.f32.mrf.mxu0
  %652 = vdwg.mxu0
  %v653 = vld [vmem:[%s3] sm:$0xff]
  %v654 = vld [vmem:[%s3 + $0x8] sm:$0xff]
  %v655 = vld [vmem:[%s3 + $0x10] sm:$0xff]
  %v656 = vld [vmem:[%s3 + $0x18] sm:$0xff]
  %v657 = vld [vmem:[%s4] sm:$0xff]
  %v658 = vadd.f32 %v653, %v657
  %v659 = vadd.f32 %v654, %v657
  %v660 = vadd.f32 %v655, %v657
  %v661 = vadd.f32 %v656, %v657
  %v662 = vadd.f32 %v118, %v658
  %v663 = vadd.f32 %v194, %v659
  %v664 = vadd.f32 %v270, %v660
  %v665 = vadd.f32 %v346, %v661
  %v666 = vadd.f32 %v422, %v658
  %v667 = vadd.f32 %v498, %v659
  %v668 = vadd.f32 %v574, %v660
  %v669 = vadd.f32 %v650, %v661
  %v670 = vsel %vm44, %v662, -inf
  %671 = vmax.xlane.f32.xlu0 %v670
  %v672 = vpop.xlane.xlu0 %671
  %v673 = vsel %vm44, %v663, -inf
  %674 = vmax.xlane.f32.xlu0 %v673
  %v675 = vpop.xlane.xlu0 %674
  %v676 = vsel %vm44, %v664, -inf
  %677 = vmax.xlane.f32.xlu0 %v676
  %v678 = vpop.xlane.xlu0 %677
  %v679 = vsel %vm44, %v665, -inf
  %680 = vmax.xlane.f32.xlu0 %v679
  %v681 = vpop.xlane.xlu0 %680
  %v682 = vsel %vm44, %v666, -inf
  %683 = vmax.xlane.f32.xlu0 %v682
  %v684 = vpop.xlane.xlu0 %683
  %v685 = vsel %vm44, %v667, -inf
  %686 = vmax.xlane.f32.xlu0 %v685
  %v687 = vpop.xlane.xlu0 %686
  %v688 = vsel %vm44, %v668, -inf
  %689 = vmax.xlane.f32.xlu0 %v688
  %v690 = vpop.xlane.xlu0 %689
  %v691 = vsel %vm44, %v669, -inf
  %692 = vmax.xlane.f32.xlu0 %v691
  %v693 = vpop.xlane.xlu0 %692
  %v694 = vsub.f32 %v662, %v672
  %v695 = vsub.f32 %v663, %v675
  %v696 = vsub.f32 %v664, %v678
  %v697 = vsub.f32 %v665, %v681
  %v698 = vsub.f32 %v666, %v684
  %v699 = vsub.f32 %v667, %v687
  %v700 = vsub.f32 %v668, %v690
  %v701 = vsub.f32 %v669, %v693
  %v702 = vmul.f32 %v694, 1.442695
  %v703 = vpow.pop %v702
  %v704 = vmul.f32 %v695, 1.442695
  %v705 = vpow.pop %v704
  %v706 = vmul.f32 %v696, 1.442695
  %v707 = vpow.pop %v706
  %v708 = vmul.f32 %v697, 1.442695
  %v709 = vpow.pop %v708
  %v710 = vmul.f32 %v698, 1.442695
  %v711 = vpow.pop %v710
  %v712 = vmul.f32 %v699, 1.442695
  %v713 = vpow.pop %v712
  %v714 = vmul.f32 %v700, 1.442695
  %v715 = vpow.pop %v714
  %v716 = vmul.f32 %v701, 1.442695
  %v717 = vpow.pop %v716
  %v718 = vsel %vm44, %v703, 0.0
  %719 = vadd.xlane.f32.xlu0 %v718
  %v720 = vpop.xlane.xlu0 %719
  %v721 = vsel %vm44, %v705, 0.0
  %722 = vadd.xlane.f32.xlu0 %v721
  %v723 = vpop.xlane.xlu0 %722
  %v724 = vsel %vm44, %v707, 0.0
  %725 = vadd.xlane.f32.xlu0 %v724
  %v726 = vpop.xlane.xlu0 %725
  %v727 = vsel %vm44, %v709, 0.0
  %728 = vadd.xlane.f32.xlu0 %v727
  %v729 = vpop.xlane.xlu0 %728
  %v730 = vsel %vm44, %v711, 0.0
  %731 = vadd.xlane.f32.xlu0 %v730
  %v732 = vpop.xlane.xlu0 %731
  %v733 = vsel %vm44, %v713, 0.0
  %734 = vadd.xlane.f32.xlu0 %v733
  %v735 = vpop.xlane.xlu0 %734
  %v736 = vsel %vm44, %v715, 0.0
  %737 = vadd.xlane.f32.xlu0 %v736
  %v738 = vpop.xlane.xlu0 %737
  %v739 = vsel %vm44, %v717, 0.0
  %740 = vadd.xlane.f32.xlu0 %v739
  %v741 = vpop.xlane.xlu0 %740
  %v742 = vrcp.pop %v720
  %v743 = vmul.f32 %v703, %v742
  %v744 = vrcp.pop %v723
  %v745 = vmul.f32 %v705, %v744
  %v746 = vrcp.pop %v726
  %v747 = vmul.f32 %v707, %v746
  %v748 = vrcp.pop %v729
  %v749 = vmul.f32 %v709, %v748
  %v750 = vrcp.pop %v732
  %v751 = vmul.f32 %v711, %v750
  %v752 = vrcp.pop %v735
  %v753 = vmul.f32 %v713, %v752
  %v754 = vrcp.pop %v738
  %v755 = vmul.f32 %v715, %v754
  %v756 = vrcp.pop %v741
  %v757 = vmul.f32 %v717, %v756
  %v759 = vsel %vm44, %v743, 0
  %761 = vmatprep.subr.mxu0 0.0
  %762 = vmatpush1.msra.mxu0 0.0
  %763 = vmatprep.subr.mxu0 0.0
  %764 = vmatpush1.msra.mxu0 0.0
  %765 = vmatprep.subr.mxu0 0.0
  %766 = vmatpush1.msra.mxu0 0.0
  %767 = vmatprep.subr.mxu0 0.0
  %768 = vmatpush1.msra.mxu0 0.0
  %769 = vmatprep.subr.mxu0 0.0
  %770 = vmatpush1.msra.mxu0 0.0
  %771 = vmatprep.subr.mxu0 0.0
  %772 = vmatpush1.msra.mxu0 0.0
  %773 = vmatprep.subr.mxu0 0.0
  %774 = vmatpush1.msra.mxu0 0.0
  %775 = vmatprep.subr.mxu0 0.0
  %776 = vmatpush1.msra.mxu0 0.0
  %777 = vmatprep.subr.mxu0 0.0
  %778 = vmatpush1.msra.mxu0 0.0
  %779 = vmatprep.subr.mxu0 0.0
  %780 = vmatpush1.msra.mxu0 0.0
  %781 = vmatprep.subr.mxu0 0.0
  %782 = vmatpush1.msra.mxu0 0.0
  %783 = vmatprep.subr.mxu0 0.0
  %784 = vmatpush1.msra.mxu0 0.0
  %785 = vmatprep.subr.mxu0 0.0
  %786 = vmatpush1.msra.mxu0 0.0
  %787 = vmatprep.subr.mxu0 0.0
  %788 = vmatpush1.msra.mxu0 0.0
  %789 = vmatprep.subr.mxu0 0.0
  %790 = vmatpush1.msra.mxu0 0.0
  %791 = vmatprep.subr.mxu0 0.0
  %792 = vmatpush1.msra.mxu0 %v36
  %793 = vmatprep.subr.mxu0 0.0
  %794 = vmatpush2.msra.mxu0 0.0
  %795 = vmatprep.subr.mxu0 0.0
  %796 = vmatpush2.msra.mxu0 0.0
  %797 = vmatprep.subr.mxu0 0.0
  %798 = vmatpush2.msra.mxu0 0.0
  %799 = vmatprep.subr.mxu0 0.0
  %800 = vmatpush2.msra.mxu0 0.0
  %801 = vmatprep.subr.mxu0 0.0
  %802 = vmatpush2.msra.mxu0 0.0
  %803 = vmatprep.subr.mxu0 0.0
  %804 = vmatpush2.msra.mxu0 0.0
  %805 = vmatprep.subr.mxu0 0.0
  %806 = vmatpush2.msra.mxu0 0.0
  %807 = vmatprep.subr.mxu0 0.0
  %808 = vmatpush2.msra.mxu0 0.0
  %809 = vmatprep.subr.mxu0 0.0
  %810 = vmatpush2.msra.mxu0 0.0
  %811 = vmatprep.subr.mxu0 0.0
  %812 = vmatpush2.msra.mxu0 0.0
  %813 = vmatprep.subr.mxu0 0.0
  %814 = vmatpush2.msra.mxu0 0.0
  %815 = vmatprep.subr.mxu0 0.0
  %816 = vmatpush2.msra.mxu0 0.0
  %817 = vmatprep.subr.mxu0 0.0
  %818 = vmatpush2.msra.mxu0 0.0
  %819 = vmatprep.subr.mxu0 0.0
  %820 = vmatpush2.msra.mxu0 0.0
  %821 = vmatprep.subr.mxu0 0.0
  %822 = vmatpush2.msra.mxu0 0.0
  %823 = vmatprep.subr.mxu0 0.0
  %824 = vmatpush2.msra.mxu0 0.0
  %825 = vmatprep.mubr.f32.mxu0 0.0
  %826 = vmatmul.mubr.f32.gmra.mxu0 %v759
  %v827 = vpop.f32.mrf.mxu0
  %v828 = vadd.f32 0.0, %v827
  %v829 = vpop.f32.mrf.mxu0
  %830 = vdwg.mxu0
  %v832 = vsel %vm44, %v745, 0
  %834 = vmatprep.subr.mxu0 0.0
  %835 = vmatpush1.msra.mxu0 0.0
  %836 = vmatprep.subr.mxu0 0.0
  %837 = vmatpush1.msra.mxu0 0.0
  %838 = vmatprep.subr.mxu0 0.0
  %839 = vmatpush1.msra.mxu0 0.0
  %840 = vmatprep.subr.mxu0 0.0
  %841 = vmatpush1.msra.mxu0 0.0
  %842 = vmatprep.subr.mxu0 0.0
  %843 = vmatpush1.msra.mxu0 0.0
  %844 = vmatprep.subr.mxu0 0.0
  %845 = vmatpush1.msra.mxu0 0.0
  %846 = vmatprep.subr.mxu0 0.0
  %847 = vmatpush1.msra.mxu0 0.0
  %848 = vmatprep.subr.mxu0 0.0
  %849 = vmatpush1.msra.mxu0 0.0
  %850 = vmatprep.subr.mxu0 0.0
  %851 = vmatpush1.msra.mxu0 0.0
  %852 = vmatprep.subr.mxu0 0.0
  %853 = vmatpush1.msra.mxu0 0.0
  %854 = vmatprep.subr.mxu0 0.0
  %855 = vmatpush1.msra.mxu0 0.0
  %856 = vmatprep.subr.mxu0 0.0
  %857 = vmatpush1.msra.mxu0 0.0
  %858 = vmatprep.subr.mxu0 0.0
  %859 = vmatpush1.msra.mxu0 0.0
  %860 = vmatprep.subr.mxu0 0.0
  %861 = vmatpush1.msra.mxu0 0.0
  %862 = vmatprep.subr.mxu0 0.0
  %863 = vmatpush1.msra.mxu0 0.0
  %864 = vmatprep.subr.mxu0 0.0
  %865 = vmatpush1.msra.mxu0 %v37
  %866 = vmatprep.subr.mxu0 0.0
  %867 = vmatpush2.msra.mxu0 0.0
  %868 = vmatprep.subr.mxu0 0.0
  %869 = vmatpush2.msra.mxu0 0.0
  %870 = vmatprep.subr.mxu0 0.0
  %871 = vmatpush2.msra.mxu0 0.0
  %872 = vmatprep.subr.mxu0 0.0
  %873 = vmatpush2.msra.mxu0 0.0
  %874 = vmatprep.subr.mxu0 0.0
  %875 = vmatpush2.msra.mxu0 0.0
  %876 = vmatprep.subr.mxu0 0.0
  %877 = vmatpush2.msra.mxu0 0.0
  %878 = vmatprep.subr.mxu0 0.0
  %879 = vmatpush2.msra.mxu0 0.0
  %880 = vmatprep.subr.mxu0 0.0
  %881 = vmatpush2.msra.mxu0 0.0
  %882 = vmatprep.subr.mxu0 0.0
  %883 = vmatpush2.msra.mxu0 0.0
  %884 = vmatprep.subr.mxu0 0.0
  %885 = vmatpush2.msra.mxu0 0.0
  %886 = vmatprep.subr.mxu0 0.0
  %887 = vmatpush2.msra.mxu0 0.0
  %888 = vmatprep.subr.mxu0 0.0
  %889 = vmatpush2.msra.mxu0 0.0
  %890 = vmatprep.subr.mxu0 0.0
  %891 = vmatpush2.msra.mxu0 0.0
  %892 = vmatprep.subr.mxu0 0.0
  %893 = vmatpush2.msra.mxu0 0.0
  %894 = vmatprep.subr.mxu0 0.0
  %895 = vmatpush2.msra.mxu0 0.0
  %896 = vmatprep.subr.mxu0 0.0
  %897 = vmatpush2.msra.mxu0 0.0
  %898 = vmatprep.mubr.f32.mxu0 0.0
  %899 = vmatmul.mubr.f32.gmra.mxu0 %v832
  %v900 = vpop.f32.mrf.mxu0
  %v901 = vadd.f32 0.0, %v900
  %v902 = vpop.f32.mrf.mxu0
  %903 = vdwg.mxu0
  %v905 = vsel %vm44, %v747, 0
  %907 = vmatprep.subr.mxu0 0.0
  %908 = vmatpush1.msra.mxu0 0.0
  %909 = vmatprep.subr.mxu0 0.0
  %910 = vmatpush1.msra.mxu0 0.0
  %911 = vmatprep.subr.mxu0 0.0
  %912 = vmatpush1.msra.mxu0 0.0
  %913 = vmatprep.subr.mxu0 0.0
  %914 = vmatpush1.msra.mxu0 0.0
  %915 = vmatprep.subr.mxu0 0.0
  %916 = vmatpush1.msra.mxu0 0.0
  %917 = vmatprep.subr.mxu0 0.0
  %918 = vmatpush1.msra.mxu0 0.0
  %919 = vmatprep.subr.mxu0 0.0
  %920 = vmatpush1.msra.mxu0 0.0
  %921 = vmatprep.subr.mxu0 0.0
  %922 = vmatpush1.msra.mxu0 0.0
  %923 = vmatprep.subr.mxu0 0.0
  %924 = vmatpush1.msra.mxu0 0.0
  %925 = vmatprep.subr.mxu0 0.0
  %926 = vmatpush1.msra.mxu0 0.0
  %927 = vmatprep.subr.mxu0 0.0
  %928 = vmatpush1.msra.mxu0 0.0
  %929 = vmatprep.subr.mxu0 0.0
  %930 = vmatpush1.msra.mxu0 0.0
  %931 = vmatprep.subr.mxu0 0.0
  %932 = vmatpush1.msra.mxu0 0.0
  %933 = vmatprep.subr.mxu0 0.0
  %934 = vmatpush1.msra.mxu0 0.0
  %935 = vmatprep.subr.mxu0 0.0
  %936 = vmatpush1.msra.mxu0 0.0
  %937 = vmatprep.subr.mxu0 0.0
  %938 = vmatpush1.msra.mxu0 %v38
  %939 = vmatprep.subr.mxu0 0.0
  %940 = vmatpush2.msra.mxu0 0.0
  %941 = vmatprep.subr.mxu0 0.0
  %942 = vmatpush2.msra.mxu0 0.0
  %943 = vmatprep.subr.mxu0 0.0
  %944 = vmatpush2.msra.mxu0 0.0
  %945 = vmatprep.subr.mxu0 0.0
  %946 = vmatpush2.msra.mxu0 0.0
  %947 = vmatprep.subr.mxu0 0.0
  %948 = vmatpush2.msra.mxu0 0.0
  %949 = vmatprep.subr.mxu0 0.0
  %950 = vmatpush2.msra.mxu0 0.0
  %951 = vmatprep.subr.mxu0 0.0
  %952 = vmatpush2.msra.mxu0 0.0
  %953 = vmatprep.subr.mxu0 0.0
  %954 = vmatpush2.msra.mxu0 0.0
  %955 = vmatprep.subr.mxu0 0.0
  %956 = vmatpush2.msra.mxu0 0.0
  %957 = vmatprep.subr.mxu0 0.0
  %958 = vmatpush2.msra.mxu0 0.0
  %959 = vmatprep.subr.mxu0 0.0
  %960 = vmatpush2.msra.mxu0 0.0
  %961 = vmatprep.subr.mxu0 0.0
  %962 = vmatpush2.msra.mxu0 0.0
  %963 = vmatprep.subr.mxu0 0.0
  %964 = vmatpush2.msra.mxu0 0.0
  %965 = vmatprep.subr.mxu0 0.0
  %966 = vmatpush2.msra.mxu0 0.0
  %967 = vmatprep.subr.mxu0 0.0
  %968 = vmatpush2.msra.mxu0 0.0
  %969 = vmatprep.subr.mxu0 0.0
  %970 = vmatpush2.msra.mxu0 0.0
  %971 = vmatprep.mubr.f32.mxu0 0.0
  %972 = vmatmul.mubr.f32.gmra.mxu0 %v905
  %v973 = vpop.f32.mrf.mxu0
  %v974 = vadd.f32 0.0, %v973
  %v975 = vpop.f32.mrf.mxu0
  %976 = vdwg.mxu0
  %v978 = vsel %vm44, %v749, 0
  %980 = vmatprep.subr.mxu0 0.0
  %981 = vmatpush1.msra.mxu0 0.0
  %982 = vmatprep.subr.mxu0 0.0
  %983 = vmatpush1.msra.mxu0 0.0
  %984 = vmatprep.subr.mxu0 0.0
  %985 = vmatpush1.msra.mxu0 0.0
  %986 = vmatprep.subr.mxu0 0.0
  %987 = vmatpush1.msra.mxu0 0.0
  %988 = vmatprep.subr.mxu0 0.0
  %989 = vmatpush1.msra.mxu0 0.0
  %990 = vmatprep.subr.mxu0 0.0
  %991 = vmatpush1.msra.mxu0 0.0
  %992 = vmatprep.subr.mxu0 0.0
  %993 = vmatpush1.msra.mxu0 0.0
  %994 = vmatprep.subr.mxu0 0.0
  %995 = vmatpush1.msra.mxu0 0.0
  %996 = vmatprep.subr.mxu0 0.0
  %997 = vmatpush1.msra.mxu0 0.0
  %998 = vmatprep.subr.mxu0 0.0
  %999 = vmatpush1.msra.mxu0 0.0
  %1000 = vmatprep.subr.mxu0 0.0
  %1001 = vmatpush1.msra.mxu0 0.0
  %1002 = vmatprep.subr.mxu0 0.0
  %1003 = vmatpush1.msra.mxu0 0.0
  %1004 = vmatprep.subr.mxu0 0.0
  %1005 = vmatpush1.msra.mxu0 0.0
  %1006 = vmatprep.subr.mxu0 0.0
  %1007 = vmatpush1.msra.mxu0 0.0
  %1008 = vmatprep.subr.mxu0 0.0
  %1009 = vmatpush1.msra.mxu0 0.0
  %1010 = vmatprep.subr.mxu0 0.0
  %1011 = vmatpush1.msra.mxu0 %v39
  %1012 = vmatprep.subr.mxu0 0.0
  %1013 = vmatpush2.msra.mxu0 0.0
  %1014 = vmatprep.subr.mxu0 0.0
  %1015 = vmatpush2.msra.mxu0 0.0
  %1016 = vmatprep.subr.mxu0 0.0
  %1017 = vmatpush2.msra.mxu0 0.0
  %1018 = vmatprep.subr.mxu0 0.0
  %1019 = vmatpush2.msra.mxu0 0.0
  %1020 = vmatprep.subr.mxu0 0.0
  %1021 = vmatpush2.msra.mxu0 0.0
  %1022 = vmatprep.subr.mxu0 0.0
  %1023 = vmatpush2.msra.mxu0 0.0
  %1024 = vmatprep.subr.mxu0 0.0
  %1025 = vmatpush2.msra.mxu0 0.0
  %1026 = vmatprep.subr.mxu0 0.0
  %1027 = vmatpush2.msra.mxu0 0.0
  %1028 = vmatprep.subr.mxu0 0.0
  %1029 = vmatpush2.msra.mxu0 0.0
  %1030 = vmatprep.subr.mxu0 0.0
  %1031 = vmatpush2.msra.mxu0 0.0
  %1032 = vmatprep.subr.mxu0 0.0
  %1033 = vmatpush2.msra.mxu0 0.0
  %1034 = vmatprep.subr.mxu0 0.0
  %1035 = vmatpush2.msra.mxu0 0.0
  %1036 = vmatprep.subr.mxu0 0.0
  %1037 = vmatpush2.msra.mxu0 0.0
  %1038 = vmatprep.subr.mxu0 0.0
  %1039 = vmatpush2.msra.mxu0 0.0
  %1040 = vmatprep.subr.mxu0 0.0
  %1041 = vmatpush2.msra.mxu0 0.0
  %1042 = vmatprep.subr.mxu0 0.0
  %1043 = vmatpush2.msra.mxu0 0.0
  %1044 = vmatprep.mubr.f32.mxu0 0.0
  %1045 = vmatmul.mubr.f32.gmra.mxu0 %v978
  %v1046 = vpop.f32.mrf.mxu0
  %v1047 = vadd.f32 0.0, %v1046
  %v1048 = vpop.f32.mrf.mxu0
  %1049 = vdwg.mxu0
  %v1051 = vsel %vm44, %v751, 0
  %1053 = vmatprep.subr.mxu0 0.0
  %1054 = vmatpush1.msra.mxu0 0.0
  %1055 = vmatprep.subr.mxu0 0.0
  %1056 = vmatpush1.msra.mxu0 0.0
  %1057 = vmatprep.subr.mxu0 0.0
  %1058 = vmatpush1.msra.mxu0 0.0
  %1059 = vmatprep.subr.mxu0 0.0
  %1060 = vmatpush1.msra.mxu0 0.0
  %1061 = vmatprep.subr.mxu0 0.0
  %1062 = vmatpush1.msra.mxu0 0.0
  %1063 = vmatprep.subr.mxu0 0.0
  %1064 = vmatpush1.msra.mxu0 0.0
  %1065 = vmatprep.subr.mxu0 0.0
  %1066 = vmatpush1.msra.mxu0 0.0
  %1067 = vmatprep.subr.mxu0 0.0
  %1068 = vmatpush1.msra.mxu0 0.0
  %1069 = vmatprep.subr.mxu0 0.0
  %1070 = vmatpush1.msra.mxu0 0.0
  %1071 = vmatprep.subr.mxu0 0.0
  %1072 = vmatpush1.msra.mxu0 0.0
  %1073 = vmatprep.subr.mxu0 0.0
  %1074 = vmatpush1.msra.mxu0 0.0
  %1075 = vmatprep.subr.mxu0 0.0
  %1076 = vmatpush1.msra.mxu0 0.0
  %1077 = vmatprep.subr.mxu0 0.0
  %1078 = vmatpush1.msra.mxu0 0.0
  %1079 = vmatprep.subr.mxu0 0.0
  %1080 = vmatpush1.msra.mxu0 0.0
  %1081 = vmatprep.subr.mxu0 0.0
  %1082 = vmatpush1.msra.mxu0 0.0
  %1083 = vmatprep.subr.mxu0 0.0
  %1084 = vmatpush1.msra.mxu0 %v40
  %1085 = vmatprep.subr.mxu0 0.0
  %1086 = vmatpush2.msra.mxu0 0.0
  %1087 = vmatprep.subr.mxu0 0.0
  %1088 = vmatpush2.msra.mxu0 0.0
  %1089 = vmatprep.subr.mxu0 0.0
  %1090 = vmatpush2.msra.mxu0 0.0
  %1091 = vmatprep.subr.mxu0 0.0
  %1092 = vmatpush2.msra.mxu0 0.0
  %1093 = vmatprep.subr.mxu0 0.0
  %1094 = vmatpush2.msra.mxu0 0.0
  %1095 = vmatprep.subr.mxu0 0.0
  %1096 = vmatpush2.msra.mxu0 0.0
  %1097 = vmatprep.subr.mxu0 0.0
  %1098 = vmatpush2.msra.mxu0 0.0
  %1099 = vmatprep.subr.mxu0 0.0
  %1100 = vmatpush2.msra.mxu0 0.0
  %1101 = vmatprep.subr.mxu0 0.0
  %1102 = vmatpush2.msra.mxu0 0.0
  %1103 = vmatprep.subr.mxu0 0.0
  %1104 = vmatpush2.msra.mxu0 0.0
  %1105 = vmatprep.subr.mxu0 0.0
  %1106 = vmatpush2.msra.mxu0 0.0
  %1107 = vmatprep.subr.mxu0 0.0
  %1108 = vmatpush2.msra.mxu0 0.0
  %1109 = vmatprep.subr.mxu0 0.0
  %1110 = vmatpush2.msra.mxu0 0.0
  %1111 = vmatprep.subr.mxu0 0.0
  %1112 = vmatpush2.msra.mxu0 0.0
  %1113 = vmatprep.subr.mxu0 0.0
  %1114 = vmatpush2.msra.mxu0 0.0
  %1115 = vmatprep.subr.mxu0 0.0
  %1116 = vmatpush2.msra.mxu0 0.0
  %1117 = vmatprep.mubr.f32.mxu0 0.0
  %1118 = vmatmul.mubr.f32.gmra.mxu0 %v1051
  %v1119 = vpop.f32.mrf.mxu0
  %v1120 = vadd.f32 0.0, %v1119
  %v1121 = vpop.f32.mrf.mxu0
  %1122 = vdwg.mxu0
  %v1124 = vsel %vm44, %v753, 0
  %1126 = vmatprep.subr.mxu0 0.0
  %1127 = vmatpush1.msra.mxu0 0.0
  %1128 = vmatprep.subr.mxu0 0.0
  %1129 = vmatpush1.msra.mxu0 0.0
  %1130 = vmatprep.subr.mxu0 0.0
  %1131 = vmatpush1.msra.mxu0 0.0
  %1132 = vmatprep.subr.mxu0 0.0
  %1133 = vmatpush1.msra.mxu0 0.0
  %1134 = vmatprep.subr.mxu0 0.0
  %1135 = vmatpush1.msra.mxu0 0.0
  %1136 = vmatprep.subr.mxu0 0.0
  %1137 = vmatpush1.msra.mxu0 0.0
  %1138 = vmatprep.subr.mxu0 0.0
  %1139 = vmatpush1.msra.mxu0 0.0
  %1140 = vmatprep.subr.mxu0 0.0
  %1141 = vmatpush1.msra.mxu0 0.0
  %1142 = vmatprep.subr.mxu0 0.0
  %1143 = vmatpush1.msra.mxu0 0.0
  %1144 = vmatprep.subr.mxu0 0.0
  %1145 = vmatpush1.msra.mxu0 0.0
  %1146 = vmatprep.subr.mxu0 0.0
  %1147 = vmatpush1.msra.mxu0 0.0
  %1148 = vmatprep.subr.mxu0 0.0
  %1149 = vmatpush1.msra.mxu0 0.0
  %1150 = vmatprep.subr.mxu0 0.0
  %1151 = vmatpush1.msra.mxu0 0.0
  %1152 = vmatprep.subr.mxu0 0.0
  %1153 = vmatpush1.msra.mxu0 0.0
  %1154 = vmatprep.subr.mxu0 0.0
  %1155 = vmatpush1.msra.mxu0 0.0
  %1156 = vmatprep.subr.mxu0 0.0
  %1157 = vmatpush1.msra.mxu0 %v41
  %1158 = vmatprep.subr.mxu0 0.0
  %1159 = vmatpush2.msra.mxu0 0.0
  %1160 = vmatprep.subr.mxu0 0.0
  %1161 = vmatpush2.msra.mxu0 0.0
  %1162 = vmatprep.subr.mxu0 0.0
  %1163 = vmatpush2.msra.mxu0 0.0
  %1164 = vmatprep.subr.mxu0 0.0
  %1165 = vmatpush2.msra.mxu0 0.0
  %1166 = vmatprep.subr.mxu0 0.0
  %1167 = vmatpush2.msra.mxu0 0.0
  %1168 = vmatprep.subr.mxu0 0.0
  %1169 = vmatpush2.msra.mxu0 0.0
  %1170 = vmatprep.subr.mxu0 0.0
  %1171 = vmatpush2.msra.mxu0 0.0
  %1172 = vmatprep.subr.mxu0 0.0
  %1173 = vmatpush2.msra.mxu0 0.0
  %1174 = vmatprep.subr.mxu0 0.0
  %1175 = vmatpush2.msra.mxu0 0.0
  %1176 = vmatprep.subr.mxu0 0.0
  %1177 = vmatpush2.msra.mxu0 0.0
  %1178 = vmatprep.subr.mxu0 0.0
  %1179 = vmatpush2.msra.mxu0 0.0
  %1180 = vmatprep.subr.mxu0 0.0
  %1181 = vmatpush2.msra.mxu0 0.0
  %1182 = vmatprep.subr.mxu0 0.0
  %1183 = vmatpush2.msra.mxu0 0.0
  %1184 = vmatprep.subr.mxu0 0.0
  %1185 = vmatpush2.msra.mxu0 0.0
  %1186 = vmatprep.subr.mxu0 0.0
  %1187 = vmatpush2.msra.mxu0 0.0
  %1188 = vmatprep.subr.mxu0 0.0
  %1189 = vmatpush2.msra.mxu0 0.0
  %1190 = vmatprep.mubr.f32.mxu0 0.0
  %1191 = vmatmul.mubr.f32.gmra.mxu0 %v1124
  %v1192 = vpop.f32.mrf.mxu0
  %v1193 = vadd.f32 0.0, %v1192
  %v1194 = vpop.f32.mrf.mxu0
  %1195 = vdwg.mxu0
  %v1197 = vsel %vm44, %v755, 0
  %1199 = vmatprep.subr.mxu0 0.0
  %1200 = vmatpush1.msra.mxu0 0.0
  %1201 = vmatprep.subr.mxu0 0.0
  %1202 = vmatpush1.msra.mxu0 0.0
  %1203 = vmatprep.subr.mxu0 0.0
  %1204 = vmatpush1.msra.mxu0 0.0
  %1205 = vmatprep.subr.mxu0 0.0
  %1206 = vmatpush1.msra.mxu0 0.0
  %1207 = vmatprep.subr.mxu0 0.0
  %1208 = vmatpush1.msra.mxu0 0.0
  %1209 = vmatprep.subr.mxu0 0.0
  %1210 = vmatpush1.msra.mxu0 0.0
  %1211 = vmatprep.subr.mxu0 0.0
  %1212 = vmatpush1.msra.mxu0 0.0
  %1213 = vmatprep.subr.mxu0 0.0
  %1214 = vmatpush1.msra.mxu0 0.0
  %1215 = vmatprep.subr.mxu0 0.0
  %1216 = vmatpush1.msra.mxu0 0.0
  %1217 = vmatprep.subr.mxu0 0.0
  %1218 = vmatpush1.msra.mxu0 0.0
  %1219 = vmatprep.subr.mxu0 0.0
  %1220 = vmatpush1.msra.mxu0 0.0
  %1221 = vmatprep.subr.mxu0 0.0
  %1222 = vmatpush1.msra.mxu0 0.0
  %1223 = vmatprep.subr.mxu0 0.0
  %1224 = vmatpush1.msra.mxu0 0.0
  %1225 = vmatprep.subr.mxu0 0.0
  %1226 = vmatpush1.msra.mxu0 0.0
  %1227 = vmatprep.subr.mxu0 0.0
  %1228 = vmatpush1.msra.mxu0 0.0
  %1229 = vmatprep.subr.mxu0 0.0
  %1230 = vmatpush1.msra.mxu0 %v42
  %1231 = vmatprep.subr.mxu0 0.0
  %1232 = vmatpush2.msra.mxu0 0.0
  %1233 = vmatprep.subr.mxu0 0.0
  %1234 = vmatpush2.msra.mxu0 0.0
  %1235 = vmatprep.subr.mxu0 0.0
  %1236 = vmatpush2.msra.mxu0 0.0
  %1237 = vmatprep.subr.mxu0 0.0
  %1238 = vmatpush2.msra.mxu0 0.0
  %1239 = vmatprep.subr.mxu0 0.0
  %1240 = vmatpush2.msra.mxu0 0.0
  %1241 = vmatprep.subr.mxu0 0.0
  %1242 = vmatpush2.msra.mxu0 0.0
  %1243 = vmatprep.subr.mxu0 0.0
  %1244 = vmatpush2.msra.mxu0 0.0
  %1245 = vmatprep.subr.mxu0 0.0
  %1246 = vmatpush2.msra.mxu0 0.0
  %1247 = vmatprep.subr.mxu0 0.0
  %1248 = vmatpush2.msra.mxu0 0.0
  %1249 = vmatprep.subr.mxu0 0.0
  %1250 = vmatpush2.msra.mxu0 0.0
  %1251 = vmatprep.subr.mxu0 0.0
  %1252 = vmatpush2.msra.mxu0 0.0
  %1253 = vmatprep.subr.mxu0 0.0
  %1254 = vmatpush2.msra.mxu0 0.0
  %1255 = vmatprep.subr.mxu0 0.0
  %1256 = vmatpush2.msra.mxu0 0.0
  %1257 = vmatprep.subr.mxu0 0.0
  %1258 = vmatpush2.msra.mxu0 0.0
  %1259 = vmatprep.subr.mxu0 0.0
  %1260 = vmatpush2.msra.mxu0 0.0
  %1261 = vmatprep.subr.mxu0 0.0
  %1262 = vmatpush2.msra.mxu0 0.0
  %1263 = vmatprep.mubr.f32.mxu0 0.0
  %1264 = vmatmul.mubr.f32.gmra.mxu0 %v1197
  %v1265 = vpop.f32.mrf.mxu0
  %v1266 = vadd.f32 0.0, %v1265
  %v1267 = vpop.f32.mrf.mxu0
  %1268 = vdwg.mxu0
  %v1270 = vsel %vm44, %v757, 0
  %1272 = vmatprep.subr.mxu0 0.0
  %1273 = vmatpush1.msra.mxu0 0.0
  %1274 = vmatprep.subr.mxu0 0.0
  %1275 = vmatpush1.msra.mxu0 0.0
  %1276 = vmatprep.subr.mxu0 0.0
  %1277 = vmatpush1.msra.mxu0 0.0
  %1278 = vmatprep.subr.mxu0 0.0
  %1279 = vmatpush1.msra.mxu0 0.0
  %1280 = vmatprep.subr.mxu0 0.0
  %1281 = vmatpush1.msra.mxu0 0.0
  %1282 = vmatprep.subr.mxu0 0.0
  %1283 = vmatpush1.msra.mxu0 0.0
  %1284 = vmatprep.subr.mxu0 0.0
  %1285 = vmatpush1.msra.mxu0 0.0
  %1286 = vmatprep.subr.mxu0 0.0
  %1287 = vmatpush1.msra.mxu0 0.0
  %1288 = vmatprep.subr.mxu0 0.0
  %1289 = vmatpush1.msra.mxu0 0.0
  %1290 = vmatprep.subr.mxu0 0.0
  %1291 = vmatpush1.msra.mxu0 0.0
  %1292 = vmatprep.subr.mxu0 0.0
  %1293 = vmatpush1.msra.mxu0 0.0
  %1294 = vmatprep.subr.mxu0 0.0
  %1295 = vmatpush1.msra.mxu0 0.0
  %1296 = vmatprep.subr.mxu0 0.0
  %1297 = vmatpush1.msra.mxu0 0.0
  %1298 = vmatprep.subr.mxu0 0.0
  %1299 = vmatpush1.msra.mxu0 0.0
  %1300 = vmatprep.subr.mxu0 0.0
  %1301 = vmatpush1.msra.mxu0 0.0
  %1302 = vmatprep.subr.mxu0 0.0
  %1303 = vmatpush1.msra.mxu0 %v43
  %1304 = vmatprep.subr.mxu0 0.0
  %1305 = vmatpush2.msra.mxu0 0.0
  %1306 = vmatprep.subr.mxu0 0.0
  %1307 = vmatpush2.msra.mxu0 0.0
  %1308 = vmatprep.subr.mxu0 0.0
  %1309 = vmatpush2.msra.mxu0 0.0
  %1310 = vmatprep.subr.mxu0 0.0
  %1311 = vmatpush2.msra.mxu0 0.0
  %1312 = vmatprep.subr.mxu0 0.0
  %1313 = vmatpush2.msra.mxu0 0.0
  %1314 = vmatprep.subr.mxu0 0.0
  %1315 = vmatpush2.msra.mxu0 0.0
  %1316 = vmatprep.subr.mxu0 0.0
  %1317 = vmatpush2.msra.mxu0 0.0
  %1318 = vmatprep.subr.mxu0 0.0
  %1319 = vmatpush2.msra.mxu0 0.0
  %1320 = vmatprep.subr.mxu0 0.0
  %1321 = vmatpush2.msra.mxu0 0.0
  %1322 = vmatprep.subr.mxu0 0.0
  %1323 = vmatpush2.msra.mxu0 0.0
  %1324 = vmatprep.subr.mxu0 0.0
  %1325 = vmatpush2.msra.mxu0 0.0
  %1326 = vmatprep.subr.mxu0 0.0
  %1327 = vmatpush2.msra.mxu0 0.0
  %1328 = vmatprep.subr.mxu0 0.0
  %1329 = vmatpush2.msra.mxu0 0.0
  %1330 = vmatprep.subr.mxu0 0.0
  %1331 = vmatpush2.msra.mxu0 0.0
  %1332 = vmatprep.subr.mxu0 0.0
  %1333 = vmatpush2.msra.mxu0 0.0
  %1334 = vmatprep.subr.mxu0 0.0
  %1335 = vmatpush2.msra.mxu0 0.0
  %1336 = vmatprep.mubr.f32.mxu0 0.0
  %1337 = vmatmul.mubr.f32.gmra.mxu0 %v1270
  %v1338 = vpop.f32.mrf.mxu0
  %v1339 = vadd.f32 0.0, %v1338
  %v1340 = vpop.f32.mrf.mxu0
  %1341 = vdwg.mxu0
  %1342 = vst.msk [vmem:[%s5] sm:$0xff] %vm44, %v828
  %1343 = vst.msk [vmem:[%s5 + $0x8] sm:$0xff] %vm44, %v901
  %1344 = vst.msk [vmem:[%s5 + $0x10] sm:$0xff] %vm44, %v974
  %1345 = vst.msk [vmem:[%s5 + $0x18] sm:$0xff] %vm44, %v1047
  %1346 = vst.msk [vmem:[%s5 + $0x20] sm:$0xff] %vm44, %v1120
  %1347 = vst.msk [vmem:[%s5 + $0x28] sm:$0xff] %vm44, %v1193
  %1348 = vst.msk [vmem:[%s5 + $0x30] sm:$0xff] %vm44, %v1266
  %1349 = vst.msk [vmem:[%s5 + $0x38] sm:$0xff] %vm44, %v1339
  // Predicated region
  $region22: #{knowledge_pretrainer_forward.36} parent=0 // pred_check
    _
  $region23: #{knowledge_pretrainer_forward.36} parent=0 // pred_check_branch
    %1351 = sbr.rel (0) target = $region25
  $region24: #{knowledge_pretrainer_forward.36} parent=0 // pred_region
    _
  $region25: #{knowledge_pretrainer_forward.36} parent=0 // pred_fallthru
    _
  // Predicated region
  $region26: #{knowledge_pretrainer_forward.36} parent=0 // pred_check
    _
  $region27: #{knowledge_pretrainer_forward.36} parent=0 // pred_check_branch
    %1353 = sbr.rel (0) target = $region29
  $region28: #{knowledge_pretrainer_forward.36} parent=0 // pred_region
    _
  $region29: #{knowledge_pretrainer_forward.36} parent=0 // pred_fallthru
    _

// kernel: knowledge_pretrainer_forward.29
$region0: #{knowledge_pretrainer_forward.29}
  #allocation0 [shape = 'u32[]', space=smem, size = 0x4, offset = 0x4, fixed_abs, tag = 'smem constant byte address 0x4 - core index']
  #allocation1 [shape = 'u32[144,128]{1,0:T(1,128)}', space=vmem, size = 0x12000, scoped, tag = 'internal scratch']
  %s0 = inlined_call_operand.vmem [shape: f32[16,32], index: 0, kind: input, shape index: {}]
  %s1 = inlined_call_operand.vmem [shape: f32[1,32], index: 1, kind: input, shape index: {}]
  %s2 = inlined_call_operand.vmem [shape: f32[32,64], index: 2, kind: input, shape index: {}]
  %s3 = inlined_call_operand.vmem [shape: f32[64,32], index: 3, kind: input, shape index: {}]
  %s4 = inlined_call_operand.vmem [shape: f32[16,32], index: 4, kind: output, shape index: {}]
  %s5 = sld [smem:[#allocation0]]
  $region26: #{knowledge_pretrainer_forward.29} parent=0
    _
  %s7 = ssub.s32 1, %s5
  %s8 = scalar_select 0, %s7, %s5
  // Predicated region
  $region2: #{knowledge_pretrainer_forward.29} parent=0 // pred_check
    _
  $region3: #{knowledge_pretrainer_forward.29} parent=0 // pred_check_branch
    %10 = sbr.rel (0) target = $region5
  $region4: #{knowledge_pretrainer_forward.29} parent=0 // pred_region
    _
  $region5: #{knowledge_pretrainer_forward.29} parent=0 // pred_fallthru
    _
  // Predicated region
  $region6: #{knowledge_pretrainer_forward.29} parent=0 // pred_check
    _
  $region7: #{knowledge_pretrainer_forward.29} parent=0 // pred_check_branch
    %12 = sbr.rel (0) target = $region9
  $region8: #{knowledge_pretrainer_forward.29} parent=0 // pred_region
    _
  $region9: #{knowledge_pretrainer_forward.29} parent=0 // pred_fallthru
    _
  // Predicated region
  $region10: #{knowledge_pretrainer_forward.29} parent=0 // pred_check
    _
  $region11: #{knowledge_pretrainer_forward.29} parent=0 // pred_check_branch
    %14 = sbr.rel (0) target = $region13
  $region12: #{knowledge_pretrainer_forward.29} parent=0 // pred_region
    _
  $region13: #{knowledge_pretrainer_forward.29} parent=0 // pred_fallthru
    _
  // Predicated region
  $region14: #{knowledge_pretrainer_forward.29} parent=0 // pred_check
    _
  $region15: #{knowledge_pretrainer_forward.29} parent=0 // pred_check_branch
    %16 = sbr.rel (0) target = $region17
  $region16: #{knowledge_pretrainer_forward.29} parent=0 // pred_region
    _
  $region17: #{knowledge_pretrainer_forward.29} parent=0 // pred_fallthru
    _
  %v17 = vld [vmem:[%s0] sm:$0xff]
  %v18 = vld [vmem:[%s0 + $0x8] sm:$0xff]
  %v19 = vmul.f32 %v17, %v17
  %v20 = vmul.f32 %v18, %v18
  %vm21 = vcmask 261120
  %v22 = vsel %vm21, %v19, 0.0
  %23 = vadd.xlane.f32.xlu0 %v22
  %v24 = vpop.xlane.xlu0 %23
  %v25 = vsel %vm21, %v20, 0.0
  %26 = vadd.xlane.f32.xlu0 %v25
  %v27 = vpop.xlane.xlu0 %26
  %v28 = vrcp.pop 32.0
  %v29 = vmul.f32 %v24, %v28
  %v30 = vmul.f32 %v27, %v28
  %v31 = vadd.f32 %v29, 1e-06
  %v32 = vadd.f32 %v30, 1e-06
  %v33 = vrsqrt.pop %v31
  %v34 = vrsqrt.pop %v32
  %v35 = vmul.f32 %v17, %v33
  %v36 = vmul.f32 %v18, %v34
  %v37 = vld [vmem:[%s1] sm:$0x1]
  %v39 = vlaneseq
  %v40 = vshrl.u32 %v39, 7
  %v41 = vsub.s32 0, %v40
  %v42 = vrot.slane %v37, %v41
  %v44 = vmul.f32 %v35, %v42
  %v45 = vmul.f32 %v36, %v42
  %v46 = vld [vmem:[%s2] sm:$0xff]
  %v47 = vld [vmem:[%s2 + $0x8] sm:$0xff]
  %v48 = vld [vmem:[%s2 + $0x10] sm:$0xff]
  %v49 = vld [vmem:[%s2 + $0x18] sm:$0xff]
  %v51 = vsel %vm21, %v44, 0
  %v54 = vsel %vm21, %v45, 0
  %56 = vmatprep.subr.mxu0 0.0
  %57 = vmatpush1.msra.mxu0 0.0
  %58 = vmatprep.subr.mxu0 0.0
  %59 = vmatpush1.msra.mxu0 0.0
  %60 = vmatprep.subr.mxu0 0.0
  %61 = vmatpush1.msra.mxu0 0.0
  %62 = vmatprep.subr.mxu0 0.0
  %63 = vmatpush1.msra.mxu0 0.0
  %64 = vmatprep.subr.mxu0 0.0
  %65 = vmatpush1.msra.mxu0 0.0
  %66 = vmatprep.subr.mxu0 0.0
  %67 = vmatpush1.msra.mxu0 0.0
  %68 = vmatprep.subr.mxu0 0.0
  %69 = vmatpush1.msra.mxu0 0.0
  %70 = vmatprep.subr.mxu0 0.0
  %71 = vmatpush1.msra.mxu0 0.0
  %72 = vmatprep.subr.mxu0 0.0
  %73 = vmatpush1.msra.mxu0 0.0
  %74 = vmatprep.subr.mxu0 0.0
  %75 = vmatpush1.msra.mxu0 0.0
  %76 = vmatprep.subr.mxu0 0.0
  %77 = vmatpush1.msra.mxu0 0.0
  %78 = vmatprep.subr.mxu0 0.0
  %79 = vmatpush1.msra.mxu0 0.0
  %80 = vmatprep.subr.mxu0 0.0
  %81 = vmatpush1.msra.mxu0 %v49
  %82 = vmatprep.subr.mxu0 0.0
  %83 = vmatpush1.msra.mxu0 %v48
  %84 = vmatprep.subr.mxu0 0.0
  %85 = vmatpush1.msra.mxu0 %v47
  %86 = vmatprep.subr.mxu0 0.0
  %87 = vmatpush1.msra.mxu0 %v46
  %88 = vmatprep.subr.mxu0 0.0
  %89 = vmatpush2.msra.mxu0 0.0
  %90 = vmatprep.subr.mxu0 0.0
  %91 = vmatpush2.msra.mxu0 0.0
  %92 = vmatprep.subr.mxu0 0.0
  %93 = vmatpush2.msra.mxu0 0.0
  %94 = vmatprep.subr.mxu0 0.0
  %95 = vmatpush2.msra.mxu0 0.0
  %96 = vmatprep.subr.mxu0 0.0
  %97 = vmatpush2.msra.mxu0 0.0
  %98 = vmatprep.subr.mxu0 0.0
  %99 = vmatpush2.msra.mxu0 0.0
  %100 = vmatprep.subr.mxu0 0.0
  %101 = vmatpush2.msra.mxu0 0.0
  %102 = vmatprep.subr.mxu0 0.0
  %103 = vmatpush2.msra.mxu0 0.0
  %104 = vmatprep.subr.mxu0 0.0
  %105 = vmatpush2.msra.mxu0 0.0
  %106 = vmatprep.subr.mxu0 0.0
  %107 = vmatpush2.msra.mxu0 0.0
  %108 = vmatprep.subr.mxu0 0.0
  %109 = vmatpush2.msra.mxu0 0.0
  %110 = vmatprep.subr.mxu0 0.0
  %111 = vmatpush2.msra.mxu0 0.0
  %112 = vmatprep.subr.mxu0 0.0
  %113 = vmatpush2.msra.mxu0 0.0
  %114 = vmatprep.subr.mxu0 0.0
  %115 = vmatpush2.msra.mxu0 0.0
  %116 = vmatprep.subr.mxu0 0.0
  %117 = vmatpush2.msra.mxu0 0.0
  %118 = vmatprep.subr.mxu0 0.0
  %119 = vmatpush2.msra.mxu0 0.0
  %120 = vmatprep.mubr.f32.mxu0 0.0
  %121 = vmatmul.mubr.f32.gmra.mxu0 %v51
  %v122 = vpop.f32.mrf.mxu0
  %v123 = vadd.f32 0.0, %v122
  %v124 = vpop.f32.mrf.mxu0
  %125 = vmatprep.mubr.f32.mxu0 0.0
  %126 = vmatmul.mubr.f32.gmra.mxu0 %v54
  %v127 = vpop.f32.mrf.mxu0
  %v128 = vadd.f32 0.0, %v127
  %v129 = vpop.f32.mrf.mxu0
  %130 = vdwg.mxu0
  %v131 = vmax.f32 %v123, 0.0
  %v132 = vmax.f32 %v128, 0.0
  %v133 = vld [vmem:[%s3] sm:$0xff]
  %v134 = vld [vmem:[%s3 + $0x8] sm:$0xff]
  %v135 = vld [vmem:[%s3 + $0x10] sm:$0xff]
  %v136 = vld [vmem:[%s3 + $0x18] sm:$0xff]
  %v137 = vld [vmem:[%s3 + $0x20] sm:$0xff]
  %v138 = vld [vmem:[%s3 + $0x28] sm:$0xff]
  %v139 = vld [vmem:[%s3 + $0x30] sm:$0xff]
  %v140 = vld [vmem:[%s3 + $0x38] sm:$0xff]
  %vm141 = vcmask 523264
  %v143 = vsel %vm141, %v131, 0
  %v146 = vsel %vm141, %v132, 0
  %148 = vmatprep.subr.mxu0 0.0
  %149 = vmatpush1.msra.mxu0 0.0
  %150 = vmatprep.subr.mxu0 0.0
  %151 = vmatpush1.msra.mxu0 0.0
  %152 = vmatprep.subr.mxu0 0.0
  %153 = vmatpush1.msra.mxu0 0.0
  %154 = vmatprep.subr.mxu0 0.0
  %155 = vmatpush1.msra.mxu0 0.0
  %156 = vmatprep.subr.mxu0 0.0
  %157 = vmatpush1.msra.mxu0 0.0
  %158 = vmatprep.subr.mxu0 0.0
  %159 = vmatpush1.msra.mxu0 0.0
  %160 = vmatprep.subr.mxu0 0.0
  %161 = vmatpush1.msra.mxu0 0.0
  %162 = vmatprep.subr.mxu0 0.0
  %163 = vmatpush1.msra.mxu0 0.0
  %164 = vmatprep.subr.mxu0 0.0
  %165 = vmatpush1.msra.mxu0 %v140
  %166 = vmatprep.subr.mxu0 0.0
  %167 = vmatpush1.msra.mxu0 %v139
  %168 = vmatprep.subr.mxu0 0.0
  %169 = vmatpush1.msra.mxu0 %v138
  %170 = vmatprep.subr.mxu0 0.0
  %171 = vmatpush1.msra.mxu0 %v137
  %172 = vmatprep.subr.mxu0 0.0
  %173 = vmatpush1.msra.mxu0 %v136
  %174 = vmatprep.subr.mxu0 0.0
  %175 = vmatpush1.msra.mxu0 %v135
  %176 = vmatprep.subr.mxu0 0.0
  %177 = vmatpush1.msra.mxu0 %v134
  %178 = vmatprep.subr.mxu0 0.0
  %179 = vmatpush1.msra.mxu0 %v133
  %180 = vmatprep.subr.mxu0 0.0
  %181 = vmatpush2.msra.mxu0 0.0
  %182 = vmatprep.subr.mxu0 0.0
  %183 = vmatpush2.msra.mxu0 0.0
  %184 = vmatprep.subr.mxu0 0.0
  %185 = vmatpush2.msra.mxu0 0.0
  %186 = vmatprep.subr.mxu0 0.0
  %187 = vmatpush2.msra.mxu0 0.0
  %188 = vmatprep.subr.mxu0 0.0
  %189 = vmatpush2.msra.mxu0 0.0
  %190 = vmatprep.subr.mxu0 0.0
  %191 = vmatpush2.msra.mxu0 0.0
  %192 = vmatprep.subr.mxu0 0.0
  %193 = vmatpush2.msra.mxu0 0.0
  %194 = vmatprep.subr.mxu0 0.0
  %195 = vmatpush2.msra.mxu0 0.0
  %196 = vmatprep.subr.mxu0 0.0
  %197 = vmatpush2.msra.mxu0 0.0
  %198 = vmatprep.subr.mxu0 0.0
  %199 = vmatpush2.msra.mxu0 0.0
  %200 = vmatprep.subr.mxu0 0.0
  %201 = vmatpush2.msra.mxu0 0.0
  %202 = vmatprep.subr.mxu0 0.0
  %203 = vmatpush2.msra.mxu0 0.0
  %204 = vmatprep.subr.mxu0 0.0
  %205 = vmatpush2.msra.mxu0 0.0
  %206 = vmatprep.subr.mxu0 0.0
  %207 = vmatpush2.msra.mxu0 0.0
  %208 = vmatprep.subr.mxu0 0.0
  %209 = vmatpush2.msra.mxu0 0.0
  %210 = vmatprep.subr.mxu0 0.0
  %211 = vmatpush2.msra.mxu0 0.0
  %212 = vmatprep.mubr.f32.mxu0 0.0
  %213 = vmatmul.mubr.f32.gmra.mxu0 %v143
  %v214 = vpop.f32.mrf.mxu0
  %v215 = vadd.f32 0.0, %v214
  %v216 = vpop.f32.mrf.mxu0
  %217 = vmatprep.mubr.f32.mxu0 0.0
  %218 = vmatmul.mubr.f32.gmra.mxu0 %v146
  %v219 = vpop.f32.mrf.mxu0
  %v220 = vadd.f32 0.0, %v219
  %v221 = vpop.f32.mrf.mxu0
  %222 = vdwg.mxu0
  %v223 = vadd.f32 %v17, %v215
  %v224 = vadd.f32 %v18, %v220
  %225 = vst.msk [vmem:[%s4] sm:$0xff] %vm21, %v223
  %226 = vst.msk [vmem:[%s4 + $0x8] sm:$0xff] %vm21, %v224
  // Predicated region
  $region18: #{knowledge_pretrainer_forward.29} parent=0 // pred_check
    _
  $region19: #{knowledge_pretrainer_forward.29} parent=0 // pred_check_branch
    %228 = sbr.rel (0) target = $region21
  $region20: #{knowledge_pretrainer_forward.29} parent=0 // pred_region
    _
  $region21: #{knowledge_pretrainer_forward.29} parent=0 // pred_fallthru
    _
  // Predicated region
  $region22: #{knowledge_pretrainer_forward.29} parent=0 // pred_check
    _
  $region23: #{knowledge_pretrainer_forward.29} parent=0 // pred_check_branch
    %230 = sbr.rel (0) target = $region25
  $region24: #{knowledge_pretrainer_forward.29} parent=0 // pred_region
    _
  $region25: #{knowledge_pretrainer_forward.29} parent=0 // pred_fallthru
    _

// kernel: knowledge_pretrainer_forward.34
$region0: #{knowledge_pretrainer_forward.34}
  #allocation0 [shape = 'u32[]', space=smem, size = 0x4, offset = 0x4, fixed_abs, tag = 'smem constant byte address 0x4 - core index']
  #allocation1 [shape = 'u32[144,128]{1,0:T(1,128)}', space=vmem, size = 0x12000, scoped, tag = 'internal scratch']
  %s0 = inlined_call_operand.vmem [shape: f32[16,32], index: 0, kind: input, shape index: {}]
  %s1 = inlined_call_operand.vmem [shape: f32[1,32], index: 1, kind: input, shape index: {}]
  %s2 = inlined_call_operand.vmem [shape: f32[16,32], index: 2, kind: output, shape index: {}]
  %s3 = sld [smem:[#allocation0]]
  $region18: #{knowledge_pretrainer_forward.34} parent=0
    _
  %s5 = ssub.s32 1, %s3
  %s6 = scalar_select 0, %s5, %s3
  // Predicated region
  $region2: #{knowledge_pretrainer_forward.34} parent=0 // pred_check
    _
  $region3: #{knowledge_pretrainer_forward.34} parent=0 // pred_check_branch
    %8 = sbr.rel (0) target = $region5
  $region4: #{knowledge_pretrainer_forward.34} parent=0 // pred_region
    _
  $region5: #{knowledge_pretrainer_forward.34} parent=0 // pred_fallthru
    _
  // Predicated region
  $region6: #{knowledge_pretrainer_forward.34} parent=0 // pred_check
    _
  $region7: #{knowledge_pretrainer_forward.34} parent=0 // pred_check_branch
    %10 = sbr.rel (0) target = $region9
  $region8: #{knowledge_pretrainer_forward.34} parent=0 // pred_region
    _
  $region9: #{knowledge_pretrainer_forward.34} parent=0 // pred_fallthru
    _
  %v11 = vld [vmem:[%s0] sm:$0xff]
  %v12 = vld [vmem:[%s0 + $0x8] sm:$0xff]
  %v13 = vmul.f32 %v11, %v11
  %v14 = vmul.f32 %v12, %v12
  %vm15 = vcmask 261120
  %v16 = vsel %vm15, %v13, 0.0
  %17 = vadd.xlane.f32.xlu0 %v16
  %v18 = vpop.xlane.xlu0 %17
  %v19 = vsel %vm15, %v14, 0.0
  %20 = vadd.xlane.f32.xlu0 %v19
  %v21 = vpop.xlane.xlu0 %20
  %v22 = vrcp.pop 32.0
  %v23 = vmul.f32 %v18, %v22
  %v24 = vmul.f32 %v21, %v22
  %v25 = vadd.f32 %v23, 1e-06
  %v26 = vadd.f32 %v24, 1e-06
  %v27 = vrsqrt.pop %v25
  %v28 = vrsqrt.pop %v26
  %v29 = vmul.f32 %v11, %v27
  %v30 = vmul.f32 %v12, %v28
  %v31 = vld [vmem:[%s1] sm:$0x1]
  %v33 = vlaneseq
  %v34 = vshrl.u32 %v33, 7
  %v35 = vsub.s32 0, %v34
  %v36 = vrot.slane %v31, %v35
  %v38 = vmul.f32 %v29, %v36
  %v39 = vmul.f32 %v30, %v36
  %40 = vst.msk [vmem:[%s2] sm:$0xff] %vm15, %v38
  %41 = vst.msk [vmem:[%s2 + $0x8] sm:$0xff] %vm15, %v39
  // Predicated region
  $region10: #{knowledge_pretrainer_forward.34} parent=0 // pred_check
    _
  $region11: #{knowledge_pretrainer_forward.34} parent=0 // pred_check_branch
    %43 = sbr.rel (0) target = $region13
  $region12: #{knowledge_pretrainer_forward.34} parent=0 // pred_region
    _
  $region13: #{knowledge_pretrainer_forward.34} parent=0 // pred_fallthru
    _
  // Predicated region
  $region14: #{knowledge_pretrainer_forward.34} parent=0 // pred_check
    _
  $region15: #{knowledge_pretrainer_forward.34} parent=0 // pred_check_branch
    %45 = sbr.rel (0) target = $region17
  $region16: #{knowledge_pretrainer_forward.34} parent=0 // pred_region
    _
  $region17: #{knowledge_pretrainer_forward.34} parent=0 // pred_fallthru
    _

// kernel: knowledge_pretrainer_forward.39
$region0: #{knowledge_pretrainer_forward.39}
  #allocation0 [shape = 'u32[]', space=smem, size = 0x4, offset = 0x4, fixed_abs, tag = 'smem constant byte address 0x4 - core index']
  #allocation1 [shape = 'u32[144,128]{1,0:T(1,128)}', space=vmem, size = 0x12000, scoped, tag = 'internal scratch']
  %s0 = inlined_call_operand.vmem [shape: f32[16,32], index: 0, kind: input, shape index: {}]
  %s1 = inlined_call_operand.vmem [shape: f32[32,64], index: 1, kind: input, shape index: {}]
  %s2 = inlined_call_operand.vmem [shape: f32[16,64], index: 2, kind: output, shape index: {}]
  %s3 = sld [smem:[#allocation0]]
  $region18: #{knowledge_pretrainer_forward.39} parent=0
    _
  %s5 = ssub.s32 1, %s3
  %s6 = scalar_select 0, %s5, %s3
  // Predicated region
  $region2: #{knowledge_pretrainer_forward.39} parent=0 // pred_check
    _
  $region3: #{knowledge_pretrainer_forward.39} parent=0 // pred_check_branch
    %8 = sbr.rel (0) target = $region5
  $region4: #{knowledge_pretrainer_forward.39} parent=0 // pred_region
    _
  $region5: #{knowledge_pretrainer_forward.39} parent=0 // pred_fallthru
    _
  // Predicated region
  $region6: #{knowledge_pretrainer_forward.39} parent=0 // pred_check
    _
  $region7: #{knowledge_pretrainer_forward.39} parent=0 // pred_check_branch
    %10 = sbr.rel (0) target = $region9
  $region8: #{knowledge_pretrainer_forward.39} parent=0 // pred_region
    _
  $region9: #{knowledge_pretrainer_forward.39} parent=0 // pred_fallthru
    _
  %v11 = vld [vmem:[%s0] sm:$0xff]
  %v12 = vld [vmem:[%s0 + $0x8] sm:$0xff]
  %v13 = vld [vmem:[%s1] sm:$0xff]
  %v14 = vld [vmem:[%s1 + $0x8] sm:$0xff]
  %v15 = vld [vmem:[%s1 + $0x10] sm:$0xff]
  %v16 = vld [vmem:[%s1 + $0x18] sm:$0xff]
  %vm17 = vcmask 261120
  %v19 = vsel %vm17, %v11, 0
  %v22 = vsel %vm17, %v12, 0
  %24 = vmatprep.subr.mxu0 0.0
  %25 = vmatpush1.msra.mxu0 0.0
  %26 = vmatprep.subr.mxu0 0.0
  %27 = vmatpush1.msra.mxu0 0.0
  %28 = vmatprep.subr.mxu0 0.0
  %29 = vmatpush1.msra.mxu0 0.0
  %30 = vmatprep.subr.mxu0 0.0
  %31 = vmatpush1.msra.mxu0 0.0
  %32 = vmatprep.subr.mxu0 0.0
  %33 = vmatpush1.msra.mxu0 0.0
  %34 = vmatprep.subr.mxu0 0.0
  %35 = vmatpush1.msra.mxu0 0.0
  %36 = vmatprep.subr.mxu0 0.0
  %37 = vmatpush1.msra.mxu0 0.0
  %38 = vmatprep.subr.mxu0 0.0
  %39 = vmatpush1.msra.mxu0 0.0
  %40 = vmatprep.subr.mxu0 0.0
  %41 = vmatpush1.msra.mxu0 0.0
  %42 = vmatprep.subr.mxu0 0.0
  %43 = vmatpush1.msra.mxu0 0.0
  %44 = vmatprep.subr.mxu0 0.0
  %45 = vmatpush1.msra.mxu0 0.0
  %46 = vmatprep.subr.mxu0 0.0
  %47 = vmatpush1.msra.mxu0 0.0
  %48 = vmatprep.subr.mxu0 0.0
  %49 = vmatpush1.msra.mxu0 %v16
  %50 = vmatprep.subr.mxu0 0.0
  %51 = vmatpush1.msra.mxu0 %v15
  %52 = vmatprep.subr.mxu0 0.0
  %53 = vmatpush1.msra.mxu0 %v14
  %54 = vmatprep.subr.mxu0 0.0
  %55 = vmatpush1.msra.mxu0 %v13
  %56 = vmatprep.subr.mxu0 0.0
  %57 = vmatpush2.msra.mxu0 0.0
  %58 = vmatprep.subr.mxu0 0.0
  %59 = vmatpush2.msra.mxu0 0.0
  %60 = vmatprep.subr.mxu0 0.0
  %61 = vmatpush2.msra.mxu0 0.0
  %62 = vmatprep.subr.mxu0 0.0
  %63 = vmatpush2.msra.mxu0 0.0
  %64 = vmatprep.subr.mxu0 0.0
  %65 = vmatpush2.msra.mxu0 0.0
  %66 = vmatprep.subr.mxu0 0.0
  %67 = vmatpush2.msra.mxu0 0.0
  %68 = vmatprep.subr.mxu0 0.0
  %69 = vmatpush2.msra.mxu0 0.0
  %70 = vmatprep.subr.mxu0 0.0
  %71 = vmatpush2.msra.mxu0 0.0
  %72 = vmatprep.subr.mxu0 0.0
  %73 = vmatpush2.msra.mxu0 0.0
  %74 = vmatprep.subr.mxu0 0.0
  %75 = vmatpush2.msra.mxu0 0.0
  %76 = vmatprep.subr.mxu0 0.0
  %77 = vmatpush2.msra.mxu0 0.0
  %78 = vmatprep.subr.mxu0 0.0
  %79 = vmatpush2.msra.mxu0 0.0
  %80 = vmatprep.subr.mxu0 0.0
  %81 = vmatpush2.msra.mxu0 0.0
  %82 = vmatprep.subr.mxu0 0.0
  %83 = vmatpush2.msra.mxu0 0.0
  %84 = vmatprep.subr.mxu0 0.0
  %85 = vmatpush2.msra.mxu0 0.0
  %86 = vmatprep.subr.mxu0 0.0
  %87 = vmatpush2.msra.mxu0 0.0
  %88 = vmatprep.mubr.f32.mxu0 0.0
  %89 = vmatmul.mubr.f32.gmra.mxu0 %v19
  %v90 = vpop.f32.mrf.mxu0
  %v91 = vadd.f32 0.0, %v90
  %v92 = vpop.f32.mrf.mxu0
  %93 = vmatprep.mubr.f32.mxu0 0.0
  %94 = vmatmul.mubr.f32.gmra.mxu0 %v22
  %v95 = vpop.f32.mrf.mxu0
  %v96 = vadd.f32 0.0, %v95
  %v97 = vpop.f32.mrf.mxu0
  %98 = vdwg.mxu0
  %vm99 = vcmask 523264
  %100 = vst.msk [vmem:[%s2] sm:$0xff] %vm99, %v91
  %101 = vst.msk [vmem:[%s2 + $0x8] sm:$0xff] %vm99, %v96
  // Predicated region
  $region10: #{knowledge_pretrainer_forward.39} parent=0 // pred_check
    _
  $region11: #{knowledge_pretrainer_forward.39} parent=0 // pred_check_branch
    %103 = sbr.rel (0) target = $region13
  $region12: #{knowledge_pretrainer_forward.39} parent=0 // pred_region
    _
  $region13: #{knowledge_pretrainer_forward.39} parent=0 // pred_fallthru
    _
  // Predicated region
  $region14: #{knowledge_pretrainer_forward.39} parent=0 // pred_check
    _
  $region15: #{knowledge_pretrainer_forward.39} parent=0 // pred_check_branch
    %105 = sbr.rel (0) target = $region17
  $region16: #{knowledge_pretrainer_forward.39} parent=0 // pred_region
    _
  $region17: #{knowledge_pretrainer_forward.39} parent=0 // pred_fallthru
    _

// kernel: knowledge_pretrainer_forward.27
$region0: #{knowledge_pretrainer_forward.27}
  #allocation0 [shape = 'u32[]', space=smem, size = 0x4, offset = 0x4, fixed_abs, tag = 'smem constant byte address 0x4 - core index']
  #allocation1 [shape = 'u32[144,128]{1,0:T(1,128)}', space=vmem, size = 0x12000, scoped, tag = 'internal scratch']
  %s0 = inlined_call_operand.vmem [shape: f32[8,8,8], index: 0, kind: input, shape index: {}]
  %s1 = inlined_call_operand.vmem [shape: f32[8,8,8], index: 1, kind: input, shape index: {}]
  %s2 = inlined_call_operand.vmem [shape: f32[8,8,8], index: 2, kind: input, shape index: {}]
  %s3 = inlined_call_operand.vmem [shape: f32[4,8,8], index: 3, kind: input, shape index: {}]
  %s4 = inlined_call_operand.vmem [shape: f32[2,1,8], index: 4, kind: input, shape index: {}]
  %s5 = inlined_call_operand.vmem [shape: f32[8,8,8], index: 5, kind: output, shape index: {}]
  %s6 = sld [smem:[#allocation0]]
  $region30: #{knowledge_pretrainer_forward.27} parent=0
    _
  %s8 = ssub.s32 1, %s6
  %s9 = scalar_select 0, %s8, %s6
  // Predicated region
  $region2: #{knowledge_pretrainer_forward.27} parent=0 // pred_check
    _
  $region3: #{knowledge_pretrainer_forward.27} parent=0 // pred_check_branch
    %11 = sbr.rel (0) target = $region5
  $region4: #{knowledge_pretrainer_forward.27} parent=0 // pred_region
    _
  $region5: #{knowledge_pretrainer_forward.27} parent=0 // pred_fallthru
    _
  // Predicated region
  $region6: #{knowledge_pretrainer_forward.27} parent=0 // pred_check
    _
  $region7: #{knowledge_pretrainer_forward.27} parent=0 // pred_check_branch
    %13 = sbr.rel (0) target = $region9
  $region8: #{knowledge_pretrainer_forward.27} parent=0 // pred_region
    _
  $region9: #{knowledge_pretrainer_forward.27} parent=0 // pred_fallthru
    _
  // Predicated region
  $region10: #{knowledge_pretrainer_forward.27} parent=0 // pred_check
    _
  $region11: #{knowledge_pretrainer_forward.27} parent=0 // pred_check_branch
    %15 = sbr.rel (0) target = $region13
  $region12: #{knowledge_pretrainer_forward.27} parent=0 // pred_region
    _
  $region13: #{knowledge_pretrainer_forward.27} parent=0 // pred_fallthru
    _
  // Predicated region
  $region14: #{knowledge_pretrainer_forward.27} parent=0 // pred_check
    _
  $region15: #{knowledge_pretrainer_forward.27} parent=0 // pred_check_branch
    %17 = sbr.rel (0) target = $region17
  $region16: #{knowledge_pretrainer_forward.27} parent=0 // pred_region
    _
  $region17: #{knowledge_pretrainer_forward.27} parent=0 // pred_fallthru
    _
  // Predicated region
  $region18: #{knowledge_pretrainer_forward.27} parent=0 // pred_check
    _
  $region19: #{knowledge_pretrainer_forward.27} parent=0 // pred_check_branch
    %19 = sbr.rel (0) target = $region21
  $region20: #{knowledge_pretrainer_forward.27} parent=0 // pred_region
    _
  $region21: #{knowledge_pretrainer_forward.27} parent=0 // pred_fallthru
    _
  %v20 = vld [vmem:[%s0] sm:$0xff]
  %v21 = vld [vmem:[%s0 + $0x8] sm:$0xff]
  %v22 = vld [vmem:[%s0 + $0x10] sm:$0xff]
  %v23 = vld [vmem:[%s0 + $0x18] sm:$0xff]
  %v24 = vld [vmem:[%s0 + $0x20] sm:$0xff]
  %v25 = vld [vmem:[%s0 + $0x28] sm:$0xff]
  %v26 = vld [vmem:[%s0 + $0x30] sm:$0xff]
  %v27 = vld [vmem:[%s0 + $0x38] sm:$0xff]
  %v28 = vld [vmem:[%s1] sm:$0xff]
  %v29 = vld [vmem:[%s1 + $0x8] sm:$0xff]
  %v30 = vld [vmem:[%s1 + $0x10] sm:$0xff]
  %v31 = vld [vmem:[%s1 + $0x18] sm:$0xff]
  %v32 = vld [vmem:[%s1 + $0x20] sm:$0xff]
  %v33 = vld [vmem:[%s1 + $0x28] sm:$0xff]
  %v34 = vld [vmem:[%s1 + $0x30] sm:$0xff]
  %v35 = vld [vmem:[%s1 + $0x38] sm:$0xff]
  %v36 = vld [vmem:[%s2] sm:$0xff]
  %v37 = vld [vmem:[%s2 + $0x8] sm:$0xff]
  %v38 = vld [vmem:[%s2 + $0x10] sm:$0xff]
  %v39 = vld [vmem:[%s2 + $0x18] sm:$0xff]
  %v40 = vld [vmem:[%s2 + $0x20] sm:$0xff]
  %v41 = vld [vmem:[%s2 + $0x28] sm:$0xff]
  %v42 = vld [vmem:[%s2 + $0x30] sm:$0xff]
  %v43 = vld [vmem:[%s2 + $0x38] sm:$0xff]
  %vm44 = vcmask 64512
  %v46 = vsel %vm44, %v20, 0
  %v49 = vsel %vm44, %v28, 0
  %51 = vmatprep.subr.mxu0 0.0
  %52 = vmatpush1.xpose.msra.mxu0 0.0
  %53 = vmatprep.subr.mxu0 0.0
  %54 = vmatpush1.xpose.msra.mxu0 0.0
  %55 = vmatprep.subr.mxu0 0.0
  %56 = vmatpush1.xpose.msra.mxu0 0.0
  %57 = vmatprep.subr.mxu0 0.0
  %58 = vmatpush1.xpose.msra.mxu0 0.0
  %59 = vmatprep.subr.mxu0 0.0
  %60 = vmatpush1.xpose.msra.mxu0 0.0
  %61 = vmatprep.subr.mxu0 0.0
  %62 = vmatpush1.xpose.msra.mxu0 0.0
  %63 = vmatprep.subr.mxu0 0.0
  %64 = vmatpush1.xpose.msra.mxu0 0.0
  %65 = vmatprep.subr.mxu0 0.0
  %66 = vmatpush1.xpose.msra.mxu0 0.0
  %67 = vmatprep.subr.mxu0 0.0
  %68 = vmatpush1.xpose.msra.mxu0 0.0
  %69 = vmatprep.subr.mxu0 0.0
  %70 = vmatpush1.xpose.msra.mxu0 0.0
  %71 = vmatprep.subr.mxu0 0.0
  %72 = vmatpush1.xpose.msra.mxu0 0.0
  %73 = vmatprep.subr.mxu0 0.0
  %74 = vmatpush1.xpose.msra.mxu0 0.0
  %75 = vmatprep.subr.mxu0 0.0
  %76 = vmatpush1.xpose.msra.mxu0 0.0
  %77 = vmatprep.subr.mxu0 0.0
  %78 = vmatpush1.xpose.msra.mxu0 0.0
  %79 = vmatprep.subr.mxu0 0.0
  %80 = vmatpush1.xpose.msra.mxu0 0.0
  %81 = vmatprep.subr.mxu0 0.0
  %82 = vmatpush1.xpose.msra.mxu0 %v49
  %83 = vmatprep.subr.mxu0 0.0
  %84 = vmatpush2.xpose.msra.mxu0 0.0
  %85 = vmatprep.subr.mxu0 0.0
  %86 = vmatpush2.xpose.msra.mxu0 0.0
  %87 = vmatprep.subr.mxu0 0.0
  %88 = vmatpush2.xpose.msra.mxu0 0.0
  %89 = vmatprep.subr.mxu0 0.0
  %90 = vmatpush2.xpose.msra.mxu0 0.0
  %91 = vmatprep.subr.mxu0 0.0
  %92 = vmatpush2.xpose.msra.mxu0 0.0
  %93 = vmatprep.subr.mxu0 0.0
  %94 = vmatpush2.xpose.msra.mxu0 0.0
  %95 = vmatprep.subr.mxu0 0.0
  %96 = vmatpush2.xpose.msra.mxu0 0.0
  %97 = vmatprep.subr.mxu0 0.0
  %98 = vmatpush2.xpose.msra.mxu0 0.0
  %99 = vmatprep.subr.mxu0 0.0
  %100 = vmatpush2.xpose.msra.mxu0 0.0
  %101 = vmatprep.subr.mxu0 0.0
  %102 = vmatpush2.xpose.msra.mxu0 0.0
  %103 = vmatprep.subr.mxu0 0.0
  %104 = vmatpush2.xpose.msra.mxu0 0.0
  %105 = vmatprep.subr.mxu0 0.0
  %106 = vmatpush2.xpose.msra.mxu0 0.0
  %107 = vmatprep.subr.mxu0 0.0
  %108 = vmatpush2.xpose.msra.mxu0 0.0
  %109 = vmatprep.subr.mxu0 0.0
  %110 = vmatpush2.xpose.msra.mxu0 0.0
  %111 = vmatprep.subr.mxu0 0.0
  %112 = vmatpush2.xpose.msra.mxu0 0.0
  %113 = vmatprep.subr.mxu0 0.0
  %114 = vmatpush2.xpose.msra.mxu0 0.0
  %115 = vmatprep.mubr.f32.mxu0 0.0
  %116 = vmatmul.mubr.f32.gmra.mxu0 %v46
  %v117 = vpop.f32.mrf.mxu0
  %v118 = vadd.f32 0.0, %v117
  %v119 = vpop.f32.mrf.mxu0
  %120 = vdwg.mxu0
  %v122 = vsel %vm44, %v21, 0
  %v125 = vsel %vm44, %v29, 0
  %127 = vmatprep.subr.mxu0 0.0
  %128 = vmatpush1.xpose.msra.mxu0 0.0
  %129 = vmatprep.subr.mxu0 0.0
  %130 = vmatpush1.xpose.msra.mxu0 0.0
  %131 = vmatprep.subr.mxu0 0.0
  %132 = vmatpush1.xpose.msra.mxu0 0.0
  %133 = vmatprep.subr.mxu0 0.0
  %134 = vmatpush1.xpose.msra.mxu0 0.0
  %135 = vmatprep.subr.mxu0 0.0
  %136 = vmatpush1.xpose.msra.mxu0 0.0
  %137 = vmatprep.subr.mxu0 0.0
  %138 = vmatpush1.xpose.msra.mxu0 0.0
  %139 = vmatprep.subr.mxu0 0.0
  %140 = vmatpush1.xpose.msra.mxu0 0.0
  %141 = vmatprep.subr.mxu0 0.0
  %142 = vmatpush1.xpose.msra.mxu0 0.0
  %143 = vmatprep.subr.mxu0 0.0
  %144 = vmatpush1.xpose.msra.mxu0 0.0
  %145 = vmatprep.subr.mxu0 0.0
  %146 = vmatpush1.xpose.msra.mxu0 0.0
  %147 = vmatprep.subr.mxu0 0.0
  %148 = vmatpush1.xpose.msra.mxu0 0.0
  %149 = vmatprep.subr.mxu0 0.0
  %150 = vmatpush1.xpose.msra.mxu0 0.0
  %151 = vmatprep.subr.mxu0 0.0
  %152 = vmatpush1.xpose.msra.mxu0 0.0
  %153 = vmatprep.subr.mxu0 0.0
  %154 = vmatpush1.xpose.msra.mxu0 0.0
  %155 = vmatprep.subr.mxu0 0.0
  %156 = vmatpush1.xpose.msra.mxu0 0.0
  %157 = vmatprep.subr.mxu0 0.0
  %158 = vmatpush1.xpose.msra.mxu0 %v125
  %159 = vmatprep.subr.mxu0 0.0
  %160 = vmatpush2.xpose.msra.mxu0 0.0
  %161 = vmatprep.subr.mxu0 0.0
  %162 = vmatpush2.xpose.msra.mxu0 0.0
  %163 = vmatprep.subr.mxu0 0.0
  %164 = vmatpush2.xpose.msra.mxu0 0.0
  %165 = vmatprep.subr.mxu0 0.0
  %166 = vmatpush2.xpose.msra.mxu0 0.0
  %167 = vmatprep.subr.mxu0 0.0
  %168 = vmatpush2.xpose.msra.mxu0 0.0
  %169 = vmatprep.subr.mxu0 0.0
  %170 = vmatpush2.xpose.msra.mxu0 0.0
  %171 = vmatprep.subr.mxu0 0.0
  %172 = vmatpush2.xpose.msra.mxu0 0.0
  %173 = vmatprep.subr.mxu0 0.0
  %174 = vmatpush2.xpose.msra.mxu0 0.0
  %175 = vmatprep.subr.mxu0 0.0
  %176 = vmatpush2.xpose.msra.mxu0 0.0
  %177 = vmatprep.subr.mxu0 0.0
  %178 = vmatpush2.xpose.msra.mxu0 0.0
  %179 = vmatprep.subr.mxu0 0.0
  %180 = vmatpush2.xpose.msra.mxu0 0.0
  %181 = vmatprep.subr.mxu0 0.0
  %182 = vmatpush2.xpose.msra.mxu0 0.0
  %183 = vmatprep.subr.mxu0 0.0
  %184 = vmatpush2.xpose.msra.mxu0 0.0
  %185 = vmatprep.subr.mxu0 0.0
  %186 = vmatpush2.xpose.msra.mxu0 0.0
  %187 = vmatprep.subr.mxu0 0.0
  %188 = vmatpush2.xpose.msra.mxu0 0.0
  %189 = vmatprep.subr.mxu0 0.0
  %190 = vmatpush2.xpose.msra.mxu0 0.0
  %191 = vmatprep.mubr.f32.mxu0 0.0
  %192 = vmatmul.mubr.f32.gmra.mxu0 %v122
  %v193 = vpop.f32.mrf.mxu0
  %v194 = vadd.f32 0.0, %v193
  %v195 = vpop.f32.mrf.mxu0
  %196 = vdwg.mxu0
  %v198 = vsel %vm44, %v22, 0
  %v201 = vsel %vm44, %v30, 0
  %203 = vmatprep.subr.mxu0 0.0
  %204 = vmatpush1.xpose.msra.mxu0 0.0
  %205 = vmatprep.subr.mxu0 0.0
  %206 = vmatpush1.xpose.msra.mxu0 0.0
  %207 = vmatprep.subr.mxu0 0.0
  %208 = vmatpush1.xpose.msra.mxu0 0.0
  %209 = vmatprep.subr.mxu0 0.0
  %210 = vmatpush1.xpose.msra.mxu0 0.0
  %211 = vmatprep.subr.mxu0 0.0
  %212 = vmatpush1.xpose.msra.mxu0 0.0
  %213 = vmatprep.subr.mxu0 0.0
  %214 = vmatpush1.xpose.msra.mxu0 0.0
  %215 = vmatprep.subr.mxu0 0.0
  %216 = vmatpush1.xpose.msra.mxu0 0.0
  %217 = vmatprep.subr.mxu0 0.0
  %218 = vmatpush1.xpose.msra.mxu0 0.0
  %219 = vmatprep.subr.mxu0 0.0
  %220 = vmatpush1.xpose.msra.mxu0 0.0
  %221 = vmatprep.subr.mxu0 0.0
  %222 = vmatpush1.xpose.msra.mxu0 0.0
  %223 = vmatprep.subr.mxu0 0.0
  %224 = vmatpush1.xpose.msra.mxu0 0.0
  %225 = vmatprep.subr.mxu0 0.0
  %226 = vmatpush1.xpose.msra.mxu0 0.0
  %227 = vmatprep.subr.mxu0 0.0
  %228 = vmatpush1.xpose.msra.mxu0 0.0
  %229 = vmatprep.subr.mxu0 0.0
  %230 = vmatpush1.xpose.msra.mxu0 0.0
  %231 = vmatprep.subr.mxu0 0.0
  %232 = vmatpush1.xpose.msra.mxu0 0.0
  %233 = vmatprep.subr.mxu0 0.0
  %234 = vmatpush1.xpose.msra.mxu0 %v201
  %235 = vmatprep.subr.mxu0 0.0
  %236 = vmatpush2.xpose.msra.mxu0 0.0
  %237 = vmatprep.subr.mxu0 0.0
  %238 = vmatpush2.xpose.msra.mxu0 0.0
  %239 = vmatprep.subr.mxu0 0.0
  %240 = vmatpush2.xpose.msra.mxu0 0.0
  %241 = vmatprep.subr.mxu0 0.0
  %242 = vmatpush2.xpose.msra.mxu0 0.0
  %243 = vmatprep.subr.mxu0 0.0
  %244 = vmatpush2.xpose.msra.mxu0 0.0
  %245 = vmatprep.subr.mxu0 0.0
  %246 = vmatpush2.xpose.msra.mxu0 0.0
  %247 = vmatprep.subr.mxu0 0.0
  %248 = vmatpush2.xpose.msra.mxu0 0.0
  %249 = vmatprep.subr.mxu0 0.0
  %250 = vmatpush2.xpose.msra.mxu0 0.0
  %251 = vmatprep.subr.mxu0 0.0
  %252 = vmatpush2.xpose.msra.mxu0 0.0
  %253 = vmatprep.subr.mxu0 0.0
  %254 = vmatpush2.xpose.msra.mxu0 0.0
  %255 = vmatprep.subr.mxu0 0.0
  %256 = vmatpush2.xpose.msra.mxu0 0.0
  %257 = vmatprep.subr.mxu0 0.0
  %258 = vmatpush2.xpose.msra.mxu0 0.0
  %259 = vmatprep.subr.mxu0 0.0
  %260 = vmatpush2.xpose.msra.mxu0 0.0
  %261 = vmatprep.subr.mxu0 0.0
  %262 = vmatpush2.xpose.msra.mxu0 0.0
  %263 = vmatprep.subr.mxu0 0.0
  %264 = vmatpush2.xpose.msra.mxu0 0.0
  %265 = vmatprep.subr.mxu0 0.0
  %266 = vmatpush2.xpose.msra.mxu0 0.0
  %267 = vmatprep.mubr.f32.mxu0 0.0
  %268 = vmatmul.mubr.f32.gmra.mxu0 %v198
  %v269 = vpop.f32.mrf.mxu0
  %v270 = vadd.f32 0.0, %v269
  %v271 = vpop.f32.mrf.mxu0
  %272 = vdwg.mxu0
  %v274 = vsel %vm44, %v23, 0
  %v277 = vsel %vm44, %v31, 0
  %279 = vmatprep.subr.mxu0 0.0
  %280 = vmatpush1.xpose.msra.mxu0 0.0
  %281 = vmatprep.subr.mxu0 0.0
  %282 = vmatpush1.xpose.msra.mxu0 0.0
  %283 = vmatprep.subr.mxu0 0.0
  %284 = vmatpush1.xpose.msra.mxu0 0.0
  %285 = vmatprep.subr.mxu0 0.0
  %286 = vmatpush1.xpose.msra.mxu0 0.0
  %287 = vmatprep.subr.mxu0 0.0
  %288 = vmatpush1.xpose.msra.mxu0 0.0
  %289 = vmatprep.subr.mxu0 0.0
  %290 = vmatpush1.xpose.msra.mxu0 0.0
  %291 = vmatprep.subr.mxu0 0.0
  %292 = vmatpush1.xpose.msra.mxu0 0.0
  %293 = vmatprep.subr.mxu0 0.0
  %294 = vmatpush1.xpose.msra.mxu0 0.0
  %295 = vmatprep.subr.mxu0 0.0
  %296 = vmatpush1.xpose.msra.mxu0 0.0
  %297 = vmatprep.subr.mxu0 0.0
  %298 = vmatpush1.xpose.msra.mxu0 0.0
  %299 = vmatprep.subr.mxu0 0.0
  %300 = vmatpush1.xpose.msra.mxu0 0.0
  %301 = vmatprep.subr.mxu0 0.0
  %302 = vmatpush1.xpose.msra.mxu0 0.0
  %303 = vmatprep.subr.mxu0 0.0
  %304 = vmatpush1.xpose.msra.mxu0 0.0
  %305 = vmatprep.subr.mxu0 0.0
  %306 = vmatpush1.xpose.msra.mxu0 0.0
  %307 = vmatprep.subr.mxu0 0.0
  %308 = vmatpush1.xpose.msra.mxu0 0.0
  %309 = vmatprep.subr.mxu0 0.0
  %310 = vmatpush1.xpose.msra.mxu0 %v277
  %311 = vmatprep.subr.mxu0 0.0
  %312 = vmatpush2.xpose.msra.mxu0 0.0
  %313 = vmatprep.subr.mxu0 0.0
  %314 = vmatpush2.xpose.msra.mxu0 0.0
  %315 = vmatprep.subr.mxu0 0.0
  %316 = vmatpush2.xpose.msra.mxu0 0.0
  %317 = vmatprep.subr.mxu0 0.0
  %318 = vmatpush2.xpose.msra.mxu0 0.0
  %319 = vmatprep.subr.mxu0 0.0
  %320 = vmatpush2.xpose.msra.mxu0 0.0
  %321 = vmatprep.subr.mxu0 0.0
  %322 = vmatpush2.xpose.msra.mxu0 0.0
  %323 = vmatprep.subr.mxu0 0.0
  %324 = vmatpush2.xpose.msra.mxu0 0.0
  %325 = vmatprep.subr.mxu0 0.0
  %326 = vmatpush2.xpose.msra.mxu0 0.0
  %327 = vmatprep.subr.mxu0 0.0
  %328 = vmatpush2.xpose.msra.mxu0 0.0
  %329 = vmatprep.subr.mxu0 0.0
  %330 = vmatpush2.xpose.msra.mxu0 0.0
  %331 = vmatprep.subr.mxu0 0.0
  %332 = vmatpush2.xpose.msra.mxu0 0.0
  %333 = vmatprep.subr.mxu0 0.0
  %334 = vmatpush2.xpose.msra.mxu0 0.0
  %335 = vmatprep.subr.mxu0 0.0
  %336 = vmatpush2.xpose.msra.mxu0 0.0
  %337 = vmatprep.subr.mxu0 0.0
  %338 = vmatpush2.xpose.msra.mxu0 0.0
  %339 = vmatprep.subr.mxu0 0.0
  %340 = vmatpush2.xpose.msra.mxu0 0.0
  %341 = vmatprep.subr.mxu0 0.0
  %342 = vmatpush2.xpose.msra.mxu0 0.0
  %343 = vmatprep.mubr.f32.mxu0 0.0
  %344 = vmatmul.mubr.f32.gmra.mxu0 %v274
  %v345 = vpop.f32.mrf.mxu0
  %v346 = vadd.f32 0.0, %v345
  %v347 = vpop.f32.mrf.mxu0
  %348 = vdwg.mxu0
  %v350 = vsel %vm44, %v24, 0
  %v353 = vsel %vm44, %v32, 0
  %355 = vmatprep.subr.mxu0 0.0
  %356 = vmatpush1.xpose.msra.mxu0 0.0
  %357 = vmatprep.subr.mxu0 0.0
  %358 = vmatpush1.xpose.msra.mxu0 0.0
  %359 = vmatprep.subr.mxu0 0.0
  %360 = vmatpush1.xpose.msra.mxu0 0.0
  %361 = vmatprep.subr.mxu0 0.0
  %362 = vmatpush1.xpose.msra.mxu0 0.0
  %363 = vmatprep.subr.mxu0 0.0
  %364 = vmatpush1.xpose.msra.mxu0 0.0
  %365 = vmatprep.subr.mxu0 0.0
  %366 = vmatpush1.xpose.msra.mxu0 0.0
  %367 = vmatprep.subr.mxu0 0.0
  %368 = vmatpush1.xpose.msra.mxu0 0.0
  %369 = vmatprep.subr.mxu0 0.0
  %370 = vmatpush1.xpose.msra.mxu0 0.0
  %371 = vmatprep.subr.mxu0 0.0
  %372 = vmatpush1.xpose.msra.mxu0 0.0
  %373 = vmatprep.subr.mxu0 0.0
  %374 = vmatpush1.xpose.msra.mxu0 0.0
  %375 = vmatprep.subr.mxu0 0.0
  %376 = vmatpush1.xpose.msra.mxu0 0.0
  %377 = vmatprep.subr.mxu0 0.0
  %378 = vmatpush1.xpose.msra.mxu0 0.0
  %379 = vmatprep.subr.mxu0 0.0
  %380 = vmatpush1.xpose.msra.mxu0 0.0
  %381 = vmatprep.subr.mxu0 0.0
  %382 = vmatpush1.xpose.msra.mxu0 0.0
  %383 = vmatprep.subr.mxu0 0.0
  %384 = vmatpush1.xpose.msra.mxu0 0.0
  %385 = vmatprep.subr.mxu0 0.0
  %386 = vmatpush1.xpose.msra.mxu0 %v353
  %387 = vmatprep.subr.mxu0 0.0
  %388 = vmatpush2.xpose.msra.mxu0 0.0
  %389 = vmatprep.subr.mxu0 0.0
  %390 = vmatpush2.xpose.msra.mxu0 0.0
  %391 = vmatprep.subr.mxu0 0.0
  %392 = vmatpush2.xpose.msra.mxu0 0.0
  %393 = vmatprep.subr.mxu0 0.0
  %394 = vmatpush2.xpose.msra.mxu0 0.0
  %395 = vmatprep.subr.mxu0 0.0
  %396 = vmatpush2.xpose.msra.mxu0 0.0
  %397 = vmatprep.subr.mxu0 0.0
  %398 = vmatpush2.xpose.msra.mxu0 0.0
  %399 = vmatprep.subr.mxu0 0.0
  %400 = vmatpush2.xpose.msra.mxu0 0.0
  %401 = vmatprep.subr.mxu0 0.0
  %402 = vmatpush2.xpose.msra.mxu0 0.0
  %403 = vmatprep.subr.mxu0 0.0
  %404 = vmatpush2.xpose.msra.mxu0 0.0
  %405 = vmatprep.subr.mxu0 0.0
  %406 = vmatpush2.xpose.msra.mxu0 0.0
  %407 = vmatprep.subr.mxu0 0.0
  %408 = vmatpush2.xpose.msra.mxu0 0.0
  %409 = vmatprep.subr.mxu0 0.0
  %410 = vmatpush2.xpose.msra.mxu0 0.0
  %411 = vmatprep.subr.mxu0 0.0
  %412 = vmatpush2.xpose.msra.mxu0 0.0
  %413 = vmatprep.subr.mxu0 0.0
  %414 = vmatpush2.xpose.msra.mxu0 0.0
  %415 = vmatprep.subr.mxu0 0.0
  %416 = vmatpush2.xpose.msra.mxu0 0.0
  %417 = vmatprep.subr.mxu0 0.0
  %418 = vmatpush2.xpose.msra.mxu0 0.0
  %419 = vmatprep.mubr.f32.mxu0 0.0
  %420 = vmatmul.mubr.f32.gmra.mxu0 %v350
  %v421 = vpop.f32.mrf.mxu0
  %v422 = vadd.f32 0.0, %v421
  %v423 = vpop.f32.mrf.mxu0
  %424 = vdwg.mxu0
  %v426 = vsel %vm44, %v25, 0
  %v429 = vsel %vm44, %v33, 0
  %431 = vmatprep.subr.mxu0 0.0
  %432 = vmatpush1.xpose.msra.mxu0 0.0
  %433 = vmatprep.subr.mxu0 0.0
  %434 = vmatpush1.xpose.msra.mxu0 0.0
  %435 = vmatprep.subr.mxu0 0.0
  %436 = vmatpush1.xpose.msra.mxu0 0.0
  %437 = vmatprep.subr.mxu0 0.0
  %438 = vmatpush1.xpose.msra.mxu0 0.0
  %439 = vmatprep.subr.mxu0 0.0
  %440 = vmatpush1.xpose.msra.mxu0 0.0
  %441 = vmatprep.subr.mxu0 0.0
  %442 = vmatpush1.xpose.msra.mxu0 0.0
  %443 = vmatprep.subr.mxu0 0.0
  %444 = vmatpush1.xpose.msra.mxu0 0.0
  %445 = vmatprep.subr.mxu0 0.0
  %446 = vmatpush1.xpose.msra.mxu0 0.0
  %447 = vmatprep.subr.mxu0 0.0
  %448 = vmatpush1.xpose.msra.mxu0 0.0
  %449 = vmatprep.subr.mxu0 0.0
  %450 = vmatpush1.xpose.msra.mxu0 0.0
  %451 = vmatprep.subr.mxu0 0.0
  %452 = vmatpush1.xpose.msra.mxu0 0.0
  %453 = vmatprep.subr.mxu0 0.0
  %454 = vmatpush1.xpose.msra.mxu0 0.0
  %455 = vmatprep.subr.mxu0 0.0
  %456 = vmatpush1.xpose.msra.mxu0 0.0
  %457 = vmatprep.subr.mxu0 0.0
  %458 = vmatpush1.xpose.msra.mxu0 0.0
  %459 = vmatprep.subr.mxu0 0.0
  %460 = vmatpush1.xpose.msra.mxu0 0.0
  %461 = vmatprep.subr.mxu0 0.0
  %462 = vmatpush1.xpose.msra.mxu0 %v429
  %463 = vmatprep.subr.mxu0 0.0
  %464 = vmatpush2.xpose.msra.mxu0 0.0
  %465 = vmatprep.subr.mxu0 0.0
  %466 = vmatpush2.xpose.msra.mxu0 0.0
  %467 = vmatprep.subr.mxu0 0.0
  %468 = vmatpush2.xpose.msra.mxu0 0.0
  %469 = vmatprep.subr.mxu0 0.0
  %470 = vmatpush2.xpose.msra.mxu0 0.0
  %471 = vmatprep.subr.mxu0 0.0
  %472 = vmatpush2.xpose.msra.mxu0 0.0
  %473 = vmatprep.subr.mxu0 0.0
  %474 = vmatpush2.xpose.msra.mxu0 0.0
  %475 = vmatprep.subr.mxu0 0.0
  %476 = vmatpush2.xpose.msra.mxu0 0.0
  %477 = vmatprep.subr.mxu0 0.0
  %478 = vmatpush2.xpose.msra.mxu0 0.0
  %479 = vmatprep.subr.mxu0 0.0
  %480 = vmatpush2.xpose.msra.mxu0 0.0
  %481 = vmatprep.subr.mxu0 0.0
  %482 = vmatpush2.xpose.msra.mxu0 0.0
  %483 = vmatprep.subr.mxu0 0.0
  %484 = vmatpush2.xpose.msra.mxu0 0.0
  %485 = vmatprep.subr.mxu0 0.0
  %486 = vmatpush2.xpose.msra.mxu0 0.0
  %487 = vmatprep.subr.mxu0 0.0
  %488 = vmatpush2.xpose.msra.mxu0 0.0
  %489 = vmatprep.subr.mxu0 0.0
  %490 = vmatpush2.xpose.msra.mxu0 0.0
  %491 = vmatprep.subr.mxu0 0.0
  %492 = vmatpush2.xpose.msra.mxu0 0.0
  %493 = vmatprep.subr.mxu0 0.0
  %494 = vmatpush2.xpose.msra.mxu0 0.0
  %495 = vmatprep.mubr.f32.mxu0 0.0
  %496 = vmatmul.mubr.f32.gmra.mxu0 %v426
  %v497 = vpop.f32.mrf.mxu0
  %v498 = vadd.f32 0.0, %v497
  %v499 = vpop.f32.mrf.mxu0
  %500 = vdwg.mxu0
  %v502 = vsel %vm44, %v26, 0
  %v505 = vsel %vm44, %v34, 0
  %507 = vmatprep.subr.mxu0 0.0
  %508 = vmatpush1.xpose.msra.mxu0 0.0
  %509 = vmatprep.subr.mxu0 0.0
  %510 = vmatpush1.xpose.msra.mxu0 0.0
  %511 = vmatprep.subr.mxu0 0.0
  %512 = vmatpush1.xpose.msra.mxu0 0.0
  %513 = vmatprep.subr.mxu0 0.0
  %514 = vmatpush1.xpose.msra.mxu0 0.0
  %515 = vmatprep.subr.mxu0 0.0
  %516 = vmatpush1.xpose.msra.mxu0 0.0
  %517 = vmatprep.subr.mxu0 0.0
  %518 = vmatpush1.xpose.msra.mxu0 0.0
  %519 = vmatprep.subr.mxu0 0.0
  %520 = vmatpush1.xpose.msra.mxu0 0.0
  %521 = vmatprep.subr.mxu0 0.0
  %522 = vmatpush1.xpose.msra.mxu0 0.0
  %523 = vmatprep.subr.mxu0 0.0
  %524 = vmatpush1.xpose.msra.mxu0 0.0
  %525 = vmatprep.subr.mxu0 0.0
  %526 = vmatpush1.xpose.msra.mxu0 0.0
  %527 = vmatprep.subr.mxu0 0.0
  %528 = vmatpush1.xpose.msra.mxu0 0.0
  %529 = vmatprep.subr.mxu0 0.0
  %530 = vmatpush1.xpose.msra.mxu0 0.0
  %531 = vmatprep.subr.mxu0 0.0
  %532 = vmatpush1.xpose.msra.mxu0 0.0
  %533 = vmatprep.subr.mxu0 0.0
  %534 = vmatpush1.xpose.msra.mxu0 0.0
  %535 = vmatprep.subr.mxu0 0.0
  %536 = vmatpush1.xpose.msra.mxu0 0.0
  %537 = vmatprep.subr.mxu0 0.0
  %538 = vmatpush1.xpose.msra.mxu0 %v505
  %539 = vmatprep.subr.mxu0 0.0
  %540 = vmatpush2.xpose.msra.mxu0 0.0
  %541 = vmatprep.subr.mxu0 0.0
  %542 = vmatpush2.xpose.msra.mxu0 0.0
  %543 = vmatprep.subr.mxu0 0.0
  %544 = vmatpush2.xpose.msra.mxu0 0.0
  %545 = vmatprep.subr.mxu0 0.0
  %546 = vmatpush2.xpose.msra.mxu0 0.0
  %547 = vmatprep.subr.mxu0 0.0
  %548 = vmatpush2.xpose.msra.mxu0 0.0
  %549 = vmatprep.subr.mxu0 0.0
  %550 = vmatpush2.xpose.msra.mxu0 0.0
  %551 = vmatprep.subr.mxu0 0.0
  %552 = vmatpush2.xpose.msra.mxu0 0.0
  %553 = vmatprep.subr.mxu0 0.0
  %554 = vmatpush2.xpose.msra.mxu0 0.0
  %555 = vmatprep.subr.mxu0 0.0
  %556 = vmatpush2.xpose.msra.mxu0 0.0
  %557 = vmatprep.subr.mxu0 0.0
  %558 = vmatpush2.xpose.msra.mxu0 0.0
  %559 = vmatprep.subr.mxu0 0.0
  %560 = vmatpush2.xpose.msra.mxu0 0.0
  %561 = vmatprep.subr.mxu0 0.0
  %562 = vmatpush2.xpose.msra.mxu0 0.0
  %563 = vmatprep.subr.mxu0 0.0
  %564 = vmatpush2.xpose.msra.mxu0 0.0
  %565 = vmatprep.subr.mxu0 0.0
  %566 = vmatpush2.xpose.msra.mxu0 0.0
  %567 = vmatprep.subr.mxu0 0.0
  %568 = vmatpush2.xpose.msra.mxu0 0.0
  %569 = vmatprep.subr.mxu0 0.0
  %570 = vmatpush2.xpose.msra.mxu0 0.0
  %571 = vmatprep.mubr.f32.mxu0 0.0
  %572 = vmatmul.mubr.f32.gmra.mxu0 %v502
  %v573 = vpop.f32.mrf.mxu0
  %v574 = vadd.f32 0.0, %v573
  %v575 = vpop.f32.mrf.mxu0
  %576 = vdwg.mxu0
  %v578 = vsel %vm44, %v27, 0
  %v581 = vsel %vm44, %v35, 0
  %583 = vmatprep.subr.mxu0 0.0
  %584 = vmatpush1.xpose.msra.mxu0 0.0
  %585 = vmatprep.subr.mxu0 0.0
  %586 = vmatpush1.xpose.msra.mxu0 0.0
  %587 = vmatprep.subr.mxu0 0.0
  %588 = vmatpush1.xpose.msra.mxu0 0.0
  %589 = vmatprep.subr.mxu0 0.0
  %590 = vmatpush1.xpose.msra.mxu0 0.0
  %591 = vmatprep.subr.mxu0 0.0
  %592 = vmatpush1.xpose.msra.mxu0 0.0
  %593 = vmatprep.subr.mxu0 0.0
  %594 = vmatpush1.xpose.msra.mxu0 0.0
  %595 = vmatprep.subr.mxu0 0.0
  %596 = vmatpush1.xpose.msra.mxu0 0.0
  %597 = vmatprep.subr.mxu0 0.0
  %598 = vmatpush1.xpose.msra.mxu0 0.0
  %599 = vmatprep.subr.mxu0 0.0
  %600 = vmatpush1.xpose.msra.mxu0 0.0
  %601 = vmatprep.subr.mxu0 0.0
  %602 = vmatpush1.xpose.msra.mxu0 0.0
  %603 = vmatprep.subr.mxu0 0.0
  %604 = vmatpush1.xpose.msra.mxu0 0.0
  %605 = vmatprep.subr.mxu0 0.0
  %606 = vmatpush1.xpose.msra.mxu0 0.0
  %607 = vmatprep.subr.mxu0 0.0
  %608 = vmatpush1.xpose.msra.mxu0 0.0
  %609 = vmatprep.subr.mxu0 0.0
  %610 = vmatpush1.xpose.msra.mxu0 0.0
  %611 = vmatprep.subr.mxu0 0.0
  %612 = vmatpush1.xpose.msra.mxu0 0.0
  %613 = vmatprep.subr.mxu0 0.0
  %614 = vmatpush1.xpose.msra.mxu0 %v581
  %615 = vmatprep.subr.mxu0 0.0
  %616 = vmatpush2.xpose.msra.mxu0 0.0
  %617 = vmatprep.subr.mxu0 0.0
  %618 = vmatpush2.xpose.msra.mxu0 0.0
  %619 = vmatprep.subr.mxu0 0.0
  %620 = vmatpush2.xpose.msra.mxu0 0.0
  %621 = vmatprep.subr.mxu0 0.0
  %622 = vmatpush2.xpose.msra.mxu0 0.0
  %623 = vmatprep.subr.mxu0 0.0
  %624 = vmatpush2.xpose.msra.mxu0 0.0
  %625 = vmatprep.subr.mxu0 0.0
  %626 = vmatpush2.xpose.msra.mxu0 0.0
  %627 = vmatprep.subr.mxu0 0.0
  %628 = vmatpush2.xpose.msra.mxu0 0.0
  %629 = vmatprep.subr.mxu0 0.0
  %630 = vmatpush2.xpose.msra.mxu0 0.0
  %631 = vmatprep.subr.mxu0 0.0
  %632 = vmatpush2.xpose.msra.mxu0 0.0
  %633 = vmatprep.subr.mxu0 0.0
  %634 = vmatpush2.xpose.msra.mxu0 0.0
  %635 = vmatprep.subr.mxu0 0.0
  %636 = vmatpush2.xpose.msra.mxu0 0.0
  %637 = vmatprep.subr.mxu0 0.0
  %638 = vmatpush2.xpose.msra.mxu0 0.0
  %639 = vmatprep.subr.mxu0 0.0
  %640 = vmatpush2.xpose.msra.mxu0 0.0
  %641 = vmatprep.subr.mxu0 0.0
  %642 = vmatpush2.xpose.msra.mxu0 0.0
  %643 = vmatprep.subr.mxu0 0.0
  %644 = vmatpush2.xpose.msra.mxu0 0.0
  %645 = vmatprep.subr.mxu0 0.0
  %646 = vmatpush2.xpose.msra.mxu0 0.0
  %647 = vmatprep.mubr.f32.mxu0 0.0
  %648 = vmatmul.mubr.f32.gmra.mxu0 %v578
  %v649 = vpop.f32.mrf.mxu0
  %v650 = vadd.f32 0.0, %v649
  %v651 = vpop.f32.mrf.mxu0
  %652 = vdwg.mxu0
  %v653 = vld [vmem:[%s3] sm:$0xff]
  %v654 = vld [vmem:[%s3 + $0x8] sm:$0xff]
  %v655 = vld [vmem:[%s3 + $0x10] sm:$0xff]
  %v656 = vld [vmem:[%s3 + $0x18] sm:$0xff]
  %v657 = vld [vmem:[%s4] sm:$0x1]
  %v658 = vld [vmem:[%s4 + $0x1] sm:$0x1]
  %v661 = vlaneseq
  %v662 = vshrl.u32 %v661, 7
  %v663 = vsub.s32 0, %v662
  %v664 = vrot.slane %v657, %v663
  %v665 = vlaneseq
  %v666 = vshrl.u32 %v665, 7
  %v667 = vsub.s32 0, %v666
  %v668 = vrot.slane %v658, %v667
  %v671 = vadd.f32 %v653, %v664
  %v672 = vadd.f32 %v654, %v664
  %v673 = vadd.f32 %v655, %v664
  %v674 = vadd.f32 %v656, %v664
  %v675 = vadd.f32 %v653, %v668
  %v676 = vadd.f32 %v654, %v668
  %v677 = vadd.f32 %v655, %v668
  %v678 = vadd.f32 %v656, %v668
  %v679 = vadd.f32 %v118, %v671
  %v680 = vadd.f32 %v194, %v672
  %v681 = vadd.f32 %v270, %v673
  %v682 = vadd.f32 %v346, %v674
  %v683 = vadd.f32 %v422, %v675
  %v684 = vadd.f32 %v498, %v676
  %v685 = vadd.f32 %v574, %v677
  %v686 = vadd.f32 %v650, %v678
  %v687 = vsel %vm44, %v679, -inf
  %688 = vmax.xlane.f32.xlu0 %v687
  %v689 = vpop.xlane.xlu0 %688
  %v690 = vsel %vm44, %v680, -inf
  %691 = vmax.xlane.f32.xlu0 %v690
  %v692 = vpop.xlane.xlu0 %691
  %v693 = vsel %vm44, %v681, -inf
  %694 = vmax.xlane.f32.xlu0 %v693
  %v695 = vpop.xlane.xlu0 %694
  %v696 = vsel %vm44, %v682, -inf
  %697 = vmax.xlane.f32.xlu0 %v696
  %v698 = vpop.xlane.xlu0 %697
  %v699 = vsel %vm44, %v683, -inf
  %700 = vmax.xlane.f32.xlu0 %v699
  %v701 = vpop.xlane.xlu0 %700
  %v702 = vsel %vm44, %v684, -inf
  %703 = vmax.xlane.f32.xlu0 %v702
  %v704 = vpop.xlane.xlu0 %703
  %v705 = vsel %vm44, %v685, -inf
  %706 = vmax.xlane.f32.xlu0 %v705
  %v707 = vpop.xlane.xlu0 %706
  %v708 = vsel %vm44, %v686, -inf
  %709 = vmax.xlane.f32.xlu0 %v708
  %v710 = vpop.xlane.xlu0 %709
  %v711 = vsub.f32 %v679, %v689
  %v712 = vsub.f32 %v680, %v692
  %v713 = vsub.f32 %v681, %v695
  %v714 = vsub.f32 %v682, %v698
  %v715 = vsub.f32 %v683, %v701
  %v716 = vsub.f32 %v684, %v704
  %v717 = vsub.f32 %v685, %v707
  %v718 = vsub.f32 %v686, %v710
  %v719 = vmul.f32 %v711, 1.442695
  %v720 = vpow.pop %v719
  %v721 = vmul.f32 %v712, 1.442695
  %v722 = vpow.pop %v721
  %v723 = vmul.f32 %v713, 1.442695
  %v724 = vpow.pop %v723
  %v725 = vmul.f32 %v714, 1.442695
  %v726 = vpow.pop %v725
  %v727 = vmul.f32 %v715, 1.442695
  %v728 = vpow.pop %v727
  %v729 = vmul.f32 %v716, 1.442695
  %v730 = vpow.pop %v729
  %v731 = vmul.f32 %v717, 1.442695
  %v732 = vpow.pop %v731
  %v733 = vmul.f32 %v718, 1.442695
  %v734 = vpow.pop %v733
  %v735 = vsel %vm44, %v720, 0.0
  %736 = vadd.xlane.f32.xlu0 %v735
  %v737 = vpop.xlane.xlu0 %736
  %v738 = vsel %vm44, %v722, 0.0
  %739 = vadd.xlane.f32.xlu0 %v738
  %v740 = vpop.xlane.xlu0 %739
  %v741 = vsel %vm44, %v724, 0.0
  %742 = vadd.xlane.f32.xlu0 %v741
  %v743 = vpop.xlane.xlu0 %742
  %v744 = vsel %vm44, %v726, 0.0
  %745 = vadd.xlane.f32.xlu0 %v744
  %v746 = vpop.xlane.xlu0 %745
  %v747 = vsel %vm44, %v728, 0.0
  %748 = vadd.xlane.f32.xlu0 %v747
  %v749 = vpop.xlane.xlu0 %748
  %v750 = vsel %vm44, %v730, 0.0
  %751 = vadd.xlane.f32.xlu0 %v750
  %v752 = vpop.xlane.xlu0 %751
  %v753 = vsel %vm44, %v732, 0.0
  %754 = vadd.xlane.f32.xlu0 %v753
  %v755 = vpop.xlane.xlu0 %754
  %v756 = vsel %vm44, %v734, 0.0
  %757 = vadd.xlane.f32.xlu0 %v756
  %v758 = vpop.xlane.xlu0 %757
  %v759 = vrcp.pop %v737
  %v760 = vmul.f32 %v720, %v759
  %v761 = vrcp.pop %v740
  %v762 = vmul.f32 %v722, %v761
  %v763 = vrcp.pop %v743
  %v764 = vmul.f32 %v724, %v763
  %v765 = vrcp.pop %v746
  %v766 = vmul.f32 %v726, %v765
  %v767 = vrcp.pop %v749
  %v768 = vmul.f32 %v728, %v767
  %v769 = vrcp.pop %v752
  %v770 = vmul.f32 %v730, %v769
  %v771 = vrcp.pop %v755
  %v772 = vmul.f32 %v732, %v771
  %v773 = vrcp.pop %v758
  %v774 = vmul.f32 %v734, %v773
  %v776 = vsel %vm44, %v760, 0
  %778 = vmatprep.subr.mxu0 0.0
  %779 = vmatpush1.msra.mxu0 0.0
  %780 = vmatprep.subr.mxu0 0.0
  %781 = vmatpush1.msra.mxu0 0.0
  %782 = vmatprep.subr.mxu0 0.0
  %783 = vmatpush1.msra.mxu0 0.0
  %784 = vmatprep.subr.mxu0 0.0
  %785 = vmatpush1.msra.mxu0 0.0
  %786 = vmatprep.subr.mxu0 0.0
  %787 = vmatpush1.msra.mxu0 0.0
  %788 = vmatprep.subr.mxu0 0.0
  %789 = vmatpush1.msra.mxu0 0.0
  %790 = vmatprep.subr.mxu0 0.0
  %791 = vmatpush1.msra.mxu0 0.0
  %792 = vmatprep.subr.mxu0 0.0
  %793 = vmatpush1.msra.mxu0 0.0
  %794 = vmatprep.subr.mxu0 0.0
  %795 = vmatpush1.msra.mxu0 0.0
  %796 = vmatprep.subr.mxu0 0.0
  %797 = vmatpush1.msra.mxu0 0.0
  %798 = vmatprep.subr.mxu0 0.0
  %799 = vmatpush1.msra.mxu0 0.0
  %800 = vmatprep.subr.mxu0 0.0
  %801 = vmatpush1.msra.mxu0 0.0
  %802 = vmatprep.subr.mxu0 0.0
  %803 = vmatpush1.msra.mxu0 0.0
  %804 = vmatprep.subr.mxu0 0.0
  %805 = vmatpush1.msra.mxu0 0.0
  %806 = vmatprep.subr.mxu0 0.0
  %807 = vmatpush1.msra.mxu0 0.0
  %808 = vmatprep.subr.mxu0 0.0
  %809 = vmatpush1.msra.mxu0 %v36
  %810 = vmatprep.subr.mxu0 0.0
  %811 = vmatpush2.msra.mxu0 0.0
  %812 = vmatprep.subr.mxu0 0.0
  %813 = vmatpush2.msra.mxu0 0.0
  %814 = vmatprep.subr.mxu0 0.0
  %815 = vmatpush2.msra.mxu0 0.0
  %816 = vmatprep.subr.mxu0 0.0
  %817 = vmatpush2.msra.mxu0 0.0
  %818 = vmatprep.subr.mxu0 0.0
  %819 = vmatpush2.msra.mxu0 0.0
  %820 = vmatprep.subr.mxu0 0.0
  %821 = vmatpush2.msra.mxu0 0.0
  %822 = vmatprep.subr.mxu0 0.0
  %823 = vmatpush2.msra.mxu0 0.0
  %824 = vmatprep.subr.mxu0 0.0
  %825 = vmatpush2.msra.mxu0 0.0
  %826 = vmatprep.subr.mxu0 0.0
  %827 = vmatpush2.msra.mxu0 0.0
  %828 = vmatprep.subr.mxu0 0.0
  %829 = vmatpush2.msra.mxu0 0.0
  %830 = vmatprep.subr.mxu0 0.0
  %831 = vmatpush2.msra.mxu0 0.0
  %832 = vmatprep.subr.mxu0 0.0
  %833 = vmatpush2.msra.mxu0 0.0
  %834 = vmatprep.subr.mxu0 0.0
  %835 = vmatpush2.msra.mxu0 0.0
  %836 = vmatprep.subr.mxu0 0.0
  %837 = vmatpush2.msra.mxu0 0.0
  %838 = vmatprep.subr.mxu0 0.0
  %839 = vmatpush2.msra.mxu0 0.0
  %840 = vmatprep.subr.mxu0 0.0
  %841 = vmatpush2.msra.mxu0 0.0
  %842 = vmatprep.mubr.f32.mxu0 0.0
  %843 = vmatmul.mubr.f32.gmra.mxu0 %v776
  %v844 = vpop.f32.mrf.mxu0
  %v845 = vadd.f32 0.0, %v844
  %v846 = vpop.f32.mrf.mxu0
  %847 = vdwg.mxu0
  %v849 = vsel %vm44, %v762, 0
  %851 = vmatprep.subr.mxu0 0.0
  %852 = vmatpush1.msra.mxu0 0.0
  %853 = vmatprep.subr.mxu0 0.0
  %854 = vmatpush1.msra.mxu0 0.0
  %855 = vmatprep.subr.mxu0 0.0
  %856 = vmatpush1.msra.mxu0 0.0
  %857 = vmatprep.subr.mxu0 0.0
  %858 = vmatpush1.msra.mxu0 0.0
  %859 = vmatprep.subr.mxu0 0.0
  %860 = vmatpush1.msra.mxu0 0.0
  %861 = vmatprep.subr.mxu0 0.0
  %862 = vmatpush1.msra.mxu0 0.0
  %863 = vmatprep.subr.mxu0 0.0
  %864 = vmatpush1.msra.mxu0 0.0
  %865 = vmatprep.subr.mxu0 0.0
  %866 = vmatpush1.msra.mxu0 0.0
  %867 = vmatprep.subr.mxu0 0.0
  %868 = vmatpush1.msra.mxu0 0.0
  %869 = vmatprep.subr.mxu0 0.0
  %870 = vmatpush1.msra.mxu0 0.0
  %871 = vmatprep.subr.mxu0 0.0
  %872 = vmatpush1.msra.mxu0 0.0
  %873 = vmatprep.subr.mxu0 0.0
  %874 = vmatpush1.msra.mxu0 0.0
  %875 = vmatprep.subr.mxu0 0.0
  %876 = vmatpush1.msra.mxu0 0.0
  %877 = vmatprep.subr.mxu0 0.0
  %878 = vmatpush1.msra.mxu0 0.0
  %879 = vmatprep.subr.mxu0 0.0
  %880 = vmatpush1.msra.mxu0 0.0
  %881 = vmatprep.subr.mxu0 0.0
  %882 = vmatpush1.msra.mxu0 %v37
  %883 = vmatprep.subr.mxu0 0.0
  %884 = vmatpush2.msra.mxu0 0.0
  %885 = vmatprep.subr.mxu0 0.0
  %886 = vmatpush2.msra.mxu0 0.0
  %887 = vmatprep.subr.mxu0 0.0
  %888 = vmatpush2.msra.mxu0 0.0
  %889 = vmatprep.subr.mxu0 0.0
  %890 = vmatpush2.msra.mxu0 0.0
  %891 = vmatprep.subr.mxu0 0.0
  %892 = vmatpush2.msra.mxu0 0.0
  %893 = vmatprep.subr.mxu0 0.0
  %894 = vmatpush2.msra.mxu0 0.0
  %895 = vmatprep.subr.mxu0 0.0
  %896 = vmatpush2.msra.mxu0 0.0
  %897 = vmatprep.subr.mxu0 0.0
  %898 = vmatpush2.msra.mxu0 0.0
  %899 = vmatprep.subr.mxu0 0.0
  %900 = vmatpush2.msra.mxu0 0.0
  %901 = vmatprep.subr.mxu0 0.0
  %902 = vmatpush2.msra.mxu0 0.0
  %903 = vmatprep.subr.mxu0 0.0
  %904 = vmatpush2.msra.mxu0 0.0
  %905 = vmatprep.subr.mxu0 0.0
  %906 = vmatpush2.msra.mxu0 0.0
  %907 = vmatprep.subr.mxu0 0.0
  %908 = vmatpush2.msra.mxu0 0.0
  %909 = vmatprep.subr.mxu0 0.0
  %910 = vmatpush2.msra.mxu0 0.0
  %911 = vmatprep.subr.mxu0 0.0
  %912 = vmatpush2.msra.mxu0 0.0
  %913 = vmatprep.subr.mxu0 0.0
  %914 = vmatpush2.msra.mxu0 0.0
  %915 = vmatprep.mubr.f32.mxu0 0.0
  %916 = vmatmul.mubr.f32.gmra.mxu0 %v849
  %v917 = vpop.f32.mrf.mxu0
  %v918 = vadd.f32 0.0, %v917
  %v919 = vpop.f32.mrf.mxu0
  %920 = vdwg.mxu0
  %v922 = vsel %vm44, %v764, 0
  %924 = vmatprep.subr.mxu0 0.0
  %925 = vmatpush1.msra.mxu0 0.0
  %926 = vmatprep.subr.mxu0 0.0
  %927 = vmatpush1.msra.mxu0 0.0
  %928 = vmatprep.subr.mxu0 0.0
  %929 = vmatpush1.msra.mxu0 0.0
  %930 = vmatprep.subr.mxu0 0.0
  %931 = vmatpush1.msra.mxu0 0.0
  %932 = vmatprep.subr.mxu0 0.0
  %933 = vmatpush1.msra.mxu0 0.0
  %934 = vmatprep.subr.mxu0 0.0
  %935 = vmatpush1.msra.mxu0 0.0
  %936 = vmatprep.subr.mxu0 0.0
  %937 = vmatpush1.msra.mxu0 0.0
  %938 = vmatprep.subr.mxu0 0.0
  %939 = vmatpush1.msra.mxu0 0.0
  %940 = vmatprep.subr.mxu0 0.0
  %941 = vmatpush1.msra.mxu0 0.0
  %942 = vmatprep.subr.mxu0 0.0
  %943 = vmatpush1.msra.mxu0 0.0
  %944 = vmatprep.subr.mxu0 0.0
  %945 = vmatpush1.msra.mxu0 0.0
  %946 = vmatprep.subr.mxu0 0.0
  %947 = vmatpush1.msra.mxu0 0.0
  %948 = vmatprep.subr.mxu0 0.0
  %949 = vmatpush1.msra.mxu0 0.0
  %950 = vmatprep.subr.mxu0 0.0
  %951 = vmatpush1.msra.mxu0 0.0
  %952 = vmatprep.subr.mxu0 0.0
  %953 = vmatpush1.msra.mxu0 0.0
  %954 = vmatprep.subr.mxu0 0.0
  %955 = vmatpush1.msra.mxu0 %v38
  %956 = vmatprep.subr.mxu0 0.0
  %957 = vmatpush2.msra.mxu0 0.0
  %958 = vmatprep.subr.mxu0 0.0
  %959 = vmatpush2.msra.mxu0 0.0
  %960 = vmatprep.subr.mxu0 0.0
  %961 = vmatpush2.msra.mxu0 0.0
  %962 = vmatprep.subr.mxu0 0.0
  %963 = vmatpush2.msra.mxu0 0.0
  %964 = vmatprep.subr.mxu0 0.0
  %965 = vmatpush2.msra.mxu0 0.0
  %966 = vmatprep.subr.mxu0 0.0
  %967 = vmatpush2.msra.mxu0 0.0
  %968 = vmatprep.subr.mxu0 0.0
  %969 = vmatpush2.msra.mxu0 0.0
  %970 = vmatprep.subr.mxu0 0.0
  %971 = vmatpush2.msra.mxu0 0.0
  %972 = vmatprep.subr.mxu0 0.0
  %973 = vmatpush2.msra.mxu0 0.0
  %974 = vmatprep.subr.mxu0 0.0
  %975 = vmatpush2.msra.mxu0 0.0
  %976 = vmatprep.subr.mxu0 0.0
  %977 = vmatpush2.msra.mxu0 0.0
  %978 = vmatprep.subr.mxu0 0.0
  %979 = vmatpush2.msra.mxu0 0.0
  %980 = vmatprep.subr.mxu0 0.0
  %981 = vmatpush2.msra.mxu0 0.0
  %982 = vmatprep.subr.mxu0 0.0
  %983 = vmatpush2.msra.mxu0 0.0
  %984 = vmatprep.subr.mxu0 0.0
  %985 = vmatpush2.msra.mxu0 0.0
  %986 = vmatprep.subr.mxu0 0.0
  %987 = vmatpush2.msra.mxu0 0.0
  %988 = vmatprep.mubr.f32.mxu0 0.0
  %989 = vmatmul.mubr.f32.gmra.mxu0 %v922
  %v990 = vpop.f32.mrf.mxu0
  %v991 = vadd.f32 0.0, %v990
  %v992 = vpop.f32.mrf.mxu0
  %993 = vdwg.mxu0
  %v995 = vsel %vm44, %v766, 0
  %997 = vmatprep.subr.mxu0 0.0
  %998 = vmatpush1.msra.mxu0 0.0
  %999 = vmatprep.subr.mxu0 0.0
  %1000 = vmatpush1.msra.mxu0 0.0
  %1001 = vmatprep.subr.mxu0 0.0
  %1002 = vmatpush1.msra.mxu0 0.0
  %1003 = vmatprep.subr.mxu0 0.0
  %1004 = vmatpush1.msra.mxu0 0.0
  %1005 = vmatprep.subr.mxu0 0.0
  %1006 = vmatpush1.msra.mxu0 0.0
  %1007 = vmatprep.subr.mxu0 0.0
  %1008 = vmatpush1.msra.mxu0 0.0
  %1009 = vmatprep.subr.mxu0 0.0
  %1010 = vmatpush1.msra.mxu0 0.0
  %1011 = vmatprep.subr.mxu0 0.0
  %1012 = vmatpush1.msra.mxu0 0.0
  %1013 = vmatprep.subr.mxu0 0.0
  %1014 = vmatpush1.msra.mxu0 0.0
  %1015 = vmatprep.subr.mxu0 0.0
  %1016 = vmatpush1.msra.mxu0 0.0
  %1017 = vmatprep.subr.mxu0 0.0
  %1018 = vmatpush1.msra.mxu0 0.0
  %1019 = vmatprep.subr.mxu0 0.0
  %1020 = vmatpush1.msra.mxu0 0.0
  %1021 = vmatprep.subr.mxu0 0.0
  %1022 = vmatpush1.msra.mxu0 0.0
  %1023 = vmatprep.subr.mxu0 0.0
  %1024 = vmatpush1.msra.mxu0 0.0
  %1025 = vmatprep.subr.mxu0 0.0
  %1026 = vmatpush1.msra.mxu0 0.0
  %1027 = vmatprep.subr.mxu0 0.0
  %1028 = vmatpush1.msra.mxu0 %v39
  %1029 = vmatprep.subr.mxu0 0.0
  %1030 = vmatpush2.msra.mxu0 0.0
  %1031 = vmatprep.subr.mxu0 0.0
  %1032 = vmatpush2.msra.mxu0 0.0
  %1033 = vmatprep.subr.mxu0 0.0
  %1034 = vmatpush2.msra.mxu0 0.0
  %1035 = vmatprep.subr.mxu0 0.0
  %1036 = vmatpush2.msra.mxu0 0.0
  %1037 = vmatprep.subr.mxu0 0.0
  %1038 = vmatpush2.msra.mxu0 0.0
  %1039 = vmatprep.subr.mxu0 0.0
  %1040 = vmatpush2.msra.mxu0 0.0
  %1041 = vmatprep.subr.mxu0 0.0
  %1042 = vmatpush2.msra.mxu0 0.0
  %1043 = vmatprep.subr.mxu0 0.0
  %1044 = vmatpush2.msra.mxu0 0.0
  %1045 = vmatprep.subr.mxu0 0.0
  %1046 = vmatpush2.msra.mxu0 0.0
  %1047 = vmatprep.subr.mxu0 0.0
  %1048 = vmatpush2.msra.mxu0 0.0
  %1049 = vmatprep.subr.mxu0 0.0
  %1050 = vmatpush2.msra.mxu0 0.0
  %1051 = vmatprep.subr.mxu0 0.0
  %1052 = vmatpush2.msra.mxu0 0.0
  %1053 = vmatprep.subr.mxu0 0.0
  %1054 = vmatpush2.msra.mxu0 0.0
  %1055 = vmatprep.subr.mxu0 0.0
  %1056 = vmatpush2.msra.mxu0 0.0
  %1057 = vmatprep.subr.mxu0 0.0
  %1058 = vmatpush2.msra.mxu0 0.0
  %1059 = vmatprep.subr.mxu0 0.0
  %1060 = vmatpush2.msra.mxu0 0.0
  %1061 = vmatprep.mubr.f32.mxu0 0.0
  %1062 = vmatmul.mubr.f32.gmra.mxu0 %v995
  %v1063 = vpop.f32.mrf.mxu0
  %v1064 = vadd.f32 0.0, %v1063
  %v1065 = vpop.f32.mrf.mxu0
  %1066 = vdwg.mxu0
  %v1068 = vsel %vm44, %v768, 0
  %1070 = vmatprep.subr.mxu0 0.0
  %1071 = vmatpush1.msra.mxu0 0.0
  %1072 = vmatprep.subr.mxu0 0.0
  %1073 = vmatpush1.msra.mxu0 0.0
  %1074 = vmatprep.subr.mxu0 0.0
  %1075 = vmatpush1.msra.mxu0 0.0
  %1076 = vmatprep.subr.mxu0 0.0
  %1077 = vmatpush1.msra.mxu0 0.0
  %1078 = vmatprep.subr.mxu0 0.0
  %1079 = vmatpush1.msra.mxu0 0.0
  %1080 = vmatprep.subr.mxu0 0.0
  %1081 = vmatpush1.msra.mxu0 0.0
  %1082 = vmatprep.subr.mxu0 0.0
  %1083 = vmatpush1.msra.mxu0 0.0
  %1084 = vmatprep.subr.mxu0 0.0
  %1085 = vmatpush1.msra.mxu0 0.0
  %1086 = vmatprep.subr.mxu0 0.0
  %1087 = vmatpush1.msra.mxu0 0.0
  %1088 = vmatprep.subr.mxu0 0.0
  %1089 = vmatpush1.msra.mxu0 0.0
  %1090 = vmatprep.subr.mxu0 0.0
  %1091 = vmatpush1.msra.mxu0 0.0
  %1092 = vmatprep.subr.mxu0 0.0
  %1093 = vmatpush1.msra.mxu0 0.0
  %1094 = vmatprep.subr.mxu0 0.0
  %1095 = vmatpush1.msra.mxu0 0.0
  %1096 = vmatprep.subr.mxu0 0.0
  %1097 = vmatpush1.msra.mxu0 0.0
  %1098 = vmatprep.subr.mxu0 0.0
  %1099 = vmatpush1.msra.mxu0 0.0
  %1100 = vmatprep.subr.mxu0 0.0
  %1101 = vmatpush1.msra.mxu0 %v40
  %1102 = vmatprep.subr.mxu0 0.0
  %1103 = vmatpush2.msra.mxu0 0.0
  %1104 = vmatprep.subr.mxu0 0.0
  %1105 = vmatpush2.msra.mxu0 0.0
  %1106 = vmatprep.subr.mxu0 0.0
  %1107 = vmatpush2.msra.mxu0 0.0
  %1108 = vmatprep.subr.mxu0 0.0
  %1109 = vmatpush2.msra.mxu0 0.0
  %1110 = vmatprep.subr.mxu0 0.0
  %1111 = vmatpush2.msra.mxu0 0.0
  %1112 = vmatprep.subr.mxu0 0.0
  %1113 = vmatpush2.msra.mxu0 0.0
  %1114 = vmatprep.subr.mxu0 0.0
  %1115 = vmatpush2.msra.mxu0 0.0
  %1116 = vmatprep.subr.mxu0 0.0
  %1117 = vmatpush2.msra.mxu0 0.0
  %1118 = vmatprep.subr.mxu0 0.0
  %1119 = vmatpush2.msra.mxu0 0.0
  %1120 = vmatprep.subr.mxu0 0.0
  %1121 = vmatpush2.msra.mxu0 0.0
  %1122 = vmatprep.subr.mxu0 0.0
  %1123 = vmatpush2.msra.mxu0 0.0
  %1124 = vmatprep.subr.mxu0 0.0
  %1125 = vmatpush2.msra.mxu0 0.0
  %1126 = vmatprep.subr.mxu0 0.0
  %1127 = vmatpush2.msra.mxu0 0.0
  %1128 = vmatprep.subr.mxu0 0.0
  %1129 = vmatpush2.msra.mxu0 0.0
  %1130 = vmatprep.subr.mxu0 0.0
  %1131 = vmatpush2.msra.mxu0 0.0
  %1132 = vmatprep.subr.mxu0 0.0
  %1133 = vmatpush2.msra.mxu0 0.0
  %1134 = vmatprep.mubr.f32.mxu0 0.0
  %1135 = vmatmul.mubr.f32.gmra.mxu0 %v1068
  %v1136 = vpop.f32.mrf.mxu0
  %v1137 = vadd.f32 0.0, %v1136
  %v1138 = vpop.f32.mrf.mxu0
  %1139 = vdwg.mxu0
  %v1141 = vsel %vm44, %v770, 0
  %1143 = vmatprep.subr.mxu0 0.0
  %1144 = vmatpush1.msra.mxu0 0.0
  %1145 = vmatprep.subr.mxu0 0.0
  %1146 = vmatpush1.msra.mxu0 0.0
  %1147 = vmatprep.subr.mxu0 0.0
  %1148 = vmatpush1.msra.mxu0 0.0
  %1149 = vmatprep.subr.mxu0 0.0
  %1150 = vmatpush1.msra.mxu0 0.0
  %1151 = vmatprep.subr.mxu0 0.0
  %1152 = vmatpush1.msra.mxu0 0.0
  %1153 = vmatprep.subr.mxu0 0.0
  %1154 = vmatpush1.msra.mxu0 0.0
  %1155 = vmatprep.subr.mxu0 0.0
  %1156 = vmatpush1.msra.mxu0 0.0
  %1157 = vmatprep.subr.mxu0 0.0
  %1158 = vmatpush1.msra.mxu0 0.0
  %1159 = vmatprep.subr.mxu0 0.0
  %1160 = vmatpush1.msra.mxu0 0.0
  %1161 = vmatprep.subr.mxu0 0.0
  %1162 = vmatpush1.msra.mxu0 0.0
  %1163 = vmatprep.subr.mxu0 0.0
  %1164 = vmatpush1.msra.mxu0 0.0
  %1165 = vmatprep.subr.mxu0 0.0
  %1166 = vmatpush1.msra.mxu0 0.0
  %1167 = vmatprep.subr.mxu0 0.0
  %1168 = vmatpush1.msra.mxu0 0.0
  %1169 = vmatprep.subr.mxu0 0.0
  %1170 = vmatpush1.msra.mxu0 0.0
  %1171 = vmatprep.subr.mxu0 0.0
  %1172 = vmatpush1.msra.mxu0 0.0
  %1173 = vmatprep.subr.mxu0 0.0
  %1174 = vmatpush1.msra.mxu0 %v41
  %1175 = vmatprep.subr.mxu0 0.0
  %1176 = vmatpush2.msra.mxu0 0.0
  %1177 = vmatprep.subr.mxu0 0.0
  %1178 = vmatpush2.msra.mxu0 0.0
  %1179 = vmatprep.subr.mxu0 0.0
  %1180 = vmatpush2.msra.mxu0 0.0
  %1181 = vmatprep.subr.mxu0 0.0
  %1182 = vmatpush2.msra.mxu0 0.0
  %1183 = vmatprep.subr.mxu0 0.0
  %1184 = vmatpush2.msra.mxu0 0.0
  %1185 = vmatprep.subr.mxu0 0.0
  %1186 = vmatpush2.msra.mxu0 0.0
  %1187 = vmatprep.subr.mxu0 0.0
  %1188 = vmatpush2.msra.mxu0 0.0
  %1189 = vmatprep.subr.mxu0 0.0
  %1190 = vmatpush2.msra.mxu0 0.0
  %1191 = vmatprep.subr.mxu0 0.0
  %1192 = vmatpush2.msra.mxu0 0.0
  %1193 = vmatprep.subr.mxu0 0.0
  %1194 = vmatpush2.msra.mxu0 0.0
  %1195 = vmatprep.subr.mxu0 0.0
  %1196 = vmatpush2.msra.mxu0 0.0
  %1197 = vmatprep.subr.mxu0 0.0
  %1198 = vmatpush2.msra.mxu0 0.0
  %1199 = vmatprep.subr.mxu0 0.0
  %1200 = vmatpush2.msra.mxu0 0.0
  %1201 = vmatprep.subr.mxu0 0.0
  %1202 = vmatpush2.msra.mxu0 0.0
  %1203 = vmatprep.subr.mxu0 0.0
  %1204 = vmatpush2.msra.mxu0 0.0
  %1205 = vmatprep.subr.mxu0 0.0
  %1206 = vmatpush2.msra.mxu0 0.0
  %1207 = vmatprep.mubr.f32.mxu0 0.0
  %1208 = vmatmul.mubr.f32.gmra.mxu0 %v1141
  %v1209 = vpop.f32.mrf.mxu0
  %v1210 = vadd.f32 0.0, %v1209
  %v1211 = vpop.f32.mrf.mxu0
  %1212 = vdwg.mxu0
  %v1214 = vsel %vm44, %v772, 0
  %1216 = vmatprep.subr.mxu0 0.0
  %1217 = vmatpush1.msra.mxu0 0.0
  %1218 = vmatprep.subr.mxu0 0.0
  %1219 = vmatpush1.msra.mxu0 0.0
  %1220 = vmatprep.subr.mxu0 0.0
  %1221 = vmatpush1.msra.mxu0 0.0
  %1222 = vmatprep.subr.mxu0 0.0
  %1223 = vmatpush1.msra.mxu0 0.0
  %1224 = vmatprep.subr.mxu0 0.0
  %1225 = vmatpush1.msra.mxu0 0.0
  %1226 = vmatprep.subr.mxu0 0.0
  %1227 = vmatpush1.msra.mxu0 0.0
  %1228 = vmatprep.subr.mxu0 0.0
  %1229 = vmatpush1.msra.mxu0 0.0
  %1230 = vmatprep.subr.mxu0 0.0
  %1231 = vmatpush1.msra.mxu0 0.0
  %1232 = vmatprep.subr.mxu0 0.0
  %1233 = vmatpush1.msra.mxu0 0.0
  %1234 = vmatprep.subr.mxu0 0.0
  %1235 = vmatpush1.msra.mxu0 0.0
  %1236 = vmatprep.subr.mxu0 0.0
  %1237 = vmatpush1.msra.mxu0 0.0
  %1238 = vmatprep.subr.mxu0 0.0
  %1239 = vmatpush1.msra.mxu0 0.0
  %1240 = vmatprep.subr.mxu0 0.0
  %1241 = vmatpush1.msra.mxu0 0.0
  %1242 = vmatprep.subr.mxu0 0.0
  %1243 = vmatpush1.msra.mxu0 0.0
  %1244 = vmatprep.subr.mxu0 0.0
  %1245 = vmatpush1.msra.mxu0 0.0
  %1246 = vmatprep.subr.mxu0 0.0
  %1247 = vmatpush1.msra.mxu0 %v42
  %1248 = vmatprep.subr.mxu0 0.0
  %1249 = vmatpush2.msra.mxu0 0.0
  %1250 = vmatprep.subr.mxu0 0.0
  %1251 = vmatpush2.msra.mxu0 0.0
  %1252 = vmatprep.subr.mxu0 0.0
  %1253 = vmatpush2.msra.mxu0 0.0
  %1254 = vmatprep.subr.mxu0 0.0
  %1255 = vmatpush2.msra.mxu0 0.0
  %1256 = vmatprep.subr.mxu0 0.0
  %1257 = vmatpush2.msra.mxu0 0.0
  %1258 = vmatprep.subr.mxu0 0.0
  %1259 = vmatpush2.msra.mxu0 0.0
  %1260 = vmatprep.subr.mxu0 0.0
  %1261 = vmatpush2.msra.mxu0 0.0
  %1262 = vmatprep.subr.mxu0 0.0
  %1263 = vmatpush2.msra.mxu0 0.0
  %1264 = vmatprep.subr.mxu0 0.0
  %1265 = vmatpush2.msra.mxu0 0.0
  %1266 = vmatprep.subr.mxu0 0.0
  %1267 = vmatpush2.msra.mxu0 0.0
  %1268 = vmatprep.subr.mxu0 0.0
  %1269 = vmatpush2.msra.mxu0 0.0
  %1270 = vmatprep.subr.mxu0 0.0
  %1271 = vmatpush2.msra.mxu0 0.0
  %1272 = vmatprep.subr.mxu0 0.0
  %1273 = vmatpush2.msra.mxu0 0.0
  %1274 = vmatprep.subr.mxu0 0.0
  %1275 = vmatpush2.msra.mxu0 0.0
  %1276 = vmatprep.subr.mxu0 0.0
  %1277 = vmatpush2.msra.mxu0 0.0
  %1278 = vmatprep.subr.mxu0 0.0
  %1279 = vmatpush2.msra.mxu0 0.0
  %1280 = vmatprep.mubr.f32.mxu0 0.0
  %1281 = vmatmul.mubr.f32.gmra.mxu0 %v1214
  %v1282 = vpop.f32.mrf.mxu0
  %v1283 = vadd.f32 0.0, %v1282
  %v1284 = vpop.f32.mrf.mxu0
  %1285 = vdwg.mxu0
  %v1287 = vsel %vm44, %v774, 0
  %1289 = vmatprep.subr.mxu0 0.0
  %1290 = vmatpush1.msra.mxu0 0.0
  %1291 = vmatprep.subr.mxu0 0.0
  %1292 = vmatpush1.msra.mxu0 0.0
  %1293 = vmatprep.subr.mxu0 0.0
  %1294 = vmatpush1.msra.mxu0 0.0
  %1295 = vmatprep.subr.mxu0 0.0
  %1296 = vmatpush1.msra.mxu0 0.0
  %1297 = vmatprep.subr.mxu0 0.0
  %1298 = vmatpush1.msra.mxu0 0.0
  %1299 = vmatprep.subr.mxu0 0.0
  %1300 = vmatpush1.msra.mxu0 0.0
  %1301 = vmatprep.subr.mxu0 0.0
  %1302 = vmatpush1.msra.mxu0 0.0
  %1303 = vmatprep.subr.mxu0 0.0
  %1304 = vmatpush1.msra.mxu0 0.0
  %1305 = vmatprep.subr.mxu0 0.0
  %1306 = vmatpush1.msra.mxu0 0.0
  %1307 = vmatprep.subr.mxu0 0.0
  %1308 = vmatpush1.msra.mxu0 0.0
  %1309 = vmatprep.subr.mxu0 0.0
  %1310 = vmatpush1.msra.mxu0 0.0
  %1311 = vmatprep.subr.mxu0 0.0
  %1312 = vmatpush1.msra.mxu0 0.0
  %1313 = vmatprep.subr.mxu0 0.0
  %1314 = vmatpush1.msra.mxu0 0.0
  %1315 = vmatprep.subr.mxu0 0.0
  %1316 = vmatpush1.msra.mxu0 0.0
  %1317 = vmatprep.subr.mxu0 0.0
  %1318 = vmatpush1.msra.mxu0 0.0
  %1319 = vmatprep.subr.mxu0 0.0
  %1320 = vmatpush1.msra.mxu0 %v43
  %1321 = vmatprep.subr.mxu0 0.0
  %1322 = vmatpush2.msra.mxu0 0.0
  %1323 = vmatprep.subr.mxu0 0.0
  %1324 = vmatpush2.msra.mxu0 0.0
  %1325 = vmatprep.subr.mxu0 0.0
  %1326 = vmatpush2.msra.mxu0 0.0
  %1327 = vmatprep.subr.mxu0 0.0
  %1328 = vmatpush2.msra.mxu0 0.0
  %1329 = vmatprep.subr.mxu0 0.0
  %1330 = vmatpush2.msra.mxu0 0.0
  %1331 = vmatprep.subr.mxu0 0.0
  %1332 = vmatpush2.msra.mxu0 0.0
  %1333 = vmatprep.subr.mxu0 0.0
  %1334 = vmatpush2.msra.mxu0 0.0
  %1335 = vmatprep.subr.mxu0 0.0
  %1336 = vmatpush2.msra.mxu0 0.0
  %1337 = vmatprep.subr.mxu0 0.0
  %1338 = vmatpush2.msra.mxu0 0.0
  %1339 = vmatprep.subr.mxu0 0.0
  %1340 = vmatpush2.msra.mxu0 0.0
  %1341 = vmatprep.subr.mxu0 0.0
  %1342 = vmatpush2.msra.mxu0 0.0
  %1343 = vmatprep.subr.mxu0 0.0
  %1344 = vmatpush2.msra.mxu0 0.0
  %1345 = vmatprep.subr.mxu0 0.0
  %1346 = vmatpush2.msra.mxu0 0.0
  %1347 = vmatprep.subr.mxu0 0.0
  %1348 = vmatpush2.msra.mxu0 0.0
  %1349 = vmatprep.subr.mxu0 0.0
  %1350 = vmatpush2.msra.mxu0 0.0
  %1351 = vmatprep.subr.mxu0 0.0
  %1352 = vmatpush2.msra.mxu0 0.0
  %1353 = vmatprep.mubr.f32.mxu0 0.0
  %1354 = vmatmul.mubr.f32.gmra.mxu0 %v1287
  %v1355 = vpop.f32.mrf.mxu0
  %v1356 = vadd.f32 0.0, %v1355
  %v1357 = vpop.f32.mrf.mxu0
  %1358 = vdwg.mxu0
  %1359 = vst.msk [vmem:[%s5] sm:$0xff] %vm44, %v845
  %1360 = vst.msk [vmem:[%s5 + $0x8] sm:$0xff] %vm44, %v918
  %1361 = vst.msk [vmem:[%s5 + $0x10] sm:$0xff] %vm44, %v991
  %1362 = vst.msk [vmem:[%s5 + $0x18] sm:$0xff] %vm44, %v1064
  %1363 = vst.msk [vmem:[%s5 + $0x20] sm:$0xff] %vm44, %v1137
  %1364 = vst.msk [vmem:[%s5 + $0x28] sm:$0xff] %vm44, %v1210
  %1365 = vst.msk [vmem:[%s5 + $0x30] sm:$0xff] %vm44, %v1283
  %1366 = vst.msk [vmem:[%s5 + $0x38] sm:$0xff] %vm44, %v1356
  // Predicated region
  $region22: #{knowledge_pretrainer_forward.27} parent=0 // pred_check
    _
  $region23: #{knowledge_pretrainer_forward.27} parent=0 // pred_check_branch
    %1368 = sbr.rel (0) target = $region25
  $region24: #{knowledge_pretrainer_forward.27} parent=0 // pred_region
    _
  $region25: #{knowledge_pretrainer_forward.27} parent=0 // pred_fallthru
    _
  // Predicated region
  $region26: #{knowledge_pretrainer_forward.27} parent=0 // pred_check
    _
  $region27: #{knowledge_pretrainer_forward.27} parent=0 // pred_check_branch
    %1370 = sbr.rel (0) target = $region29
  $region28: #{knowledge_pretrainer_forward.27} parent=0 // pred_region
    _
  $region29: #{knowledge_pretrainer_forward.27} parent=0 // pred_fallthru
    _

// kernel: knowledge_pretrainer_forward.50
$region0: #{knowledge_pretrainer_forward.50}
  #allocation0 [shape = 'u32[]', space=smem, size = 0x4, offset = 0x4, fixed_abs, tag = 'smem constant byte address 0x4 - core index']
  #allocation1 [shape = 'u32[144,128]{1,0:T(1,128)}', space=vmem, size = 0x12000, scoped, tag = 'internal scratch']
  %s0 = inlined_call_operand.vmem [shape: f32[16,32], index: 0, kind: input, shape index: {}]
  %s1 = inlined_call_operand.hbm [shape: f32[1,32], index: 1, kind: input, shape index: {}]
  %s2 = inlined_call_operand.vmem [shape: f32[32,64], index: 2, kind: input, shape index: {}]
  %s3 = inlined_call_operand.vmem [shape: f32[64,32], index: 3, kind: input, shape index: {}]
  %s4 = inlined_call_operand.vmem [shape: f32[16,32], index: 4, kind: output, shape index: {}]
  %s5 = sld [smem:[#allocation0]]
  $region30: #{knowledge_pretrainer_forward.50} parent=0
    _
  %s7 = ssub.s32 1, %s5
  %s8 = scalar_select 0, %s7, %s5
  $region1: #{knowledge_pretrainer_forward.50} parent=0
    #allocation2 [shape = 'u8[512]{0}', space=vmem, size = 0x400, scoped, tag = 'input window, operand 1, single buffered']
    #allocation3 [shape = 's32[1]{0}', space=sflag, size = 0x4, scoped, tag = 'scoped memory for knowledge_pretrainer_forward.50']
    %9 = vsyncpa [#allocation3], 0
    // Predicated region
    $region2: #{knowledge_pretrainer_forward.50} parent=1 // pred_check
      _
    $region3: #{knowledge_pretrainer_forward.50} parent=1 // pred_check_branch
      %11 = sbr.rel (0) target = $region5
    $region4: #{knowledge_pretrainer_forward.50} parent=1 // pred_region
      _
    $region5: #{knowledge_pretrainer_forward.50} parent=1 // pred_fallthru
      _
    // Predicated region
    $region6: #{knowledge_pretrainer_forward.50} parent=1 // pred_check
      _
    $region7: #{knowledge_pretrainer_forward.50} parent=1 // pred_check_branch
      %13 = sbr.rel (0) target = $region9
    $region8: #{knowledge_pretrainer_forward.50} parent=1 // pred_region
      %s15 = ssub.s32 16, 16
      %16 = vsyncadd [#allocation3], %s15
      %s18 = sshll.u32 [#allocation2], 4
      %s19 = int_to_ptr.vmem [resolvable:$true] %s18
      %21 = dma.hbm_to_vmem [thread:$0]  %s1, 16, %s19, [#allocation3]
    $region9: #{knowledge_pretrainer_forward.50} parent=1 // pred_fallthru
      _
    // Predicated region
    $region10: #{knowledge_pretrainer_forward.50} parent=1 // pred_check
      _
    $region11: #{knowledge_pretrainer_forward.50} parent=1 // pred_check_branch
      %23 = sbr.rel (0) target = $region13
    $region12: #{knowledge_pretrainer_forward.50} parent=1 // pred_region
      _
    $region13: #{knowledge_pretrainer_forward.50} parent=1 // pred_fallthru
      _
    // Predicated region
    $region14: #{knowledge_pretrainer_forward.50} parent=1 // pred_check
      _
    $region15: #{knowledge_pretrainer_forward.50} parent=1 // pred_check_branch
      %25 = sbr.rel (0) target = $region17
    $region16: #{knowledge_pretrainer_forward.50} parent=1 // pred_region
      _
    $region17: #{knowledge_pretrainer_forward.50} parent=1 // pred_fallthru
      _
    // Predicated region
    $region18: #{knowledge_pretrainer_forward.50} parent=1 // pred_check
      _
    $region19: #{knowledge_pretrainer_forward.50} parent=1 // pred_check_branch
      %27 = sbr.rel (0) target = $region21
    $region20: #{knowledge_pretrainer_forward.50} parent=1 // pred_region
      %28 = dma.done [#allocation3], 16
    $region21: #{knowledge_pretrainer_forward.50} parent=1 // pred_fallthru
      _
    %v29 = vld [vmem:[%s0] sm:$0xff]
    %v30 = vld [vmem:[%s0 + $0x8] sm:$0xff]
    %v31 = vmul.f32 %v29, %v29
    %v32 = vmul.f32 %v30, %v30
    %vm33 = vcmask 261120
    %v34 = vsel %vm33, %v31, 0.0
    %35 = vadd.xlane.f32.xlu0 %v34
    %v36 = vpop.xlane.xlu0 %35
    %v37 = vsel %vm33, %v32, 0.0
    %38 = vadd.xlane.f32.xlu0 %v37
    %v39 = vpop.xlane.xlu0 %38
    %v40 = vrcp.pop 32.0
    %v41 = vmul.f32 %v36, %v40
    %v42 = vmul.f32 %v39, %v40
    %v43 = vadd.f32 %v41, 1e-06
    %v44 = vadd.f32 %v42, 1e-06
    %v45 = vrsqrt.pop %v43
    %v46 = vrsqrt.pop %v44
    %v47 = vmul.f32 %v29, %v45
    %v48 = vmul.f32 %v30, %v46
    %v49 = vld [vmem:[#allocation2] sm:$0x1]
    %v51 = vlaneseq
    %v52 = vshrl.u32 %v51, 7
    %v53 = vsub.s32 0, %v52
    %v54 = vrot.slane %v49, %v53
    %v56 = vmul.f32 %v47, %v54
    %v57 = vmul.f32 %v48, %v54
    %v58 = vld [vmem:[%s2] sm:$0xff]
    %v59 = vld [vmem:[%s2 + $0x8] sm:$0xff]
    %v60 = vld [vmem:[%s2 + $0x10] sm:$0xff]
    %v61 = vld [vmem:[%s2 + $0x18] sm:$0xff]
    %v63 = vsel %vm33, %v56, 0
    %v66 = vsel %vm33, %v57, 0
    %68 = vmatprep.subr.mxu0 0.0
    %69 = vmatpush1.msra.mxu0 0.0
    %70 = vmatprep.subr.mxu0 0.0
    %71 = vmatpush1.msra.mxu0 0.0
    %72 = vmatprep.subr.mxu0 0.0
    %73 = vmatpush1.msra.mxu0 0.0
    %74 = vmatprep.subr.mxu0 0.0
    %75 = vmatpush1.msra.mxu0 0.0
    %76 = vmatprep.subr.mxu0 0.0
    %77 = vmatpush1.msra.mxu0 0.0
    %78 = vmatprep.subr.mxu0 0.0
    %79 = vmatpush1.msra.mxu0 0.0
    %80 = vmatprep.subr.mxu0 0.0
    %81 = vmatpush1.msra.mxu0 0.0
    %82 = vmatprep.subr.mxu0 0.0
    %83 = vmatpush1.msra.mxu0 0.0
    %84 = vmatprep.subr.mxu0 0.0
    %85 = vmatpush1.msra.mxu0 0.0
    %86 = vmatprep.subr.mxu0 0.0
    %87 = vmatpush1.msra.mxu0 0.0
    %88 = vmatprep.subr.mxu0 0.0
    %89 = vmatpush1.msra.mxu0 0.0
    %90 = vmatprep.subr.mxu0 0.0
    %91 = vmatpush1.msra.mxu0 0.0
    %92 = vmatprep.subr.mxu0 0.0
    %93 = vmatpush1.msra.mxu0 %v61
    %94 = vmatprep.subr.mxu0 0.0
    %95 = vmatpush1.msra.mxu0 %v60
    %96 = vmatprep.subr.mxu0 0.0
    %97 = vmatpush1.msra.mxu0 %v59
    %98 = vmatprep.subr.mxu0 0.0
    %99 = vmatpush1.msra.mxu0 %v58
    %100 = vmatprep.subr.mxu0 0.0
    %101 = vmatpush2.msra.mxu0 0.0
    %102 = vmatprep.subr.mxu0 0.0
    %103 = vmatpush2.msra.mxu0 0.0
    %104 = vmatprep.subr.mxu0 0.0
    %105 = vmatpush2.msra.mxu0 0.0
    %106 = vmatprep.subr.mxu0 0.0
    %107 = vmatpush2.msra.mxu0 0.0
    %108 = vmatprep.subr.mxu0 0.0
    %109 = vmatpush2.msra.mxu0 0.0
    %110 = vmatprep.subr.mxu0 0.0
    %111 = vmatpush2.msra.mxu0 0.0
    %112 = vmatprep.subr.mxu0 0.0
    %113 = vmatpush2.msra.mxu0 0.0
    %114 = vmatprep.subr.mxu0 0.0
    %115 = vmatpush2.msra.mxu0 0.0
    %116 = vmatprep.subr.mxu0 0.0
    %117 = vmatpush2.msra.mxu0 0.0
    %118 = vmatprep.subr.mxu0 0.0
    %119 = vmatpush2.msra.mxu0 0.0
    %120 = vmatprep.subr.mxu0 0.0
    %121 = vmatpush2.msra.mxu0 0.0
    %122 = vmatprep.subr.mxu0 0.0
    %123 = vmatpush2.msra.mxu0 0.0
    %124 = vmatprep.subr.mxu0 0.0
    %125 = vmatpush2.msra.mxu0 0.0
    %126 = vmatprep.subr.mxu0 0.0
    %127 = vmatpush2.msra.mxu0 0.0
    %128 = vmatprep.subr.mxu0 0.0
    %129 = vmatpush2.msra.mxu0 0.0
    %130 = vmatprep.subr.mxu0 0.0
    %131 = vmatpush2.msra.mxu0 0.0
    %132 = vmatprep.mubr.f32.mxu0 0.0
    %133 = vmatmul.mubr.f32.gmra.mxu0 %v63
    %v134 = vpop.f32.mrf.mxu0
    %v135 = vadd.f32 0.0, %v134
    %v136 = vpop.f32.mrf.mxu0
    %137 = vmatprep.mubr.f32.mxu0 0.0
    %138 = vmatmul.mubr.f32.gmra.mxu0 %v66
    %v139 = vpop.f32.mrf.mxu0
    %v140 = vadd.f32 0.0, %v139
    %v141 = vpop.f32.mrf.mxu0
    %142 = vdwg.mxu0
    %v143 = vmax.f32 %v135, 0.0
    %v144 = vmax.f32 %v140, 0.0
    %v145 = vld [vmem:[%s3] sm:$0xff]
    %v146 = vld [vmem:[%s3 + $0x8] sm:$0xff]
    %v147 = vld [vmem:[%s3 + $0x10] sm:$0xff]
    %v148 = vld [vmem:[%s3 + $0x18] sm:$0xff]
    %v149 = vld [vmem:[%s3 + $0x20] sm:$0xff]
    %v150 = vld [vmem:[%s3 + $0x28] sm:$0xff]
    %v151 = vld [vmem:[%s3 + $0x30] sm:$0xff]
    %v152 = vld [vmem:[%s3 + $0x38] sm:$0xff]
    %vm153 = vcmask 523264
    %v155 = vsel %vm153, %v143, 0
    %v158 = vsel %vm153, %v144, 0
    %160 = vmatprep.subr.mxu0 0.0
    %161 = vmatpush1.msra.mxu0 0.0
    %162 = vmatprep.subr.mxu0 0.0
    %163 = vmatpush1.msra.mxu0 0.0
    %164 = vmatprep.subr.mxu0 0.0
    %165 = vmatpush1.msra.mxu0 0.0
    %166 = vmatprep.subr.mxu0 0.0
    %167 = vmatpush1.msra.mxu0 0.0
    %168 = vmatprep.subr.mxu0 0.0
    %169 = vmatpush1.msra.mxu0 0.0
    %170 = vmatprep.subr.mxu0 0.0
    %171 = vmatpush1.msra.mxu0 0.0
    %172 = vmatprep.subr.mxu0 0.0
    %173 = vmatpush1.msra.mxu0 0.0
    %174 = vmatprep.subr.mxu0 0.0
    %175 = vmatpush1.msra.mxu0 0.0
    %176 = vmatprep.subr.mxu0 0.0
    %177 = vmatpush1.msra.mxu0 %v152
    %178 = vmatprep.subr.mxu0 0.0
    %179 = vmatpush1.msra.mxu0 %v151
    %180 = vmatprep.subr.mxu0 0.0
    %181 = vmatpush1.msra.mxu0 %v150
    %182 = vmatprep.subr.mxu0 0.0
    %183 = vmatpush1.msra.mxu0 %v149
    %184 = vmatprep.subr.mxu0 0.0
    %185 = vmatpush1.msra.mxu0 %v148
    %186 = vmatprep.subr.mxu0 0.0
    %187 = vmatpush1.msra.mxu0 %v147
    %188 = vmatprep.subr.mxu0 0.0
    %189 = vmatpush1.msra.mxu0 %v146
    %190 = vmatprep.subr.mxu0 0.0
    %191 = vmatpush1.msra.mxu0 %v145
    %192 = vmatprep.subr.mxu0 0.0
    %193 = vmatpush2.msra.mxu0 0.0
    %194 = vmatprep.subr.mxu0 0.0
    %195 = vmatpush2.msra.mxu0 0.0
    %196 = vmatprep.subr.mxu0 0.0
    %197 = vmatpush2.msra.mxu0 0.0
    %198 = vmatprep.subr.mxu0 0.0
    %199 = vmatpush2.msra.mxu0 0.0
    %200 = vmatprep.subr.mxu0 0.0
    %201 = vmatpush2.msra.mxu0 0.0
    %202 = vmatprep.subr.mxu0 0.0
    %203 = vmatpush2.msra.mxu0 0.0
    %204 = vmatprep.subr.mxu0 0.0
    %205 = vmatpush2.msra.mxu0 0.0
    %206 = vmatprep.subr.mxu0 0.0
    %207 = vmatpush2.msra.mxu0 0.0
    %208 = vmatprep.subr.mxu0 0.0
    %209 = vmatpush2.msra.mxu0 0.0
    %210 = vmatprep.subr.mxu0 0.0
    %211 = vmatpush2.msra.mxu0 0.0
    %212 = vmatprep.subr.mxu0 0.0
    %213 = vmatpush2.msra.mxu0 0.0
    %214 = vmatprep.subr.mxu0 0.0
    %215 = vmatpush2.msra.mxu0 0.0
    %216 = vmatprep.subr.mxu0 0.0
    %217 = vmatpush2.msra.mxu0 0.0
    %218 = vmatprep.subr.mxu0 0.0
    %219 = vmatpush2.msra.mxu0 0.0
    %220 = vmatprep.subr.mxu0 0.0
    %221 = vmatpush2.msra.mxu0 0.0
    %222 = vmatprep.subr.mxu0 0.0
    %223 = vmatpush2.msra.mxu0 0.0
    %224 = vmatprep.mubr.f32.mxu0 0.0
    %225 = vmatmul.mubr.f32.gmra.mxu0 %v155
    %v226 = vpop.f32.mrf.mxu0
    %v227 = vadd.f32 0.0, %v226
    %v228 = vpop.f32.mrf.mxu0
    %229 = vmatprep.mubr.f32.mxu0 0.0
    %230 = vmatmul.mubr.f32.gmra.mxu0 %v158
    %v231 = vpop.f32.mrf.mxu0
    %v232 = vadd.f32 0.0, %v231
    %v233 = vpop.f32.mrf.mxu0
    %234 = vdwg.mxu0
    %v235 = vadd.f32 %v29, %v227
    %v236 = vadd.f32 %v30, %v232
    %237 = vst.msk [vmem:[%s4] sm:$0xff] %vm33, %v235
    %238 = vst.msk [vmem:[%s4 + $0x8] sm:$0xff] %vm33, %v236
    // Predicated region
    $region22: #{knowledge_pretrainer_forward.50} parent=1 // pred_check
      _
    $region23: #{knowledge_pretrainer_forward.50} parent=1 // pred_check_branch
      %240 = sbr.rel (0) target = $region25
    $region24: #{knowledge_pretrainer_forward.50} parent=1 // pred_region
      _
    $region25: #{knowledge_pretrainer_forward.50} parent=1 // pred_fallthru
      _
    // Predicated region
    $region26: #{knowledge_pretrainer_forward.50} parent=1 // pred_check
      _
    $region27: #{knowledge_pretrainer_forward.50} parent=1 // pred_check_branch
      %242 = sbr.rel (0) target = $region29
    $region28: #{knowledge_pretrainer_forward.50} parent=1 // pred_region
      _
    $region29: #{knowledge_pretrainer_forward.50} parent=1 // pred_fallthru
      _
    %243 = vsyncpa [#allocation3], 1

// kernel: knowledge_pretrainer_forward.40
$region0: #{knowledge_pretrainer_forward.40}
  #allocation0 [shape = 'u32[]', space=smem, size = 0x4, offset = 0x4, fixed_abs, tag = 'smem constant byte address 0x4 - core index']
  #allocation1 [shape = 'u32[144,128]{1,0:T(1,128)}', space=vmem, size = 0x12000, scoped, tag = 'internal scratch']
  #allocation2 [shape = 'f32[1,1,1]{2,1,0:T(1,128)S(1)}', space=vmem, size = 0x200, scoped, tag = 'scoped memory for knowledge_pretrainer_forward.40']
  %s0 = inlined_call_operand.vmem [shape: f32[8,8,8], index: 0, kind: input, shape index: {}]
  %s1 = inlined_call_operand.vmem [shape: f32[8,8,8], index: 1, kind: input, shape index: {}]
  %s2 = inlined_call_operand.vmem [shape: f32[8,8,8], index: 2, kind: input, shape index: {}]
  %s3 = inlined_call_operand.<no memory space> [shape: f32[1,1,1], index: 3, kind: input, shape index: {}]
  %s4 = inlined_call_operand.vmem [shape: f32[2,1,8], index: 4, kind: input, shape index: {}]
  %s5 = inlined_call_operand.vmem [shape: f32[8,8,8], index: 5, kind: output, shape index: {}]
  %s6 = sld [smem:[#allocation0]]
  $region30: #{knowledge_pretrainer_forward.40} parent=0
    _
  %s8 = ssub.s32 1, %s6
  %s9 = scalar_select 0, %s8, %s6
  %v10 = vstv %s3
  %11 = vst [vmem:[#allocation2] sm:$0x1] %v10
  // Predicated region
  $region2: #{knowledge_pretrainer_forward.40} parent=0 // pred_check
    _
  $region3: #{knowledge_pretrainer_forward.40} parent=0 // pred_check_branch
    %13 = sbr.rel (0) target = $region5
  $region4: #{knowledge_pretrainer_forward.40} parent=0 // pred_region
    _
  $region5: #{knowledge_pretrainer_forward.40} parent=0 // pred_fallthru
    _
  // Predicated region
  $region6: #{knowledge_pretrainer_forward.40} parent=0 // pred_check
    _
  $region7: #{knowledge_pretrainer_forward.40} parent=0 // pred_check_branch
    %15 = sbr.rel (0) target = $region9
  $region8: #{knowledge_pretrainer_forward.40} parent=0 // pred_region
    _
  $region9: #{knowledge_pretrainer_forward.40} parent=0 // pred_fallthru
    _
  // Predicated region
  $region10: #{knowledge_pretrainer_forward.40} parent=0 // pred_check
    _
  $region11: #{knowledge_pretrainer_forward.40} parent=0 // pred_check_branch
    %17 = sbr.rel (0) target = $region13
  $region12: #{knowledge_pretrainer_forward.40} parent=0 // pred_region
    _
  $region13: #{knowledge_pretrainer_forward.40} parent=0 // pred_fallthru
    _
  // Predicated region
  $region14: #{knowledge_pretrainer_forward.40} parent=0 // pred_check
    _
  $region15: #{knowledge_pretrainer_forward.40} parent=0 // pred_check_branch
    %19 = sbr.rel (0) target = $region17
  $region16: #{knowledge_pretrainer_forward.40} parent=0 // pred_region
    _
  $region17: #{knowledge_pretrainer_forward.40} parent=0 // pred_fallthru
    _
  // Predicated region
  $region18: #{knowledge_pretrainer_forward.40} parent=0 // pred_check
    _
  $region19: #{knowledge_pretrainer_forward.40} parent=0 // pred_check_branch
    %21 = sbr.rel (0) target = $region21
  $region20: #{knowledge_pretrainer_forward.40} parent=0 // pred_region
    _
  $region21: #{knowledge_pretrainer_forward.40} parent=0 // pred_fallthru
    _
  %v22 = vld [vmem:[%s0] sm:$0xff]
  %v23 = vld [vmem:[%s0 + $0x8] sm:$0xff]
  %v24 = vld [vmem:[%s0 + $0x10] sm:$0xff]
  %v25 = vld [vmem:[%s0 + $0x18] sm:$0xff]
  %v26 = vld [vmem:[%s0 + $0x20] sm:$0xff]
  %v27 = vld [vmem:[%s0 + $0x28] sm:$0xff]
  %v28 = vld [vmem:[%s0 + $0x30] sm:$0xff]
  %v29 = vld [vmem:[%s0 + $0x38] sm:$0xff]
  %v30 = vld [vmem:[%s1] sm:$0xff]
  %v31 = vld [vmem:[%s1 + $0x8] sm:$0xff]
  %v32 = vld [vmem:[%s1 + $0x10] sm:$0xff]
  %v33 = vld [vmem:[%s1 + $0x18] sm:$0xff]
  %v34 = vld [vmem:[%s1 + $0x20] sm:$0xff]
  %v35 = vld [vmem:[%s1 + $0x28] sm:$0xff]
  %v36 = vld [vmem:[%s1 + $0x30] sm:$0xff]
  %v37 = vld [vmem:[%s1 + $0x38] sm:$0xff]
  %v38 = vld [vmem:[%s2] sm:$0xff]
  %v39 = vld [vmem:[%s2 + $0x8] sm:$0xff]
  %v40 = vld [vmem:[%s2 + $0x10] sm:$0xff]
  %v41 = vld [vmem:[%s2 + $0x18] sm:$0xff]
  %v42 = vld [vmem:[%s2 + $0x20] sm:$0xff]
  %v43 = vld [vmem:[%s2 + $0x28] sm:$0xff]
  %v44 = vld [vmem:[%s2 + $0x30] sm:$0xff]
  %v45 = vld [vmem:[%s2 + $0x38] sm:$0xff]
  %vm46 = vcmask 64512
  %v48 = vsel %vm46, %v22, 0
  %v51 = vsel %vm46, %v30, 0
  %53 = vmatprep.subr.mxu0 0.0
  %54 = vmatpush1.xpose.msra.mxu0 0.0
  %55 = vmatprep.subr.mxu0 0.0
  %56 = vmatpush1.xpose.msra.mxu0 0.0
  %57 = vmatprep.subr.mxu0 0.0
  %58 = vmatpush1.xpose.msra.mxu0 0.0
  %59 = vmatprep.subr.mxu0 0.0
  %60 = vmatpush1.xpose.msra.mxu0 0.0
  %61 = vmatprep.subr.mxu0 0.0
  %62 = vmatpush1.xpose.msra.mxu0 0.0
  %63 = vmatprep.subr.mxu0 0.0
  %64 = vmatpush1.xpose.msra.mxu0 0.0
  %65 = vmatprep.subr.mxu0 0.0
  %66 = vmatpush1.xpose.msra.mxu0 0.0
  %67 = vmatprep.subr.mxu0 0.0
  %68 = vmatpush1.xpose.msra.mxu0 0.0
  %69 = vmatprep.subr.mxu0 0.0
  %70 = vmatpush1.xpose.msra.mxu0 0.0
  %71 = vmatprep.subr.mxu0 0.0
  %72 = vmatpush1.xpose.msra.mxu0 0.0
  %73 = vmatprep.subr.mxu0 0.0
  %74 = vmatpush1.xpose.msra.mxu0 0.0
  %75 = vmatprep.subr.mxu0 0.0
  %76 = vmatpush1.xpose.msra.mxu0 0.0
  %77 = vmatprep.subr.mxu0 0.0
  %78 = vmatpush1.xpose.msra.mxu0 0.0
  %79 = vmatprep.subr.mxu0 0.0
  %80 = vmatpush1.xpose.msra.mxu0 0.0
  %81 = vmatprep.subr.mxu0 0.0
  %82 = vmatpush1.xpose.msra.mxu0 0.0
  %83 = vmatprep.subr.mxu0 0.0
  %84 = vmatpush1.xpose.msra.mxu0 %v51
  %85 = vmatprep.subr.mxu0 0.0
  %86 = vmatpush2.xpose.msra.mxu0 0.0
  %87 = vmatprep.subr.mxu0 0.0
  %88 = vmatpush2.xpose.msra.mxu0 0.0
  %89 = vmatprep.subr.mxu0 0.0
  %90 = vmatpush2.xpose.msra.mxu0 0.0
  %91 = vmatprep.subr.mxu0 0.0
  %92 = vmatpush2.xpose.msra.mxu0 0.0
  %93 = vmatprep.subr.mxu0 0.0
  %94 = vmatpush2.xpose.msra.mxu0 0.0
  %95 = vmatprep.subr.mxu0 0.0
  %96 = vmatpush2.xpose.msra.mxu0 0.0
  %97 = vmatprep.subr.mxu0 0.0
  %98 = vmatpush2.xpose.msra.mxu0 0.0
  %99 = vmatprep.subr.mxu0 0.0
  %100 = vmatpush2.xpose.msra.mxu0 0.0
  %101 = vmatprep.subr.mxu0 0.0
  %102 = vmatpush2.xpose.msra.mxu0 0.0
  %103 = vmatprep.subr.mxu0 0.0
  %104 = vmatpush2.xpose.msra.mxu0 0.0
  %105 = vmatprep.subr.mxu0 0.0
  %106 = vmatpush2.xpose.msra.mxu0 0.0
  %107 = vmatprep.subr.mxu0 0.0
  %108 = vmatpush2.xpose.msra.mxu0 0.0
  %109 = vmatprep.subr.mxu0 0.0
  %110 = vmatpush2.xpose.msra.mxu0 0.0
  %111 = vmatprep.subr.mxu0 0.0
  %112 = vmatpush2.xpose.msra.mxu0 0.0
  %113 = vmatprep.subr.mxu0 0.0
  %114 = vmatpush2.xpose.msra.mxu0 0.0
  %115 = vmatprep.subr.mxu0 0.0
  %116 = vmatpush2.xpose.msra.mxu0 0.0
  %117 = vmatprep.mubr.f32.mxu0 0.0
  %118 = vmatmul.mubr.f32.gmra.mxu0 %v48
  %v119 = vpop.f32.mrf.mxu0
  %v120 = vadd.f32 0.0, %v119
  %v121 = vpop.f32.mrf.mxu0
  %122 = vdwg.mxu0
  %v124 = vsel %vm46, %v23, 0
  %v127 = vsel %vm46, %v31, 0
  %129 = vmatprep.subr.mxu0 0.0
  %130 = vmatpush1.xpose.msra.mxu0 0.0
  %131 = vmatprep.subr.mxu0 0.0
  %132 = vmatpush1.xpose.msra.mxu0 0.0
  %133 = vmatprep.subr.mxu0 0.0
  %134 = vmatpush1.xpose.msra.mxu0 0.0
  %135 = vmatprep.subr.mxu0 0.0
  %136 = vmatpush1.xpose.msra.mxu0 0.0
  %137 = vmatprep.subr.mxu0 0.0
  %138 = vmatpush1.xpose.msra.mxu0 0.0
  %139 = vmatprep.subr.mxu0 0.0
  %140 = vmatpush1.xpose.msra.mxu0 0.0
  %141 = vmatprep.subr.mxu0 0.0
  %142 = vmatpush1.xpose.msra.mxu0 0.0
  %143 = vmatprep.subr.mxu0 0.0
  %144 = vmatpush1.xpose.msra.mxu0 0.0
  %145 = vmatprep.subr.mxu0 0.0
  %146 = vmatpush1.xpose.msra.mxu0 0.0
  %147 = vmatprep.subr.mxu0 0.0
  %148 = vmatpush1.xpose.msra.mxu0 0.0
  %149 = vmatprep.subr.mxu0 0.0
  %150 = vmatpush1.xpose.msra.mxu0 0.0
  %151 = vmatprep.subr.mxu0 0.0
  %152 = vmatpush1.xpose.msra.mxu0 0.0
  %153 = vmatprep.subr.mxu0 0.0
  %154 = vmatpush1.xpose.msra.mxu0 0.0
  %155 = vmatprep.subr.mxu0 0.0
  %156 = vmatpush1.xpose.msra.mxu0 0.0
  %157 = vmatprep.subr.mxu0 0.0
  %158 = vmatpush1.xpose.msra.mxu0 0.0
  %159 = vmatprep.subr.mxu0 0.0
  %160 = vmatpush1.xpose.msra.mxu0 %v127
  %161 = vmatprep.subr.mxu0 0.0
  %162 = vmatpush2.xpose.msra.mxu0 0.0
  %163 = vmatprep.subr.mxu0 0.0
  %164 = vmatpush2.xpose.msra.mxu0 0.0
  %165 = vmatprep.subr.mxu0 0.0
  %166 = vmatpush2.xpose.msra.mxu0 0.0
  %167 = vmatprep.subr.mxu0 0.0
  %168 = vmatpush2.xpose.msra.mxu0 0.0
  %169 = vmatprep.subr.mxu0 0.0
  %170 = vmatpush2.xpose.msra.mxu0 0.0
  %171 = vmatprep.subr.mxu0 0.0
  %172 = vmatpush2.xpose.msra.mxu0 0.0
  %173 = vmatprep.subr.mxu0 0.0
  %174 = vmatpush2.xpose.msra.mxu0 0.0
  %175 = vmatprep.subr.mxu0 0.0
  %176 = vmatpush2.xpose.msra.mxu0 0.0
  %177 = vmatprep.subr.mxu0 0.0
  %178 = vmatpush2.xpose.msra.mxu0 0.0
  %179 = vmatprep.subr.mxu0 0.0
  %180 = vmatpush2.xpose.msra.mxu0 0.0
  %181 = vmatprep.subr.mxu0 0.0
  %182 = vmatpush2.xpose.msra.mxu0 0.0
  %183 = vmatprep.subr.mxu0 0.0
  %184 = vmatpush2.xpose.msra.mxu0 0.0
  %185 = vmatprep.subr.mxu0 0.0
  %186 = vmatpush2.xpose.msra.mxu0 0.0
  %187 = vmatprep.subr.mxu0 0.0
  %188 = vmatpush2.xpose.msra.mxu0 0.0
  %189 = vmatprep.subr.mxu0 0.0
  %190 = vmatpush2.xpose.msra.mxu0 0.0
  %191 = vmatprep.subr.mxu0 0.0
  %192 = vmatpush2.xpose.msra.mxu0 0.0
  %193 = vmatprep.mubr.f32.mxu0 0.0
  %194 = vmatmul.mubr.f32.gmra.mxu0 %v124
  %v195 = vpop.f32.mrf.mxu0
  %v196 = vadd.f32 0.0, %v195
  %v197 = vpop.f32.mrf.mxu0
  %198 = vdwg.mxu0
  %v200 = vsel %vm46, %v24, 0
  %v203 = vsel %vm46, %v32, 0
  %205 = vmatprep.subr.mxu0 0.0
  %206 = vmatpush1.xpose.msra.mxu0 0.0
  %207 = vmatprep.subr.mxu0 0.0
  %208 = vmatpush1.xpose.msra.mxu0 0.0
  %209 = vmatprep.subr.mxu0 0.0
  %210 = vmatpush1.xpose.msra.mxu0 0.0
  %211 = vmatprep.subr.mxu0 0.0
  %212 = vmatpush1.xpose.msra.mxu0 0.0
  %213 = vmatprep.subr.mxu0 0.0
  %214 = vmatpush1.xpose.msra.mxu0 0.0
  %215 = vmatprep.subr.mxu0 0.0
  %216 = vmatpush1.xpose.msra.mxu0 0.0
  %217 = vmatprep.subr.mxu0 0.0
  %218 = vmatpush1.xpose.msra.mxu0 0.0
  %219 = vmatprep.subr.mxu0 0.0
  %220 = vmatpush1.xpose.msra.mxu0 0.0
  %221 = vmatprep.subr.mxu0 0.0
  %222 = vmatpush1.xpose.msra.mxu0 0.0
  %223 = vmatprep.subr.mxu0 0.0
  %224 = vmatpush1.xpose.msra.mxu0 0.0
  %225 = vmatprep.subr.mxu0 0.0
  %226 = vmatpush1.xpose.msra.mxu0 0.0
  %227 = vmatprep.subr.mxu0 0.0
  %228 = vmatpush1.xpose.msra.mxu0 0.0
  %229 = vmatprep.subr.mxu0 0.0
  %230 = vmatpush1.xpose.msra.mxu0 0.0
  %231 = vmatprep.subr.mxu0 0.0
  %232 = vmatpush1.xpose.msra.mxu0 0.0
  %233 = vmatprep.subr.mxu0 0.0
  %234 = vmatpush1.xpose.msra.mxu0 0.0
  %235 = vmatprep.subr.mxu0 0.0
  %236 = vmatpush1.xpose.msra.mxu0 %v203
  %237 = vmatprep.subr.mxu0 0.0
  %238 = vmatpush2.xpose.msra.mxu0 0.0
  %239 = vmatprep.subr.mxu0 0.0
  %240 = vmatpush2.xpose.msra.mxu0 0.0
  %241 = vmatprep.subr.mxu0 0.0
  %242 = vmatpush2.xpose.msra.mxu0 0.0
  %243 = vmatprep.subr.mxu0 0.0
  %244 = vmatpush2.xpose.msra.mxu0 0.0
  %245 = vmatprep.subr.mxu0 0.0
  %246 = vmatpush2.xpose.msra.mxu0 0.0
  %247 = vmatprep.subr.mxu0 0.0
  %248 = vmatpush2.xpose.msra.mxu0 0.0
  %249 = vmatprep.subr.mxu0 0.0
  %250 = vmatpush2.xpose.msra.mxu0 0.0
  %251 = vmatprep.subr.mxu0 0.0
  %252 = vmatpush2.xpose.msra.mxu0 0.0
  %253 = vmatprep.subr.mxu0 0.0
  %254 = vmatpush2.xpose.msra.mxu0 0.0
  %255 = vmatprep.subr.mxu0 0.0
  %256 = vmatpush2.xpose.msra.mxu0 0.0
  %257 = vmatprep.subr.mxu0 0.0
  %258 = vmatpush2.xpose.msra.mxu0 0.0
  %259 = vmatprep.subr.mxu0 0.0
  %260 = vmatpush2.xpose.msra.mxu0 0.0
  %261 = vmatprep.subr.mxu0 0.0
  %262 = vmatpush2.xpose.msra.mxu0 0.0
  %263 = vmatprep.subr.mxu0 0.0
  %264 = vmatpush2.xpose.msra.mxu0 0.0
  %265 = vmatprep.subr.mxu0 0.0
  %266 = vmatpush2.xpose.msra.mxu0 0.0
  %267 = vmatprep.subr.mxu0 0.0
  %268 = vmatpush2.xpose.msra.mxu0 0.0
  %269 = vmatprep.mubr.f32.mxu0 0.0
  %270 = vmatmul.mubr.f32.gmra.mxu0 %v200
  %v271 = vpop.f32.mrf.mxu0
  %v272 = vadd.f32 0.0, %v271
  %v273 = vpop.f32.mrf.mxu0
  %274 = vdwg.mxu0
  %v276 = vsel %vm46, %v25, 0
  %v279 = vsel %vm46, %v33, 0
  %281 = vmatprep.subr.mxu0 0.0
  %282 = vmatpush1.xpose.msra.mxu0 0.0
  %283 = vmatprep.subr.mxu0 0.0
  %284 = vmatpush1.xpose.msra.mxu0 0.0
  %285 = vmatprep.subr.mxu0 0.0
  %286 = vmatpush1.xpose.msra.mxu0 0.0
  %287 = vmatprep.subr.mxu0 0.0
  %288 = vmatpush1.xpose.msra.mxu0 0.0
  %289 = vmatprep.subr.mxu0 0.0
  %290 = vmatpush1.xpose.msra.mxu0 0.0
  %291 = vmatprep.subr.mxu0 0.0
  %292 = vmatpush1.xpose.msra.mxu0 0.0
  %293 = vmatprep.subr.mxu0 0.0
  %294 = vmatpush1.xpose.msra.mxu0 0.0
  %295 = vmatprep.subr.mxu0 0.0
  %296 = vmatpush1.xpose.msra.mxu0 0.0
  %297 = vmatprep.subr.mxu0 0.0
  %298 = vmatpush1.xpose.msra.mxu0 0.0
  %299 = vmatprep.subr.mxu0 0.0
  %300 = vmatpush1.xpose.msra.mxu0 0.0
  %301 = vmatprep.subr.mxu0 0.0
  %302 = vmatpush1.xpose.msra.mxu0 0.0
  %303 = vmatprep.subr.mxu0 0.0
  %304 = vmatpush1.xpose.msra.mxu0 0.0
  %305 = vmatprep.subr.mxu0 0.0
  %306 = vmatpush1.xpose.msra.mxu0 0.0
  %307 = vmatprep.subr.mxu0 0.0
  %308 = vmatpush1.xpose.msra.mxu0 0.0
  %309 = vmatprep.subr.mxu0 0.0
  %310 = vmatpush1.xpose.msra.mxu0 0.0
  %311 = vmatprep.subr.mxu0 0.0
  %312 = vmatpush1.xpose.msra.mxu0 %v279
  %313 = vmatprep.subr.mxu0 0.0
  %314 = vmatpush2.xpose.msra.mxu0 0.0
  %315 = vmatprep.subr.mxu0 0.0
  %316 = vmatpush2.xpose.msra.mxu0 0.0
  %317 = vmatprep.subr.mxu0 0.0
  %318 = vmatpush2.xpose.msra.mxu0 0.0
  %319 = vmatprep.subr.mxu0 0.0
  %320 = vmatpush2.xpose.msra.mxu0 0.0
  %321 = vmatprep.subr.mxu0 0.0
  %322 = vmatpush2.xpose.msra.mxu0 0.0
  %323 = vmatprep.subr.mxu0 0.0
  %324 = vmatpush2.xpose.msra.mxu0 0.0
  %325 = vmatprep.subr.mxu0 0.0
  %326 = vmatpush2.xpose.msra.mxu0 0.0
  %327 = vmatprep.subr.mxu0 0.0
  %328 = vmatpush2.xpose.msra.mxu0 0.0
  %329 = vmatprep.subr.mxu0 0.0
  %330 = vmatpush2.xpose.msra.mxu0 0.0
  %331 = vmatprep.subr.mxu0 0.0
  %332 = vmatpush2.xpose.msra.mxu0 0.0
  %333 = vmatprep.subr.mxu0 0.0
  %334 = vmatpush2.xpose.msra.mxu0 0.0
  %335 = vmatprep.subr.mxu0 0.0
  %336 = vmatpush2.xpose.msra.mxu0 0.0
  %337 = vmatprep.subr.mxu0 0.0
  %338 = vmatpush2.xpose.msra.mxu0 0.0
  %339 = vmatprep.subr.mxu0 0.0
  %340 = vmatpush2.xpose.msra.mxu0 0.0
  %341 = vmatprep.subr.mxu0 0.0
  %342 = vmatpush2.xpose.msra.mxu0 0.0
  %343 = vmatprep.subr.mxu0 0.0
  %344 = vmatpush2.xpose.msra.mxu0 0.0
  %345 = vmatprep.mubr.f32.mxu0 0.0
  %346 = vmatmul.mubr.f32.gmra.mxu0 %v276
  %v347 = vpop.f32.mrf.mxu0
  %v348 = vadd.f32 0.0, %v347
  %v349 = vpop.f32.mrf.mxu0
  %350 = vdwg.mxu0
  %v352 = vsel %vm46, %v26, 0
  %v355 = vsel %vm46, %v34, 0
  %357 = vmatprep.subr.mxu0 0.0
  %358 = vmatpush1.xpose.msra.mxu0 0.0
  %359 = vmatprep.subr.mxu0 0.0
  %360 = vmatpush1.xpose.msra.mxu0 0.0
  %361 = vmatprep.subr.mxu0 0.0
  %362 = vmatpush1.xpose.msra.mxu0 0.0
  %363 = vmatprep.subr.mxu0 0.0
  %364 = vmatpush1.xpose.msra.mxu0 0.0
  %365 = vmatprep.subr.mxu0 0.0
  %366 = vmatpush1.xpose.msra.mxu0 0.0
  %367 = vmatprep.subr.mxu0 0.0
  %368 = vmatpush1.xpose.msra.mxu0 0.0
  %369 = vmatprep.subr.mxu0 0.0
  %370 = vmatpush1.xpose.msra.mxu0 0.0
  %371 = vmatprep.subr.mxu0 0.0
  %372 = vmatpush1.xpose.msra.mxu0 0.0
  %373 = vmatprep.subr.mxu0 0.0
  %374 = vmatpush1.xpose.msra.mxu0 0.0
  %375 = vmatprep.subr.mxu0 0.0
  %376 = vmatpush1.xpose.msra.mxu0 0.0
  %377 = vmatprep.subr.mxu0 0.0
  %378 = vmatpush1.xpose.msra.mxu0 0.0
  %379 = vmatprep.subr.mxu0 0.0
  %380 = vmatpush1.xpose.msra.mxu0 0.0
  %381 = vmatprep.subr.mxu0 0.0
  %382 = vmatpush1.xpose.msra.mxu0 0.0
  %383 = vmatprep.subr.mxu0 0.0
  %384 = vmatpush1.xpose.msra.mxu0 0.0
  %385 = vmatprep.subr.mxu0 0.0
  %386 = vmatpush1.xpose.msra.mxu0 0.0
  %387 = vmatprep.subr.mxu0 0.0
  %388 = vmatpush1.xpose.msra.mxu0 %v355
  %389 = vmatprep.subr.mxu0 0.0
  %390 = vmatpush2.xpose.msra.mxu0 0.0
  %391 = vmatprep.subr.mxu0 0.0
  %392 = vmatpush2.xpose.msra.mxu0 0.0
  %393 = vmatprep.subr.mxu0 0.0
  %394 = vmatpush2.xpose.msra.mxu0 0.0
  %395 = vmatprep.subr.mxu0 0.0
  %396 = vmatpush2.xpose.msra.mxu0 0.0
  %397 = vmatprep.subr.mxu0 0.0
  %398 = vmatpush2.xpose.msra.mxu0 0.0
  %399 = vmatprep.subr.mxu0 0.0
  %400 = vmatpush2.xpose.msra.mxu0 0.0
  %401 = vmatprep.subr.mxu0 0.0
  %402 = vmatpush2.xpose.msra.mxu0 0.0
  %403 = vmatprep.subr.mxu0 0.0
  %404 = vmatpush2.xpose.msra.mxu0 0.0
  %405 = vmatprep.subr.mxu0 0.0
  %406 = vmatpush2.xpose.msra.mxu0 0.0
  %407 = vmatprep.subr.mxu0 0.0
  %408 = vmatpush2.xpose.msra.mxu0 0.0
  %409 = vmatprep.subr.mxu0 0.0
  %410 = vmatpush2.xpose.msra.mxu0 0.0
  %411 = vmatprep.subr.mxu0 0.0
  %412 = vmatpush2.xpose.msra.mxu0 0.0
  %413 = vmatprep.subr.mxu0 0.0
  %414 = vmatpush2.xpose.msra.mxu0 0.0
  %415 = vmatprep.subr.mxu0 0.0
  %416 = vmatpush2.xpose.msra.mxu0 0.0
  %417 = vmatprep.subr.mxu0 0.0
  %418 = vmatpush2.xpose.msra.mxu0 0.0
  %419 = vmatprep.subr.mxu0 0.0
  %420 = vmatpush2.xpose.msra.mxu0 0.0
  %421 = vmatprep.mubr.f32.mxu0 0.0
  %422 = vmatmul.mubr.f32.gmra.mxu0 %v352
  %v423 = vpop.f32.mrf.mxu0
  %v424 = vadd.f32 0.0, %v423
  %v425 = vpop.f32.mrf.mxu0
  %426 = vdwg.mxu0
  %v428 = vsel %vm46, %v27, 0
  %v431 = vsel %vm46, %v35, 0
  %433 = vmatprep.subr.mxu0 0.0
  %434 = vmatpush1.xpose.msra.mxu0 0.0
  %435 = vmatprep.subr.mxu0 0.0
  %436 = vmatpush1.xpose.msra.mxu0 0.0
  %437 = vmatprep.subr.mxu0 0.0
  %438 = vmatpush1.xpose.msra.mxu0 0.0
  %439 = vmatprep.subr.mxu0 0.0
  %440 = vmatpush1.xpose.msra.mxu0 0.0
  %441 = vmatprep.subr.mxu0 0.0
  %442 = vmatpush1.xpose.msra.mxu0 0.0
  %443 = vmatprep.subr.mxu0 0.0
  %444 = vmatpush1.xpose.msra.mxu0 0.0
  %445 = vmatprep.subr.mxu0 0.0
  %446 = vmatpush1.xpose.msra.mxu0 0.0
  %447 = vmatprep.subr.mxu0 0.0
  %448 = vmatpush1.xpose.msra.mxu0 0.0
  %449 = vmatprep.subr.mxu0 0.0
  %450 = vmatpush1.xpose.msra.mxu0 0.0
  %451 = vmatprep.subr.mxu0 0.0
  %452 = vmatpush1.xpose.msra.mxu0 0.0
  %453 = vmatprep.subr.mxu0 0.0
  %454 = vmatpush1.xpose.msra.mxu0 0.0
  %455 = vmatprep.subr.mxu0 0.0
  %456 = vmatpush1.xpose.msra.mxu0 0.0
  %457 = vmatprep.subr.mxu0 0.0
  %458 = vmatpush1.xpose.msra.mxu0 0.0
  %459 = vmatprep.subr.mxu0 0.0
  %460 = vmatpush1.xpose.msra.mxu0 0.0
  %461 = vmatprep.subr.mxu0 0.0
  %462 = vmatpush1.xpose.msra.mxu0 0.0
  %463 = vmatprep.subr.mxu0 0.0
  %464 = vmatpush1.xpose.msra.mxu0 %v431
  %465 = vmatprep.subr.mxu0 0.0
  %466 = vmatpush2.xpose.msra.mxu0 0.0
  %467 = vmatprep.subr.mxu0 0.0
  %468 = vmatpush2.xpose.msra.mxu0 0.0
  %469 = vmatprep.subr.mxu0 0.0
  %470 = vmatpush2.xpose.msra.mxu0 0.0
  %471 = vmatprep.subr.mxu0 0.0
  %472 = vmatpush2.xpose.msra.mxu0 0.0
  %473 = vmatprep.subr.mxu0 0.0
  %474 = vmatpush2.xpose.msra.mxu0 0.0
  %475 = vmatprep.subr.mxu0 0.0
  %476 = vmatpush2.xpose.msra.mxu0 0.0
  %477 = vmatprep.subr.mxu0 0.0
  %478 = vmatpush2.xpose.msra.mxu0 0.0
  %479 = vmatprep.subr.mxu0 0.0
  %480 = vmatpush2.xpose.msra.mxu0 0.0
  %481 = vmatprep.subr.mxu0 0.0
  %482 = vmatpush2.xpose.msra.mxu0 0.0
  %483 = vmatprep.subr.mxu0 0.0
  %484 = vmatpush2.xpose.msra.mxu0 0.0
  %485 = vmatprep.subr.mxu0 0.0
  %486 = vmatpush2.xpose.msra.mxu0 0.0
  %487 = vmatprep.subr.mxu0 0.0
  %488 = vmatpush2.xpose.msra.mxu0 0.0
  %489 = vmatprep.subr.mxu0 0.0
  %490 = vmatpush2.xpose.msra.mxu0 0.0
  %491 = vmatprep.subr.mxu0 0.0
  %492 = vmatpush2.xpose.msra.mxu0 0.0
  %493 = vmatprep.subr.mxu0 0.0
  %494 = vmatpush2.xpose.msra.mxu0 0.0
  %495 = vmatprep.subr.mxu0 0.0
  %496 = vmatpush2.xpose.msra.mxu0 0.0
  %497 = vmatprep.mubr.f32.mxu0 0.0
  %498 = vmatmul.mubr.f32.gmra.mxu0 %v428
  %v499 = vpop.f32.mrf.mxu0
  %v500 = vadd.f32 0.0, %v499
  %v501 = vpop.f32.mrf.mxu0
  %502 = vdwg.mxu0
  %v504 = vsel %vm46, %v28, 0
  %v507 = vsel %vm46, %v36, 0
  %509 = vmatprep.subr.mxu0 0.0
  %510 = vmatpush1.xpose.msra.mxu0 0.0
  %511 = vmatprep.subr.mxu0 0.0
  %512 = vmatpush1.xpose.msra.mxu0 0.0
  %513 = vmatprep.subr.mxu0 0.0
  %514 = vmatpush1.xpose.msra.mxu0 0.0
  %515 = vmatprep.subr.mxu0 0.0
  %516 = vmatpush1.xpose.msra.mxu0 0.0
  %517 = vmatprep.subr.mxu0 0.0
  %518 = vmatpush1.xpose.msra.mxu0 0.0
  %519 = vmatprep.subr.mxu0 0.0
  %520 = vmatpush1.xpose.msra.mxu0 0.0
  %521 = vmatprep.subr.mxu0 0.0
  %522 = vmatpush1.xpose.msra.mxu0 0.0
  %523 = vmatprep.subr.mxu0 0.0
  %524 = vmatpush1.xpose.msra.mxu0 0.0
  %525 = vmatprep.subr.mxu0 0.0
  %526 = vmatpush1.xpose.msra.mxu0 0.0
  %527 = vmatprep.subr.mxu0 0.0
  %528 = vmatpush1.xpose.msra.mxu0 0.0
  %529 = vmatprep.subr.mxu0 0.0
  %530 = vmatpush1.xpose.msra.mxu0 0.0
  %531 = vmatprep.subr.mxu0 0.0
  %532 = vmatpush1.xpose.msra.mxu0 0.0
  %533 = vmatprep.subr.mxu0 0.0
  %534 = vmatpush1.xpose.msra.mxu0 0.0
  %535 = vmatprep.subr.mxu0 0.0
  %536 = vmatpush1.xpose.msra.mxu0 0.0
  %537 = vmatprep.subr.mxu0 0.0
  %538 = vmatpush1.xpose.msra.mxu0 0.0
  %539 = vmatprep.subr.mxu0 0.0
  %540 = vmatpush1.xpose.msra.mxu0 %v507
  %541 = vmatprep.subr.mxu0 0.0
  %542 = vmatpush2.xpose.msra.mxu0 0.0
  %543 = vmatprep.subr.mxu0 0.0
  %544 = vmatpush2.xpose.msra.mxu0 0.0
  %545 = vmatprep.subr.mxu0 0.0
  %546 = vmatpush2.xpose.msra.mxu0 0.0
  %547 = vmatprep.subr.mxu0 0.0
  %548 = vmatpush2.xpose.msra.mxu0 0.0
  %549 = vmatprep.subr.mxu0 0.0
  %550 = vmatpush2.xpose.msra.mxu0 0.0
  %551 = vmatprep.subr.mxu0 0.0
  %552 = vmatpush2.xpose.msra.mxu0 0.0
  %553 = vmatprep.subr.mxu0 0.0
  %554 = vmatpush2.xpose.msra.mxu0 0.0
  %555 = vmatprep.subr.mxu0 0.0
  %556 = vmatpush2.xpose.msra.mxu0 0.0
  %557 = vmatprep.subr.mxu0 0.0
  %558 = vmatpush2.xpose.msra.mxu0 0.0
  %559 = vmatprep.subr.mxu0 0.0
  %560 = vmatpush2.xpose.msra.mxu0 0.0
  %561 = vmatprep.subr.mxu0 0.0
  %562 = vmatpush2.xpose.msra.mxu0 0.0
  %563 = vmatprep.subr.mxu0 0.0
  %564 = vmatpush2.xpose.msra.mxu0 0.0
  %565 = vmatprep.subr.mxu0 0.0
  %566 = vmatpush2.xpose.msra.mxu0 0.0
  %567 = vmatprep.subr.mxu0 0.0
  %568 = vmatpush2.xpose.msra.mxu0 0.0
  %569 = vmatprep.subr.mxu0 0.0
  %570 = vmatpush2.xpose.msra.mxu0 0.0
  %571 = vmatprep.subr.mxu0 0.0
  %572 = vmatpush2.xpose.msra.mxu0 0.0
  %573 = vmatprep.mubr.f32.mxu0 0.0
  %574 = vmatmul.mubr.f32.gmra.mxu0 %v504
  %v575 = vpop.f32.mrf.mxu0
  %v576 = vadd.f32 0.0, %v575
  %v577 = vpop.f32.mrf.mxu0
  %578 = vdwg.mxu0
  %v580 = vsel %vm46, %v29, 0
  %v583 = vsel %vm46, %v37, 0
  %585 = vmatprep.subr.mxu0 0.0
  %586 = vmatpush1.xpose.msra.mxu0 0.0
  %587 = vmatprep.subr.mxu0 0.0
  %588 = vmatpush1.xpose.msra.mxu0 0.0
  %589 = vmatprep.subr.mxu0 0.0
  %590 = vmatpush1.xpose.msra.mxu0 0.0
  %591 = vmatprep.subr.mxu0 0.0
  %592 = vmatpush1.xpose.msra.mxu0 0.0
  %593 = vmatprep.subr.mxu0 0.0
  %594 = vmatpush1.xpose.msra.mxu0 0.0
  %595 = vmatprep.subr.mxu0 0.0
  %596 = vmatpush1.xpose.msra.mxu0 0.0
  %597 = vmatprep.subr.mxu0 0.0
  %598 = vmatpush1.xpose.msra.mxu0 0.0
  %599 = vmatprep.subr.mxu0 0.0
  %600 = vmatpush1.xpose.msra.mxu0 0.0
  %601 = vmatprep.subr.mxu0 0.0
  %602 = vmatpush1.xpose.msra.mxu0 0.0
  %603 = vmatprep.subr.mxu0 0.0
  %604 = vmatpush1.xpose.msra.mxu0 0.0
  %605 = vmatprep.subr.mxu0 0.0
  %606 = vmatpush1.xpose.msra.mxu0 0.0
  %607 = vmatprep.subr.mxu0 0.0
  %608 = vmatpush1.xpose.msra.mxu0 0.0
  %609 = vmatprep.subr.mxu0 0.0
  %610 = vmatpush1.xpose.msra.mxu0 0.0
  %611 = vmatprep.subr.mxu0 0.0
  %612 = vmatpush1.xpose.msra.mxu0 0.0
  %613 = vmatprep.subr.mxu0 0.0
  %614 = vmatpush1.xpose.msra.mxu0 0.0
  %615 = vmatprep.subr.mxu0 0.0
  %616 = vmatpush1.xpose.msra.mxu0 %v583
  %617 = vmatprep.subr.mxu0 0.0
  %618 = vmatpush2.xpose.msra.mxu0 0.0
  %619 = vmatprep.subr.mxu0 0.0
  %620 = vmatpush2.xpose.msra.mxu0 0.0
  %621 = vmatprep.subr.mxu0 0.0
  %622 = vmatpush2.xpose.msra.mxu0 0.0
  %623 = vmatprep.subr.mxu0 0.0
  %624 = vmatpush2.xpose.msra.mxu0 0.0
  %625 = vmatprep.subr.mxu0 0.0
  %626 = vmatpush2.xpose.msra.mxu0 0.0
  %627 = vmatprep.subr.mxu0 0.0
  %628 = vmatpush2.xpose.msra.mxu0 0.0
  %629 = vmatprep.subr.mxu0 0.0
  %630 = vmatpush2.xpose.msra.mxu0 0.0
  %631 = vmatprep.subr.mxu0 0.0
  %632 = vmatpush2.xpose.msra.mxu0 0.0
  %633 = vmatprep.subr.mxu0 0.0
  %634 = vmatpush2.xpose.msra.mxu0 0.0
  %635 = vmatprep.subr.mxu0 0.0
  %636 = vmatpush2.xpose.msra.mxu0 0.0
  %637 = vmatprep.subr.mxu0 0.0
  %638 = vmatpush2.xpose.msra.mxu0 0.0
  %639 = vmatprep.subr.mxu0 0.0
  %640 = vmatpush2.xpose.msra.mxu0 0.0
  %641 = vmatprep.subr.mxu0 0.0
  %642 = vmatpush2.xpose.msra.mxu0 0.0
  %643 = vmatprep.subr.mxu0 0.0
  %644 = vmatpush2.xpose.msra.mxu0 0.0
  %645 = vmatprep.subr.mxu0 0.0
  %646 = vmatpush2.xpose.msra.mxu0 0.0
  %647 = vmatprep.subr.mxu0 0.0
  %648 = vmatpush2.xpose.msra.mxu0 0.0
  %649 = vmatprep.mubr.f32.mxu0 0.0
  %650 = vmatmul.mubr.f32.gmra.mxu0 %v580
  %v651 = vpop.f32.mrf.mxu0
  %v652 = vadd.f32 0.0, %v651
  %v653 = vpop.f32.mrf.mxu0
  %654 = vdwg.mxu0
  %v655 = vld [vmem:[#allocation2] sm:$0x1]
  %v656 = vld [vmem:[%s4] sm:$0x1]
  %v657 = vld [vmem:[%s4 + $0x1] sm:$0x1]
  %659 = vset.pattern.permute.xlu0 0
  %660 = vperm.xlu0 %659, %v655
  %v661 = vpop.permute.xlu0 %660
  %v663 = vlaneseq
  %v664 = vshrl.u32 %v663, 7
  %v665 = vsub.s32 0, %v664
  %v666 = vrot.slane %v661, %v665
  %v667 = vadd.f32 %v666, %v656
  %v668 = vadd.f32 %v666, %v657
  %v671 = vlaneseq
  %v672 = vshrl.u32 %v671, 7
  %v673 = vsub.s32 0, %v672
  %v674 = vrot.slane %v667, %v673
  %v675 = vlaneseq
  %v676 = vshrl.u32 %v675, 7
  %v677 = vsub.s32 0, %v676
  %v678 = vrot.slane %v668, %v677
  %v681 = vadd.f32 %v120, %v674
  %v682 = vadd.f32 %v196, %v674
  %v683 = vadd.f32 %v272, %v674
  %v684 = vadd.f32 %v348, %v674
  %v685 = vadd.f32 %v424, %v678
  %v686 = vadd.f32 %v500, %v678
  %v687 = vadd.f32 %v576, %v678
  %v688 = vadd.f32 %v652, %v678
  %v689 = vsel %vm46, %v681, -inf
  %690 = vmax.xlane.f32.xlu0 %v689
  %v691 = vpop.xlane.xlu0 %690
  %v692 = vsel %vm46, %v682, -inf
  %693 = vmax.xlane.f32.xlu0 %v692
  %v694 = vpop.xlane.xlu0 %693
  %v695 = vsel %vm46, %v683, -inf
  %696 = vmax.xlane.f32.xlu0 %v695
  %v697 = vpop.xlane.xlu0 %696
  %v698 = vsel %vm46, %v684, -inf
  %699 = vmax.xlane.f32.xlu0 %v698
  %v700 = vpop.xlane.xlu0 %699
  %v701 = vsel %vm46, %v685, -inf
  %702 = vmax.xlane.f32.xlu0 %v701
  %v703 = vpop.xlane.xlu0 %702
  %v704 = vsel %vm46, %v686, -inf
  %705 = vmax.xlane.f32.xlu0 %v704
  %v706 = vpop.xlane.xlu0 %705
  %v707 = vsel %vm46, %v687, -inf
  %708 = vmax.xlane.f32.xlu0 %v707
  %v709 = vpop.xlane.xlu0 %708
  %v710 = vsel %vm46, %v688, -inf
  %711 = vmax.xlane.f32.xlu0 %v710
  %v712 = vpop.xlane.xlu0 %711
  %v713 = vsub.f32 %v681, %v691
  %v714 = vsub.f32 %v682, %v694
  %v715 = vsub.f32 %v683, %v697
  %v716 = vsub.f32 %v684, %v700
  %v717 = vsub.f32 %v685, %v703
  %v718 = vsub.f32 %v686, %v706
  %v719 = vsub.f32 %v687, %v709
  %v720 = vsub.f32 %v688, %v712
  %v721 = vmul.f32 %v713, 1.442695
  %v722 = vpow.pop %v721
  %v723 = vmul.f32 %v714, 1.442695
  %v724 = vpow.pop %v723
  %v725 = vmul.f32 %v715, 1.442695
  %v726 = vpow.pop %v725
  %v727 = vmul.f32 %v716, 1.442695
  %v728 = vpow.pop %v727
  %v729 = vmul.f32 %v717, 1.442695
  %v730 = vpow.pop %v729
  %v731 = vmul.f32 %v718, 1.442695
  %v732 = vpow.pop %v731
  %v733 = vmul.f32 %v719, 1.442695
  %v734 = vpow.pop %v733
  %v735 = vmul.f32 %v720, 1.442695
  %v736 = vpow.pop %v735
  %v737 = vsel %vm46, %v722, 0.0
  %738 = vadd.xlane.f32.xlu0 %v737
  %v739 = vpop.xlane.xlu0 %738
  %v740 = vsel %vm46, %v724, 0.0
  %741 = vadd.xlane.f32.xlu0 %v740
  %v742 = vpop.xlane.xlu0 %741
  %v743 = vsel %vm46, %v726, 0.0
  %744 = vadd.xlane.f32.xlu0 %v743
  %v745 = vpop.xlane.xlu0 %744
  %v746 = vsel %vm46, %v728, 0.0
  %747 = vadd.xlane.f32.xlu0 %v746
  %v748 = vpop.xlane.xlu0 %747
  %v749 = vsel %vm46, %v730, 0.0
  %750 = vadd.xlane.f32.xlu0 %v749
  %v751 = vpop.xlane.xlu0 %750
  %v752 = vsel %vm46, %v732, 0.0
  %753 = vadd.xlane.f32.xlu0 %v752
  %v754 = vpop.xlane.xlu0 %753
  %v755 = vsel %vm46, %v734, 0.0
  %756 = vadd.xlane.f32.xlu0 %v755
  %v757 = vpop.xlane.xlu0 %756
  %v758 = vsel %vm46, %v736, 0.0
  %759 = vadd.xlane.f32.xlu0 %v758
  %v760 = vpop.xlane.xlu0 %759
  %v761 = vrcp.pop %v739
  %v762 = vmul.f32 %v722, %v761
  %v763 = vrcp.pop %v742
  %v764 = vmul.f32 %v724, %v763
  %v765 = vrcp.pop %v745
  %v766 = vmul.f32 %v726, %v765
  %v767 = vrcp.pop %v748
  %v768 = vmul.f32 %v728, %v767
  %v769 = vrcp.pop %v751
  %v770 = vmul.f32 %v730, %v769
  %v771 = vrcp.pop %v754
  %v772 = vmul.f32 %v732, %v771
  %v773 = vrcp.pop %v757
  %v774 = vmul.f32 %v734, %v773
  %v775 = vrcp.pop %v760
  %v776 = vmul.f32 %v736, %v775
  %v778 = vsel %vm46, %v762, 0
  %780 = vmatprep.subr.mxu0 0.0
  %781 = vmatpush1.msra.mxu0 0.0
  %782 = vmatprep.subr.mxu0 0.0
  %783 = vmatpush1.msra.mxu0 0.0
  %784 = vmatprep.subr.mxu0 0.0
  %785 = vmatpush1.msra.mxu0 0.0
  %786 = vmatprep.subr.mxu0 0.0
  %787 = vmatpush1.msra.mxu0 0.0
  %788 = vmatprep.subr.mxu0 0.0
  %789 = vmatpush1.msra.mxu0 0.0
  %790 = vmatprep.subr.mxu0 0.0
  %791 = vmatpush1.msra.mxu0 0.0
  %792 = vmatprep.subr.mxu0 0.0
  %793 = vmatpush1.msra.mxu0 0.0
  %794 = vmatprep.subr.mxu0 0.0
  %795 = vmatpush1.msra.mxu0 0.0
  %796 = vmatprep.subr.mxu0 0.0
  %797 = vmatpush1.msra.mxu0 0.0
  %798 = vmatprep.subr.mxu0 0.0
  %799 = vmatpush1.msra.mxu0 0.0
  %800 = vmatprep.subr.mxu0 0.0
  %801 = vmatpush1.msra.mxu0 0.0
  %802 = vmatprep.subr.mxu0 0.0
  %803 = vmatpush1.msra.mxu0 0.0
  %804 = vmatprep.subr.mxu0 0.0
  %805 = vmatpush1.msra.mxu0 0.0
  %806 = vmatprep.subr.mxu0 0.0
  %807 = vmatpush1.msra.mxu0 0.0
  %808 = vmatprep.subr.mxu0 0.0
  %809 = vmatpush1.msra.mxu0 0.0
  %810 = vmatprep.subr.mxu0 0.0
  %811 = vmatpush1.msra.mxu0 %v38
  %812 = vmatprep.subr.mxu0 0.0
  %813 = vmatpush2.msra.mxu0 0.0
  %814 = vmatprep.subr.mxu0 0.0
  %815 = vmatpush2.msra.mxu0 0.0
  %816 = vmatprep.subr.mxu0 0.0
  %817 = vmatpush2.msra.mxu0 0.0
  %818 = vmatprep.subr.mxu0 0.0
  %819 = vmatpush2.msra.mxu0 0.0
  %820 = vmatprep.subr.mxu0 0.0
  %821 = vmatpush2.msra.mxu0 0.0
  %822 = vmatprep.subr.mxu0 0.0
  %823 = vmatpush2.msra.mxu0 0.0
  %824 = vmatprep.subr.mxu0 0.0
  %825 = vmatpush2.msra.mxu0 0.0
  %826 = vmatprep.subr.mxu0 0.0
  %827 = vmatpush2.msra.mxu0 0.0
  %828 = vmatprep.subr.mxu0 0.0
  %829 = vmatpush2.msra.mxu0 0.0
  %830 = vmatprep.subr.mxu0 0.0
  %831 = vmatpush2.msra.mxu0 0.0
  %832 = vmatprep.subr.mxu0 0.0
  %833 = vmatpush2.msra.mxu0 0.0
  %834 = vmatprep.subr.mxu0 0.0
  %835 = vmatpush2.msra.mxu0 0.0
  %836 = vmatprep.subr.mxu0 0.0
  %837 = vmatpush2.msra.mxu0 0.0
  %838 = vmatprep.subr.mxu0 0.0
  %839 = vmatpush2.msra.mxu0 0.0
  %840 = vmatprep.subr.mxu0 0.0
  %841 = vmatpush2.msra.mxu0 0.0
  %842 = vmatprep.subr.mxu0 0.0
  %843 = vmatpush2.msra.mxu0 0.0
  %844 = vmatprep.mubr.f32.mxu0 0.0
  %845 = vmatmul.mubr.f32.gmra.mxu0 %v778
  %v846 = vpop.f32.mrf.mxu0
  %v847 = vadd.f32 0.0, %v846
  %v848 = vpop.f32.mrf.mxu0
  %849 = vdwg.mxu0
  %v851 = vsel %vm46, %v764, 0
  %853 = vmatprep.subr.mxu0 0.0
  %854 = vmatpush1.msra.mxu0 0.0
  %855 = vmatprep.subr.mxu0 0.0
  %856 = vmatpush1.msra.mxu0 0.0
  %857 = vmatprep.subr.mxu0 0.0
  %858 = vmatpush1.msra.mxu0 0.0
  %859 = vmatprep.subr.mxu0 0.0
  %860 = vmatpush1.msra.mxu0 0.0
  %861 = vmatprep.subr.mxu0 0.0
  %862 = vmatpush1.msra.mxu0 0.0
  %863 = vmatprep.subr.mxu0 0.0
  %864 = vmatpush1.msra.mxu0 0.0
  %865 = vmatprep.subr.mxu0 0.0
  %866 = vmatpush1.msra.mxu0 0.0
  %867 = vmatprep.subr.mxu0 0.0
  %868 = vmatpush1.msra.mxu0 0.0
  %869 = vmatprep.subr.mxu0 0.0
  %870 = vmatpush1.msra.mxu0 0.0
  %871 = vmatprep.subr.mxu0 0.0
  %872 = vmatpush1.msra.mxu0 0.0
  %873 = vmatprep.subr.mxu0 0.0
  %874 = vmatpush1.msra.mxu0 0.0
  %875 = vmatprep.subr.mxu0 0.0
  %876 = vmatpush1.msra.mxu0 0.0
  %877 = vmatprep.subr.mxu0 0.0
  %878 = vmatpush1.msra.mxu0 0.0
  %879 = vmatprep.subr.mxu0 0.0
  %880 = vmatpush1.msra.mxu0 0.0
  %881 = vmatprep.subr.mxu0 0.0
  %882 = vmatpush1.msra.mxu0 0.0
  %883 = vmatprep.subr.mxu0 0.0
  %884 = vmatpush1.msra.mxu0 %v39
  %885 = vmatprep.subr.mxu0 0.0
  %886 = vmatpush2.msra.mxu0 0.0
  %887 = vmatprep.subr.mxu0 0.0
  %888 = vmatpush2.msra.mxu0 0.0
  %889 = vmatprep.subr.mxu0 0.0
  %890 = vmatpush2.msra.mxu0 0.0
  %891 = vmatprep.subr.mxu0 0.0
  %892 = vmatpush2.msra.mxu0 0.0
  %893 = vmatprep.subr.mxu0 0.0
  %894 = vmatpush2.msra.mxu0 0.0
  %895 = vmatprep.subr.mxu0 0.0
  %896 = vmatpush2.msra.mxu0 0.0
  %897 = vmatprep.subr.mxu0 0.0
  %898 = vmatpush2.msra.mxu0 0.0
  %899 = vmatprep.subr.mxu0 0.0
  %900 = vmatpush2.msra.mxu0 0.0
  %901 = vmatprep.subr.mxu0 0.0
  %902 = vmatpush2.msra.mxu0 0.0
  %903 = vmatprep.subr.mxu0 0.0
  %904 = vmatpush2.msra.mxu0 0.0
  %905 = vmatprep.subr.mxu0 0.0
  %906 = vmatpush2.msra.mxu0 0.0
  %907 = vmatprep.subr.mxu0 0.0
  %908 = vmatpush2.msra.mxu0 0.0
  %909 = vmatprep.subr.mxu0 0.0
  %910 = vmatpush2.msra.mxu0 0.0
  %911 = vmatprep.subr.mxu0 0.0
  %912 = vmatpush2.msra.mxu0 0.0
  %913 = vmatprep.subr.mxu0 0.0
  %914 = vmatpush2.msra.mxu0 0.0
  %915 = vmatprep.subr.mxu0 0.0
  %916 = vmatpush2.msra.mxu0 0.0
  %917 = vmatprep.mubr.f32.mxu0 0.0
  %918 = vmatmul.mubr.f32.gmra.mxu0 %v851
  %v919 = vpop.f32.mrf.mxu0
  %v920 = vadd.f32 0.0, %v919
  %v921 = vpop.f32.mrf.mxu0
  %922 = vdwg.mxu0
  %v924 = vsel %vm46, %v766, 0
  %926 = vmatprep.subr.mxu0 0.0
  %927 = vmatpush1.msra.mxu0 0.0
  %928 = vmatprep.subr.mxu0 0.0
  %929 = vmatpush1.msra.mxu0 0.0
  %930 = vmatprep.subr.mxu0 0.0
  %931 = vmatpush1.msra.mxu0 0.0
  %932 = vmatprep.subr.mxu0 0.0
  %933 = vmatpush1.msra.mxu0 0.0
  %934 = vmatprep.subr.mxu0 0.0
  %935 = vmatpush1.msra.mxu0 0.0
  %936 = vmatprep.subr.mxu0 0.0
  %937 = vmatpush1.msra.mxu0 0.0
  %938 = vmatprep.subr.mxu0 0.0
  %939 = vmatpush1.msra.mxu0 0.0
  %940 = vmatprep.subr.mxu0 0.0
  %941 = vmatpush1.msra.mxu0 0.0
  %942 = vmatprep.subr.mxu0 0.0
  %943 = vmatpush1.msra.mxu0 0.0
  %944 = vmatprep.subr.mxu0 0.0
  %945 = vmatpush1.msra.mxu0 0.0
  %946 = vmatprep.subr.mxu0 0.0
  %947 = vmatpush1.msra.mxu0 0.0
  %948 = vmatprep.subr.mxu0 0.0
  %949 = vmatpush1.msra.mxu0 0.0
  %950 = vmatprep.subr.mxu0 0.0
  %951 = vmatpush1.msra.mxu0 0.0
  %952 = vmatprep.subr.mxu0 0.0
  %953 = vmatpush1.msra.mxu0 0.0
  %954 = vmatprep.subr.mxu0 0.0
  %955 = vmatpush1.msra.mxu0 0.0
  %956 = vmatprep.subr.mxu0 0.0
  %957 = vmatpush1.msra.mxu0 %v40
  %958 = vmatprep.subr.mxu0 0.0
  %959 = vmatpush2.msra.mxu0 0.0
  %960 = vmatprep.subr.mxu0 0.0
  %961 = vmatpush2.msra.mxu0 0.0
  %962 = vmatprep.subr.mxu0 0.0
  %963 = vmatpush2.msra.mxu0 0.0
  %964 = vmatprep.subr.mxu0 0.0
  %965 = vmatpush2.msra.mxu0 0.0
  %966 = vmatprep.subr.mxu0 0.0
  %967 = vmatpush2.msra.mxu0 0.0
  %968 = vmatprep.subr.mxu0 0.0
  %969 = vmatpush2.msra.mxu0 0.0
  %970 = vmatprep.subr.mxu0 0.0
  %971 = vmatpush2.msra.mxu0 0.0
  %972 = vmatprep.subr.mxu0 0.0
  %973 = vmatpush2.msra.mxu0 0.0
  %974 = vmatprep.subr.mxu0 0.0
  %975 = vmatpush2.msra.mxu0 0.0
  %976 = vmatprep.subr.mxu0 0.0
  %977 = vmatpush2.msra.mxu0 0.0
  %978 = vmatprep.subr.mxu0 0.0
  %979 = vmatpush2.msra.mxu0 0.0
  %980 = vmatprep.subr.mxu0 0.0
  %981 = vmatpush2.msra.mxu0 0.0
  %982 = vmatprep.subr.mxu0 0.0
  %983 = vmatpush2.msra.mxu0 0.0
  %984 = vmatprep.subr.mxu0 0.0
  %985 = vmatpush2.msra.mxu0 0.0
  %986 = vmatprep.subr.mxu0 0.0
  %987 = vmatpush2.msra.mxu0 0.0
  %988 = vmatprep.subr.mxu0 0.0
  %989 = vmatpush2.msra.mxu0 0.0
  %990 = vmatprep.mubr.f32.mxu0 0.0
  %991 = vmatmul.mubr.f32.gmra.mxu0 %v924
  %v992 = vpop.f32.mrf.mxu0
  %v993 = vadd.f32 0.0, %v992
  %v994 = vpop.f32.mrf.mxu0
  %995 = vdwg.mxu0
  %v997 = vsel %vm46, %v768, 0
  %999 = vmatprep.subr.mxu0 0.0
  %1000 = vmatpush1.msra.mxu0 0.0
  %1001 = vmatprep.subr.mxu0 0.0
  %1002 = vmatpush1.msra.mxu0 0.0
  %1003 = vmatprep.subr.mxu0 0.0
  %1004 = vmatpush1.msra.mxu0 0.0
  %1005 = vmatprep.subr.mxu0 0.0
  %1006 = vmatpush1.msra.mxu0 0.0
  %1007 = vmatprep.subr.mxu0 0.0
  %1008 = vmatpush1.msra.mxu0 0.0
  %1009 = vmatprep.subr.mxu0 0.0
  %1010 = vmatpush1.msra.mxu0 0.0
  %1011 = vmatprep.subr.mxu0 0.0
  %1012 = vmatpush1.msra.mxu0 0.0
  %1013 = vmatprep.subr.mxu0 0.0
  %1014 = vmatpush1.msra.mxu0 0.0
  %1015 = vmatprep.subr.mxu0 0.0
  %1016 = vmatpush1.msra.mxu0 0.0
  %1017 = vmatprep.subr.mxu0 0.0
  %1018 = vmatpush1.msra.mxu0 0.0
  %1019 = vmatprep.subr.mxu0 0.0
  %1020 = vmatpush1.msra.mxu0 0.0
  %1021 = vmatprep.subr.mxu0 0.0
  %1022 = vmatpush1.msra.mxu0 0.0
  %1023 = vmatprep.subr.mxu0 0.0
  %1024 = vmatpush1.msra.mxu0 0.0
  %1025 = vmatprep.subr.mxu0 0.0
  %1026 = vmatpush1.msra.mxu0 0.0
  %1027 = vmatprep.subr.mxu0 0.0
  %1028 = vmatpush1.msra.mxu0 0.0
  %1029 = vmatprep.subr.mxu0 0.0
  %1030 = vmatpush1.msra.mxu0 %v41
  %1031 = vmatprep.subr.mxu0 0.0
  %1032 = vmatpush2.msra.mxu0 0.0
  %1033 = vmatprep.subr.mxu0 0.0
  %1034 = vmatpush2.msra.mxu0 0.0
  %1035 = vmatprep.subr.mxu0 0.0
  %1036 = vmatpush2.msra.mxu0 0.0
  %1037 = vmatprep.subr.mxu0 0.0
  %1038 = vmatpush2.msra.mxu0 0.0
  %1039 = vmatprep.subr.mxu0 0.0
  %1040 = vmatpush2.msra.mxu0 0.0
  %1041 = vmatprep.subr.mxu0 0.0
  %1042 = vmatpush2.msra.mxu0 0.0
  %1043 = vmatprep.subr.mxu0 0.0
  %1044 = vmatpush2.msra.mxu0 0.0
  %1045 = vmatprep.subr.mxu0 0.0
  %1046 = vmatpush2.msra.mxu0 0.0
  %1047 = vmatprep.subr.mxu0 0.0
  %1048 = vmatpush2.msra.mxu0 0.0
  %1049 = vmatprep.subr.mxu0 0.0
  %1050 = vmatpush2.msra.mxu0 0.0
  %1051 = vmatprep.subr.mxu0 0.0
  %1052 = vmatpush2.msra.mxu0 0.0
  %1053 = vmatprep.subr.mxu0 0.0
  %1054 = vmatpush2.msra.mxu0 0.0
  %1055 = vmatprep.subr.mxu0 0.0
  %1056 = vmatpush2.msra.mxu0 0.0
  %1057 = vmatprep.subr.mxu0 0.0
  %1058 = vmatpush2.msra.mxu0 0.0
  %1059 = vmatprep.subr.mxu0 0.0
  %1060 = vmatpush2.msra.mxu0 0.0
  %1061 = vmatprep.subr.mxu0 0.0
  %1062 = vmatpush2.msra.mxu0 0.0
  %1063 = vmatprep.mubr.f32.mxu0 0.0
  %1064 = vmatmul.mubr.f32.gmra.mxu0 %v997
  %v1065 = vpop.f32.mrf.mxu0
  %v1066 = vadd.f32 0.0, %v1065
  %v1067 = vpop.f32.mrf.mxu0
  %1068 = vdwg.mxu0
  %v1070 = vsel %vm46, %v770, 0
  %1072 = vmatprep.subr.mxu0 0.0
  %1073 = vmatpush1.msra.mxu0 0.0
  %1074 = vmatprep.subr.mxu0 0.0
  %1075 = vmatpush1.msra.mxu0 0.0
  %1076 = vmatprep.subr.mxu0 0.0
  %1077 = vmatpush1.msra.mxu0 0.0
  %1078 = vmatprep.subr.mxu0 0.0
  %1079 = vmatpush1.msra.mxu0 0.0
  %1080 = vmatprep.subr.mxu0 0.0
  %1081 = vmatpush1.msra.mxu0 0.0
  %1082 = vmatprep.subr.mxu0 0.0
  %1083 = vmatpush1.msra.mxu0 0.0
  %1084 = vmatprep.subr.mxu0 0.0
  %1085 = vmatpush1.msra.mxu0 0.0
  %1086 = vmatprep.subr.mxu0 0.0
  %1087 = vmatpush1.msra.mxu0 0.0
  %1088 = vmatprep.subr.mxu0 0.0
  %1089 = vmatpush1.msra.mxu0 0.0
  %1090 = vmatprep.subr.mxu0 0.0
  %1091 = vmatpush1.msra.mxu0 0.0
  %1092 = vmatprep.subr.mxu0 0.0
  %1093 = vmatpush1.msra.mxu0 0.0
  %1094 = vmatprep.subr.mxu0 0.0
  %1095 = vmatpush1.msra.mxu0 0.0
  %1096 = vmatprep.subr.mxu0 0.0
  %1097 = vmatpush1.msra.mxu0 0.0
  %1098 = vmatprep.subr.mxu0 0.0
  %1099 = vmatpush1.msra.mxu0 0.0
  %1100 = vmatprep.subr.mxu0 0.0
  %1101 = vmatpush1.msra.mxu0 0.0
  %1102 = vmatprep.subr.mxu0 0.0
  %1103 = vmatpush1.msra.mxu0 %v42
  %1104 = vmatprep.subr.mxu0 0.0
  %1105 = vmatpush2.msra.mxu0 0.0
  %1106 = vmatprep.subr.mxu0 0.0
  %1107 = vmatpush2.msra.mxu0 0.0
  %1108 = vmatprep.subr.mxu0 0.0
  %1109 = vmatpush2.msra.mxu0 0.0
  %1110 = vmatprep.subr.mxu0 0.0
  %1111 = vmatpush2.msra.mxu0 0.0
  %1112 = vmatprep.subr.mxu0 0.0
  %1113 = vmatpush2.msra.mxu0 0.0
  %1114 = vmatprep.subr.mxu0 0.0
  %1115 = vmatpush2.msra.mxu0 0.0
  %1116 = vmatprep.subr.mxu0 0.0
  %1117 = vmatpush2.msra.mxu0 0.0
  %1118 = vmatprep.subr.mxu0 0.0
  %1119 = vmatpush2.msra.mxu0 0.0
  %1120 = vmatprep.subr.mxu0 0.0
  %1121 = vmatpush2.msra.mxu0 0.0
  %1122 = vmatprep.subr.mxu0 0.0
  %1123 = vmatpush2.msra.mxu0 0.0
  %1124 = vmatprep.subr.mxu0 0.0
  %1125 = vmatpush2.msra.mxu0 0.0
  %1126 = vmatprep.subr.mxu0 0.0
  %1127 = vmatpush2.msra.mxu0 0.0
  %1128 = vmatprep.subr.mxu0 0.0
  %1129 = vmatpush2.msra.mxu0 0.0
  %1130 = vmatprep.subr.mxu0 0.0
  %1131 = vmatpush2.msra.mxu0 0.0
  %1132 = vmatprep.subr.mxu0 0.0
  %1133 = vmatpush2.msra.mxu0 0.0
  %1134 = vmatprep.subr.mxu0 0.0
  %1135 = vmatpush2.msra.mxu0 0.0
  %1136 = vmatprep.mubr.f32.mxu0 0.0
  %1137 = vmatmul.mubr.f32.gmra.mxu0 %v1070
  %v1138 = vpop.f32.mrf.mxu0
  %v1139 = vadd.f32 0.0, %v1138
  %v1140 = vpop.f32.mrf.mxu0
  %1141 = vdwg.mxu0
  %v1143 = vsel %vm46, %v772, 0
  %1145 = vmatprep.subr.mxu0 0.0
  %1146 = vmatpush1.msra.mxu0 0.0
  %1147 = vmatprep.subr.mxu0 0.0
  %1148 = vmatpush1.msra.mxu0 0.0
  %1149 = vmatprep.subr.mxu0 0.0
  %1150 = vmatpush1.msra.mxu0 0.0
  %1151 = vmatprep.subr.mxu0 0.0
  %1152 = vmatpush1.msra.mxu0 0.0
  %1153 = vmatprep.subr.mxu0 0.0
  %1154 = vmatpush1.msra.mxu0 0.0
  %1155 = vmatprep.subr.mxu0 0.0
  %1156 = vmatpush1.msra.mxu0 0.0
  %1157 = vmatprep.subr.mxu0 0.0
  %1158 = vmatpush1.msra.mxu0 0.0
  %1159 = vmatprep.subr.mxu0 0.0
  %1160 = vmatpush1.msra.mxu0 0.0
  %1161 = vmatprep.subr.mxu0 0.0
  %1162 = vmatpush1.msra.mxu0 0.0
  %1163 = vmatprep.subr.mxu0 0.0
  %1164 = vmatpush1.msra.mxu0 0.0
  %1165 = vmatprep.subr.mxu0 0.0
  %1166 = vmatpush1.msra.mxu0 0.0
  %1167 = vmatprep.subr.mxu0 0.0
  %1168 = vmatpush1.msra.mxu0 0.0
  %1169 = vmatprep.subr.mxu0 0.0
  %1170 = vmatpush1.msra.mxu0 0.0
  %1171 = vmatprep.subr.mxu0 0.0
  %1172 = vmatpush1.msra.mxu0 0.0
  %1173 = vmatprep.subr.mxu0 0.0
  %1174 = vmatpush1.msra.mxu0 0.0
  %1175 = vmatprep.subr.mxu0 0.0
  %1176 = vmatpush1.msra.mxu0 %v43
  %1177 = vmatprep.subr.mxu0 0.0
  %1178 = vmatpush2.msra.mxu0 0.0
  %1179 = vmatprep.subr.mxu0 0.0
  %1180 = vmatpush2.msra.mxu0 0.0
  %1181 = vmatprep.subr.mxu0 0.0
  %1182 = vmatpush2.msra.mxu0 0.0
  %1183 = vmatprep.subr.mxu0 0.0
  %1184 = vmatpush2.msra.mxu0 0.0
  %1185 = vmatprep.subr.mxu0 0.0
  %1186 = vmatpush2.msra.mxu0 0.0
  %1187 = vmatprep.subr.mxu0 0.0
  %1188 = vmatpush2.msra.mxu0 0.0
  %1189 = vmatprep.subr.mxu0 0.0
  %1190 = vmatpush2.msra.mxu0 0.0
  %1191 = vmatprep.subr.mxu0 0.0
  %1192 = vmatpush2.msra.mxu0 0.0
  %1193 = vmatprep.subr.mxu0 0.0
  %1194 = vmatpush2.msra.mxu0 0.0
  %1195 = vmatprep.subr.mxu0 0.0
  %1196 = vmatpush2.msra.mxu0 0.0
  %1197 = vmatprep.subr.mxu0 0.0
  %1198 = vmatpush2.msra.mxu0 0.0
  %1199 = vmatprep.subr.mxu0 0.0
  %1200 = vmatpush2.msra.mxu0 0.0
  %1201 = vmatprep.subr.mxu0 0.0
  %1202 = vmatpush2.msra.mxu0 0.0
  %1203 = vmatprep.subr.mxu0 0.0
  %1204 = vmatpush2.msra.mxu0 0.0
  %1205 = vmatprep.subr.mxu0 0.0
  %1206 = vmatpush2.msra.mxu0 0.0
  %1207 = vmatprep.subr.mxu0 0.0
  %1208 = vmatpush2.msra.mxu0 0.0
  %1209 = vmatprep.mubr.f32.mxu0 0.0
  %1210 = vmatmul.mubr.f32.gmra.mxu0 %v1143
  %v1211 = vpop.f32.mrf.mxu0
  %v1212 = vadd.f32 0.0, %v1211
  %v1213 = vpop.f32.mrf.mxu0
  %1214 = vdwg.mxu0
  %v1216 = vsel %vm46, %v774, 0
  %1218 = vmatprep.subr.mxu0 0.0
  %1219 = vmatpush1.msra.mxu0 0.0
  %1220 = vmatprep.subr.mxu0 0.0
  %1221 = vmatpush1.msra.mxu0 0.0
  %1222 = vmatprep.subr.mxu0 0.0
  %1223 = vmatpush1.msra.mxu0 0.0
  %1224 = vmatprep.subr.mxu0 0.0
  %1225 = vmatpush1.msra.mxu0 0.0
  %1226 = vmatprep.subr.mxu0 0.0
  %1227 = vmatpush1.msra.mxu0 0.0
  %1228 = vmatprep.subr.mxu0 0.0
  %1229 = vmatpush1.msra.mxu0 0.0
  %1230 = vmatprep.subr.mxu0 0.0
  %1231 = vmatpush1.msra.mxu0 0.0
  %1232 = vmatprep.subr.mxu0 0.0
  %1233 = vmatpush1.msra.mxu0 0.0
  %1234 = vmatprep.subr.mxu0 0.0
  %1235 = vmatpush1.msra.mxu0 0.0
  %1236 = vmatprep.subr.mxu0 0.0
  %1237 = vmatpush1.msra.mxu0 0.0
  %1238 = vmatprep.subr.mxu0 0.0
  %1239 = vmatpush1.msra.mxu0 0.0
  %1240 = vmatprep.subr.mxu0 0.0
  %1241 = vmatpush1.msra.mxu0 0.0
  %1242 = vmatprep.subr.mxu0 0.0
  %1243 = vmatpush1.msra.mxu0 0.0
  %1244 = vmatprep.subr.mxu0 0.0
  %1245 = vmatpush1.msra.mxu0 0.0
  %1246 = vmatprep.subr.mxu0 0.0
  %1247 = vmatpush1.msra.mxu0 0.0
  %1248 = vmatprep.subr.mxu0 0.0
  %1249 = vmatpush1.msra.mxu0 %v44
  %1250 = vmatprep.subr.mxu0 0.0
  %1251 = vmatpush2.msra.mxu0 0.0
  %1252 = vmatprep.subr.mxu0 0.0
  %1253 = vmatpush2.msra.mxu0 0.0
  %1254 = vmatprep.subr.mxu0 0.0
  %1255 = vmatpush2.msra.mxu0 0.0
  %1256 = vmatprep.subr.mxu0 0.0
  %1257 = vmatpush2.msra.mxu0 0.0
  %1258 = vmatprep.subr.mxu0 0.0
  %1259 = vmatpush2.msra.mxu0 0.0
  %1260 = vmatprep.subr.mxu0 0.0
  %1261 = vmatpush2.msra.mxu0 0.0
  %1262 = vmatprep.subr.mxu0 0.0
  %1263 = vmatpush2.msra.mxu0 0.0
  %1264 = vmatprep.subr.mxu0 0.0
  %1265 = vmatpush2.msra.mxu0 0.0
  %1266 = vmatprep.subr.mxu0 0.0
  %1267 = vmatpush2.msra.mxu0 0.0
  %1268 = vmatprep.subr.mxu0 0.0
  %1269 = vmatpush2.msra.mxu0 0.0
  %1270 = vmatprep.subr.mxu0 0.0
  %1271 = vmatpush2.msra.mxu0 0.0
  %1272 = vmatprep.subr.mxu0 0.0
  %1273 = vmatpush2.msra.mxu0 0.0
  %1274 = vmatprep.subr.mxu0 0.0
  %1275 = vmatpush2.msra.mxu0 0.0
  %1276 = vmatprep.subr.mxu0 0.0
  %1277 = vmatpush2.msra.mxu0 0.0
  %1278 = vmatprep.subr.mxu0 0.0
  %1279 = vmatpush2.msra.mxu0 0.0
  %1280 = vmatprep.subr.mxu0 0.0
  %1281 = vmatpush2.msra.mxu0 0.0
  %1282 = vmatprep.mubr.f32.mxu0 0.0
  %1283 = vmatmul.mubr.f32.gmra.mxu0 %v1216
  %v1284 = vpop.f32.mrf.mxu0
  %v1285 = vadd.f32 0.0, %v1284
  %v1286 = vpop.f32.mrf.mxu0
  %1287 = vdwg.mxu0
  %v1289 = vsel %vm46, %v776, 0
  %1291 = vmatprep.subr.mxu0 0.0
  %1292 = vmatpush1.msra.mxu0 0.0
  %1293 = vmatprep.subr.mxu0 0.0
  %1294 = vmatpush1.msra.mxu0 0.0
  %1295 = vmatprep.subr.mxu0 0.0
  %1296 = vmatpush1.msra.mxu0 0.0
  %1297 = vmatprep.subr.mxu0 0.0
  %1298 = vmatpush1.msra.mxu0 0.0
  %1299 = vmatprep.subr.mxu0 0.0
  %1300 = vmatpush1.msra.mxu0 0.0
  %1301 = vmatprep.subr.mxu0 0.0
  %1302 = vmatpush1.msra.mxu0 0.0
  %1303 = vmatprep.subr.mxu0 0.0
  %1304 = vmatpush1.msra.mxu0 0.0
  %1305 = vmatprep.subr.mxu0 0.0
  %1306 = vmatpush1.msra.mxu0 0.0
  %1307 = vmatprep.subr.mxu0 0.0
  %1308 = vmatpush1.msra.mxu0 0.0
  %1309 = vmatprep.subr.mxu0 0.0
  %1310 = vmatpush1.msra.mxu0 0.0
  %1311 = vmatprep.subr.mxu0 0.0
  %1312 = vmatpush1.msra.mxu0 0.0
  %1313 = vmatprep.subr.mxu0 0.0
  %1314 = vmatpush1.msra.mxu0 0.0
  %1315 = vmatprep.subr.mxu0 0.0
  %1316 = vmatpush1.msra.mxu0 0.0
  %1317 = vmatprep.subr.mxu0 0.0
  %1318 = vmatpush1.msra.mxu0 0.0
  %1319 = vmatprep.subr.mxu0 0.0
  %1320 = vmatpush1.msra.mxu0 0.0
  %1321 = vmatprep.subr.mxu0 0.0
  %1322 = vmatpush1.msra.mxu0 %v45
  %1323 = vmatprep.subr.mxu0 0.0
  %1324 = vmatpush2.msra.mxu0 0.0
  %1325 = vmatprep.subr.mxu0 0.0
  %1326 = vmatpush2.msra.mxu0 0.0
  %1327 = vmatprep.subr.mxu0 0.0
  %1328 = vmatpush2.msra.mxu0 0.0
  %1329 = vmatprep.subr.mxu0 0.0
  %1330 = vmatpush2.msra.mxu0 0.0
  %1331 = vmatprep.subr.mxu0 0.0
  %1332 = vmatpush2.msra.mxu0 0.0
  %1333 = vmatprep.subr.mxu0 0.0
  %1334 = vmatpush2.msra.mxu0 0.0
  %1335 = vmatprep.subr.mxu0 0.0
  %1336 = vmatpush2.msra.mxu0 0.0
  %1337 = vmatprep.subr.mxu0 0.0
  %1338 = vmatpush2.msra.mxu0 0.0
  %1339 = vmatprep.subr.mxu0 0.0
  %1340 = vmatpush2.msra.mxu0 0.0
  %1341 = vmatprep.subr.mxu0 0.0
  %1342 = vmatpush2.msra.mxu0 0.0
  %1343 = vmatprep.subr.mxu0 0.0
  %1344 = vmatpush2.msra.mxu0 0.0
  %1345 = vmatprep.subr.mxu0 0.0
  %1346 = vmatpush2.msra.mxu0 0.0
  %1347 = vmatprep.subr.mxu0 0.0
  %1348 = vmatpush2.msra.mxu0 0.0
  %1349 = vmatprep.subr.mxu0 0.0
  %1350 = vmatpush2.msra.mxu0 0.0
  %1351 = vmatprep.subr.mxu0 0.0
  %1352 = vmatpush2.msra.mxu0 0.0
  %1353 = vmatprep.subr.mxu0 0.0
  %1354 = vmatpush2.msra.mxu0 0.0
  %1355 = vmatprep.mubr.f32.mxu0 0.0
  %1356 = vmatmul.mubr.f32.gmra.mxu0 %v1289
  %v1357 = vpop.f32.mrf.mxu0
  %v1358 = vadd.f32 0.0, %v1357
  %v1359 = vpop.f32.mrf.mxu0
  %1360 = vdwg.mxu0
  %1361 = vst.msk [vmem:[%s5] sm:$0xff] %vm46, %v847
  %1362 = vst.msk [vmem:[%s5 + $0x8] sm:$0xff] %vm46, %v920
  %1363 = vst.msk [vmem:[%s5 + $0x10] sm:$0xff] %vm46, %v993
  %1364 = vst.msk [vmem:[%s5 + $0x18] sm:$0xff] %vm46, %v1066
  %1365 = vst.msk [vmem:[%s5 + $0x20] sm:$0xff] %vm46, %v1139
  %1366 = vst.msk [vmem:[%s5 + $0x28] sm:$0xff] %vm46, %v1212
  %1367 = vst.msk [vmem:[%s5 + $0x30] sm:$0xff] %vm46, %v1285
  %1368 = vst.msk [vmem:[%s5 + $0x38] sm:$0xff] %vm46, %v1358
  // Predicated region
  $region22: #{knowledge_pretrainer_forward.40} parent=0 // pred_check
    _
  $region23: #{knowledge_pretrainer_forward.40} parent=0 // pred_check_branch
    %1370 = sbr.rel (0) target = $region25
  $region24: #{knowledge_pretrainer_forward.40} parent=0 // pred_region
    _
  $region25: #{knowledge_pretrainer_forward.40} parent=0 // pred_fallthru
    _
  // Predicated region
  $region26: #{knowledge_pretrainer_forward.40} parent=0 // pred_check
    _
  $region27: #{knowledge_pretrainer_forward.40} parent=0 // pred_check_branch
    %1372 = sbr.rel (0) target = $region29
  $region28: #{knowledge_pretrainer_forward.40} parent=0 // pred_region
    _
  $region29: #{knowledge_pretrainer_forward.40} parent=0 // pred_fallthru
    _

// kernel: knowledge_pretrainer_forward.51
$region0: #{knowledge_pretrainer_forward.51}
  #allocation0 [shape = 'u32[]', space=smem, size = 0x4, offset = 0x4, fixed_abs, tag = 'smem constant byte address 0x4 - core index']
  #allocation1 [shape = 'u32[144,128]{1,0:T(1,128)}', space=vmem, size = 0x12000, scoped, tag = 'internal scratch']
  #allocation2 [shape = 'f32[16,1]{1,0:T(8,128)}', space=vmem, size = 0x2000, scoped, tag = 'scratch operand']
  #allocation3 [shape = 'f32[16,1]{1,0:T(8,128)}', space=vmem, size = 0x2000, scoped, tag = 'scratch operand']
  #allocation4 [shape = 'f32[16,1]{1,0:T(8,128)}', space=vmem, size = 0x2000, scoped, tag = 'scratch operand']
  %s0 = inlined_call_operand.vmem [shape: f32[16,32], index: 0, kind: input, shape index: {}]
  %s1 = inlined_call_operand.vmem [shape: f32[1,32], index: 1, kind: input, shape index: {}]
  %s2 = inlined_call_operand.vmem [shape: bf16[32768,32], index: 2, kind: input, shape index: {}]
  %s3 = inlined_call_operand.vmem [shape: s32[16,1], index: 3, kind: input, shape index: {}]
  %s4 = inlined_call_operand.hbm [shape: f32[1,1], index: 4, kind: output, shape index: {}]
  %s5 = sld [smem:[#allocation0]]
  $region57: #{knowledge_pretrainer_forward.51} parent=0
    _
  %s7 = ssub.s32 1, %s5
  %s8 = scalar_select 0, %s7, %s5
  $region1: #{knowledge_pretrainer_forward.51} parent=0
    #allocation5 [shape = 'u8[512]{0}', space=vmem, size = 0x400, scoped, tag = 'output window, operand 0, single buffered']
    #allocation6 [shape = 's32[2]{0}', space=sflag, size = 0x8, scoped, tag = 'scoped memory for knowledge_pretrainer_forward.51']
    %9 = vsyncpa [#allocation6], 0
    loop: start=0, step=1, limit=10
    $region2: #{knowledge_pretrainer_forward.51} parent=1 // loop_pre_header
      _
    $region3: #{knowledge_pretrainer_forward.51} parent=1 // loop_header
      %s11 = sphi 0, %s15
      %p12 = scmp.ge.s32.totalorder %s11, 10
      %s19 = sphi 0, %s19
      %s21 = sphi 0, %s19
      %s22 = sphi 0, %s21
      %s36 = sphi 0, %s22
      %s40 = sphi 0, %s40
      %s42 = sphi 0, %s40
      %s43 = sphi 0, %s42
      %s57 = sphi 0, %s43
      %s63 = sphi 0, %s65
      %s66 = sphi 0, %s63
      %s67 = sphi 0, %s66
      %s83 = sphi 0, %s67
      %s87 = sphi 0, %s87
      %s89 = sphi 0, %s87
      %s90 = sphi 0, %s89
      %s104 = sphi 0, %s90
      %s108 = sphi 0, %s108
      %s110 = sphi 0, %s108
      %s111 = sphi 0, %s110
      %s125 = sphi 0, %s111
    $region4: #{knowledge_pretrainer_forward.51} parent=1 // loop_header_branch
      %14 = sbr.rel (%p12) target = $region8
    $region5: #{knowledge_pretrainer_forward.51} parent=1 // loop_body
      %s16 = ssub.s32 %s11, 1
      %s17 = ssub.s32 %s11, 2
      %s18 = sadd.s32 %s11, 1
      %s20 = sadd.s32 %s19, 1
      %p23 = scmp.eq.s32.totalorder %s11, 7
      %p24 = scmp.ne.s32.totalorder %s19, %s21
      %p25 = scmp.eq.s32.totalorder %s11, 0
      %p26 = por %p24, %p25
      %p27 = scmp.ne.s32.totalorder %s19, %s21
      %p28 = scmp.eq.s32.totalorder %s16, 7
      %p29 = por %p27, %p28
      %p30 = scmp.ne.s32.totalorder %s21, %s22
      %p31 = scmp.eq.s32.totalorder %s16, 0
      %p32 = por %p30, %p31
      %p33 = scmp.ne.s32.totalorder %s21, %s22
      %p34 = scmp.eq.s32.totalorder %s17, 7
      %p35 = por %p33, %p34
      %p37 = scmp.ne.s32.totalorder %s22, %s36
      %p38 = scmp.eq.s32.totalorder %s17, 0
      %p39 = por %p37, %p38
      %s41 = sadd.s32 %s40, 1
      %p44 = scmp.eq.s32.totalorder %s11, 7
      %p45 = scmp.ne.s32.totalorder %s40, %s42
      %p46 = scmp.eq.s32.totalorder %s11, 0
      %p47 = por %p45, %p46
      %p48 = scmp.ne.s32.totalorder %s40, %s42
      %p49 = scmp.eq.s32.totalorder %s16, 7
      %p50 = por %p48, %p49
      %p51 = scmp.ne.s32.totalorder %s42, %s43
      %p52 = scmp.eq.s32.totalorder %s16, 0
      %p53 = por %p51, %p52
      %p54 = scmp.ne.s32.totalorder %s42, %s43
      %p55 = scmp.eq.s32.totalorder %s17, 7
      %p56 = por %p54, %p55
      %p58 = scmp.ne.s32.totalorder %s43, %s57
      %p59 = scmp.eq.s32.totalorder %s17, 0
      %p60 = por %p58, %p59
      %s61 = ssub.s32 %s11, %s18
      %p62 = scmp.eq.s32.totalorder %s61, 0
      %s64 = sadd.s32 %s63, 1
      %s65 = scalar_select %p62, %s63, %s64
      %p68 = pneg %p62
      %p69 = scmp.eq.s32.totalorder %s11, 7
      %p70 = por %p68, %p69
      %p71 = scmp.ne.s32.totalorder %s63, %s66
      %p72 = scmp.eq.s32.totalorder %s11, 0
      %p73 = por %p71, %p72
      %p74 = scmp.ne.s32.totalorder %s63, %s66
      %p75 = scmp.eq.s32.totalorder %s16, 7
      %p76 = por %p74, %p75
      %p77 = scmp.ne.s32.totalorder %s66, %s67
      %p78 = scmp.eq.s32.totalorder %s16, 0
      %p79 = por %p77, %p78
      %p80 = scmp.ne.s32.totalorder %s66, %s67
      %p81 = scmp.eq.s32.totalorder %s17, 7
      %p82 = por %p80, %p81
      %p84 = scmp.ne.s32.totalorder %s67, %s83
      %p85 = scmp.eq.s32.totalorder %s17, 0
      %p86 = por %p84, %p85
      %s88 = sadd.s32 %s87, 1
      %p91 = scmp.eq.s32.totalorder %s11, 7
      %p92 = scmp.ne.s32.totalorder %s87, %s89
      %p93 = scmp.eq.s32.totalorder %s11, 0
      %p94 = por %p92, %p93
      %p95 = scmp.ne.s32.totalorder %s87, %s89
      %p96 = scmp.eq.s32.totalorder %s16, 7
      %p97 = por %p95, %p96
      %p98 = scmp.ne.s32.totalorder %s89, %s90
      %p99 = scmp.eq.s32.totalorder %s16, 0
      %p100 = por %p98, %p99
      %p101 = scmp.ne.s32.totalorder %s89, %s90
      %p102 = scmp.eq.s32.totalorder %s17, 7
      %p103 = por %p101, %p102
      %p105 = scmp.ne.s32.totalorder %s90, %s104
      %p106 = scmp.eq.s32.totalorder %s17, 0
      %p107 = por %p105, %p106
      %s109 = sadd.s32 %s108, 1
      %p112 = scmp.eq.s32.totalorder %s11, 7
      %p113 = scmp.ne.s32.totalorder %s108, %s110
      %p114 = scmp.eq.s32.totalorder %s11, 0
      %p115 = por %p113, %p114
      %p116 = scmp.ne.s32.totalorder %s108, %s110
      %p117 = scmp.eq.s32.totalorder %s16, 7
      %p118 = por %p116, %p117
      %p119 = scmp.ne.s32.totalorder %s110, %s111
      %p120 = scmp.eq.s32.totalorder %s16, 0
      %p121 = por %p119, %p120
      %p122 = scmp.ne.s32.totalorder %s110, %s111
      %p123 = scmp.eq.s32.totalorder %s17, 7
      %p124 = por %p122, %p123
      %p126 = scmp.ne.s32.totalorder %s111, %s125
      %p127 = scmp.eq.s32.totalorder %s17, 0
      %p128 = por %p126, %p127
      %p129 = scmp.le.s32.totalorder 1, %s11
      %p130 = scmp.lt.s32.totalorder %s11, 9
      %p131 = pnand %p129, %p130
      %p132 = pneg %p131
      // Predicated region
      $region9: #{knowledge_pretrainer_forward.51} parent=5 // pred_check
        _
      $region10: #{knowledge_pretrainer_forward.51} parent=5 // pred_check_branch
        %134 = sbr.rel (%p131) target = $region12
      $region11: #{knowledge_pretrainer_forward.51} parent=5 // pred_region
        %s135 = ssub.s32 %s11, 1
        // Predicated region
        $region13: #{knowledge_pretrainer_forward.51} parent=11 // pred_check
          %p136 = pneg %p32
        $region14: #{knowledge_pretrainer_forward.51} parent=11 // pred_check_branch
          %138 = sbr.rel (%p136) target = $region16
        $region15: #{knowledge_pretrainer_forward.51} parent=11 // pred_region
          _
        $region16: #{knowledge_pretrainer_forward.51} parent=11 // pred_fallthru
          _
        // Predicated region
        $region17: #{knowledge_pretrainer_forward.51} parent=11 // pred_check
          %p139 = pneg %p53
        $region18: #{knowledge_pretrainer_forward.51} parent=11 // pred_check_branch
          %141 = sbr.rel (%p139) target = $region20
        $region19: #{knowledge_pretrainer_forward.51} parent=11 // pred_region
          _
        $region20: #{knowledge_pretrainer_forward.51} parent=11 // pred_fallthru
          _
        // Predicated region
        $region21: #{knowledge_pretrainer_forward.51} parent=11 // pred_check
          %p142 = pneg %p100
        $region22: #{knowledge_pretrainer_forward.51} parent=11 // pred_check_branch
          %144 = sbr.rel (%p142) target = $region24
        $region23: #{knowledge_pretrainer_forward.51} parent=11 // pred_region
          _
        $region24: #{knowledge_pretrainer_forward.51} parent=11 // pred_fallthru
          _
      $region12: #{knowledge_pretrainer_forward.51} parent=5 // pred_fallthru
        _
      %p145 = scmp.lt.s32.totalorder %s11, 8
      // Predicated region
      $region25: #{knowledge_pretrainer_forward.51} parent=5 // pred_check
        %p146 = pneg %p145
      $region26: #{knowledge_pretrainer_forward.51} parent=5 // pred_check_branch
        %148 = sbr.rel (%p146) target = $region28
      $region27: #{knowledge_pretrainer_forward.51} parent=5 // pred_region
        // Predicated region
        $region29: #{knowledge_pretrainer_forward.51} parent=27 // pred_check
          %p149 = pneg %p73
        $region30: #{knowledge_pretrainer_forward.51} parent=27 // pred_check_branch
          %151 = sbr.rel (%p149) target = $region32
        $region31: #{knowledge_pretrainer_forward.51} parent=27 // pred_region
          %s152 = smul.u32 512, %s11
          %p153 = scmp.lt.s32.totalorder %s152, 4095
          %s154 = scalar_select %p153, %s152, 4095
          %s155 = smul.addr %s154, 4
          %s156 = scalar_lea.vmem %s2, %s155
          %s157 = smul.u32 512, %s11
        $region32: #{knowledge_pretrainer_forward.51} parent=27 // pred_fallthru
          _
      $region28: #{knowledge_pretrainer_forward.51} parent=5 // pred_fallthru
        _
      %p158 = scmp.le.s32.totalorder 1, %s11
      %p159 = scmp.lt.s32.totalorder %s11, 9
      %p160 = pnand %p158, %p159
      %p161 = pneg %p160
      // Predicated region
      $region33: #{knowledge_pretrainer_forward.51} parent=5 // pred_check
        _
      $region34: #{knowledge_pretrainer_forward.51} parent=5 // pred_check_branch
        %163 = sbr.rel (%p160) target = $region36
      $region35: #{knowledge_pretrainer_forward.51} parent=5 // pred_region
        %s164 = ssub.s32 %s11, 1
        %p165 = pneg %p32
        %p166 = pneg %p29
        %p167 = pneg %p53
        %p168 = pneg %p50
        %s169 = smul.u32 512, %s16
        %p170 = scmp.lt.s32.totalorder %s169, 4095
        %s171 = scalar_select %p170, %s169, 4095
        %s172 = smul.addr %s171, 4
        %s173 = scalar_lea.vmem %s2, %s172
        %p174 = pneg %p79
        %p175 = pneg %p76
        %p176 = pneg %p100
        %p177 = pneg %p97
        %p178 = pneg %p121
        %p179 = pneg %p118
        %s180 = smul.u32 512, %s16
        %p181 = scmp.lt.s32.totalorder %s180, 4095
        %s182 = scalar_select %p181, %s180, 4095
        %s183 = smul.addr %s182, 4
        %s184 = scalar_lea.vmem %s2, %s183
        %s185 = smul.u32 512, %s16
        %p187 = scmp.eq.s32.totalorder %s16, 0
        // Predicated region
        $region37: #{knowledge_pretrainer_forward.51} parent=35 // pred_check
          %p188 = pneg %p187
        $region38: #{knowledge_pretrainer_forward.51} parent=35 // pred_check_branch
          %190 = sbr.rel (%p188) target = $region40
        $region39: #{knowledge_pretrainer_forward.51} parent=35 // pred_region
          %vm191 = vcmask 7168
          %192 = vst.msk [vmem:[#allocation2] sm:$0xff] %vm191, -inf
          %193 = vst.msk [vmem:[#allocation2 + $0x8] sm:$0xff] %vm191, -inf
          %194 = vst.msk [vmem:[#allocation3] sm:$0xff] %vm191, 0.0
          %195 = vst.msk [vmem:[#allocation3 + $0x8] sm:$0xff] %vm191, 0.0
          %196 = vst.msk [vmem:[#allocation4] sm:$0xff] %vm191, 0.0
          %197 = vst.msk [vmem:[#allocation4 + $0x8] sm:$0xff] %vm191, 0.0
        $region40: #{knowledge_pretrainer_forward.51} parent=35 // pred_fallthru
          _
        %v198 = vld [vmem:[%s0] sm:$0xff]
        %v199 = vld [vmem:[%s0 + $0x8] sm:$0xff]
        %v200 = vmul.f32 %v198, %v198
        %v201 = vmul.f32 %v199, %v199
        %vm202 = vcmask 261120
        %v203 = vsel %vm202, %v200, 0.0
        %204 = vadd.xlane.f32.xlu0 %v203
        %v205 = vpop.xlane.xlu0 %204
        %v206 = vsel %vm202, %v201, 0.0
        %207 = vadd.xlane.f32.xlu0 %v206
        %v208 = vpop.xlane.xlu0 %207
        %v209 = vrcp.pop 32.0
        %v210 = vmul.f32 %v205, %v209
        %v211 = vmul.f32 %v208, %v209
        %v212 = vadd.f32 %v210, 1e-06
        %v213 = vadd.f32 %v211, 1e-06
        %v214 = vrsqrt.pop %v212
        %v215 = vrsqrt.pop %v213
        %v216 = vmul.f32 %v198, %v214
        %v217 = vmul.f32 %v199, %v215
        %v218 = vld [vmem:[%s1] sm:$0x1]
        %v220 = vlaneseq
        %v221 = vshrl.u32 %v220, 7
        %v222 = vsub.s32 0, %v221
        %v223 = vrot.slane %v218, %v222
        %v225 = vmul.f32 %v216, %v223
        %v226 = vmul.f32 %v217, %v223
        %v227 = vmul.f32 %v225, 0.17677669
        %v228 = vmul.f32 %v226, 0.17677669
        %v229 = vpack.c.bf16 %v228, %v227
        %v230 = vld [vmem:[%s184] sm:$0xf]
        %v231 = vld [vmem:[%s184 + $0x4] sm:$0xf]
        %v232 = vld [vmem:[%s184 + $0x8] sm:$0xf]
        %v233 = vld [vmem:[%s184 + $0xc] sm:$0xf]
        %v234 = vld [vmem:[%s184 + $0x10] sm:$0xf]
        %v235 = vld [vmem:[%s184 + $0x14] sm:$0xf]
        %v236 = vld [vmem:[%s184 + $0x18] sm:$0xf]
        %v237 = vld [vmem:[%s184 + $0x1c] sm:$0xf]
        %v238 = vld [vmem:[%s184 + $0x20] sm:$0xf]
        %v239 = vld [vmem:[%s184 + $0x24] sm:$0xf]
        %v240 = vld [vmem:[%s184 + $0x28] sm:$0xf]
        %v241 = vld [vmem:[%s184 + $0x2c] sm:$0xf]
        %v242 = vld [vmem:[%s184 + $0x30] sm:$0xf]
        %v243 = vld [vmem:[%s184 + $0x34] sm:$0xf]
        %v244 = vld [vmem:[%s184 + $0x38] sm:$0xf]
        %v245 = vld [vmem:[%s184 + $0x3c] sm:$0xf]
        %v246 = vld [vmem:[%s184 + $0x40] sm:$0xf]
        %v247 = vld [vmem:[%s184 + $0x44] sm:$0xf]
        %v248 = vld [vmem:[%s184 + $0x48] sm:$0xf]
        %v249 = vld [vmem:[%s184 + $0x4c] sm:$0xf]
        %v250 = vld [vmem:[%s184 + $0x50] sm:$0xf]
        %v251 = vld [vmem:[%s184 + $0x54] sm:$0xf]
        %v252 = vld [vmem:[%s184 + $0x58] sm:$0xf]
        %v253 = vld [vmem:[%s184 + $0x5c] sm:$0xf]
        %v254 = vld [vmem:[%s184 + $0x60] sm:$0xf]
        %v255 = vld [vmem:[%s184 + $0x64] sm:$0xf]
        %v256 = vld [vmem:[%s184 + $0x68] sm:$0xf]
        %v257 = vld [vmem:[%s184 + $0x6c] sm:$0xf]
        %v258 = vld [vmem:[%s184 + $0x70] sm:$0xf]
        %v259 = vld [vmem:[%s184 + $0x74] sm:$0xf]
        %v260 = vld [vmem:[%s184 + $0x78] sm:$0xf]
        %v261 = vld [vmem:[%s184 + $0x7c] sm:$0xf]
        %v262 = vld [vmem:[%s184 + $0x80] sm:$0xf]
        %v263 = vld [vmem:[%s184 + $0x84] sm:$0xf]
        %v264 = vld [vmem:[%s184 + $0x88] sm:$0xf]
        %v265 = vld [vmem:[%s184 + $0x8c] sm:$0xf]
        %v266 = vld [vmem:[%s184 + $0x90] sm:$0xf]
        %v267 = vld [vmem:[%s184 + $0x94] sm:$0xf]
        %v268 = vld [vmem:[%s184 + $0x98] sm:$0xf]
        %v269 = vld [vmem:[%s184 + $0x9c] sm:$0xf]
        %v270 = vld [vmem:[%s184 + $0xa0] sm:$0xf]
        %v271 = vld [vmem:[%s184 + $0xa4] sm:$0xf]
        %v272 = vld [vmem:[%s184 + $0xa8] sm:$0xf]
        %v273 = vld [vmem:[%s184 + $0xac] sm:$0xf]
        %v274 = vld [vmem:[%s184 + $0xb0] sm:$0xf]
        %v275 = vld [vmem:[%s184 + $0xb4] sm:$0xf]
        %v276 = vld [vmem:[%s184 + $0xb8] sm:$0xf]
        %v277 = vld [vmem:[%s184 + $0xbc] sm:$0xf]
        %v278 = vld [vmem:[%s184 + $0xc0] sm:$0xf]
        %v279 = vld [vmem:[%s184 + $0xc4] sm:$0xf]
        %v280 = vld [vmem:[%s184 + $0xc8] sm:$0xf]
        %v281 = vld [vmem:[%s184 + $0xcc] sm:$0xf]
        %v282 = vld [vmem:[%s184 + $0xd0] sm:$0xf]
        %v283 = vld [vmem:[%s184 + $0xd4] sm:$0xf]
        %v284 = vld [vmem:[%s184 + $0xd8] sm:$0xf]
        %v285 = vld [vmem:[%s184 + $0xdc] sm:$0xf]
        %v286 = vld [vmem:[%s184 + $0xe0] sm:$0xf]
        %v287 = vld [vmem:[%s184 + $0xe4] sm:$0xf]
        %v288 = vld [vmem:[%s184 + $0xe8] sm:$0xf]
        %v289 = vld [vmem:[%s184 + $0xec] sm:$0xf]
        %v290 = vld [vmem:[%s184 + $0xf0] sm:$0xf]
        %v291 = vld [vmem:[%s184 + $0xf4] sm:$0xf]
        %v292 = vld [vmem:[%s184 + $0xf8] sm:$0xf]
        %v293 = vld [vmem:[%s184 + $0xfc] sm:$0xf]
        %v294 = vld [vmem:[%s184 + $0x100] sm:$0xf]
        %v295 = vld [vmem:[%s184 + $0x104] sm:$0xf]
        %v296 = vld [vmem:[%s184 + $0x108] sm:$0xf]
        %v297 = vld [vmem:[%s184 + $0x10c] sm:$0xf]
        %v298 = vld [vmem:[%s184 + $0x110] sm:$0xf]
        %v299 = vld [vmem:[%s184 + $0x114] sm:$0xf]
        %v300 = vld [vmem:[%s184 + $0x118] sm:$0xf]
        %v301 = vld [vmem:[%s184 + $0x11c] sm:$0xf]
        %v302 = vld [vmem:[%s184 + $0x120] sm:$0xf]
        %v303 = vld [vmem:[%s184 + $0x124] sm:$0xf]
        %v304 = vld [vmem:[%s184 + $0x128] sm:$0xf]
        %v305 = vld [vmem:[%s184 + $0x12c] sm:$0xf]
        %v306 = vld [vmem:[%s184 + $0x130] sm:$0xf]
        %v307 = vld [vmem:[%s184 + $0x134] sm:$0xf]
        %v308 = vld [vmem:[%s184 + $0x138] sm:$0xf]
        %v309 = vld [vmem:[%s184 + $0x13c] sm:$0xf]
        %v310 = vld [vmem:[%s184 + $0x140] sm:$0xf]
        %v311 = vld [vmem:[%s184 + $0x144] sm:$0xf]
        %v312 = vld [vmem:[%s184 + $0x148] sm:$0xf]
        %v313 = vld [vmem:[%s184 + $0x14c] sm:$0xf]
        %v314 = vld [vmem:[%s184 + $0x150] sm:$0xf]
        %v315 = vld [vmem:[%s184 + $0x154] sm:$0xf]
        %v316 = vld [vmem:[%s184 + $0x158] sm:$0xf]
        %v317 = vld [vmem:[%s184 + $0x15c] sm:$0xf]
        %v318 = vld [vmem:[%s184 + $0x160] sm:$0xf]
        %v319 = vld [vmem:[%s184 + $0x164] sm:$0xf]
        %v320 = vld [vmem:[%s184 + $0x168] sm:$0xf]
        %v321 = vld [vmem:[%s184 + $0x16c] sm:$0xf]
        %v322 = vld [vmem:[%s184 + $0x170] sm:$0xf]
        %v323 = vld [vmem:[%s184 + $0x174] sm:$0xf]
        %v324 = vld [vmem:[%s184 + $0x178] sm:$0xf]
        %v325 = vld [vmem:[%s184 + $0x17c] sm:$0xf]
        %v326 = vld [vmem:[%s184 + $0x180] sm:$0xf]
        %v327 = vld [vmem:[%s184 + $0x184] sm:$0xf]
        %v328 = vld [vmem:[%s184 + $0x188] sm:$0xf]
        %v329 = vld [vmem:[%s184 + $0x18c] sm:$0xf]
        %v330 = vld [vmem:[%s184 + $0x190] sm:$0xf]
        %v331 = vld [vmem:[%s184 + $0x194] sm:$0xf]
        %v332 = vld [vmem:[%s184 + $0x198] sm:$0xf]
        %v333 = vld [vmem:[%s184 + $0x19c] sm:$0xf]
        %v334 = vld [vmem:[%s184 + $0x1a0] sm:$0xf]
        %v335 = vld [vmem:[%s184 + $0x1a4] sm:$0xf]
        %v336 = vld [vmem:[%s184 + $0x1a8] sm:$0xf]
        %v337 = vld [vmem:[%s184 + $0x1ac] sm:$0xf]
        %v338 = vld [vmem:[%s184 + $0x1b0] sm:$0xf]
        %v339 = vld [vmem:[%s184 + $0x1b4] sm:$0xf]
        %v340 = vld [vmem:[%s184 + $0x1b8] sm:$0xf]
        %v341 = vld [vmem:[%s184 + $0x1bc] sm:$0xf]
        %v342 = vld [vmem:[%s184 + $0x1c0] sm:$0xf]
        %v343 = vld [vmem:[%s184 + $0x1c4] sm:$0xf]
        %v344 = vld [vmem:[%s184 + $0x1c8] sm:$0xf]
        %v345 = vld [vmem:[%s184 + $0x1cc] sm:$0xf]
        %v346 = vld [vmem:[%s184 + $0x1d0] sm:$0xf]
        %v347 = vld [vmem:[%s184 + $0x1d4] sm:$0xf]
        %v348 = vld [vmem:[%s184 + $0x1d8] sm:$0xf]
        %v349 = vld [vmem:[%s184 + $0x1dc] sm:$0xf]
        %v350 = vld [vmem:[%s184 + $0x1e0] sm:$0xf]
        %v351 = vld [vmem:[%s184 + $0x1e4] sm:$0xf]
        %v352 = vld [vmem:[%s184 + $0x1e8] sm:$0xf]
        %v353 = vld [vmem:[%s184 + $0x1ec] sm:$0xf]
        %v354 = vld [vmem:[%s184 + $0x1f0] sm:$0xf]
        %v355 = vld [vmem:[%s184 + $0x1f4] sm:$0xf]
        %v356 = vld [vmem:[%s184 + $0x1f8] sm:$0xf]
        %v357 = vld [vmem:[%s184 + $0x1fc] sm:$0xf]
        %v358 = vld [vmem:[%s184 + $0x200] sm:$0xf]
        %v359 = vld [vmem:[%s184 + $0x204] sm:$0xf]
        %v360 = vld [vmem:[%s184 + $0x208] sm:$0xf]
        %v361 = vld [vmem:[%s184 + $0x20c] sm:$0xf]
        %v362 = vld [vmem:[%s184 + $0x210] sm:$0xf]
        %v363 = vld [vmem:[%s184 + $0x214] sm:$0xf]
        %v364 = vld [vmem:[%s184 + $0x218] sm:$0xf]
        %v365 = vld [vmem:[%s184 + $0x21c] sm:$0xf]
        %v366 = vld [vmem:[%s184 + $0x220] sm:$0xf]
        %v367 = vld [vmem:[%s184 + $0x224] sm:$0xf]
        %v368 = vld [vmem:[%s184 + $0x228] sm:$0xf]
        %v369 = vld [vmem:[%s184 + $0x22c] sm:$0xf]
        %v370 = vld [vmem:[%s184 + $0x230] sm:$0xf]
        %v371 = vld [vmem:[%s184 + $0x234] sm:$0xf]
        %v372 = vld [vmem:[%s184 + $0x238] sm:$0xf]
        %v373 = vld [vmem:[%s184 + $0x23c] sm:$0xf]
        %v374 = vld [vmem:[%s184 + $0x240] sm:$0xf]
        %v375 = vld [vmem:[%s184 + $0x244] sm:$0xf]
        %v376 = vld [vmem:[%s184 + $0x248] sm:$0xf]
        %v377 = vld [vmem:[%s184 + $0x24c] sm:$0xf]
        %v378 = vld [vmem:[%s184 + $0x250] sm:$0xf]
        %v379 = vld [vmem:[%s184 + $0x254] sm:$0xf]
        %v380 = vld [vmem:[%s184 + $0x258] sm:$0xf]
        %v381 = vld [vmem:[%s184 + $0x25c] sm:$0xf]
        %v382 = vld [vmem:[%s184 + $0x260] sm:$0xf]
        %v383 = vld [vmem:[%s184 + $0x264] sm:$0xf]
        %v384 = vld [vmem:[%s184 + $0x268] sm:$0xf]
        %v385 = vld [vmem:[%s184 + $0x26c] sm:$0xf]
        %v386 = vld [vmem:[%s184 + $0x270] sm:$0xf]
        %v387 = vld [vmem:[%s184 + $0x274] sm:$0xf]
        %v388 = vld [vmem:[%s184 + $0x278] sm:$0xf]
        %v389 = vld [vmem:[%s184 + $0x27c] sm:$0xf]
        %v390 = vld [vmem:[%s184 + $0x280] sm:$0xf]
        %v391 = vld [vmem:[%s184 + $0x284] sm:$0xf]
        %v392 = vld [vmem:[%s184 + $0x288] sm:$0xf]
        %v393 = vld [vmem:[%s184 + $0x28c] sm:$0xf]
        %v394 = vld [vmem:[%s184 + $0x290] sm:$0xf]
        %v395 = vld [vmem:[%s184 + $0x294] sm:$0xf]
        %v396 = vld [vmem:[%s184 + $0x298] sm:$0xf]
        %v397 = vld [vmem:[%s184 + $0x29c] sm:$0xf]
        %v398 = vld [vmem:[%s184 + $0x2a0] sm:$0xf]
        %v399 = vld [vmem:[%s184 + $0x2a4] sm:$0xf]
        %v400 = vld [vmem:[%s184 + $0x2a8] sm:$0xf]
        %v401 = vld [vmem:[%s184 + $0x2ac] sm:$0xf]
        %v402 = vld [vmem:[%s184 + $0x2b0] sm:$0xf]
        %v403 = vld [vmem:[%s184 + $0x2b4] sm:$0xf]
        %v404 = vld [vmem:[%s184 + $0x2b8] sm:$0xf]
        %v405 = vld [vmem:[%s184 + $0x2bc] sm:$0xf]
        %v406 = vld [vmem:[%s184 + $0x2c0] sm:$0xf]
        %v407 = vld [vmem:[%s184 + $0x2c4] sm:$0xf]
        %v408 = vld [vmem:[%s184 + $0x2c8] sm:$0xf]
        %v409 = vld [vmem:[%s184 + $0x2cc] sm:$0xf]
        %v410 = vld [vmem:[%s184 + $0x2d0] sm:$0xf]
        %v411 = vld [vmem:[%s184 + $0x2d4] sm:$0xf]
        %v412 = vld [vmem:[%s184 + $0x2d8] sm:$0xf]
        %v413 = vld [vmem:[%s184 + $0x2dc] sm:$0xf]
        %v414 = vld [vmem:[%s184 + $0x2e0] sm:$0xf]
        %v415 = vld [vmem:[%s184 + $0x2e4] sm:$0xf]
        %v416 = vld [vmem:[%s184 + $0x2e8] sm:$0xf]
        %v417 = vld [vmem:[%s184 + $0x2ec] sm:$0xf]
        %v418 = vld [vmem:[%s184 + $0x2f0] sm:$0xf]
        %v419 = vld [vmem:[%s184 + $0x2f4] sm:$0xf]
        %v420 = vld [vmem:[%s184 + $0x2f8] sm:$0xf]
        %v421 = vld [vmem:[%s184 + $0x2fc] sm:$0xf]
        %v422 = vld [vmem:[%s184 + $0x300] sm:$0xf]
        %v423 = vld [vmem:[%s184 + $0x304] sm:$0xf]
        %v424 = vld [vmem:[%s184 + $0x308] sm:$0xf]
        %v425 = vld [vmem:[%s184 + $0x30c] sm:$0xf]
        %v426 = vld [vmem:[%s184 + $0x310] sm:$0xf]
        %v427 = vld [vmem:[%s184 + $0x314] sm:$0xf]
        %v428 = vld [vmem:[%s184 + $0x318] sm:$0xf]
        %v429 = vld [vmem:[%s184 + $0x31c] sm:$0xf]
        %v430 = vld [vmem:[%s184 + $0x320] sm:$0xf]
        %v431 = vld [vmem:[%s184 + $0x324] sm:$0xf]
        %v432 = vld [vmem:[%s184 + $0x328] sm:$0xf]
        %v433 = vld [vmem:[%s184 + $0x32c] sm:$0xf]
        %v434 = vld [vmem:[%s184 + $0x330] sm:$0xf]
        %v435 = vld [vmem:[%s184 + $0x334] sm:$0xf]
        %v436 = vld [vmem:[%s184 + $0x338] sm:$0xf]
        %v437 = vld [vmem:[%s184 + $0x33c] sm:$0xf]
        %v438 = vld [vmem:[%s184 + $0x340] sm:$0xf]
        %v439 = vld [vmem:[%s184 + $0x344] sm:$0xf]
        %v440 = vld [vmem:[%s184 + $0x348] sm:$0xf]
        %v441 = vld [vmem:[%s184 + $0x34c] sm:$0xf]
        %v442 = vld [vmem:[%s184 + $0x350] sm:$0xf]
        %v443 = vld [vmem:[%s184 + $0x354] sm:$0xf]
        %v444 = vld [vmem:[%s184 + $0x358] sm:$0xf]
        %v445 = vld [vmem:[%s184 + $0x35c] sm:$0xf]
        %v446 = vld [vmem:[%s184 + $0x360] sm:$0xf]
        %v447 = vld [vmem:[%s184 + $0x364] sm:$0xf]
        %v448 = vld [vmem:[%s184 + $0x368] sm:$0xf]
        %v449 = vld [vmem:[%s184 + $0x36c] sm:$0xf]
        %v450 = vld [vmem:[%s184 + $0x370] sm:$0xf]
        %v451 = vld [vmem:[%s184 + $0x374] sm:$0xf]
        %v452 = vld [vmem:[%s184 + $0x378] sm:$0xf]
        %v453 = vld [vmem:[%s184 + $0x37c] sm:$0xf]
        %v454 = vld [vmem:[%s184 + $0x380] sm:$0xf]
        %v455 = vld [vmem:[%s184 + $0x384] sm:$0xf]
        %v456 = vld [vmem:[%s184 + $0x388] sm:$0xf]
        %v457 = vld [vmem:[%s184 + $0x38c] sm:$0xf]
        %v458 = vld [vmem:[%s184 + $0x390] sm:$0xf]
        %v459 = vld [vmem:[%s184 + $0x394] sm:$0xf]
        %v460 = vld [vmem:[%s184 + $0x398] sm:$0xf]
        %v461 = vld [vmem:[%s184 + $0x39c] sm:$0xf]
        %v462 = vld [vmem:[%s184 + $0x3a0] sm:$0xf]
        %v463 = vld [vmem:[%s184 + $0x3a4] sm:$0xf]
        %v464 = vld [vmem:[%s184 + $0x3a8] sm:$0xf]
        %v465 = vld [vmem:[%s184 + $0x3ac] sm:$0xf]
        %v466 = vld [vmem:[%s184 + $0x3b0] sm:$0xf]
        %v467 = vld [vmem:[%s184 + $0x3b4] sm:$0xf]
        %v468 = vld [vmem:[%s184 + $0x3b8] sm:$0xf]
        %v469 = vld [vmem:[%s184 + $0x3bc] sm:$0xf]
        %v470 = vld [vmem:[%s184 + $0x3c0] sm:$0xf]
        %v471 = vld [vmem:[%s184 + $0x3c4] sm:$0xf]
        %v472 = vld [vmem:[%s184 + $0x3c8] sm:$0xf]
        %v473 = vld [vmem:[%s184 + $0x3cc] sm:$0xf]
        %v474 = vld [vmem:[%s184 + $0x3d0] sm:$0xf]
        %v475 = vld [vmem:[%s184 + $0x3d4] sm:$0xf]
        %v476 = vld [vmem:[%s184 + $0x3d8] sm:$0xf]
        %v477 = vld [vmem:[%s184 + $0x3dc] sm:$0xf]
        %v478 = vld [vmem:[%s184 + $0x3e0] sm:$0xf]
        %v479 = vld [vmem:[%s184 + $0x3e4] sm:$0xf]
        %v480 = vld [vmem:[%s184 + $0x3e8] sm:$0xf]
        %v481 = vld [vmem:[%s184 + $0x3ec] sm:$0xf]
        %v482 = vld [vmem:[%s184 + $0x3f0] sm:$0xf]
        %v483 = vld [vmem:[%s184 + $0x3f4] sm:$0xf]
        %v484 = vld [vmem:[%s184 + $0x3f8] sm:$0xf]
        %v485 = vld [vmem:[%s184 + $0x3fc] sm:$0xf]
        %v486 = vld [vmem:[%s184 + $0x400] sm:$0xf]
        %v487 = vld [vmem:[%s184 + $0x404] sm:$0xf]
        %v488 = vld [vmem:[%s184 + $0x408] sm:$0xf]
        %v489 = vld [vmem:[%s184 + $0x40c] sm:$0xf]
        %v490 = vld [vmem:[%s184 + $0x410] sm:$0xf]
        %v491 = vld [vmem:[%s184 + $0x414] sm:$0xf]
        %v492 = vld [vmem:[%s184 + $0x418] sm:$0xf]
        %v493 = vld [vmem:[%s184 + $0x41c] sm:$0xf]
        %v494 = vld [vmem:[%s184 + $0x420] sm:$0xf]
        %v495 = vld [vmem:[%s184 + $0x424] sm:$0xf]
        %v496 = vld [vmem:[%s184 + $0x428] sm:$0xf]
        %v497 = vld [vmem:[%s184 + $0x42c] sm:$0xf]
        %v498 = vld [vmem:[%s184 + $0x430] sm:$0xf]
        %v499 = vld [vmem:[%s184 + $0x434] sm:$0xf]
        %v500 = vld [vmem:[%s184 + $0x438] sm:$0xf]
        %v501 = vld [vmem:[%s184 + $0x43c] sm:$0xf]
        %v502 = vld [vmem:[%s184 + $0x440] sm:$0xf]
        %v503 = vld [vmem:[%s184 + $0x444] sm:$0xf]
        %v504 = vld [vmem:[%s184 + $0x448] sm:$0xf]
        %v505 = vld [vmem:[%s184 + $0x44c] sm:$0xf]
        %v506 = vld [vmem:[%s184 + $0x450] sm:$0xf]
        %v507 = vld [vmem:[%s184 + $0x454] sm:$0xf]
        %v508 = vld [vmem:[%s184 + $0x458] sm:$0xf]
        %v509 = vld [vmem:[%s184 + $0x45c] sm:$0xf]
        %v510 = vld [vmem:[%s184 + $0x460] sm:$0xf]
        %v511 = vld [vmem:[%s184 + $0x464] sm:$0xf]
        %v512 = vld [vmem:[%s184 + $0x468] sm:$0xf]
        %v513 = vld [vmem:[%s184 + $0x46c] sm:$0xf]
        %v514 = vld [vmem:[%s184 + $0x470] sm:$0xf]
        %v515 = vld [vmem:[%s184 + $0x474] sm:$0xf]
        %v516 = vld [vmem:[%s184 + $0x478] sm:$0xf]
        %v517 = vld [vmem:[%s184 + $0x47c] sm:$0xf]
        %v518 = vld [vmem:[%s184 + $0x480] sm:$0xf]
        %v519 = vld [vmem:[%s184 + $0x484] sm:$0xf]
        %v520 = vld [vmem:[%s184 + $0x488] sm:$0xf]
        %v521 = vld [vmem:[%s184 + $0x48c] sm:$0xf]
        %v522 = vld [vmem:[%s184 + $0x490] sm:$0xf]
        %v523 = vld [vmem:[%s184 + $0x494] sm:$0xf]
        %v524 = vld [vmem:[%s184 + $0x498] sm:$0xf]
        %v525 = vld [vmem:[%s184 + $0x49c] sm:$0xf]
        %v526 = vld [vmem:[%s184 + $0x4a0] sm:$0xf]
        %v527 = vld [vmem:[%s184 + $0x4a4] sm:$0xf]
        %v528 = vld [vmem:[%s184 + $0x4a8] sm:$0xf]
        %v529 = vld [vmem:[%s184 + $0x4ac] sm:$0xf]
        %v530 = vld [vmem:[%s184 + $0x4b0] sm:$0xf]
        %v531 = vld [vmem:[%s184 + $0x4b4] sm:$0xf]
        %v532 = vld [vmem:[%s184 + $0x4b8] sm:$0xf]
        %v533 = vld [vmem:[%s184 + $0x4bc] sm:$0xf]
        %v534 = vld [vmem:[%s184 + $0x4c0] sm:$0xf]
        %v535 = vld [vmem:[%s184 + $0x4c4] sm:$0xf]
        %v536 = vld [vmem:[%s184 + $0x4c8] sm:$0xf]
        %v537 = vld [vmem:[%s184 + $0x4cc] sm:$0xf]
        %v538 = vld [vmem:[%s184 + $0x4d0] sm:$0xf]
        %v539 = vld [vmem:[%s184 + $0x4d4] sm:$0xf]
        %v540 = vld [vmem:[%s184 + $0x4d8] sm:$0xf]
        %v541 = vld [vmem:[%s184 + $0x4dc] sm:$0xf]
        %v542 = vld [vmem:[%s184 + $0x4e0] sm:$0xf]
        %v543 = vld [vmem:[%s184 + $0x4e4] sm:$0xf]
        %v544 = vld [vmem:[%s184 + $0x4e8] sm:$0xf]
        %v545 = vld [vmem:[%s184 + $0x4ec] sm:$0xf]
        %v546 = vld [vmem:[%s184 + $0x4f0] sm:$0xf]
        %v547 = vld [vmem:[%s184 + $0x4f4] sm:$0xf]
        %v548 = vld [vmem:[%s184 + $0x4f8] sm:$0xf]
        %v549 = vld [vmem:[%s184 + $0x4fc] sm:$0xf]
        %v550 = vld [vmem:[%s184 + $0x500] sm:$0xf]
        %v551 = vld [vmem:[%s184 + $0x504] sm:$0xf]
        %v552 = vld [vmem:[%s184 + $0x508] sm:$0xf]
        %v553 = vld [vmem:[%s184 + $0x50c] sm:$0xf]
        %v554 = vld [vmem:[%s184 + $0x510] sm:$0xf]
        %v555 = vld [vmem:[%s184 + $0x514] sm:$0xf]
        %v556 = vld [vmem:[%s184 + $0x518] sm:$0xf]
        %v557 = vld [vmem:[%s184 + $0x51c] sm:$0xf]
        %v558 = vld [vmem:[%s184 + $0x520] sm:$0xf]
        %v559 = vld [vmem:[%s184 + $0x524] sm:$0xf]
        %v560 = vld [vmem:[%s184 + $0x528] sm:$0xf]
        %v561 = vld [vmem:[%s184 + $0x52c] sm:$0xf]
        %v562 = vld [vmem:[%s184 + $0x530] sm:$0xf]
        %v563 = vld [vmem:[%s184 + $0x534] sm:$0xf]
        %v564 = vld [vmem:[%s184 + $0x538] sm:$0xf]
        %v565 = vld [vmem:[%s184 + $0x53c] sm:$0xf]
        %v566 = vld [vmem:[%s184 + $0x540] sm:$0xf]
        %v567 = vld [vmem:[%s184 + $0x544] sm:$0xf]
        %v568 = vld [vmem:[%s184 + $0x548] sm:$0xf]
        %v569 = vld [vmem:[%s184 + $0x54c] sm:$0xf]
        %v570 = vld [vmem:[%s184 + $0x550] sm:$0xf]
        %v571 = vld [vmem:[%s184 + $0x554] sm:$0xf]
        %v572 = vld [vmem:[%s184 + $0x558] sm:$0xf]
        %v573 = vld [vmem:[%s184 + $0x55c] sm:$0xf]
        %v574 = vld [vmem:[%s184 + $0x560] sm:$0xf]
        %v575 = vld [vmem:[%s184 + $0x564] sm:$0xf]
        %v576 = vld [vmem:[%s184 + $0x568] sm:$0xf]
        %v577 = vld [vmem:[%s184 + $0x56c] sm:$0xf]
        %v578 = vld [vmem:[%s184 + $0x570] sm:$0xf]
        %v579 = vld [vmem:[%s184 + $0x574] sm:$0xf]
        %v580 = vld [vmem:[%s184 + $0x578] sm:$0xf]
        %v581 = vld [vmem:[%s184 + $0x57c] sm:$0xf]
        %v582 = vld [vmem:[%s184 + $0x580] sm:$0xf]
        %v583 = vld [vmem:[%s184 + $0x584] sm:$0xf]
        %v584 = vld [vmem:[%s184 + $0x588] sm:$0xf]
        %v585 = vld [vmem:[%s184 + $0x58c] sm:$0xf]
        %v586 = vld [vmem:[%s184 + $0x590] sm:$0xf]
        %v587 = vld [vmem:[%s184 + $0x594] sm:$0xf]
        %v588 = vld [vmem:[%s184 + $0x598] sm:$0xf]
        %v589 = vld [vmem:[%s184 + $0x59c] sm:$0xf]
        %v590 = vld [vmem:[%s184 + $0x5a0] sm:$0xf]
        %v591 = vld [vmem:[%s184 + $0x5a4] sm:$0xf]
        %v592 = vld [vmem:[%s184 + $0x5a8] sm:$0xf]
        %v593 = vld [vmem:[%s184 + $0x5ac] sm:$0xf]
        %v594 = vld [vmem:[%s184 + $0x5b0] sm:$0xf]
        %v595 = vld [vmem:[%s184 + $0x5b4] sm:$0xf]
        %v596 = vld [vmem:[%s184 + $0x5b8] sm:$0xf]
        %v597 = vld [vmem:[%s184 + $0x5bc] sm:$0xf]
        %v598 = vld [vmem:[%s184 + $0x5c0] sm:$0xf]
        %v599 = vld [vmem:[%s184 + $0x5c4] sm:$0xf]
        %v600 = vld [vmem:[%s184 + $0x5c8] sm:$0xf]
        %v601 = vld [vmem:[%s184 + $0x5cc] sm:$0xf]
        %v602 = vld [vmem:[%s184 + $0x5d0] sm:$0xf]
        %v603 = vld [vmem:[%s184 + $0x5d4] sm:$0xf]
        %v604 = vld [vmem:[%s184 + $0x5d8] sm:$0xf]
        %v605 = vld [vmem:[%s184 + $0x5dc] sm:$0xf]
        %v606 = vld [vmem:[%s184 + $0x5e0] sm:$0xf]
        %v607 = vld [vmem:[%s184 + $0x5e4] sm:$0xf]
        %v608 = vld [vmem:[%s184 + $0x5e8] sm:$0xf]
        %v609 = vld [vmem:[%s184 + $0x5ec] sm:$0xf]
        %v610 = vld [vmem:[%s184 + $0x5f0] sm:$0xf]
        %v611 = vld [vmem:[%s184 + $0x5f4] sm:$0xf]
        %v612 = vld [vmem:[%s184 + $0x5f8] sm:$0xf]
        %v613 = vld [vmem:[%s184 + $0x5fc] sm:$0xf]
        %v614 = vld [vmem:[%s184 + $0x600] sm:$0xf]
        %v615 = vld [vmem:[%s184 + $0x604] sm:$0xf]
        %v616 = vld [vmem:[%s184 + $0x608] sm:$0xf]
        %v617 = vld [vmem:[%s184 + $0x60c] sm:$0xf]
        %v618 = vld [vmem:[%s184 + $0x610] sm:$0xf]
        %v619 = vld [vmem:[%s184 + $0x614] sm:$0xf]
        %v620 = vld [vmem:[%s184 + $0x618] sm:$0xf]
        %v621 = vld [vmem:[%s184 + $0x61c] sm:$0xf]
        %v622 = vld [vmem:[%s184 + $0x620] sm:$0xf]
        %v623 = vld [vmem:[%s184 + $0x624] sm:$0xf]
        %v624 = vld [vmem:[%s184 + $0x628] sm:$0xf]
        %v625 = vld [vmem:[%s184 + $0x62c] sm:$0xf]
        %v626 = vld [vmem:[%s184 + $0x630] sm:$0xf]
        %v627 = vld [vmem:[%s184 + $0x634] sm:$0xf]
        %v628 = vld [vmem:[%s184 + $0x638] sm:$0xf]
        %v629 = vld [vmem:[%s184 + $0x63c] sm:$0xf]
        %v630 = vld [vmem:[%s184 + $0x640] sm:$0xf]
        %v631 = vld [vmem:[%s184 + $0x644] sm:$0xf]
        %v632 = vld [vmem:[%s184 + $0x648] sm:$0xf]
        %v633 = vld [vmem:[%s184 + $0x64c] sm:$0xf]
        %v634 = vld [vmem:[%s184 + $0x650] sm:$0xf]
        %v635 = vld [vmem:[%s184 + $0x654] sm:$0xf]
        %v636 = vld [vmem:[%s184 + $0x658] sm:$0xf]
        %v637 = vld [vmem:[%s184 + $0x65c] sm:$0xf]
        %v638 = vld [vmem:[%s184 + $0x660] sm:$0xf]
        %v639 = vld [vmem:[%s184 + $0x664] sm:$0xf]
        %v640 = vld [vmem:[%s184 + $0x668] sm:$0xf]
        %v641 = vld [vmem:[%s184 + $0x66c] sm:$0xf]
        %v642 = vld [vmem:[%s184 + $0x670] sm:$0xf]
        %v643 = vld [vmem:[%s184 + $0x674] sm:$0xf]
        %v644 = vld [vmem:[%s184 + $0x678] sm:$0xf]
        %v645 = vld [vmem:[%s184 + $0x67c] sm:$0xf]
        %v646 = vld [vmem:[%s184 + $0x680] sm:$0xf]
        %v647 = vld [vmem:[%s184 + $0x684] sm:$0xf]
        %v648 = vld [vmem:[%s184 + $0x688] sm:$0xf]
        %v649 = vld [vmem:[%s184 + $0x68c] sm:$0xf]
        %v650 = vld [vmem:[%s184 + $0x690] sm:$0xf]
        %v651 = vld [vmem:[%s184 + $0x694] sm:$0xf]
        %v652 = vld [vmem:[%s184 + $0x698] sm:$0xf]
        %v653 = vld [vmem:[%s184 + $0x69c] sm:$0xf]
        %v654 = vld [vmem:[%s184 + $0x6a0] sm:$0xf]
        %v655 = vld [vmem:[%s184 + $0x6a4] sm:$0xf]
        %v656 = vld [vmem:[%s184 + $0x6a8] sm:$0xf]
        %v657 = vld [vmem:[%s184 + $0x6ac] sm:$0xf]
        %v658 = vld [vmem:[%s184 + $0x6b0] sm:$0xf]
        %v659 = vld [vmem:[%s184 + $0x6b4] sm:$0xf]
        %v660 = vld [vmem:[%s184 + $0x6b8] sm:$0xf]
        %v661 = vld [vmem:[%s184 + $0x6bc] sm:$0xf]
        %v662 = vld [vmem:[%s184 + $0x6c0] sm:$0xf]
        %v663 = vld [vmem:[%s184 + $0x6c4] sm:$0xf]
        %v664 = vld [vmem:[%s184 + $0x6c8] sm:$0xf]
        %v665 = vld [vmem:[%s184 + $0x6cc] sm:$0xf]
        %v666 = vld [vmem:[%s184 + $0x6d0] sm:$0xf]
        %v667 = vld [vmem:[%s184 + $0x6d4] sm:$0xf]
        %v668 = vld [vmem:[%s184 + $0x6d8] sm:$0xf]
        %v669 = vld [vmem:[%s184 + $0x6dc] sm:$0xf]
        %v670 = vld [vmem:[%s184 + $0x6e0] sm:$0xf]
        %v671 = vld [vmem:[%s184 + $0x6e4] sm:$0xf]
        %v672 = vld [vmem:[%s184 + $0x6e8] sm:$0xf]
        %v673 = vld [vmem:[%s184 + $0x6ec] sm:$0xf]
        %v674 = vld [vmem:[%s184 + $0x6f0] sm:$0xf]
        %v675 = vld [vmem:[%s184 + $0x6f4] sm:$0xf]
        %v676 = vld [vmem:[%s184 + $0x6f8] sm:$0xf]
        %v677 = vld [vmem:[%s184 + $0x6fc] sm:$0xf]
        %v678 = vld [vmem:[%s184 + $0x700] sm:$0xf]
        %v679 = vld [vmem:[%s184 + $0x704] sm:$0xf]
        %v680 = vld [vmem:[%s184 + $0x708] sm:$0xf]
        %v681 = vld [vmem:[%s184 + $0x70c] sm:$0xf]
        %v682 = vld [vmem:[%s184 + $0x710] sm:$0xf]
        %v683 = vld [vmem:[%s184 + $0x714] sm:$0xf]
        %v684 = vld [vmem:[%s184 + $0x718] sm:$0xf]
        %v685 = vld [vmem:[%s184 + $0x71c] sm:$0xf]
        %v686 = vld [vmem:[%s184 + $0x720] sm:$0xf]
        %v687 = vld [vmem:[%s184 + $0x724] sm:$0xf]
        %v688 = vld [vmem:[%s184 + $0x728] sm:$0xf]
        %v689 = vld [vmem:[%s184 + $0x72c] sm:$0xf]
        %v690 = vld [vmem:[%s184 + $0x730] sm:$0xf]
        %v691 = vld [vmem:[%s184 + $0x734] sm:$0xf]
        %v692 = vld [vmem:[%s184 + $0x738] sm:$0xf]
        %v693 = vld [vmem:[%s184 + $0x73c] sm:$0xf]
        %v694 = vld [vmem:[%s184 + $0x740] sm:$0xf]
        %v695 = vld [vmem:[%s184 + $0x744] sm:$0xf]
        %v696 = vld [vmem:[%s184 + $0x748] sm:$0xf]
        %v697 = vld [vmem:[%s184 + $0x74c] sm:$0xf]
        %v698 = vld [vmem:[%s184 + $0x750] sm:$0xf]
        %v699 = vld [vmem:[%s184 + $0x754] sm:$0xf]
        %v700 = vld [vmem:[%s184 + $0x758] sm:$0xf]
        %v701 = vld [vmem:[%s184 + $0x75c] sm:$0xf]
        %v702 = vld [vmem:[%s184 + $0x760] sm:$0xf]
        %v703 = vld [vmem:[%s184 + $0x764] sm:$0xf]
        %v704 = vld [vmem:[%s184 + $0x768] sm:$0xf]
        %v705 = vld [vmem:[%s184 + $0x76c] sm:$0xf]
        %v706 = vld [vmem:[%s184 + $0x770] sm:$0xf]
        %v707 = vld [vmem:[%s184 + $0x774] sm:$0xf]
        %v708 = vld [vmem:[%s184 + $0x778] sm:$0xf]
        %v709 = vld [vmem:[%s184 + $0x77c] sm:$0xf]
        %v710 = vld [vmem:[%s184 + $0x780] sm:$0xf]
        %v711 = vld [vmem:[%s184 + $0x784] sm:$0xf]
        %v712 = vld [vmem:[%s184 + $0x788] sm:$0xf]
        %v713 = vld [vmem:[%s184 + $0x78c] sm:$0xf]
        %v714 = vld [vmem:[%s184 + $0x790] sm:$0xf]
        %v715 = vld [vmem:[%s184 + $0x794] sm:$0xf]
        %v716 = vld [vmem:[%s184 + $0x798] sm:$0xf]
        %v717 = vld [vmem:[%s184 + $0x79c] sm:$0xf]
        %v718 = vld [vmem:[%s184 + $0x7a0] sm:$0xf]
        %v719 = vld [vmem:[%s184 + $0x7a4] sm:$0xf]
        %v720 = vld [vmem:[%s184 + $0x7a8] sm:$0xf]
        %v721 = vld [vmem:[%s184 + $0x7ac] sm:$0xf]
        %v722 = vld [vmem:[%s184 + $0x7b0] sm:$0xf]
        %v723 = vld [vmem:[%s184 + $0x7b4] sm:$0xf]
        %v724 = vld [vmem:[%s184 + $0x7b8] sm:$0xf]
        %v725 = vld [vmem:[%s184 + $0x7bc] sm:$0xf]
        %v726 = vld [vmem:[%s184 + $0x7c0] sm:$0xf]
        %v727 = vld [vmem:[%s184 + $0x7c4] sm:$0xf]
        %v728 = vld [vmem:[%s184 + $0x7c8] sm:$0xf]
        %v729 = vld [vmem:[%s184 + $0x7cc] sm:$0xf]
        %v730 = vld [vmem:[%s184 + $0x7d0] sm:$0xf]
        %v731 = vld [vmem:[%s184 + $0x7d4] sm:$0xf]
        %v732 = vld [vmem:[%s184 + $0x7d8] sm:$0xf]
        %v733 = vld [vmem:[%s184 + $0x7dc] sm:$0xf]
        %v734 = vld [vmem:[%s184 + $0x7e0] sm:$0xf]
        %v735 = vld [vmem:[%s184 + $0x7e4] sm:$0xf]
        %v736 = vld [vmem:[%s184 + $0x7e8] sm:$0xf]
        %v737 = vld [vmem:[%s184 + $0x7ec] sm:$0xf]
        %v738 = vld [vmem:[%s184 + $0x7f0] sm:$0xf]
        %v739 = vld [vmem:[%s184 + $0x7f4] sm:$0xf]
        %v740 = vld [vmem:[%s184 + $0x7f8] sm:$0xf]
        %v741 = vld [vmem:[%s184 + $0x7fc] sm:$0xf]
        %v1254 = vunpack.c.l.b16 %v230
        %v1255 = vunpack.c.l.b16 %v231
        %v1256 = vunpack.c.l.b16 %v232
        %v1257 = vunpack.c.l.b16 %v233
        %v1258 = vunpack.c.l.b16 %v234
        %v1259 = vunpack.c.l.b16 %v235
        %v1260 = vunpack.c.l.b16 %v236
        %v1261 = vunpack.c.l.b16 %v237
        %v1262 = vunpack.c.l.b16 %v238
        %v1263 = vunpack.c.l.b16 %v239
        %v1264 = vunpack.c.l.b16 %v240
        %v1265 = vunpack.c.l.b16 %v241
        %v1266 = vunpack.c.l.b16 %v242
        %v1267 = vunpack.c.l.b16 %v243
        %v1268 = vunpack.c.l.b16 %v244
        %v1269 = vunpack.c.l.b16 %v245
        %v1270 = vunpack.c.l.b16 %v246
        %v1271 = vunpack.c.l.b16 %v247
        %v1272 = vunpack.c.l.b16 %v248
        %v1273 = vunpack.c.l.b16 %v249
        %v1274 = vunpack.c.l.b16 %v250
        %v1275 = vunpack.c.l.b16 %v251
        %v1276 = vunpack.c.l.b16 %v252
        %v1277 = vunpack.c.l.b16 %v253
        %v1278 = vunpack.c.l.b16 %v254
        %v1279 = vunpack.c.l.b16 %v255
        %v1280 = vunpack.c.l.b16 %v256
        %v1281 = vunpack.c.l.b16 %v257
        %v1282 = vunpack.c.l.b16 %v258
        %v1283 = vunpack.c.l.b16 %v259
        %v1284 = vunpack.c.l.b16 %v260
        %v1285 = vunpack.c.l.b16 %v261
        %v1286 = vunpack.c.l.b16 %v262
        %v1287 = vunpack.c.l.b16 %v263
        %v1288 = vunpack.c.l.b16 %v264
        %v1289 = vunpack.c.l.b16 %v265
        %v1290 = vunpack.c.l.b16 %v266
        %v1291 = vunpack.c.l.b16 %v267
        %v1292 = vunpack.c.l.b16 %v268
        %v1293 = vunpack.c.l.b16 %v269
        %v1294 = vunpack.c.l.b16 %v270
        %v1295 = vunpack.c.l.b16 %v271
        %v1296 = vunpack.c.l.b16 %v272
        %v1297 = vunpack.c.l.b16 %v273
        %v1298 = vunpack.c.l.b16 %v274
        %v1299 = vunpack.c.l.b16 %v275
        %v1300 = vunpack.c.l.b16 %v276
        %v1301 = vunpack.c.l.b16 %v277
        %v1302 = vunpack.c.l.b16 %v278
        %v1303 = vunpack.c.l.b16 %v279
        %v1304 = vunpack.c.l.b16 %v280
        %v1305 = vunpack.c.l.b16 %v281
        %v1306 = vunpack.c.l.b16 %v282
        %v1307 = vunpack.c.l.b16 %v283
        %v1308 = vunpack.c.l.b16 %v284
        %v1309 = vunpack.c.l.b16 %v285
        %v1310 = vunpack.c.l.b16 %v286
        %v1311 = vunpack.c.l.b16 %v287
        %v1312 = vunpack.c.l.b16 %v288
        %v1313 = vunpack.c.l.b16 %v289
        %v1314 = vunpack.c.l.b16 %v290
        %v1315 = vunpack.c.l.b16 %v291
        %v1316 = vunpack.c.l.b16 %v292
        %v1317 = vunpack.c.l.b16 %v293
        %v1318 = vunpack.c.l.b16 %v294
        %v1319 = vunpack.c.l.b16 %v295
        %v1320 = vunpack.c.l.b16 %v296
        %v1321 = vunpack.c.l.b16 %v297
        %v1322 = vunpack.c.l.b16 %v298
        %v1323 = vunpack.c.l.b16 %v299
        %v1324 = vunpack.c.l.b16 %v300
        %v1325 = vunpack.c.l.b16 %v301
        %v1326 = vunpack.c.l.b16 %v302
        %v1327 = vunpack.c.l.b16 %v303
        %v1328 = vunpack.c.l.b16 %v304
        %v1329 = vunpack.c.l.b16 %v305
        %v1330 = vunpack.c.l.b16 %v306
        %v1331 = vunpack.c.l.b16 %v307
        %v1332 = vunpack.c.l.b16 %v308
        %v1333 = vunpack.c.l.b16 %v309
        %v1334 = vunpack.c.l.b16 %v310
        %v1335 = vunpack.c.l.b16 %v311
        %v1336 = vunpack.c.l.b16 %v312
        %v1337 = vunpack.c.l.b16 %v313
        %v1338 = vunpack.c.l.b16 %v314
        %v1339 = vunpack.c.l.b16 %v315
        %v1340 = vunpack.c.l.b16 %v316
        %v1341 = vunpack.c.l.b16 %v317
        %v1342 = vunpack.c.l.b16 %v318
        %v1343 = vunpack.c.l.b16 %v319
        %v1344 = vunpack.c.l.b16 %v320
        %v1345 = vunpack.c.l.b16 %v321
        %v1346 = vunpack.c.l.b16 %v322
        %v1347 = vunpack.c.l.b16 %v323
        %v1348 = vunpack.c.l.b16 %v324
        %v1349 = vunpack.c.l.b16 %v325
        %v1350 = vunpack.c.l.b16 %v326
        %v1351 = vunpack.c.l.b16 %v327
        %v1352 = vunpack.c.l.b16 %v328
        %v1353 = vunpack.c.l.b16 %v329
        %v1354 = vunpack.c.l.b16 %v330
        %v1355 = vunpack.c.l.b16 %v331
        %v1356 = vunpack.c.l.b16 %v332
        %v1357 = vunpack.c.l.b16 %v333
        %v1358 = vunpack.c.l.b16 %v334
        %v1359 = vunpack.c.l.b16 %v335
        %v1360 = vunpack.c.l.b16 %v336
        %v1361 = vunpack.c.l.b16 %v337
        %v1362 = vunpack.c.l.b16 %v338
        %v1363 = vunpack.c.l.b16 %v339
        %v1364 = vunpack.c.l.b16 %v340
        %v1365 = vunpack.c.l.b16 %v341
        %v1366 = vunpack.c.l.b16 %v342
        %v1367 = vunpack.c.l.b16 %v343
        %v1368 = vunpack.c.l.b16 %v344
        %v1369 = vunpack.c.l.b16 %v345
        %v1370 = vunpack.c.l.b16 %v346
        %v1371 = vunpack.c.l.b16 %v347
        %v1372 = vunpack.c.l.b16 %v348
        %v1373 = vunpack.c.l.b16 %v349
        %v1374 = vunpack.c.l.b16 %v350
        %v1375 = vunpack.c.l.b16 %v351
        %v1376 = vunpack.c.l.b16 %v352
        %v1377 = vunpack.c.l.b16 %v353
        %v1378 = vunpack.c.l.b16 %v354
        %v1379 = vunpack.c.l.b16 %v355
        %v1380 = vunpack.c.l.b16 %v356
        %v1381 = vunpack.c.l.b16 %v357
        %v1382 = vunpack.c.l.b16 %v358
        %v1383 = vunpack.c.l.b16 %v359
        %v1384 = vunpack.c.l.b16 %v360
        %v1385 = vunpack.c.l.b16 %v361
        %v1386 = vunpack.c.l.b16 %v362
        %v1387 = vunpack.c.l.b16 %v363
        %v1388 = vunpack.c.l.b16 %v364
        %v1389 = vunpack.c.l.b16 %v365
        %v1390 = vunpack.c.l.b16 %v366
        %v1391 = vunpack.c.l.b16 %v367
        %v1392 = vunpack.c.l.b16 %v368
        %v1393 = vunpack.c.l.b16 %v369
        %v1394 = vunpack.c.l.b16 %v370
        %v1395 = vunpack.c.l.b16 %v371
        %v1396 = vunpack.c.l.b16 %v372
        %v1397 = vunpack.c.l.b16 %v373
        %v1398 = vunpack.c.l.b16 %v374
        %v1399 = vunpack.c.l.b16 %v375
        %v1400 = vunpack.c.l.b16 %v376
        %v1401 = vunpack.c.l.b16 %v377
        %v1402 = vunpack.c.l.b16 %v378
        %v1403 = vunpack.c.l.b16 %v379
        %v1404 = vunpack.c.l.b16 %v380
        %v1405 = vunpack.c.l.b16 %v381
        %v1406 = vunpack.c.l.b16 %v382
        %v1407 = vunpack.c.l.b16 %v383
        %v1408 = vunpack.c.l.b16 %v384
        %v1409 = vunpack.c.l.b16 %v385
        %v1410 = vunpack.c.l.b16 %v386
        %v1411 = vunpack.c.l.b16 %v387
        %v1412 = vunpack.c.l.b16 %v388
        %v1413 = vunpack.c.l.b16 %v389
        %v1414 = vunpack.c.l.b16 %v390
        %v1415 = vunpack.c.l.b16 %v391
        %v1416 = vunpack.c.l.b16 %v392
        %v1417 = vunpack.c.l.b16 %v393
        %v1418 = vunpack.c.l.b16 %v394
        %v1419 = vunpack.c.l.b16 %v395
        %v1420 = vunpack.c.l.b16 %v396
        %v1421 = vunpack.c.l.b16 %v397
        %v1422 = vunpack.c.l.b16 %v398
        %v1423 = vunpack.c.l.b16 %v399
        %v1424 = vunpack.c.l.b16 %v400
        %v1425 = vunpack.c.l.b16 %v401
        %v1426 = vunpack.c.l.b16 %v402
        %v1427 = vunpack.c.l.b16 %v403
        %v1428 = vunpack.c.l.b16 %v404
        %v1429 = vunpack.c.l.b16 %v405
        %v1430 = vunpack.c.l.b16 %v406
        %v1431 = vunpack.c.l.b16 %v407
        %v1432 = vunpack.c.l.b16 %v408
        %v1433 = vunpack.c.l.b16 %v409
        %v1434 = vunpack.c.l.b16 %v410
        %v1435 = vunpack.c.l.b16 %v411
        %v1436 = vunpack.c.l.b16 %v412
        %v1437 = vunpack.c.l.b16 %v413
        %v1438 = vunpack.c.l.b16 %v414
        %v1439 = vunpack.c.l.b16 %v415
        %v1440 = vunpack.c.l.b16 %v416
        %v1441 = vunpack.c.l.b16 %v417
        %v1442 = vunpack.c.l.b16 %v418
        %v1443 = vunpack.c.l.b16 %v419
        %v1444 = vunpack.c.l.b16 %v420
        %v1445 = vunpack.c.l.b16 %v421
        %v1446 = vunpack.c.l.b16 %v422
        %v1447 = vunpack.c.l.b16 %v423
        %v1448 = vunpack.c.l.b16 %v424
        %v1449 = vunpack.c.l.b16 %v425
        %v1450 = vunpack.c.l.b16 %v426
        %v1451 = vunpack.c.l.b16 %v427
        %v1452 = vunpack.c.l.b16 %v428
        %v1453 = vunpack.c.l.b16 %v429
        %v1454 = vunpack.c.l.b16 %v430
        %v1455 = vunpack.c.l.b16 %v431
        %v1456 = vunpack.c.l.b16 %v432
        %v1457 = vunpack.c.l.b16 %v433
        %v1458 = vunpack.c.l.b16 %v434
        %v1459 = vunpack.c.l.b16 %v435
        %v1460 = vunpack.c.l.b16 %v436
        %v1461 = vunpack.c.l.b16 %v437
        %v1462 = vunpack.c.l.b16 %v438
        %v1463 = vunpack.c.l.b16 %v439
        %v1464 = vunpack.c.l.b16 %v440
        %v1465 = vunpack.c.l.b16 %v441
        %v1466 = vunpack.c.l.b16 %v442
        %v1467 = vunpack.c.l.b16 %v443
        %v1468 = vunpack.c.l.b16 %v444
        %v1469 = vunpack.c.l.b16 %v445
        %v1470 = vunpack.c.l.b16 %v446
        %v1471 = vunpack.c.l.b16 %v447
        %v1472 = vunpack.c.l.b16 %v448
        %v1473 = vunpack.c.l.b16 %v449
        %v1474 = vunpack.c.l.b16 %v450
        %v1475 = vunpack.c.l.b16 %v451
        %v1476 = vunpack.c.l.b16 %v452
        %v1477 = vunpack.c.l.b16 %v453
        %v1478 = vunpack.c.l.b16 %v454
        %v1479 = vunpack.c.l.b16 %v455
        %v1480 = vunpack.c.l.b16 %v456
        %v1481 = vunpack.c.l.b16 %v457
        %v1482 = vunpack.c.l.b16 %v458
        %v1483 = vunpack.c.l.b16 %v459
        %v1484 = vunpack.c.l.b16 %v460
        %v1485 = vunpack.c.l.b16 %v461
        %v1486 = vunpack.c.l.b16 %v462
        %v1487 = vunpack.c.l.b16 %v463
        %v1488 = vunpack.c.l.b16 %v464
        %v1489 = vunpack.c.l.b16 %v465
        %v1490 = vunpack.c.l.b16 %v466
        %v1491 = vunpack.c.l.b16 %v467
        %v1492 = vunpack.c.l.b16 %v468
        %v1493 = vunpack.c.l.b16 %v469
        %v1494 = vunpack.c.l.b16 %v470
        %v1495 = vunpack.c.l.b16 %v471
        %v1496 = vunpack.c.l.b16 %v472
        %v1497 = vunpack.c.l.b16 %v473
        %v1498 = vunpack.c.l.b16 %v474
        %v1499 = vunpack.c.l.b16 %v475
        %v1500 = vunpack.c.l.b16 %v476
        %v1501 = vunpack.c.l.b16 %v477
        %v1502 = vunpack.c.l.b16 %v478
        %v1503 = vunpack.c.l.b16 %v479
        %v1504 = vunpack.c.l.b16 %v480
        %v1505 = vunpack.c.l.b16 %v481
        %v1506 = vunpack.c.l.b16 %v482
        %v1507 = vunpack.c.l.b16 %v483
        %v1508 = vunpack.c.l.b16 %v484
        %v1509 = vunpack.c.l.b16 %v485
        %v1510 = vunpack.c.l.b16 %v486
        %v1511 = vunpack.c.l.b16 %v487
        %v1512 = vunpack.c.l.b16 %v488
        %v1513 = vunpack.c.l.b16 %v489
        %v1514 = vunpack.c.l.b16 %v490
        %v1515 = vunpack.c.l.b16 %v491
        %v1516 = vunpack.c.l.b16 %v492
        %v1517 = vunpack.c.l.b16 %v493
        %v1518 = vunpack.c.l.b16 %v494
        %v1519 = vunpack.c.l.b16 %v495
        %v1520 = vunpack.c.l.b16 %v496
        %v1521 = vunpack.c.l.b16 %v497
        %v1522 = vunpack.c.l.b16 %v498
        %v1523 = vunpack.c.l.b16 %v499
        %v1524 = vunpack.c.l.b16 %v500
        %v1525 = vunpack.c.l.b16 %v501
        %v1526 = vunpack.c.l.b16 %v502
        %v1527 = vunpack.c.l.b16 %v503
        %v1528 = vunpack.c.l.b16 %v504
        %v1529 = vunpack.c.l.b16 %v505
        %v1530 = vunpack.c.l.b16 %v506
        %v1531 = vunpack.c.l.b16 %v507
        %v1532 = vunpack.c.l.b16 %v508
        %v1533 = vunpack.c.l.b16 %v509
        %v1534 = vunpack.c.l.b16 %v510
        %v1535 = vunpack.c.l.b16 %v511
        %v1536 = vunpack.c.l.b16 %v512
        %v1537 = vunpack.c.l.b16 %v513
        %v1538 = vunpack.c.l.b16 %v514
        %v1539 = vunpack.c.l.b16 %v515
        %v1540 = vunpack.c.l.b16 %v516
        %v1541 = vunpack.c.l.b16 %v517
        %v1542 = vunpack.c.l.b16 %v518
        %v1543 = vunpack.c.l.b16 %v519
        %v1544 = vunpack.c.l.b16 %v520
        %v1545 = vunpack.c.l.b16 %v521
        %v1546 = vunpack.c.l.b16 %v522
        %v1547 = vunpack.c.l.b16 %v523
        %v1548 = vunpack.c.l.b16 %v524
        %v1549 = vunpack.c.l.b16 %v525
        %v1550 = vunpack.c.l.b16 %v526
        %v1551 = vunpack.c.l.b16 %v527
        %v1552 = vunpack.c.l.b16 %v528
        %v1553 = vunpack.c.l.b16 %v529
        %v1554 = vunpack.c.l.b16 %v530
        %v1555 = vunpack.c.l.b16 %v531
        %v1556 = vunpack.c.l.b16 %v532
        %v1557 = vunpack.c.l.b16 %v533
        %v1558 = vunpack.c.l.b16 %v534
        %v1559 = vunpack.c.l.b16 %v535
        %v1560 = vunpack.c.l.b16 %v536
        %v1561 = vunpack.c.l.b16 %v537
        %v1562 = vunpack.c.l.b16 %v538
        %v1563 = vunpack.c.l.b16 %v539
        %v1564 = vunpack.c.l.b16 %v540
        %v1565 = vunpack.c.l.b16 %v541
        %v1566 = vunpack.c.l.b16 %v542
        %v1567 = vunpack.c.l.b16 %v543
        %v1568 = vunpack.c.l.b16 %v544
        %v1569 = vunpack.c.l.b16 %v545
        %v1570 = vunpack.c.l.b16 %v546
        %v1571 = vunpack.c.l.b16 %v547
        %v1572 = vunpack.c.l.b16 %v548
        %v1573 = vunpack.c.l.b16 %v549
        %v1574 = vunpack.c.l.b16 %v550
        %v1575 = vunpack.c.l.b16 %v551
        %v1576 = vunpack.c.l.b16 %v552
        %v1577 = vunpack.c.l.b16 %v553
        %v1578 = vunpack.c.l.b16 %v554
        %v1579 = vunpack.c.l.b16 %v555
        %v1580 = vunpack.c.l.b16 %v556
        %v1581 = vunpack.c.l.b16 %v557
        %v1582 = vunpack.c.l.b16 %v558
        %v1583 = vunpack.c.l.b16 %v559
        %v1584 = vunpack.c.l.b16 %v560
        %v1585 = vunpack.c.l.b16 %v561
        %v1586 = vunpack.c.l.b16 %v562
        %v1587 = vunpack.c.l.b16 %v563
        %v1588 = vunpack.c.l.b16 %v564
        %v1589 = vunpack.c.l.b16 %v565
        %v1590 = vunpack.c.l.b16 %v566
        %v1591 = vunpack.c.l.b16 %v567
        %v1592 = vunpack.c.l.b16 %v568
        %v1593 = vunpack.c.l.b16 %v569
        %v1594 = vunpack.c.l.b16 %v570
        %v1595 = vunpack.c.l.b16 %v571
        %v1596 = vunpack.c.l.b16 %v572
        %v1597 = vunpack.c.l.b16 %v573
        %v1598 = vunpack.c.l.b16 %v574
        %v1599 = vunpack.c.l.b16 %v575
        %v1600 = vunpack.c.l.b16 %v576
        %v1601 = vunpack.c.l.b16 %v577
        %v1602 = vunpack.c.l.b16 %v578
        %v1603 = vunpack.c.l.b16 %v579
        %v1604 = vunpack.c.l.b16 %v580
        %v1605 = vunpack.c.l.b16 %v581
        %v1606 = vunpack.c.l.b16 %v582
        %v1607 = vunpack.c.l.b16 %v583
        %v1608 = vunpack.c.l.b16 %v584
        %v1609 = vunpack.c.l.b16 %v585
        %v1610 = vunpack.c.l.b16 %v586
        %v1611 = vunpack.c.l.b16 %v587
        %v1612 = vunpack.c.l.b16 %v588
        %v1613 = vunpack.c.l.b16 %v589
        %v1614 = vunpack.c.l.b16 %v590
        %v1615 = vunpack.c.l.b16 %v591
        %v1616 = vunpack.c.l.b16 %v592
        %v1617 = vunpack.c.l.b16 %v593
        %v1618 = vunpack.c.l.b16 %v594
        %v1619 = vunpack.c.l.b16 %v595
        %v1620 = vunpack.c.l.b16 %v596
        %v1621 = vunpack.c.l.b16 %v597
        %v1622 = vunpack.c.l.b16 %v598
        %v1623 = vunpack.c.l.b16 %v599
        %v1624 = vunpack.c.l.b16 %v600
        %v1625 = vunpack.c.l.b16 %v601
        %v1626 = vunpack.c.l.b16 %v602
        %v1627 = vunpack.c.l.b16 %v603
        %v1628 = vunpack.c.l.b16 %v604
        %v1629 = vunpack.c.l.b16 %v605
        %v1630 = vunpack.c.l.b16 %v606
        %v1631 = vunpack.c.l.b16 %v607
        %v1632 = vunpack.c.l.b16 %v608
        %v1633 = vunpack.c.l.b16 %v609
        %v1634 = vunpack.c.l.b16 %v610
        %v1635 = vunpack.c.l.b16 %v611
        %v1636 = vunpack.c.l.b16 %v612
        %v1637 = vunpack.c.l.b16 %v613
        %v1638 = vunpack.c.l.b16 %v614
        %v1639 = vunpack.c.l.b16 %v615
        %v1640 = vunpack.c.l.b16 %v616
        %v1641 = vunpack.c.l.b16 %v617
        %v1642 = vunpack.c.l.b16 %v618
        %v1643 = vunpack.c.l.b16 %v619
        %v1644 = vunpack.c.l.b16 %v620
        %v1645 = vunpack.c.l.b16 %v621
        %v1646 = vunpack.c.l.b16 %v622
        %v1647 = vunpack.c.l.b16 %v623
        %v1648 = vunpack.c.l.b16 %v624
        %v1649 = vunpack.c.l.b16 %v625
        %v1650 = vunpack.c.l.b16 %v626
        %v1651 = vunpack.c.l.b16 %v627
        %v1652 = vunpack.c.l.b16 %v628
        %v1653 = vunpack.c.l.b16 %v629
        %v1654 = vunpack.c.l.b16 %v630
        %v1655 = vunpack.c.l.b16 %v631
        %v1656 = vunpack.c.l.b16 %v632
        %v1657 = vunpack.c.l.b16 %v633
        %v1658 = vunpack.c.l.b16 %v634
        %v1659 = vunpack.c.l.b16 %v635
        %v1660 = vunpack.c.l.b16 %v636
        %v1661 = vunpack.c.l.b16 %v637
        %v1662 = vunpack.c.l.b16 %v638
        %v1663 = vunpack.c.l.b16 %v639
        %v1664 = vunpack.c.l.b16 %v640
        %v1665 = vunpack.c.l.b16 %v641
        %v1666 = vunpack.c.l.b16 %v642
        %v1667 = vunpack.c.l.b16 %v643
        %v1668 = vunpack.c.l.b16 %v644
        %v1669 = vunpack.c.l.b16 %v645
        %v1670 = vunpack.c.l.b16 %v646
        %v1671 = vunpack.c.l.b16 %v647
        %v1672 = vunpack.c.l.b16 %v648
        %v1673 = vunpack.c.l.b16 %v649
        %v1674 = vunpack.c.l.b16 %v650
        %v1675 = vunpack.c.l.b16 %v651
        %v1676 = vunpack.c.l.b16 %v652
        %v1677 = vunpack.c.l.b16 %v653
        %v1678 = vunpack.c.l.b16 %v654
        %v1679 = vunpack.c.l.b16 %v655
        %v1680 = vunpack.c.l.b16 %v656
        %v1681 = vunpack.c.l.b16 %v657
        %v1682 = vunpack.c.l.b16 %v658
        %v1683 = vunpack.c.l.b16 %v659
        %v1684 = vunpack.c.l.b16 %v660
        %v1685 = vunpack.c.l.b16 %v661
        %v1686 = vunpack.c.l.b16 %v662
        %v1687 = vunpack.c.l.b16 %v663
        %v1688 = vunpack.c.l.b16 %v664
        %v1689 = vunpack.c.l.b16 %v665
        %v1690 = vunpack.c.l.b16 %v666
        %v1691 = vunpack.c.l.b16 %v667
        %v1692 = vunpack.c.l.b16 %v668
        %v1693 = vunpack.c.l.b16 %v669
        %v1694 = vunpack.c.l.b16 %v670
        %v1695 = vunpack.c.l.b16 %v671
        %v1696 = vunpack.c.l.b16 %v672
        %v1697 = vunpack.c.l.b16 %v673
        %v1698 = vunpack.c.l.b16 %v674
        %v1699 = vunpack.c.l.b16 %v675
        %v1700 = vunpack.c.l.b16 %v676
        %v1701 = vunpack.c.l.b16 %v677
        %v1702 = vunpack.c.l.b16 %v678
        %v1703 = vunpack.c.l.b16 %v679
        %v1704 = vunpack.c.l.b16 %v680
        %v1705 = vunpack.c.l.b16 %v681
        %v1706 = vunpack.c.l.b16 %v682
        %v1707 = vunpack.c.l.b16 %v683
        %v1708 = vunpack.c.l.b16 %v684
        %v1709 = vunpack.c.l.b16 %v685
        %v1710 = vunpack.c.l.b16 %v686
        %v1711 = vunpack.c.l.b16 %v687
        %v1712 = vunpack.c.l.b16 %v688
        %v1713 = vunpack.c.l.b16 %v689
        %v1714 = vunpack.c.l.b16 %v690
        %v1715 = vunpack.c.l.b16 %v691
        %v1716 = vunpack.c.l.b16 %v692
        %v1717 = vunpack.c.l.b16 %v693
        %v1718 = vunpack.c.l.b16 %v694
        %v1719 = vunpack.c.l.b16 %v695
        %v1720 = vunpack.c.l.b16 %v696
        %v1721 = vunpack.c.l.b16 %v697
        %v1722 = vunpack.c.l.b16 %v698
        %v1723 = vunpack.c.l.b16 %v699
        %v1724 = vunpack.c.l.b16 %v700
        %v1725 = vunpack.c.l.b16 %v701
        %v1726 = vunpack.c.l.b16 %v702
        %v1727 = vunpack.c.l.b16 %v703
        %v1728 = vunpack.c.l.b16 %v704
        %v1729 = vunpack.c.l.b16 %v705
        %v1730 = vunpack.c.l.b16 %v706
        %v1731 = vunpack.c.l.b16 %v707
        %v1732 = vunpack.c.l.b16 %v708
        %v1733 = vunpack.c.l.b16 %v709
        %v1734 = vunpack.c.l.b16 %v710
        %v1735 = vunpack.c.l.b16 %v711
        %v1736 = vunpack.c.l.b16 %v712
        %v1737 = vunpack.c.l.b16 %v713
        %v1738 = vunpack.c.l.b16 %v714
        %v1739 = vunpack.c.l.b16 %v715
        %v1740 = vunpack.c.l.b16 %v716
        %v1741 = vunpack.c.l.b16 %v717
        %v1742 = vunpack.c.l.b16 %v718
        %v1743 = vunpack.c.l.b16 %v719
        %v1744 = vunpack.c.l.b16 %v720
        %v1745 = vunpack.c.l.b16 %v721
        %v1746 = vunpack.c.l.b16 %v722
        %v1747 = vunpack.c.l.b16 %v723
        %v1748 = vunpack.c.l.b16 %v724
        %v1749 = vunpack.c.l.b16 %v725
        %v1750 = vunpack.c.l.b16 %v726
        %v1751 = vunpack.c.l.b16 %v727
        %v1752 = vunpack.c.l.b16 %v728
        %v1753 = vunpack.c.l.b16 %v729
        %v1754 = vunpack.c.l.b16 %v730
        %v1755 = vunpack.c.l.b16 %v731
        %v1756 = vunpack.c.l.b16 %v732
        %v1757 = vunpack.c.l.b16 %v733
        %v1758 = vunpack.c.l.b16 %v734
        %v1759 = vunpack.c.l.b16 %v735
        %v1760 = vunpack.c.l.b16 %v736
        %v1761 = vunpack.c.l.b16 %v737
        %v1762 = vunpack.c.l.b16 %v738
        %v1763 = vunpack.c.l.b16 %v739
        %v1764 = vunpack.c.l.b16 %v740
        %v1765 = vunpack.c.l.b16 %v741
        %v1766 = vpack.c.b16 %v1255, %v1254
        %v1767 = vpack.c.b16 %v1257, %v1256
        %v1768 = vpack.c.b16 %v1259, %v1258
        %v1769 = vpack.c.b16 %v1261, %v1260
        %v1770 = vpack.c.b16 %v1263, %v1262
        %v1771 = vpack.c.b16 %v1265, %v1264
        %v1772 = vpack.c.b16 %v1267, %v1266
        %v1773 = vpack.c.b16 %v1269, %v1268
        %v1774 = vpack.c.b16 %v1271, %v1270
        %v1775 = vpack.c.b16 %v1273, %v1272
        %v1776 = vpack.c.b16 %v1275, %v1274
        %v1777 = vpack.c.b16 %v1277, %v1276
        %v1778 = vpack.c.b16 %v1279, %v1278
        %v1779 = vpack.c.b16 %v1281, %v1280
        %v1780 = vpack.c.b16 %v1283, %v1282
        %v1781 = vpack.c.b16 %v1285, %v1284
        %v1782 = vpack.c.b16 %v1287, %v1286
        %v1783 = vpack.c.b16 %v1289, %v1288
        %v1784 = vpack.c.b16 %v1291, %v1290
        %v1785 = vpack.c.b16 %v1293, %v1292
        %v1786 = vpack.c.b16 %v1295, %v1294
        %v1787 = vpack.c.b16 %v1297, %v1296
        %v1788 = vpack.c.b16 %v1299, %v1298
        %v1789 = vpack.c.b16 %v1301, %v1300
        %v1790 = vpack.c.b16 %v1303, %v1302
        %v1791 = vpack.c.b16 %v1305, %v1304
        %v1792 = vpack.c.b16 %v1307, %v1306
        %v1793 = vpack.c.b16 %v1309, %v1308
        %v1794 = vpack.c.b16 %v1311, %v1310
        %v1795 = vpack.c.b16 %v1313, %v1312
        %v1796 = vpack.c.b16 %v1315, %v1314
        %v1797 = vpack.c.b16 %v1317, %v1316
        %v1798 = vpack.c.b16 %v1319, %v1318
        %v1799 = vpack.c.b16 %v1321, %v1320
        %v1800 = vpack.c.b16 %v1323, %v1322
        %v1801 = vpack.c.b16 %v1325, %v1324
        %v1802 = vpack.c.b16 %v1327, %v1326
        %v1803 = vpack.c.b16 %v1329, %v1328
        %v1804 = vpack.c.b16 %v1331, %v1330
        %v1805 = vpack.c.b16 %v1333, %v1332
        %v1806 = vpack.c.b16 %v1335, %v1334
        %v1807 = vpack.c.b16 %v1337, %v1336
        %v1808 = vpack.c.b16 %v1339, %v1338
        %v1809 = vpack.c.b16 %v1341, %v1340
        %v1810 = vpack.c.b16 %v1343, %v1342
        %v1811 = vpack.c.b16 %v1345, %v1344
        %v1812 = vpack.c.b16 %v1347, %v1346
        %v1813 = vpack.c.b16 %v1349, %v1348
        %v1814 = vpack.c.b16 %v1351, %v1350
        %v1815 = vpack.c.b16 %v1353, %v1352
        %v1816 = vpack.c.b16 %v1355, %v1354
        %v1817 = vpack.c.b16 %v1357, %v1356
        %v1818 = vpack.c.b16 %v1359, %v1358
        %v1819 = vpack.c.b16 %v1361, %v1360
        %v1820 = vpack.c.b16 %v1363, %v1362
        %v1821 = vpack.c.b16 %v1365, %v1364
        %v1822 = vpack.c.b16 %v1367, %v1366
        %v1823 = vpack.c.b16 %v1369, %v1368
        %v1824 = vpack.c.b16 %v1371, %v1370
        %v1825 = vpack.c.b16 %v1373, %v1372
        %v1826 = vpack.c.b16 %v1375, %v1374
        %v1827 = vpack.c.b16 %v1377, %v1376
        %v1828 = vpack.c.b16 %v1379, %v1378
        %v1829 = vpack.c.b16 %v1381, %v1380
        %v1830 = vpack.c.b16 %v1383, %v1382
        %v1831 = vpack.c.b16 %v1385, %v1384
        %v1832 = vpack.c.b16 %v1387, %v1386
        %v1833 = vpack.c.b16 %v1389, %v1388
        %v1834 = vpack.c.b16 %v1391, %v1390
        %v1835 = vpack.c.b16 %v1393, %v1392
        %v1836 = vpack.c.b16 %v1395, %v1394
        %v1837 = vpack.c.b16 %v1397, %v1396
        %v1838 = vpack.c.b16 %v1399, %v1398
        %v1839 = vpack.c.b16 %v1401, %v1400
        %v1840 = vpack.c.b16 %v1403, %v1402
        %v1841 = vpack.c.b16 %v1405, %v1404
        %v1842 = vpack.c.b16 %v1407, %v1406
        %v1843 = vpack.c.b16 %v1409, %v1408
        %v1844 = vpack.c.b16 %v1411, %v1410
        %v1845 = vpack.c.b16 %v1413, %v1412
        %v1846 = vpack.c.b16 %v1415, %v1414
        %v1847 = vpack.c.b16 %v1417, %v1416
        %v1848 = vpack.c.b16 %v1419, %v1418
        %v1849 = vpack.c.b16 %v1421, %v1420
        %v1850 = vpack.c.b16 %v1423, %v1422
        %v1851 = vpack.c.b16 %v1425, %v1424
        %v1852 = vpack.c.b16 %v1427, %v1426
        %v1853 = vpack.c.b16 %v1429, %v1428
        %v1854 = vpack.c.b16 %v1431, %v1430
        %v1855 = vpack.c.b16 %v1433, %v1432
        %v1856 = vpack.c.b16 %v1435, %v1434
        %v1857 = vpack.c.b16 %v1437, %v1436
        %v1858 = vpack.c.b16 %v1439, %v1438
        %v1859 = vpack.c.b16 %v1441, %v1440
        %v1860 = vpack.c.b16 %v1443, %v1442
        %v1861 = vpack.c.b16 %v1445, %v1444
        %v1862 = vpack.c.b16 %v1447, %v1446
        %v1863 = vpack.c.b16 %v1449, %v1448
        %v1864 = vpack.c.b16 %v1451, %v1450
        %v1865 = vpack.c.b16 %v1453, %v1452
        %v1866 = vpack.c.b16 %v1455, %v1454
        %v1867 = vpack.c.b16 %v1457, %v1456
        %v1868 = vpack.c.b16 %v1459, %v1458
        %v1869 = vpack.c.b16 %v1461, %v1460
        %v1870 = vpack.c.b16 %v1463, %v1462
        %v1871 = vpack.c.b16 %v1465, %v1464
        %v1872 = vpack.c.b16 %v1467, %v1466
        %v1873 = vpack.c.b16 %v1469, %v1468
        %v1874 = vpack.c.b16 %v1471, %v1470
        %v1875 = vpack.c.b16 %v1473, %v1472
        %v1876 = vpack.c.b16 %v1475, %v1474
        %v1877 = vpack.c.b16 %v1477, %v1476
        %v1878 = vpack.c.b16 %v1479, %v1478
        %v1879 = vpack.c.b16 %v1481, %v1480
        %v1880 = vpack.c.b16 %v1483, %v1482
        %v1881 = vpack.c.b16 %v1485, %v1484
        %v1882 = vpack.c.b16 %v1487, %v1486
        %v1883 = vpack.c.b16 %v1489, %v1488
        %v1884 = vpack.c.b16 %v1491, %v1490
        %v1885 = vpack.c.b16 %v1493, %v1492
        %v1886 = vpack.c.b16 %v1495, %v1494
        %v1887 = vpack.c.b16 %v1497, %v1496
        %v1888 = vpack.c.b16 %v1499, %v1498
        %v1889 = vpack.c.b16 %v1501, %v1500
        %v1890 = vpack.c.b16 %v1503, %v1502
        %v1891 = vpack.c.b16 %v1505, %v1504
        %v1892 = vpack.c.b16 %v1507, %v1506
        %v1893 = vpack.c.b16 %v1509, %v1508
        %v1894 = vpack.c.b16 %v1511, %v1510
        %v1895 = vpack.c.b16 %v1513, %v1512
        %v1896 = vpack.c.b16 %v1515, %v1514
        %v1897 = vpack.c.b16 %v1517, %v1516
        %v1898 = vpack.c.b16 %v1519, %v1518
        %v1899 = vpack.c.b16 %v1521, %v1520
        %v1900 = vpack.c.b16 %v1523, %v1522
        %v1901 = vpack.c.b16 %v1525, %v1524
        %v1902 = vpack.c.b16 %v1527, %v1526
        %v1903 = vpack.c.b16 %v1529, %v1528
        %v1904 = vpack.c.b16 %v1531, %v1530
        %v1905 = vpack.c.b16 %v1533, %v1532
        %v1906 = vpack.c.b16 %v1535, %v1534
        %v1907 = vpack.c.b16 %v1537, %v1536
        %v1908 = vpack.c.b16 %v1539, %v1538
        %v1909 = vpack.c.b16 %v1541, %v1540
        %v1910 = vpack.c.b16 %v1543, %v1542
        %v1911 = vpack.c.b16 %v1545, %v1544
        %v1912 = vpack.c.b16 %v1547, %v1546
        %v1913 = vpack.c.b16 %v1549, %v1548
        %v1914 = vpack.c.b16 %v1551, %v1550
        %v1915 = vpack.c.b16 %v1553, %v1552
        %v1916 = vpack.c.b16 %v1555, %v1554
        %v1917 = vpack.c.b16 %v1557, %v1556
        %v1918 = vpack.c.b16 %v1559, %v1558
        %v1919 = vpack.c.b16 %v1561, %v1560
        %v1920 = vpack.c.b16 %v1563, %v1562
        %v1921 = vpack.c.b16 %v1565, %v1564
        %v1922 = vpack.c.b16 %v1567, %v1566
        %v1923 = vpack.c.b16 %v1569, %v1568
        %v1924 = vpack.c.b16 %v1571, %v1570
        %v1925 = vpack.c.b16 %v1573, %v1572
        %v1926 = vpack.c.b16 %v1575, %v1574
        %v1927 = vpack.c.b16 %v1577, %v1576
        %v1928 = vpack.c.b16 %v1579, %v1578
        %v1929 = vpack.c.b16 %v1581, %v1580
        %v1930 = vpack.c.b16 %v1583, %v1582
        %v1931 = vpack.c.b16 %v1585, %v1584
        %v1932 = vpack.c.b16 %v1587, %v1586
        %v1933 = vpack.c.b16 %v1589, %v1588
        %v1934 = vpack.c.b16 %v1591, %v1590
        %v1935 = vpack.c.b16 %v1593, %v1592
        %v1936 = vpack.c.b16 %v1595, %v1594
        %v1937 = vpack.c.b16 %v1597, %v1596
        %v1938 = vpack.c.b16 %v1599, %v1598
        %v1939 = vpack.c.b16 %v1601, %v1600
        %v1940 = vpack.c.b16 %v1603, %v1602
        %v1941 = vpack.c.b16 %v1605, %v1604
        %v1942 = vpack.c.b16 %v1607, %v1606
        %v1943 = vpack.c.b16 %v1609, %v1608
        %v1944 = vpack.c.b16 %v1611, %v1610
        %v1945 = vpack.c.b16 %v1613, %v1612
        %v1946 = vpack.c.b16 %v1615, %v1614
        %v1947 = vpack.c.b16 %v1617, %v1616
        %v1948 = vpack.c.b16 %v1619, %v1618
        %v1949 = vpack.c.b16 %v1621, %v1620
        %v1950 = vpack.c.b16 %v1623, %v1622
        %v1951 = vpack.c.b16 %v1625, %v1624
        %v1952 = vpack.c.b16 %v1627, %v1626
        %v1953 = vpack.c.b16 %v1629, %v1628
        %v1954 = vpack.c.b16 %v1631, %v1630
        %v1955 = vpack.c.b16 %v1633, %v1632
        %v1956 = vpack.c.b16 %v1635, %v1634
        %v1957 = vpack.c.b16 %v1637, %v1636
        %v1958 = vpack.c.b16 %v1639, %v1638
        %v1959 = vpack.c.b16 %v1641, %v1640
        %v1960 = vpack.c.b16 %v1643, %v1642
        %v1961 = vpack.c.b16 %v1645, %v1644
        %v1962 = vpack.c.b16 %v1647, %v1646
        %v1963 = vpack.c.b16 %v1649, %v1648
        %v1964 = vpack.c.b16 %v1651, %v1650
        %v1965 = vpack.c.b16 %v1653, %v1652
        %v1966 = vpack.c.b16 %v1655, %v1654
        %v1967 = vpack.c.b16 %v1657, %v1656
        %v1968 = vpack.c.b16 %v1659, %v1658
        %v1969 = vpack.c.b16 %v1661, %v1660
        %v1970 = vpack.c.b16 %v1663, %v1662
        %v1971 = vpack.c.b16 %v1665, %v1664
        %v1972 = vpack.c.b16 %v1667, %v1666
        %v1973 = vpack.c.b16 %v1669, %v1668
        %v1974 = vpack.c.b16 %v1671, %v1670
        %v1975 = vpack.c.b16 %v1673, %v1672
        %v1976 = vpack.c.b16 %v1675, %v1674
        %v1977 = vpack.c.b16 %v1677, %v1676
        %v1978 = vpack.c.b16 %v1679, %v1678
        %v1979 = vpack.c.b16 %v1681, %v1680
        %v1980 = vpack.c.b16 %v1683, %v1682
        %v1981 = vpack.c.b16 %v1685, %v1684
        %v1982 = vpack.c.b16 %v1687, %v1686
        %v1983 = vpack.c.b16 %v1689, %v1688
        %v1984 = vpack.c.b16 %v1691, %v1690
        %v1985 = vpack.c.b16 %v1693, %v1692
        %v1986 = vpack.c.b16 %v1695, %v1694
        %v1987 = vpack.c.b16 %v1697, %v1696
        %v1988 = vpack.c.b16 %v1699, %v1698
        %v1989 = vpack.c.b16 %v1701, %v1700
        %v1990 = vpack.c.b16 %v1703, %v1702
        %v1991 = vpack.c.b16 %v1705, %v1704
        %v1992 = vpack.c.b16 %v1707, %v1706
        %v1993 = vpack.c.b16 %v1709, %v1708
        %v1994 = vpack.c.b16 %v1711, %v1710
        %v1995 = vpack.c.b16 %v1713, %v1712
        %v1996 = vpack.c.b16 %v1715, %v1714
        %v1997 = vpack.c.b16 %v1717, %v1716
        %v1998 = vpack.c.b16 %v1719, %v1718
        %v1999 = vpack.c.b16 %v1721, %v1720
        %v2000 = vpack.c.b16 %v1723, %v1722
        %v2001 = vpack.c.b16 %v1725, %v1724
        %v2002 = vpack.c.b16 %v1727, %v1726
        %v2003 = vpack.c.b16 %v1729, %v1728
        %v2004 = vpack.c.b16 %v1731, %v1730
        %v2005 = vpack.c.b16 %v1733, %v1732
        %v2006 = vpack.c.b16 %v1735, %v1734
        %v2007 = vpack.c.b16 %v1737, %v1736
        %v2008 = vpack.c.b16 %v1739, %v1738
        %v2009 = vpack.c.b16 %v1741, %v1740
        %v2010 = vpack.c.b16 %v1743, %v1742
        %v2011 = vpack.c.b16 %v1745, %v1744
        %v2012 = vpack.c.b16 %v1747, %v1746
        %v2013 = vpack.c.b16 %v1749, %v1748
        %v2014 = vpack.c.b16 %v1751, %v1750
        %v2015 = vpack.c.b16 %v1753, %v1752
        %v2016 = vpack.c.b16 %v1755, %v1754
        %v2017 = vpack.c.b16 %v1757, %v1756
        %v2018 = vpack.c.b16 %v1759, %v1758
        %v2019 = vpack.c.b16 %v1761, %v1760
        %v2020 = vpack.c.b16 %v1763, %v1762
        %v2021 = vpack.c.b16 %v1765, %v1764
        %v2023 = vsel %vm202, %v229, 0
        %v2026 = vsel %vm202, %v1766, 0
        %v2029 = vsel %vm202, %v1767, 0
        %v2032 = vsel %vm202, %v1768, 0
        %v2035 = vsel %vm202, %v1769, 0
        %v2038 = vsel %vm202, %v1770, 0
        %v2041 = vsel %vm202, %v1771, 0
        %v2044 = vsel %vm202, %v1772, 0
        %v2047 = vsel %vm202, %v1773, 0
        %v2050 = vsel %vm202, %v1774, 0
        %v2053 = vsel %vm202, %v1775, 0
        %v2056 = vsel %vm202, %v1776, 0
        %v2059 = vsel %vm202, %v1777, 0
        %v2062 = vsel %vm202, %v1778, 0
        %v2065 = vsel %vm202, %v1779, 0
        %v2068 = vsel %vm202, %v1780, 0
        %v2071 = vsel %vm202, %v1781, 0
        %v2074 = vsel %vm202, %v1782, 0
        %v2077 = vsel %vm202, %v1783, 0
        %v2080 = vsel %vm202, %v1784, 0
        %v2083 = vsel %vm202, %v1785, 0
        %v2086 = vsel %vm202, %v1786, 0
        %v2089 = vsel %vm202, %v1787, 0
        %v2092 = vsel %vm202, %v1788, 0
        %v2095 = vsel %vm202, %v1789, 0
        %v2098 = vsel %vm202, %v1790, 0
        %v2101 = vsel %vm202, %v1791, 0
        %v2104 = vsel %vm202, %v1792, 0
        %v2107 = vsel %vm202, %v1793, 0
        %v2110 = vsel %vm202, %v1794, 0
        %v2113 = vsel %vm202, %v1795, 0
        %v2116 = vsel %vm202, %v1796, 0
        %v2119 = vsel %vm202, %v1797, 0
        %v2122 = vsel %vm202, %v1798, 0
        %v2125 = vsel %vm202, %v1799, 0
        %v2128 = vsel %vm202, %v1800, 0
        %v2131 = vsel %vm202, %v1801, 0
        %v2134 = vsel %vm202, %v1802, 0
        %v2137 = vsel %vm202, %v1803, 0
        %v2140 = vsel %vm202, %v1804, 0
        %v2143 = vsel %vm202, %v1805, 0
        %v2146 = vsel %vm202, %v1806, 0
        %v2149 = vsel %vm202, %v1807, 0
        %v2152 = vsel %vm202, %v1808, 0
        %v2155 = vsel %vm202, %v1809, 0
        %v2158 = vsel %vm202, %v1810, 0
        %v2161 = vsel %vm202, %v1811, 0
        %v2164 = vsel %vm202, %v1812, 0
        %v2167 = vsel %vm202, %v1813, 0
        %v2170 = vsel %vm202, %v1814, 0
        %v2173 = vsel %vm202, %v1815, 0
        %v2176 = vsel %vm202, %v1816, 0
        %v2179 = vsel %vm202, %v1817, 0
        %v2182 = vsel %vm202, %v1818, 0
        %v2185 = vsel %vm202, %v1819, 0
        %v2188 = vsel %vm202, %v1820, 0
        %v2191 = vsel %vm202, %v1821, 0
        %v2194 = vsel %vm202, %v1822, 0
        %v2197 = vsel %vm202, %v1823, 0
        %v2200 = vsel %vm202, %v1824, 0
        %v2203 = vsel %vm202, %v1825, 0
        %v2206 = vsel %vm202, %v1826, 0
        %v2209 = vsel %vm202, %v1827, 0
        %v2212 = vsel %vm202, %v1828, 0
        %v2215 = vsel %vm202, %v1829, 0
        %v2218 = vsel %vm202, %v1830, 0
        %v2221 = vsel %vm202, %v1831, 0
        %v2224 = vsel %vm202, %v1832, 0
        %v2227 = vsel %vm202, %v1833, 0
        %v2230 = vsel %vm202, %v1834, 0
        %v2233 = vsel %vm202, %v1835, 0
        %v2236 = vsel %vm202, %v1836, 0
        %v2239 = vsel %vm202, %v1837, 0
        %v2242 = vsel %vm202, %v1838, 0
        %v2245 = vsel %vm202, %v1839, 0
        %v2248 = vsel %vm202, %v1840, 0
        %v2251 = vsel %vm202, %v1841, 0
        %v2254 = vsel %vm202, %v1842, 0
        %v2257 = vsel %vm202, %v1843, 0
        %v2260 = vsel %vm202, %v1844, 0
        %v2263 = vsel %vm202, %v1845, 0
        %v2266 = vsel %vm202, %v1846, 0
        %v2269 = vsel %vm202, %v1847, 0
        %v2272 = vsel %vm202, %v1848, 0
        %v2275 = vsel %vm202, %v1849, 0
        %v2278 = vsel %vm202, %v1850, 0
        %v2281 = vsel %vm202, %v1851, 0
        %v2284 = vsel %vm202, %v1852, 0
        %v2287 = vsel %vm202, %v1853, 0
        %v2290 = vsel %vm202, %v1854, 0
        %v2293 = vsel %vm202, %v1855, 0
        %v2296 = vsel %vm202, %v1856, 0
        %v2299 = vsel %vm202, %v1857, 0
        %v2302 = vsel %vm202, %v1858, 0
        %v2305 = vsel %vm202, %v1859, 0
        %v2308 = vsel %vm202, %v1860, 0
        %v2311 = vsel %vm202, %v1861, 0
        %v2314 = vsel %vm202, %v1862, 0
        %v2317 = vsel %vm202, %v1863, 0
        %v2320 = vsel %vm202, %v1864, 0
        %v2323 = vsel %vm202, %v1865, 0
        %v2326 = vsel %vm202, %v1866, 0
        %v2329 = vsel %vm202, %v1867, 0
        %v2332 = vsel %vm202, %v1868, 0
        %v2335 = vsel %vm202, %v1869, 0
        %v2338 = vsel %vm202, %v1870, 0
        %v2341 = vsel %vm202, %v1871, 0
        %v2344 = vsel %vm202, %v1872, 0
        %v2347 = vsel %vm202, %v1873, 0
        %v2350 = vsel %vm202, %v1874, 0
        %v2353 = vsel %vm202, %v1875, 0
        %v2356 = vsel %vm202, %v1876, 0
        %v2359 = vsel %vm202, %v1877, 0
        %v2362 = vsel %vm202, %v1878, 0
        %v2365 = vsel %vm202, %v1879, 0
        %v2368 = vsel %vm202, %v1880, 0
        %v2371 = vsel %vm202, %v1881, 0
        %v2374 = vsel %vm202, %v1882, 0
        %v2377 = vsel %vm202, %v1883, 0
        %v2380 = vsel %vm202, %v1884, 0
        %v2383 = vsel %vm202, %v1885, 0
        %v2386 = vsel %vm202, %v1886, 0
        %v2389 = vsel %vm202, %v1887, 0
        %v2392 = vsel %vm202, %v1888, 0
        %v2395 = vsel %vm202, %v1889, 0
        %v2398 = vsel %vm202, %v1890, 0
        %v2401 = vsel %vm202, %v1891, 0
        %v2404 = vsel %vm202, %v1892, 0
        %v2407 = vsel %vm202, %v1893, 0
        %v2410 = vsel %vm202, %v1894, 0
        %v2413 = vsel %vm202, %v1895, 0
        %v2416 = vsel %vm202, %v1896, 0
        %v2419 = vsel %vm202, %v1897, 0
        %v2422 = vsel %vm202, %v1898, 0
        %v2425 = vsel %vm202, %v1899, 0
        %v2428 = vsel %vm202, %v1900, 0
        %v2431 = vsel %vm202, %v1901, 0
        %v2434 = vsel %vm202, %v1902, 0
        %v2437 = vsel %vm202, %v1903, 0
        %v2440 = vsel %vm202, %v1904, 0
        %v2443 = vsel %vm202, %v1905, 0
        %v2446 = vsel %vm202, %v1906, 0
        %v2449 = vsel %vm202, %v1907, 0
        %v2452 = vsel %vm202, %v1908, 0
        %v2455 = vsel %vm202, %v1909, 0
        %v2458 = vsel %vm202, %v1910, 0
        %v2461 = vsel %vm202, %v1911, 0
        %v2464 = vsel %vm202, %v1912, 0
        %v2467 = vsel %vm202, %v1913, 0
        %v2470 = vsel %vm202, %v1914, 0
        %v2473 = vsel %vm202, %v1915, 0
        %v2476 = vsel %vm202, %v1916, 0
        %v2479 = vsel %vm202, %v1917, 0
        %v2482 = vsel %vm202, %v1918, 0
        %v2485 = vsel %vm202, %v1919, 0
        %v2488 = vsel %vm202, %v1920, 0
        %v2491 = vsel %vm202, %v1921, 0
        %v2494 = vsel %vm202, %v1922, 0
        %v2497 = vsel %vm202, %v1923, 0
        %v2500 = vsel %vm202, %v1924, 0
        %v2503 = vsel %vm202, %v1925, 0
        %v2506 = vsel %vm202, %v1926, 0
        %v2509 = vsel %vm202, %v1927, 0
        %v2512 = vsel %vm202, %v1928, 0
        %v2515 = vsel %vm202, %v1929, 0
        %v2518 = vsel %vm202, %v1930, 0
        %v2521 = vsel %vm202, %v1931, 0
        %v2524 = vsel %vm202, %v1932, 0
        %v2527 = vsel %vm202, %v1933, 0
        %v2530 = vsel %vm202, %v1934, 0
        %v2533 = vsel %vm202, %v1935, 0
        %v2536 = vsel %vm202, %v1936, 0
        %v2539 = vsel %vm202, %v1937, 0
        %v2542 = vsel %vm202, %v1938, 0
        %v2545 = vsel %vm202, %v1939, 0
        %v2548 = vsel %vm202, %v1940, 0
        %v2551 = vsel %vm202, %v1941, 0
        %v2554 = vsel %vm202, %v1942, 0
        %v2557 = vsel %vm202, %v1943, 0
        %v2560 = vsel %vm202, %v1944, 0
        %v2563 = vsel %vm202, %v1945, 0
        %v2566 = vsel %vm202, %v1946, 0
        %v2569 = vsel %vm202, %v1947, 0
        %v2572 = vsel %vm202, %v1948, 0
        %v2575 = vsel %vm202, %v1949, 0
        %v2578 = vsel %vm202, %v1950, 0
        %v2581 = vsel %vm202, %v1951, 0
        %v2584 = vsel %vm202, %v1952, 0
        %v2587 = vsel %vm202, %v1953, 0
        %v2590 = vsel %vm202, %v1954, 0
        %v2593 = vsel %vm202, %v1955, 0
        %v2596 = vsel %vm202, %v1956, 0
        %v2599 = vsel %vm202, %v1957, 0
        %v2602 = vsel %vm202, %v1958, 0
        %v2605 = vsel %vm202, %v1959, 0
        %v2608 = vsel %vm202, %v1960, 0
        %v2611 = vsel %vm202, %v1961, 0
        %v2614 = vsel %vm202, %v1962, 0
        %v2617 = vsel %vm202, %v1963, 0
        %v2620 = vsel %vm202, %v1964, 0
        %v2623 = vsel %vm202, %v1965, 0
        %v2626 = vsel %vm202, %v1966, 0
        %v2629 = vsel %vm202, %v1967, 0
        %v2632 = vsel %vm202, %v1968, 0
        %v2635 = vsel %vm202, %v1969, 0
        %v2638 = vsel %vm202, %v1970, 0
        %v2641 = vsel %vm202, %v1971, 0
        %v2644 = vsel %vm202, %v1972, 0
        %v2647 = vsel %vm202, %v1973, 0
        %v2650 = vsel %vm202, %v1974, 0
        %v2653 = vsel %vm202, %v1975, 0
        %v2656 = vsel %vm202, %v1976, 0
        %v2659 = vsel %vm202, %v1977, 0
        %v2662 = vsel %vm202, %v1978, 0
        %v2665 = vsel %vm202, %v1979, 0
        %v2668 = vsel %vm202, %v1980, 0
        %v2671 = vsel %vm202, %v1981, 0
        %v2674 = vsel %vm202, %v1982, 0
        %v2677 = vsel %vm202, %v1983, 0
        %v2680 = vsel %vm202, %v1984, 0
        %v2683 = vsel %vm202, %v1985, 0
        %v2686 = vsel %vm202, %v1986, 0
        %v2689 = vsel %vm202, %v1987, 0
        %v2692 = vsel %vm202, %v1988, 0
        %v2695 = vsel %vm202, %v1989, 0
        %v2698 = vsel %vm202, %v1990, 0
        %v2701 = vsel %vm202, %v1991, 0
        %v2704 = vsel %vm202, %v1992, 0
        %v2707 = vsel %vm202, %v1993, 0
        %v2710 = vsel %vm202, %v1994, 0
        %v2713 = vsel %vm202, %v1995, 0
        %v2716 = vsel %vm202, %v1996, 0
        %v2719 = vsel %vm202, %v1997, 0
        %v2722 = vsel %vm202, %v1998, 0
        %v2725 = vsel %vm202, %v1999, 0
        %v2728 = vsel %vm202, %v2000, 0
        %v2731 = vsel %vm202, %v2001, 0
        %v2734 = vsel %vm202, %v2002, 0
        %v2737 = vsel %vm202, %v2003, 0
        %v2740 = vsel %vm202, %v2004, 0
        %v2743 = vsel %vm202, %v2005, 0
        %v2746 = vsel %vm202, %v2006, 0
        %v2749 = vsel %vm202, %v2007, 0
        %v2752 = vsel %vm202, %v2008, 0
        %v2755 = vsel %vm202, %v2009, 0
        %v2758 = vsel %vm202, %v2010, 0
        %v2761 = vsel %vm202, %v2011, 0
        %v2764 = vsel %vm202, %v2012, 0
        %v2767 = vsel %vm202, %v2013, 0
        %v2770 = vsel %vm202, %v2014, 0
        %v2773 = vsel %vm202, %v2015, 0
        %v2776 = vsel %vm202, %v2016, 0
        %v2779 = vsel %vm202, %v2017, 0
        %v2782 = vsel %vm202, %v2018, 0
        %v2785 = vsel %vm202, %v2019, 0
        %v2788 = vsel %vm202, %v2020, 0
        %v2791 = vsel %vm202, %v2021, 0
        %2793 = vmatprep.subr.bf16.mxu0 0
        %2794 = vmatpush1.bf16.xpose.msra.mxu0 %v2047
        %2795 = vmatprep.subr.bf16.mxu0 0
        %2796 = vmatpush1.bf16.xpose.msra.mxu0 %v2044
        %2797 = vmatprep.subr.bf16.mxu0 0
        %2798 = vmatpush1.bf16.xpose.msra.mxu0 %v2041
        %2799 = vmatprep.subr.bf16.mxu0 0
        %2800 = vmatpush1.bf16.xpose.msra.mxu0 %v2038
        %2801 = vmatprep.subr.bf16.mxu0 0
        %2802 = vmatpush1.bf16.xpose.msra.mxu0 %v2035
        %2803 = vmatprep.subr.bf16.mxu0 0
        %2804 = vmatpush1.bf16.xpose.msra.mxu0 %v2032
        %2805 = vmatprep.subr.bf16.mxu0 0
        %2806 = vmatpush1.bf16.xpose.msra.mxu0 %v2029
        %2807 = vmatprep.subr.bf16.mxu0 0
        %2808 = vmatpush1.bf16.xpose.msra.mxu0 %v2026
        %2809 = vmatprep.subr.bf16.mxu0 0
        %2810 = vmatpush2.bf16.xpose.msra.mxu0 %v2071
        %2811 = vmatprep.subr.bf16.mxu0 0
        %2812 = vmatpush2.bf16.xpose.msra.mxu0 %v2068
        %2813 = vmatprep.subr.bf16.mxu0 0
        %2814 = vmatpush2.bf16.xpose.msra.mxu0 %v2065
        %2815 = vmatprep.subr.bf16.mxu0 0
        %2816 = vmatpush2.bf16.xpose.msra.mxu0 %v2062
        %2817 = vmatprep.subr.bf16.mxu0 0
        %2818 = vmatpush2.bf16.xpose.msra.mxu0 %v2059
        %2819 = vmatprep.subr.bf16.mxu0 0
        %2820 = vmatpush2.bf16.xpose.msra.mxu0 %v2056
        %2821 = vmatprep.subr.bf16.mxu0 0
        %2822 = vmatpush2.bf16.xpose.msra.mxu0 %v2053
        %2823 = vmatprep.subr.bf16.mxu0 0
        %2824 = vmatpush2.bf16.xpose.msra.mxu0 %v2050
        %2825 = vmatprep.mubr.bf16.mxu0 0
        %2826 = vmatmul.mubr.bf16.gmra.mxu0 %v2023
        %v2827 = vpop.f32.mrf.mxu0
        %v2828 = vadd.f32 0.0, %v2827
        %v2829 = vpop.f32.mrf.mxu0
        %v2830 = vadd.f32 0.0, %v2829
        %v2831 = vpop.f32.mrf.mxu0
        %v2832 = vadd.f32 0.0, %v2831
        %v2833 = vpop.f32.mrf.mxu0
        %v2834 = vadd.f32 0.0, %v2833
        %2835 = vdwg.mxu0
        %2836 = vmatprep.subr.bf16.mxu0 0
        %2837 = vmatpush1.bf16.xpose.msra.mxu0 %v2095
        %2838 = vmatprep.subr.bf16.mxu0 0
        %2839 = vmatpush1.bf16.xpose.msra.mxu0 %v2092
        %2840 = vmatprep.subr.bf16.mxu0 0
        %2841 = vmatpush1.bf16.xpose.msra.mxu0 %v2089
        %2842 = vmatprep.subr.bf16.mxu0 0
        %2843 = vmatpush1.bf16.xpose.msra.mxu0 %v2086
        %2844 = vmatprep.subr.bf16.mxu0 0
        %2845 = vmatpush1.bf16.xpose.msra.mxu0 %v2083
        %2846 = vmatprep.subr.bf16.mxu0 0
        %2847 = vmatpush1.bf16.xpose.msra.mxu0 %v2080
        %2848 = vmatprep.subr.bf16.mxu0 0
        %2849 = vmatpush1.bf16.xpose.msra.mxu0 %v2077
        %2850 = vmatprep.subr.bf16.mxu0 0
        %2851 = vmatpush1.bf16.xpose.msra.mxu0 %v2074
        %2852 = vmatprep.subr.bf16.mxu0 0
        %2853 = vmatpush2.bf16.xpose.msra.mxu0 %v2119
        %2854 = vmatprep.subr.bf16.mxu0 0
        %2855 = vmatpush2.bf16.xpose.msra.mxu0 %v2116
        %2856 = vmatprep.subr.bf16.mxu0 0
        %2857 = vmatpush2.bf16.xpose.msra.mxu0 %v2113
        %2858 = vmatprep.subr.bf16.mxu0 0
        %2859 = vmatpush2.bf16.xpose.msra.mxu0 %v2110
        %2860 = vmatprep.subr.bf16.mxu0 0
        %2861 = vmatpush2.bf16.xpose.msra.mxu0 %v2107
        %2862 = vmatprep.subr.bf16.mxu0 0
        %2863 = vmatpush2.bf16.xpose.msra.mxu0 %v2104
        %2864 = vmatprep.subr.bf16.mxu0 0
        %2865 = vmatpush2.bf16.xpose.msra.mxu0 %v2101
        %2866 = vmatprep.subr.bf16.mxu0 0
        %2867 = vmatpush2.bf16.xpose.msra.mxu0 %v2098
        %2868 = vmatprep.mubr.bf16.mxu0 0
        %2869 = vmatmul.mubr.bf16.gmra.mxu0 %v2023
        %v2870 = vpop.f32.mrf.mxu0
        %v2871 = vadd.f32 0.0, %v2870
        %v2872 = vpop.f32.mrf.mxu0
        %v2873 = vadd.f32 0.0, %v2872
        %v2874 = vpop.f32.mrf.mxu0
        %v2875 = vadd.f32 0.0, %v2874
        %v2876 = vpop.f32.mrf.mxu0
        %v2877 = vadd.f32 0.0, %v2876
        %2878 = vdwg.mxu0
        %2879 = vmatprep.subr.bf16.mxu0 0
        %2880 = vmatpush1.bf16.xpose.msra.mxu0 %v2143
        %2881 = vmatprep.subr.bf16.mxu0 0
        %2882 = vmatpush1.bf16.xpose.msra.mxu0 %v2140
        %2883 = vmatprep.subr.bf16.mxu0 0
        %2884 = vmatpush1.bf16.xpose.msra.mxu0 %v2137
        %2885 = vmatprep.subr.bf16.mxu0 0
        %2886 = vmatpush1.bf16.xpose.msra.mxu0 %v2134
        %2887 = vmatprep.subr.bf16.mxu0 0
        %2888 = vmatpush1.bf16.xpose.msra.mxu0 %v2131
        %2889 = vmatprep.subr.bf16.mxu0 0
        %2890 = vmatpush1.bf16.xpose.msra.mxu0 %v2128
        %2891 = vmatprep.subr.bf16.mxu0 0
        %2892 = vmatpush1.bf16.xpose.msra.mxu0 %v2125
        %2893 = vmatprep.subr.bf16.mxu0 0
        %2894 = vmatpush1.bf16.xpose.msra.mxu0 %v2122
        %2895 = vmatprep.subr.bf16.mxu0 0
        %2896 = vmatpush2.bf16.xpose.msra.mxu0 %v2167
        %2897 = vmatprep.subr.bf16.mxu0 0
        %2898 = vmatpush2.bf16.xpose.msra.mxu0 %v2164
        %2899 = vmatprep.subr.bf16.mxu0 0
        %2900 = vmatpush2.bf16.xpose.msra.mxu0 %v2161
        %2901 = vmatprep.subr.bf16.mxu0 0
        %2902 = vmatpush2.bf16.xpose.msra.mxu0 %v2158
        %2903 = vmatprep.subr.bf16.mxu0 0
        %2904 = vmatpush2.bf16.xpose.msra.mxu0 %v2155
        %2905 = vmatprep.subr.bf16.mxu0 0
        %2906 = vmatpush2.bf16.xpose.msra.mxu0 %v2152
        %2907 = vmatprep.subr.bf16.mxu0 0
        %2908 = vmatpush2.bf16.xpose.msra.mxu0 %v2149
        %2909 = vmatprep.subr.bf16.mxu0 0
        %2910 = vmatpush2.bf16.xpose.msra.mxu0 %v2146
        %2911 = vmatprep.mubr.bf16.mxu0 0
        %2912 = vmatmul.mubr.bf16.gmra.mxu0 %v2023
        %v2913 = vpop.f32.mrf.mxu0
        %v2914 = vadd.f32 0.0, %v2913
        %v2915 = vpop.f32.mrf.mxu0
        %v2916 = vadd.f32 0.0, %v2915
        %v2917 = vpop.f32.mrf.mxu0
        %v2918 = vadd.f32 0.0, %v2917
        %v2919 = vpop.f32.mrf.mxu0
        %v2920 = vadd.f32 0.0, %v2919
        %2921 = vdwg.mxu0
        %2922 = vmatprep.subr.bf16.mxu0 0
        %2923 = vmatpush1.bf16.xpose.msra.mxu0 %v2191
        %2924 = vmatprep.subr.bf16.mxu0 0
        %2925 = vmatpush1.bf16.xpose.msra.mxu0 %v2188
        %2926 = vmatprep.subr.bf16.mxu0 0
        %2927 = vmatpush1.bf16.xpose.msra.mxu0 %v2185
        %2928 = vmatprep.subr.bf16.mxu0 0
        %2929 = vmatpush1.bf16.xpose.msra.mxu0 %v2182
        %2930 = vmatprep.subr.bf16.mxu0 0
        %2931 = vmatpush1.bf16.xpose.msra.mxu0 %v2179
        %2932 = vmatprep.subr.bf16.mxu0 0
        %2933 = vmatpush1.bf16.xpose.msra.mxu0 %v2176
        %2934 = vmatprep.subr.bf16.mxu0 0
        %2935 = vmatpush1.bf16.xpose.msra.mxu0 %v2173
        %2936 = vmatprep.subr.bf16.mxu0 0
        %2937 = vmatpush1.bf16.xpose.msra.mxu0 %v2170
        %2938 = vmatprep.subr.bf16.mxu0 0
        %2939 = vmatpush2.bf16.xpose.msra.mxu0 %v2215
        %2940 = vmatprep.subr.bf16.mxu0 0
        %2941 = vmatpush2.bf16.xpose.msra.mxu0 %v2212
        %2942 = vmatprep.subr.bf16.mxu0 0
        %2943 = vmatpush2.bf16.xpose.msra.mxu0 %v2209
        %2944 = vmatprep.subr.bf16.mxu0 0
        %2945 = vmatpush2.bf16.xpose.msra.mxu0 %v2206
        %2946 = vmatprep.subr.bf16.mxu0 0
        %2947 = vmatpush2.bf16.xpose.msra.mxu0 %v2203
        %2948 = vmatprep.subr.bf16.mxu0 0
        %2949 = vmatpush2.bf16.xpose.msra.mxu0 %v2200
        %2950 = vmatprep.subr.bf16.mxu0 0
        %2951 = vmatpush2.bf16.xpose.msra.mxu0 %v2197
        %2952 = vmatprep.subr.bf16.mxu0 0
        %2953 = vmatpush2.bf16.xpose.msra.mxu0 %v2194
        %2954 = vmatprep.mubr.bf16.mxu0 0
        %2955 = vmatmul.mubr.bf16.gmra.mxu0 %v2023
        %v2956 = vpop.f32.mrf.mxu0
        %v2957 = vadd.f32 0.0, %v2956
        %v2958 = vpop.f32.mrf.mxu0
        %v2959 = vadd.f32 0.0, %v2958
        %v2960 = vpop.f32.mrf.mxu0
        %v2961 = vadd.f32 0.0, %v2960
        %v2962 = vpop.f32.mrf.mxu0
        %v2963 = vadd.f32 0.0, %v2962
        %2964 = vdwg.mxu0
        %2965 = vmatprep.subr.bf16.mxu0 0
        %2966 = vmatpush1.bf16.xpose.msra.mxu0 %v2239
        %2967 = vmatprep.subr.bf16.mxu0 0
        %2968 = vmatpush1.bf16.xpose.msra.mxu0 %v2236
        %2969 = vmatprep.subr.bf16.mxu0 0
        %2970 = vmatpush1.bf16.xpose.msra.mxu0 %v2233
        %2971 = vmatprep.subr.bf16.mxu0 0
        %2972 = vmatpush1.bf16.xpose.msra.mxu0 %v2230
        %2973 = vmatprep.subr.bf16.mxu0 0
        %2974 = vmatpush1.bf16.xpose.msra.mxu0 %v2227
        %2975 = vmatprep.subr.bf16.mxu0 0
        %2976 = vmatpush1.bf16.xpose.msra.mxu0 %v2224
        %2977 = vmatprep.subr.bf16.mxu0 0
        %2978 = vmatpush1.bf16.xpose.msra.mxu0 %v2221
        %2979 = vmatprep.subr.bf16.mxu0 0
        %2980 = vmatpush1.bf16.xpose.msra.mxu0 %v2218
        %2981 = vmatprep.subr.bf16.mxu0 0
        %2982 = vmatpush2.bf16.xpose.msra.mxu0 %v2263
        %2983 = vmatprep.subr.bf16.mxu0 0
        %2984 = vmatpush2.bf16.xpose.msra.mxu0 %v2260
        %2985 = vmatprep.subr.bf16.mxu0 0
        %2986 = vmatpush2.bf16.xpose.msra.mxu0 %v2257
        %2987 = vmatprep.subr.bf16.mxu0 0
        %2988 = vmatpush2.bf16.xpose.msra.mxu0 %v2254
        %2989 = vmatprep.subr.bf16.mxu0 0
        %2990 = vmatpush2.bf16.xpose.msra.mxu0 %v2251
        %2991 = vmatprep.subr.bf16.mxu0 0
        %2992 = vmatpush2.bf16.xpose.msra.mxu0 %v2248
        %2993 = vmatprep.subr.bf16.mxu0 0
        %2994 = vmatpush2.bf16.xpose.msra.mxu0 %v2245
        %2995 = vmatprep.subr.bf16.mxu0 0
        %2996 = vmatpush2.bf16.xpose.msra.mxu0 %v2242
        %2997 = vmatprep.mubr.bf16.mxu0 0
        %2998 = vmatmul.mubr.bf16.gmra.mxu0 %v2023
        %v2999 = vpop.f32.mrf.mxu0
        %v3000 = vadd.f32 0.0, %v2999
        %v3001 = vpop.f32.mrf.mxu0
        %v3002 = vadd.f32 0.0, %v3001
        %v3003 = vpop.f32.mrf.mxu0
        %v3004 = vadd.f32 0.0, %v3003
        %v3005 = vpop.f32.mrf.mxu0
        %v3006 = vadd.f32 0.0, %v3005
        %3007 = vdwg.mxu0
        %3008 = vmatprep.subr.bf16.mxu0 0
        %3009 = vmatpush1.bf16.xpose.msra.mxu0 %v2287
        %3010 = vmatprep.subr.bf16.mxu0 0
        %3011 = vmatpush1.bf16.xpose.msra.mxu0 %v2284
        %3012 = vmatprep.subr.bf16.mxu0 0
        %3013 = vmatpush1.bf16.xpose.msra.mxu0 %v2281
        %3014 = vmatprep.subr.bf16.mxu0 0
        %3015 = vmatpush1.bf16.xpose.msra.mxu0 %v2278
        %3016 = vmatprep.subr.bf16.mxu0 0
        %3017 = vmatpush1.bf16.xpose.msra.mxu0 %v2275
        %3018 = vmatprep.subr.bf16.mxu0 0
        %3019 = vmatpush1.bf16.xpose.msra.mxu0 %v2272
        %3020 = vmatprep.subr.bf16.mxu0 0
        %3021 = vmatpush1.bf16.xpose.msra.mxu0 %v2269
        %3022 = vmatprep.subr.bf16.mxu0 0
        %3023 = vmatpush1.bf16.xpose.msra.mxu0 %v2266
        %3024 = vmatprep.subr.bf16.mxu0 0
        %3025 = vmatpush2.bf16.xpose.msra.mxu0 %v2311
        %3026 = vmatprep.subr.bf16.mxu0 0
        %3027 = vmatpush2.bf16.xpose.msra.mxu0 %v2308
        %3028 = vmatprep.subr.bf16.mxu0 0
        %3029 = vmatpush2.bf16.xpose.msra.mxu0 %v2305
        %3030 = vmatprep.subr.bf16.mxu0 0
        %3031 = vmatpush2.bf16.xpose.msra.mxu0 %v2302
        %3032 = vmatprep.subr.bf16.mxu0 0
        %3033 = vmatpush2.bf16.xpose.msra.mxu0 %v2299
        %3034 = vmatprep.subr.bf16.mxu0 0
        %3035 = vmatpush2.bf16.xpose.msra.mxu0 %v2296
        %3036 = vmatprep.subr.bf16.mxu0 0
        %3037 = vmatpush2.bf16.xpose.msra.mxu0 %v2293
        %3038 = vmatprep.subr.bf16.mxu0 0
        %3039 = vmatpush2.bf16.xpose.msra.mxu0 %v2290
        %3040 = vmatprep.mubr.bf16.mxu0 0
        %3041 = vmatmul.mubr.bf16.gmra.mxu0 %v2023
        %v3042 = vpop.f32.mrf.mxu0
        %v3043 = vadd.f32 0.0, %v3042
        %v3044 = vpop.f32.mrf.mxu0
        %v3045 = vadd.f32 0.0, %v3044
        %v3046 = vpop.f32.mrf.mxu0
        %v3047 = vadd.f32 0.0, %v3046
        %v3048 = vpop.f32.mrf.mxu0
        %v3049 = vadd.f32 0.0, %v3048
        %3050 = vdwg.mxu0
        %3051 = vmatprep.subr.bf16.mxu0 0
        %3052 = vmatpush1.bf16.xpose.msra.mxu0 %v2335
        %3053 = vmatprep.subr.bf16.mxu0 0
        %3054 = vmatpush1.bf16.xpose.msra.mxu0 %v2332
        %3055 = vmatprep.subr.bf16.mxu0 0
        %3056 = vmatpush1.bf16.xpose.msra.mxu0 %v2329
        %3057 = vmatprep.subr.bf16.mxu0 0
        %3058 = vmatpush1.bf16.xpose.msra.mxu0 %v2326
        %3059 = vmatprep.subr.bf16.mxu0 0
        %3060 = vmatpush1.bf16.xpose.msra.mxu0 %v2323
        %3061 = vmatprep.subr.bf16.mxu0 0
        %3062 = vmatpush1.bf16.xpose.msra.mxu0 %v2320
        %3063 = vmatprep.subr.bf16.mxu0 0
        %3064 = vmatpush1.bf16.xpose.msra.mxu0 %v2317
        %3065 = vmatprep.subr.bf16.mxu0 0
        %3066 = vmatpush1.bf16.xpose.msra.mxu0 %v2314
        %3067 = vmatprep.subr.bf16.mxu0 0
        %3068 = vmatpush2.bf16.xpose.msra.mxu0 %v2359
        %3069 = vmatprep.subr.bf16.mxu0 0
        %3070 = vmatpush2.bf16.xpose.msra.mxu0 %v2356
        %3071 = vmatprep.subr.bf16.mxu0 0
        %3072 = vmatpush2.bf16.xpose.msra.mxu0 %v2353
        %3073 = vmatprep.subr.bf16.mxu0 0
        %3074 = vmatpush2.bf16.xpose.msra.mxu0 %v2350
        %3075 = vmatprep.subr.bf16.mxu0 0
        %3076 = vmatpush2.bf16.xpose.msra.mxu0 %v2347
        %3077 = vmatprep.subr.bf16.mxu0 0
        %3078 = vmatpush2.bf16.xpose.msra.mxu0 %v2344
        %3079 = vmatprep.subr.bf16.mxu0 0
        %3080 = vmatpush2.bf16.xpose.msra.mxu0 %v2341
        %3081 = vmatprep.subr.bf16.mxu0 0
        %3082 = vmatpush2.bf16.xpose.msra.mxu0 %v2338
        %3083 = vmatprep.mubr.bf16.mxu0 0
        %3084 = vmatmul.mubr.bf16.gmra.mxu0 %v2023
        %v3085 = vpop.f32.mrf.mxu0
        %v3086 = vadd.f32 0.0, %v3085
        %v3087 = vpop.f32.mrf.mxu0
        %v3088 = vadd.f32 0.0, %v3087
        %v3089 = vpop.f32.mrf.mxu0
        %v3090 = vadd.f32 0.0, %v3089
        %v3091 = vpop.f32.mrf.mxu0
        %v3092 = vadd.f32 0.0, %v3091
        %3093 = vdwg.mxu0
        %3094 = vmatprep.subr.bf16.mxu0 0
        %3095 = vmatpush1.bf16.xpose.msra.mxu0 %v2383
        %3096 = vmatprep.subr.bf16.mxu0 0
        %3097 = vmatpush1.bf16.xpose.msra.mxu0 %v2380
        %3098 = vmatprep.subr.bf16.mxu0 0
        %3099 = vmatpush1.bf16.xpose.msra.mxu0 %v2377
        %3100 = vmatprep.subr.bf16.mxu0 0
        %3101 = vmatpush1.bf16.xpose.msra.mxu0 %v2374
        %3102 = vmatprep.subr.bf16.mxu0 0
        %3103 = vmatpush1.bf16.xpose.msra.mxu0 %v2371
        %3104 = vmatprep.subr.bf16.mxu0 0
        %3105 = vmatpush1.bf16.xpose.msra.mxu0 %v2368
        %3106 = vmatprep.subr.bf16.mxu0 0
        %3107 = vmatpush1.bf16.xpose.msra.mxu0 %v2365
        %3108 = vmatprep.subr.bf16.mxu0 0
        %3109 = vmatpush1.bf16.xpose.msra.mxu0 %v2362
        %3110 = vmatprep.subr.bf16.mxu0 0
        %3111 = vmatpush2.bf16.xpose.msra.mxu0 %v2407
        %3112 = vmatprep.subr.bf16.mxu0 0
        %3113 = vmatpush2.bf16.xpose.msra.mxu0 %v2404
        %3114 = vmatprep.subr.bf16.mxu0 0
        %3115 = vmatpush2.bf16.xpose.msra.mxu0 %v2401
        %3116 = vmatprep.subr.bf16.mxu0 0
        %3117 = vmatpush2.bf16.xpose.msra.mxu0 %v2398
        %3118 = vmatprep.subr.bf16.mxu0 0
        %3119 = vmatpush2.bf16.xpose.msra.mxu0 %v2395
        %3120 = vmatprep.subr.bf16.mxu0 0
        %3121 = vmatpush2.bf16.xpose.msra.mxu0 %v2392
        %3122 = vmatprep.subr.bf16.mxu0 0
        %3123 = vmatpush2.bf16.xpose.msra.mxu0 %v2389
        %3124 = vmatprep.subr.bf16.mxu0 0
        %3125 = vmatpush2.bf16.xpose.msra.mxu0 %v2386
        %3126 = vmatprep.mubr.bf16.mxu0 0
        %3127 = vmatmul.mubr.bf16.gmra.mxu0 %v2023
        %v3128 = vpop.f32.mrf.mxu0
        %v3129 = vadd.f32 0.0, %v3128
        %v3130 = vpop.f32.mrf.mxu0
        %v3131 = vadd.f32 0.0, %v3130
        %v3132 = vpop.f32.mrf.mxu0
        %v3133 = vadd.f32 0.0, %v3132
        %v3134 = vpop.f32.mrf.mxu0
        %v3135 = vadd.f32 0.0, %v3134
        %3136 = vdwg.mxu0
        %3137 = vmatprep.subr.bf16.mxu0 0
        %3138 = vmatpush1.bf16.xpose.msra.mxu0 %v2431
        %3139 = vmatprep.subr.bf16.mxu0 0
        %3140 = vmatpush1.bf16.xpose.msra.mxu0 %v2428
        %3141 = vmatprep.subr.bf16.mxu0 0
        %3142 = vmatpush1.bf16.xpose.msra.mxu0 %v2425
        %3143 = vmatprep.subr.bf16.mxu0 0
        %3144 = vmatpush1.bf16.xpose.msra.mxu0 %v2422
        %3145 = vmatprep.subr.bf16.mxu0 0
        %3146 = vmatpush1.bf16.xpose.msra.mxu0 %v2419
        %3147 = vmatprep.subr.bf16.mxu0 0
        %3148 = vmatpush1.bf16.xpose.msra.mxu0 %v2416
        %3149 = vmatprep.subr.bf16.mxu0 0
        %3150 = vmatpush1.bf16.xpose.msra.mxu0 %v2413
        %3151 = vmatprep.subr.bf16.mxu0 0
        %3152 = vmatpush1.bf16.xpose.msra.mxu0 %v2410
        %3153 = vmatprep.subr.bf16.mxu0 0
        %3154 = vmatpush2.bf16.xpose.msra.mxu0 %v2455
        %3155 = vmatprep.subr.bf16.mxu0 0
        %3156 = vmatpush2.bf16.xpose.msra.mxu0 %v2452
        %3157 = vmatprep.subr.bf16.mxu0 0
        %3158 = vmatpush2.bf16.xpose.msra.mxu0 %v2449
        %3159 = vmatprep.subr.bf16.mxu0 0
        %3160 = vmatpush2.bf16.xpose.msra.mxu0 %v2446
        %3161 = vmatprep.subr.bf16.mxu0 0
        %3162 = vmatpush2.bf16.xpose.msra.mxu0 %v2443
        %3163 = vmatprep.subr.bf16.mxu0 0
        %3164 = vmatpush2.bf16.xpose.msra.mxu0 %v2440
        %3165 = vmatprep.subr.bf16.mxu0 0
        %3166 = vmatpush2.bf16.xpose.msra.mxu0 %v2437
        %3167 = vmatprep.subr.bf16.mxu0 0
        %3168 = vmatpush2.bf16.xpose.msra.mxu0 %v2434
        %3169 = vmatprep.mubr.bf16.mxu0 0
        %3170 = vmatmul.mubr.bf16.gmra.mxu0 %v2023
        %v3171 = vpop.f32.mrf.mxu0
        %v3172 = vadd.f32 0.0, %v3171
        %v3173 = vpop.f32.mrf.mxu0
        %v3174 = vadd.f32 0.0, %v3173
        %v3175 = vpop.f32.mrf.mxu0
        %v3176 = vadd.f32 0.0, %v3175
        %v3177 = vpop.f32.mrf.mxu0
        %v3178 = vadd.f32 0.0, %v3177
        %3179 = vdwg.mxu0
        %3180 = vmatprep.subr.bf16.mxu0 0
        %3181 = vmatpush1.bf16.xpose.msra.mxu0 %v2479
        %3182 = vmatprep.subr.bf16.mxu0 0
        %3183 = vmatpush1.bf16.xpose.msra.mxu0 %v2476
        %3184 = vmatprep.subr.bf16.mxu0 0
        %3185 = vmatpush1.bf16.xpose.msra.mxu0 %v2473
        %3186 = vmatprep.subr.bf16.mxu0 0
        %3187 = vmatpush1.bf16.xpose.msra.mxu0 %v2470
        %3188 = vmatprep.subr.bf16.mxu0 0
        %3189 = vmatpush1.bf16.xpose.msra.mxu0 %v2467
        %3190 = vmatprep.subr.bf16.mxu0 0
        %3191 = vmatpush1.bf16.xpose.msra.mxu0 %v2464
        %3192 = vmatprep.subr.bf16.mxu0 0
        %3193 = vmatpush1.bf16.xpose.msra.mxu0 %v2461
        %3194 = vmatprep.subr.bf16.mxu0 0
        %3195 = vmatpush1.bf16.xpose.msra.mxu0 %v2458
        %3196 = vmatprep.subr.bf16.mxu0 0
        %3197 = vmatpush2.bf16.xpose.msra.mxu0 %v2503
        %3198 = vmatprep.subr.bf16.mxu0 0
        %3199 = vmatpush2.bf16.xpose.msra.mxu0 %v2500
        %3200 = vmatprep.subr.bf16.mxu0 0
        %3201 = vmatpush2.bf16.xpose.msra.mxu0 %v2497
        %3202 = vmatprep.subr.bf16.mxu0 0
        %3203 = vmatpush2.bf16.xpose.msra.mxu0 %v2494
        %3204 = vmatprep.subr.bf16.mxu0 0
        %3205 = vmatpush2.bf16.xpose.msra.mxu0 %v2491
        %3206 = vmatprep.subr.bf16.mxu0 0
        %3207 = vmatpush2.bf16.xpose.msra.mxu0 %v2488
        %3208 = vmatprep.subr.bf16.mxu0 0
        %3209 = vmatpush2.bf16.xpose.msra.mxu0 %v2485
        %3210 = vmatprep.subr.bf16.mxu0 0
        %3211 = vmatpush2.bf16.xpose.msra.mxu0 %v2482
        %3212 = vmatprep.mubr.bf16.mxu0 0
        %3213 = vmatmul.mubr.bf16.gmra.mxu0 %v2023
        %v3214 = vpop.f32.mrf.mxu0
        %v3215 = vadd.f32 0.0, %v3214
        %v3216 = vpop.f32.mrf.mxu0
        %v3217 = vadd.f32 0.0, %v3216
        %v3218 = vpop.f32.mrf.mxu0
        %v3219 = vadd.f32 0.0, %v3218
        %v3220 = vpop.f32.mrf.mxu0
        %v3221 = vadd.f32 0.0, %v3220
        %3222 = vdwg.mxu0
        %3223 = vmatprep.subr.bf16.mxu0 0
        %3224 = vmatpush1.bf16.xpose.msra.mxu0 %v2527
        %3225 = vmatprep.subr.bf16.mxu0 0
        %3226 = vmatpush1.bf16.xpose.msra.mxu0 %v2524
        %3227 = vmatprep.subr.bf16.mxu0 0
        %3228 = vmatpush1.bf16.xpose.msra.mxu0 %v2521
        %3229 = vmatprep.subr.bf16.mxu0 0
        %3230 = vmatpush1.bf16.xpose.msra.mxu0 %v2518
        %3231 = vmatprep.subr.bf16.mxu0 0
        %3232 = vmatpush1.bf16.xpose.msra.mxu0 %v2515
        %3233 = vmatprep.subr.bf16.mxu0 0
        %3234 = vmatpush1.bf16.xpose.msra.mxu0 %v2512
        %3235 = vmatprep.subr.bf16.mxu0 0
        %3236 = vmatpush1.bf16.xpose.msra.mxu0 %v2509
        %3237 = vmatprep.subr.bf16.mxu0 0
        %3238 = vmatpush1.bf16.xpose.msra.mxu0 %v2506
        %3239 = vmatprep.subr.bf16.mxu0 0
        %3240 = vmatpush2.bf16.xpose.msra.mxu0 %v2551
        %3241 = vmatprep.subr.bf16.mxu0 0
        %3242 = vmatpush2.bf16.xpose.msra.mxu0 %v2548
        %3243 = vmatprep.subr.bf16.mxu0 0
        %3244 = vmatpush2.bf16.xpose.msra.mxu0 %v2545
        %3245 = vmatprep.subr.bf16.mxu0 0
        %3246 = vmatpush2.bf16.xpose.msra.mxu0 %v2542
        %3247 = vmatprep.subr.bf16.mxu0 0
        %3248 = vmatpush2.bf16.xpose.msra.mxu0 %v2539
        %3249 = vmatprep.subr.bf16.mxu0 0
        %3250 = vmatpush2.bf16.xpose.msra.mxu0 %v2536
        %3251 = vmatprep.subr.bf16.mxu0 0
        %3252 = vmatpush2.bf16.xpose.msra.mxu0 %v2533
        %3253 = vmatprep.subr.bf16.mxu0 0
        %3254 = vmatpush2.bf16.xpose.msra.mxu0 %v2530
        %3255 = vmatprep.mubr.bf16.mxu0 0
        %3256 = vmatmul.mubr.bf16.gmra.mxu0 %v2023
        %v3257 = vpop.f32.mrf.mxu0
        %v3258 = vadd.f32 0.0, %v3257
        %v3259 = vpop.f32.mrf.mxu0
        %v3260 = vadd.f32 0.0, %v3259
        %v3261 = vpop.f32.mrf.mxu0
        %v3262 = vadd.f32 0.0, %v3261
        %v3263 = vpop.f32.mrf.mxu0
        %v3264 = vadd.f32 0.0, %v3263
        %3265 = vdwg.mxu0
        %3266 = vmatprep.subr.bf16.mxu0 0
        %3267 = vmatpush1.bf16.xpose.msra.mxu0 %v2575
        %3268 = vmatprep.subr.bf16.mxu0 0
        %3269 = vmatpush1.bf16.xpose.msra.mxu0 %v2572
        %3270 = vmatprep.subr.bf16.mxu0 0
        %3271 = vmatpush1.bf16.xpose.msra.mxu0 %v2569
        %3272 = vmatprep.subr.bf16.mxu0 0
        %3273 = vmatpush1.bf16.xpose.msra.mxu0 %v2566
        %3274 = vmatprep.subr.bf16.mxu0 0
        %3275 = vmatpush1.bf16.xpose.msra.mxu0 %v2563
        %3276 = vmatprep.subr.bf16.mxu0 0
        %3277 = vmatpush1.bf16.xpose.msra.mxu0 %v2560
        %3278 = vmatprep.subr.bf16.mxu0 0
        %3279 = vmatpush1.bf16.xpose.msra.mxu0 %v2557
        %3280 = vmatprep.subr.bf16.mxu0 0
        %3281 = vmatpush1.bf16.xpose.msra.mxu0 %v2554
        %3282 = vmatprep.subr.bf16.mxu0 0
        %3283 = vmatpush2.bf16.xpose.msra.mxu0 %v2599
        %3284 = vmatprep.subr.bf16.mxu0 0
        %3285 = vmatpush2.bf16.xpose.msra.mxu0 %v2596
        %3286 = vmatprep.subr.bf16.mxu0 0
        %3287 = vmatpush2.bf16.xpose.msra.mxu0 %v2593
        %3288 = vmatprep.subr.bf16.mxu0 0
        %3289 = vmatpush2.bf16.xpose.msra.mxu0 %v2590
        %3290 = vmatprep.subr.bf16.mxu0 0
        %3291 = vmatpush2.bf16.xpose.msra.mxu0 %v2587
        %3292 = vmatprep.subr.bf16.mxu0 0
        %3293 = vmatpush2.bf16.xpose.msra.mxu0 %v2584
        %3294 = vmatprep.subr.bf16.mxu0 0
        %3295 = vmatpush2.bf16.xpose.msra.mxu0 %v2581
        %3296 = vmatprep.subr.bf16.mxu0 0
        %3297 = vmatpush2.bf16.xpose.msra.mxu0 %v2578
        %3298 = vmatprep.mubr.bf16.mxu0 0
        %3299 = vmatmul.mubr.bf16.gmra.mxu0 %v2023
        %v3300 = vpop.f32.mrf.mxu0
        %v3301 = vadd.f32 0.0, %v3300
        %v3302 = vpop.f32.mrf.mxu0
        %v3303 = vadd.f32 0.0, %v3302
        %v3304 = vpop.f32.mrf.mxu0
        %v3305 = vadd.f32 0.0, %v3304
        %v3306 = vpop.f32.mrf.mxu0
        %v3307 = vadd.f32 0.0, %v3306
        %3308 = vdwg.mxu0
        %3309 = vmatprep.subr.bf16.mxu0 0
        %3310 = vmatpush1.bf16.xpose.msra.mxu0 %v2623
        %3311 = vmatprep.subr.bf16.mxu0 0
        %3312 = vmatpush1.bf16.xpose.msra.mxu0 %v2620
        %3313 = vmatprep.subr.bf16.mxu0 0
        %3314 = vmatpush1.bf16.xpose.msra.mxu0 %v2617
        %3315 = vmatprep.subr.bf16.mxu0 0
        %3316 = vmatpush1.bf16.xpose.msra.mxu0 %v2614
        %3317 = vmatprep.subr.bf16.mxu0 0
        %3318 = vmatpush1.bf16.xpose.msra.mxu0 %v2611
        %3319 = vmatprep.subr.bf16.mxu0 0
        %3320 = vmatpush1.bf16.xpose.msra.mxu0 %v2608
        %3321 = vmatprep.subr.bf16.mxu0 0
        %3322 = vmatpush1.bf16.xpose.msra.mxu0 %v2605
        %3323 = vmatprep.subr.bf16.mxu0 0
        %3324 = vmatpush1.bf16.xpose.msra.mxu0 %v2602
        %3325 = vmatprep.subr.bf16.mxu0 0
        %3326 = vmatpush2.bf16.xpose.msra.mxu0 %v2647
        %3327 = vmatprep.subr.bf16.mxu0 0
        %3328 = vmatpush2.bf16.xpose.msra.mxu0 %v2644
        %3329 = vmatprep.subr.bf16.mxu0 0
        %3330 = vmatpush2.bf16.xpose.msra.mxu0 %v2641
        %3331 = vmatprep.subr.bf16.mxu0 0
        %3332 = vmatpush2.bf16.xpose.msra.mxu0 %v2638
        %3333 = vmatprep.subr.bf16.mxu0 0
        %3334 = vmatpush2.bf16.xpose.msra.mxu0 %v2635
        %3335 = vmatprep.subr.bf16.mxu0 0
        %3336 = vmatpush2.bf16.xpose.msra.mxu0 %v2632
        %3337 = vmatprep.subr.bf16.mxu0 0
        %3338 = vmatpush2.bf16.xpose.msra.mxu0 %v2629
        %3339 = vmatprep.subr.bf16.mxu0 0
        %3340 = vmatpush2.bf16.xpose.msra.mxu0 %v2626
        %3341 = vmatprep.mubr.bf16.mxu0 0
        %3342 = vmatmul.mubr.bf16.gmra.mxu0 %v2023
        %v3343 = vpop.f32.mrf.mxu0
        %v3344 = vadd.f32 0.0, %v3343
        %v3345 = vpop.f32.mrf.mxu0
        %v3346 = vadd.f32 0.0, %v3345
        %v3347 = vpop.f32.mrf.mxu0
        %v3348 = vadd.f32 0.0, %v3347
        %v3349 = vpop.f32.mrf.mxu0
        %v3350 = vadd.f32 0.0, %v3349
        %3351 = vdwg.mxu0
        %3352 = vmatprep.subr.bf16.mxu0 0
        %3353 = vmatpush1.bf16.xpose.msra.mxu0 %v2671
        %3354 = vmatprep.subr.bf16.mxu0 0
        %3355 = vmatpush1.bf16.xpose.msra.mxu0 %v2668
        %3356 = vmatprep.subr.bf16.mxu0 0
        %3357 = vmatpush1.bf16.xpose.msra.mxu0 %v2665
        %3358 = vmatprep.subr.bf16.mxu0 0
        %3359 = vmatpush1.bf16.xpose.msra.mxu0 %v2662
        %3360 = vmatprep.subr.bf16.mxu0 0
        %3361 = vmatpush1.bf16.xpose.msra.mxu0 %v2659
        %3362 = vmatprep.subr.bf16.mxu0 0
        %3363 = vmatpush1.bf16.xpose.msra.mxu0 %v2656
        %3364 = vmatprep.subr.bf16.mxu0 0
        %3365 = vmatpush1.bf16.xpose.msra.mxu0 %v2653
        %3366 = vmatprep.subr.bf16.mxu0 0
        %3367 = vmatpush1.bf16.xpose.msra.mxu0 %v2650
        %3368 = vmatprep.subr.bf16.mxu0 0
        %3369 = vmatpush2.bf16.xpose.msra.mxu0 %v2695
        %3370 = vmatprep.subr.bf16.mxu0 0
        %3371 = vmatpush2.bf16.xpose.msra.mxu0 %v2692
        %3372 = vmatprep.subr.bf16.mxu0 0
        %3373 = vmatpush2.bf16.xpose.msra.mxu0 %v2689
        %3374 = vmatprep.subr.bf16.mxu0 0
        %3375 = vmatpush2.bf16.xpose.msra.mxu0 %v2686
        %3376 = vmatprep.subr.bf16.mxu0 0
        %3377 = vmatpush2.bf16.xpose.msra.mxu0 %v2683
        %3378 = vmatprep.subr.bf16.mxu0 0
        %3379 = vmatpush2.bf16.xpose.msra.mxu0 %v2680
        %3380 = vmatprep.subr.bf16.mxu0 0
        %3381 = vmatpush2.bf16.xpose.msra.mxu0 %v2677
        %3382 = vmatprep.subr.bf16.mxu0 0
        %3383 = vmatpush2.bf16.xpose.msra.mxu0 %v2674
        %3384 = vmatprep.mubr.bf16.mxu0 0
        %3385 = vmatmul.mubr.bf16.gmra.mxu0 %v2023
        %v3386 = vpop.f32.mrf.mxu0
        %v3387 = vadd.f32 0.0, %v3386
        %v3388 = vpop.f32.mrf.mxu0
        %v3389 = vadd.f32 0.0, %v3388
        %v3390 = vpop.f32.mrf.mxu0
        %v3391 = vadd.f32 0.0, %v3390
        %v3392 = vpop.f32.mrf.mxu0
        %v3393 = vadd.f32 0.0, %v3392
        %3394 = vdwg.mxu0
        %3395 = vmatprep.subr.bf16.mxu0 0
        %3396 = vmatpush1.bf16.xpose.msra.mxu0 %v2719
        %3397 = vmatprep.subr.bf16.mxu0 0
        %3398 = vmatpush1.bf16.xpose.msra.mxu0 %v2716
        %3399 = vmatprep.subr.bf16.mxu0 0
        %3400 = vmatpush1.bf16.xpose.msra.mxu0 %v2713
        %3401 = vmatprep.subr.bf16.mxu0 0
        %3402 = vmatpush1.bf16.xpose.msra.mxu0 %v2710
        %3403 = vmatprep.subr.bf16.mxu0 0
        %3404 = vmatpush1.bf16.xpose.msra.mxu0 %v2707
        %3405 = vmatprep.subr.bf16.mxu0 0
        %3406 = vmatpush1.bf16.xpose.msra.mxu0 %v2704
        %3407 = vmatprep.subr.bf16.mxu0 0
        %3408 = vmatpush1.bf16.xpose.msra.mxu0 %v2701
        %3409 = vmatprep.subr.bf16.mxu0 0
        %3410 = vmatpush1.bf16.xpose.msra.mxu0 %v2698
        %3411 = vmatprep.subr.bf16.mxu0 0
        %3412 = vmatpush2.bf16.xpose.msra.mxu0 %v2743
        %3413 = vmatprep.subr.bf16.mxu0 0
        %3414 = vmatpush2.bf16.xpose.msra.mxu0 %v2740
        %3415 = vmatprep.subr.bf16.mxu0 0
        %3416 = vmatpush2.bf16.xpose.msra.mxu0 %v2737
        %3417 = vmatprep.subr.bf16.mxu0 0
        %3418 = vmatpush2.bf16.xpose.msra.mxu0 %v2734
        %3419 = vmatprep.subr.bf16.mxu0 0
        %3420 = vmatpush2.bf16.xpose.msra.mxu0 %v2731
        %3421 = vmatprep.subr.bf16.mxu0 0
        %3422 = vmatpush2.bf16.xpose.msra.mxu0 %v2728
        %3423 = vmatprep.subr.bf16.mxu0 0
        %3424 = vmatpush2.bf16.xpose.msra.mxu0 %v2725
        %3425 = vmatprep.subr.bf16.mxu0 0
        %3426 = vmatpush2.bf16.xpose.msra.mxu0 %v2722
        %3427 = vmatprep.mubr.bf16.mxu0 0
        %3428 = vmatmul.mubr.bf16.gmra.mxu0 %v2023
        %v3429 = vpop.f32.mrf.mxu0
        %v3430 = vadd.f32 0.0, %v3429
        %v3431 = vpop.f32.mrf.mxu0
        %v3432 = vadd.f32 0.0, %v3431
        %v3433 = vpop.f32.mrf.mxu0
        %v3434 = vadd.f32 0.0, %v3433
        %v3435 = vpop.f32.mrf.mxu0
        %v3436 = vadd.f32 0.0, %v3435
        %3437 = vdwg.mxu0
        %3438 = vmatprep.subr.bf16.mxu0 0
        %3439 = vmatpush1.bf16.xpose.msra.mxu0 %v2767
        %3440 = vmatprep.subr.bf16.mxu0 0
        %3441 = vmatpush1.bf16.xpose.msra.mxu0 %v2764
        %3442 = vmatprep.subr.bf16.mxu0 0
        %3443 = vmatpush1.bf16.xpose.msra.mxu0 %v2761
        %3444 = vmatprep.subr.bf16.mxu0 0
        %3445 = vmatpush1.bf16.xpose.msra.mxu0 %v2758
        %3446 = vmatprep.subr.bf16.mxu0 0
        %3447 = vmatpush1.bf16.xpose.msra.mxu0 %v2755
        %3448 = vmatprep.subr.bf16.mxu0 0
        %3449 = vmatpush1.bf16.xpose.msra.mxu0 %v2752
        %3450 = vmatprep.subr.bf16.mxu0 0
        %3451 = vmatpush1.bf16.xpose.msra.mxu0 %v2749
        %3452 = vmatprep.subr.bf16.mxu0 0
        %3453 = vmatpush1.bf16.xpose.msra.mxu0 %v2746
        %3454 = vmatprep.subr.bf16.mxu0 0
        %3455 = vmatpush2.bf16.xpose.msra.mxu0 %v2791
        %3456 = vmatprep.subr.bf16.mxu0 0
        %3457 = vmatpush2.bf16.xpose.msra.mxu0 %v2788
        %3458 = vmatprep.subr.bf16.mxu0 0
        %3459 = vmatpush2.bf16.xpose.msra.mxu0 %v2785
        %3460 = vmatprep.subr.bf16.mxu0 0
        %3461 = vmatpush2.bf16.xpose.msra.mxu0 %v2782
        %3462 = vmatprep.subr.bf16.mxu0 0
        %3463 = vmatpush2.bf16.xpose.msra.mxu0 %v2779
        %3464 = vmatprep.subr.bf16.mxu0 0
        %3465 = vmatpush2.bf16.xpose.msra.mxu0 %v2776
        %3466 = vmatprep.subr.bf16.mxu0 0
        %3467 = vmatpush2.bf16.xpose.msra.mxu0 %v2773
        %3468 = vmatprep.subr.bf16.mxu0 0
        %3469 = vmatpush2.bf16.xpose.msra.mxu0 %v2770
        %3470 = vmatprep.mubr.bf16.mxu0 0
        %3471 = vmatmul.mubr.bf16.gmra.mxu0 %v2023
        %v3472 = vpop.f32.mrf.mxu0
        %v3473 = vadd.f32 0.0, %v3472
        %v3474 = vpop.f32.mrf.mxu0
        %v3475 = vadd.f32 0.0, %v3474
        %v3476 = vpop.f32.mrf.mxu0
        %v3477 = vadd.f32 0.0, %v3476
        %v3478 = vpop.f32.mrf.mxu0
        %v3479 = vadd.f32 0.0, %v3478
        %3480 = vdwg.mxu0
        %v3481 = vld [vmem:[%s3] sm:$0xff]
        %v3482 = vld [vmem:[%s3 + $0x8] sm:$0xff]
        %v3483 = vlaneseq
        %v3484 = vand.u32 %v3483, 127
        %v3485 = vadd.s32 %v3484, 128
        %v3486 = vadd.s32 %v3484, 256
        %v3487 = vadd.s32 %v3484, 384
        %v3488 = vadd.s32 %v3484, 512
        %v3489 = vadd.s32 %v3484, 640
        %v3490 = vadd.s32 %v3484, 768
        %v3491 = vadd.s32 %v3484, 896
        %v3492 = vadd.s32 %v3484, 1024
        %v3493 = vadd.s32 %v3484, 1152
        %v3494 = vadd.s32 %v3484, 1280
        %v3495 = vadd.s32 %v3484, 1408
        %v3496 = vadd.s32 %v3484, 1536
        %v3497 = vadd.s32 %v3484, 1664
        %v3498 = vadd.s32 %v3484, 1792
        %v3499 = vadd.s32 %v3484, 1920
        %v3500 = vadd.s32 %v3484, 2048
        %v3501 = vadd.s32 %v3484, 2176
        %v3502 = vadd.s32 %v3484, 2304
        %v3503 = vadd.s32 %v3484, 2432
        %v3504 = vadd.s32 %v3484, 2560
        %v3505 = vadd.s32 %v3484, 2688
        %v3506 = vadd.s32 %v3484, 2816
        %v3507 = vadd.s32 %v3484, 2944
        %v3508 = vadd.s32 %v3484, 3072
        %v3509 = vadd.s32 %v3484, 3200
        %v3510 = vadd.s32 %v3484, 3328
        %v3511 = vadd.s32 %v3484, 3456
        %v3512 = vadd.s32 %v3484, 3584
        %v3513 = vadd.s32 %v3484, 3712
        %v3514 = vadd.s32 %v3484, 3840
        %v3515 = vadd.s32 %v3484, 3968
        %s3516 = smul.u32 %s16, 4096
        %v3517 = vstv %s3516
        %v3518 = vadd.s32 %v3484, %v3517
        %v3519 = vadd.s32 %v3485, %v3517
        %v3520 = vadd.s32 %v3486, %v3517
        %v3521 = vadd.s32 %v3487, %v3517
        %v3522 = vadd.s32 %v3488, %v3517
        %v3523 = vadd.s32 %v3489, %v3517
        %v3524 = vadd.s32 %v3490, %v3517
        %v3525 = vadd.s32 %v3491, %v3517
        %v3526 = vadd.s32 %v3492, %v3517
        %v3527 = vadd.s32 %v3493, %v3517
        %v3528 = vadd.s32 %v3494, %v3517
        %v3529 = vadd.s32 %v3495, %v3517
        %v3530 = vadd.s32 %v3496, %v3517
        %v3531 = vadd.s32 %v3497, %v3517
        %v3532 = vadd.s32 %v3498, %v3517
        %v3533 = vadd.s32 %v3499, %v3517
        %v3534 = vadd.s32 %v3500, %v3517
        %v3535 = vadd.s32 %v3501, %v3517
        %v3536 = vadd.s32 %v3502, %v3517
        %v3537 = vadd.s32 %v3503, %v3517
        %v3538 = vadd.s32 %v3504, %v3517
        %v3539 = vadd.s32 %v3505, %v3517
        %v3540 = vadd.s32 %v3506, %v3517
        %v3541 = vadd.s32 %v3507, %v3517
        %v3542 = vadd.s32 %v3508, %v3517
        %v3543 = vadd.s32 %v3509, %v3517
        %v3544 = vadd.s32 %v3510, %v3517
        %v3545 = vadd.s32 %v3511, %v3517
        %v3546 = vadd.s32 %v3512, %v3517
        %v3547 = vadd.s32 %v3513, %v3517
        %v3548 = vadd.s32 %v3514, %v3517
        %v3549 = vadd.s32 %v3515, %v3517
        %vm3550 = vcmp.lt.s32.totalorder %v3518, 32128
        %vm3551 = vcmp.lt.s32.totalorder %v3519, 32128
        %vm3552 = vcmp.lt.s32.totalorder %v3520, 32128
        %vm3553 = vcmp.lt.s32.totalorder %v3521, 32128
        %vm3554 = vcmp.lt.s32.totalorder %v3522, 32128
        %vm3555 = vcmp.lt.s32.totalorder %v3523, 32128
        %vm3556 = vcmp.lt.s32.totalorder %v3524, 32128
        %vm3557 = vcmp.lt.s32.totalorder %v3525, 32128
        %vm3558 = vcmp.lt.s32.totalorder %v3526, 32128
        %vm3559 = vcmp.lt.s32.totalorder %v3527, 32128
        %vm3560 = vcmp.lt.s32.totalorder %v3528, 32128
        %vm3561 = vcmp.lt.s32.totalorder %v3529, 32128
        %vm3562 = vcmp.lt.s32.totalorder %v3530, 32128
        %vm3563 = vcmp.lt.s32.totalorder %v3531, 32128
        %vm3564 = vcmp.lt.s32.totalorder %v3532, 32128
        %vm3565 = vcmp.lt.s32.totalorder %v3533, 32128
        %vm3566 = vcmp.lt.s32.totalorder %v3534, 32128
        %vm3567 = vcmp.lt.s32.totalorder %v3535, 32128
        %vm3568 = vcmp.lt.s32.totalorder %v3536, 32128
        %vm3569 = vcmp.lt.s32.totalorder %v3537, 32128
        %vm3570 = vcmp.lt.s32.totalorder %v3538, 32128
        %vm3571 = vcmp.lt.s32.totalorder %v3539, 32128
        %vm3572 = vcmp.lt.s32.totalorder %v3540, 32128
        %vm3573 = vcmp.lt.s32.totalorder %v3541, 32128
        %vm3574 = vcmp.lt.s32.totalorder %v3542, 32128
        %vm3575 = vcmp.lt.s32.totalorder %v3543, 32128
        %vm3576 = vcmp.lt.s32.totalorder %v3544, 32128
        %vm3577 = vcmp.lt.s32.totalorder %v3545, 32128
        %vm3578 = vcmp.lt.s32.totalorder %v3546, 32128
        %vm3579 = vcmp.lt.s32.totalorder %v3547, 32128
        %vm3580 = vcmp.lt.s32.totalorder %v3548, 32128
        %vm3581 = vcmp.lt.s32.totalorder %v3549, 32128
        %v3582 = vsel %vm3550, %v2828, -1e+09
        %v3583 = vsel %vm3551, %v2830, -1e+09
        %v3584 = vsel %vm3552, %v2871, -1e+09
        %v3585 = vsel %vm3553, %v2873, -1e+09
        %v3586 = vsel %vm3554, %v2914, -1e+09
        %v3587 = vsel %vm3555, %v2916, -1e+09
        %v3588 = vsel %vm3556, %v2957, -1e+09
        %v3589 = vsel %vm3557, %v2959, -1e+09
        %v3590 = vsel %vm3558, %v3000, -1e+09
        %v3591 = vsel %vm3559, %v3002, -1e+09
        %v3592 = vsel %vm3560, %v3043, -1e+09
        %v3593 = vsel %vm3561, %v3045, -1e+09
        %v3594 = vsel %vm3562, %v3086, -1e+09
        %v3595 = vsel %vm3563, %v3088, -1e+09
        %v3596 = vsel %vm3564, %v3129, -1e+09
        %v3597 = vsel %vm3565, %v3131, -1e+09
        %v3598 = vsel %vm3566, %v3172, -1e+09
        %v3599 = vsel %vm3567, %v3174, -1e+09
        %v3600 = vsel %vm3568, %v3215, -1e+09
        %v3601 = vsel %vm3569, %v3217, -1e+09
        %v3602 = vsel %vm3570, %v3258, -1e+09
        %v3603 = vsel %vm3571, %v3260, -1e+09
        %v3604 = vsel %vm3572, %v3301, -1e+09
        %v3605 = vsel %vm3573, %v3303, -1e+09
        %v3606 = vsel %vm3574, %v3344, -1e+09
        %v3607 = vsel %vm3575, %v3346, -1e+09
        %v3608 = vsel %vm3576, %v3387, -1e+09
        %v3609 = vsel %vm3577, %v3389, -1e+09
        %v3610 = vsel %vm3578, %v3430, -1e+09
        %v3611 = vsel %vm3579, %v3432, -1e+09
        %v3612 = vsel %vm3580, %v3473, -1e+09
        %v3613 = vsel %vm3581, %v3475, -1e+09
        %v3614 = vsel %vm3550, %v2832, -1e+09
        %v3615 = vsel %vm3551, %v2834, -1e+09
        %v3616 = vsel %vm3552, %v2875, -1e+09
        %v3617 = vsel %vm3553, %v2877, -1e+09
        %v3618 = vsel %vm3554, %v2918, -1e+09
        %v3619 = vsel %vm3555, %v2920, -1e+09
        %v3620 = vsel %vm3556, %v2961, -1e+09
        %v3621 = vsel %vm3557, %v2963, -1e+09
        %v3622 = vsel %vm3558, %v3004, -1e+09
        %v3623 = vsel %vm3559, %v3006, -1e+09
        %v3624 = vsel %vm3560, %v3047, -1e+09
        %v3625 = vsel %vm3561, %v3049, -1e+09
        %v3626 = vsel %vm3562, %v3090, -1e+09
        %v3627 = vsel %vm3563, %v3092, -1e+09
        %v3628 = vsel %vm3564, %v3133, -1e+09
        %v3629 = vsel %vm3565, %v3135, -1e+09
        %v3630 = vsel %vm3566, %v3176, -1e+09
        %v3631 = vsel %vm3567, %v3178, -1e+09
        %v3632 = vsel %vm3568, %v3219, -1e+09
        %v3633 = vsel %vm3569, %v3221, -1e+09
        %v3634 = vsel %vm3570, %v3262, -1e+09
        %v3635 = vsel %vm3571, %v3264, -1e+09
        %v3636 = vsel %vm3572, %v3305, -1e+09
        %v3637 = vsel %vm3573, %v3307, -1e+09
        %v3638 = vsel %vm3574, %v3348, -1e+09
        %v3639 = vsel %vm3575, %v3350, -1e+09
        %v3640 = vsel %vm3576, %v3391, -1e+09
        %v3641 = vsel %vm3577, %v3393, -1e+09
        %v3642 = vsel %vm3578, %v3434, -1e+09
        %v3643 = vsel %vm3579, %v3436, -1e+09
        %v3644 = vsel %vm3580, %v3477, -1e+09
        %v3645 = vsel %vm3581, %v3479, -1e+09
        %v3646 = vld [vmem:[#allocation2] sm:$0xff]
        %v3647 = vld [vmem:[#allocation2 + $0x8] sm:$0xff]
        %v3648 = vmax.f32 %v3582, %v3584
        %v3649 = vmax.f32 %v3583, %v3585
        %v3650 = vmax.f32 %v3648, %v3586
        %v3651 = vmax.f32 %v3649, %v3587
        %v3652 = vmax.f32 %v3650, %v3588
        %v3653 = vmax.f32 %v3651, %v3589
        %v3654 = vmax.f32 %v3652, %v3590
        %v3655 = vmax.f32 %v3653, %v3591
        %v3656 = vmax.f32 %v3654, %v3592
        %v3657 = vmax.f32 %v3655, %v3593
        %v3658 = vmax.f32 %v3656, %v3594
        %v3659 = vmax.f32 %v3657, %v3595
        %v3660 = vmax.f32 %v3658, %v3596
        %v3661 = vmax.f32 %v3659, %v3597
        %v3662 = vmax.f32 %v3660, %v3598
        %v3663 = vmax.f32 %v3661, %v3599
        %v3664 = vmax.f32 %v3662, %v3600
        %v3665 = vmax.f32 %v3663, %v3601
        %v3666 = vmax.f32 %v3664, %v3602
        %v3667 = vmax.f32 %v3665, %v3603
        %v3668 = vmax.f32 %v3666, %v3604
        %v3669 = vmax.f32 %v3667, %v3605
        %v3670 = vmax.f32 %v3668, %v3606
        %v3671 = vmax.f32 %v3669, %v3607
        %v3672 = vmax.f32 %v3670, %v3608
        %v3673 = vmax.f32 %v3671, %v3609
        %v3674 = vmax.f32 %v3672, %v3610
        %v3675 = vmax.f32 %v3673, %v3611
        %v3676 = vmax.f32 %v3674, %v3612
        %v3677 = vmax.f32 %v3675, %v3613
        %v3678 = vmax.f32 %v3676, %v3677
        %3679 = vmax.xlane.f32.xlu0 %v3678
        %v3680 = vpop.xlane.xlu0 %3679
        %v3681 = vmax.f32 %v3614, %v3616
        %v3682 = vmax.f32 %v3615, %v3617
        %v3683 = vmax.f32 %v3681, %v3618
        %v3684 = vmax.f32 %v3682, %v3619
        %v3685 = vmax.f32 %v3683, %v3620
        %v3686 = vmax.f32 %v3684, %v3621
        %v3687 = vmax.f32 %v3685, %v3622
        %v3688 = vmax.f32 %v3686, %v3623
        %v3689 = vmax.f32 %v3687, %v3624
        %v3690 = vmax.f32 %v3688, %v3625
        %v3691 = vmax.f32 %v3689, %v3626
        %v3692 = vmax.f32 %v3690, %v3627
        %v3693 = vmax.f32 %v3691, %v3628
        %v3694 = vmax.f32 %v3692, %v3629
        %v3695 = vmax.f32 %v3693, %v3630
        %v3696 = vmax.f32 %v3694, %v3631
        %v3697 = vmax.f32 %v3695, %v3632
        %v3698 = vmax.f32 %v3696, %v3633
        %v3699 = vmax.f32 %v3697, %v3634
        %v3700 = vmax.f32 %v3698, %v3635
        %v3701 = vmax.f32 %v3699, %v3636
        %v3702 = vmax.f32 %v3700, %v3637
        %v3703 = vmax.f32 %v3701, %v3638
        %v3704 = vmax.f32 %v3702, %v3639
        %v3705 = vmax.f32 %v3703, %v3640
        %v3706 = vmax.f32 %v3704, %v3641
        %v3707 = vmax.f32 %v3705, %v3642
        %v3708 = vmax.f32 %v3706, %v3643
        %v3709 = vmax.f32 %v3707, %v3644
        %v3710 = vmax.f32 %v3708, %v3645
        %v3711 = vmax.f32 %v3709, %v3710
        %3712 = vmax.xlane.f32.xlu0 %v3711
        %v3713 = vpop.xlane.xlu0 %3712
        %v3714 = vmax.f32 %v3646, %v3680
        %v3715 = vmax.f32 %v3647, %v3713
        %v3716 = vsub.f32 %v3646, %v3714
        %v3717 = vsub.f32 %v3647, %v3715
        %v3718 = vmul.f32 %v3716, 1.442695
        %v3719 = vpow.pop %v3718
        %v3720 = vmul.f32 %v3717, 1.442695
        %v3721 = vpow.pop %v3720
        %v3722 = vld [vmem:[#allocation3] sm:$0xff]
        %v3723 = vld [vmem:[#allocation3 + $0x8] sm:$0xff]
        %v3724 = vmul.f32 %v3719, %v3722
        %v3725 = vmul.f32 %v3721, %v3723
        %3727 = vset.pattern.permute.xlu0 0
        %3728 = vperm.xlu0 %3727, %v3714
        %v3729 = vpop.permute.xlu0 %3728
        %3732 = vset.pattern.permute.xlu0 0
        %3733 = vperm.xlu0 %3732, %v3715
        %v3734 = vpop.permute.xlu0 %3733
        %v3736 = vsub.f32 %v3582, %v3729
        %v3737 = vsub.f32 %v3583, %v3729
        %v3738 = vsub.f32 %v3584, %v3729
        %v3739 = vsub.f32 %v3585, %v3729
        %v3740 = vsub.f32 %v3586, %v3729
        %v3741 = vsub.f32 %v3587, %v3729
        %v3742 = vsub.f32 %v3588, %v3729
        %v3743 = vsub.f32 %v3589, %v3729
        %v3744 = vsub.f32 %v3590, %v3729
        %v3745 = vsub.f32 %v3591, %v3729
        %v3746 = vsub.f32 %v3592, %v3729
        %v3747 = vsub.f32 %v3593, %v3729
        %v3748 = vsub.f32 %v3594, %v3729
        %v3749 = vsub.f32 %v3595, %v3729
        %v3750 = vsub.f32 %v3596, %v3729
        %v3751 = vsub.f32 %v3597, %v3729
        %v3752 = vsub.f32 %v3598, %v3729
        %v3753 = vsub.f32 %v3599, %v3729
        %v3754 = vsub.f32 %v3600, %v3729
        %v3755 = vsub.f32 %v3601, %v3729
        %v3756 = vsub.f32 %v3602, %v3729
        %v3757 = vsub.f32 %v3603, %v3729
        %v3758 = vsub.f32 %v3604, %v3729
        %v3759 = vsub.f32 %v3605, %v3729
        %v3760 = vsub.f32 %v3606, %v3729
        %v3761 = vsub.f32 %v3607, %v3729
        %v3762 = vsub.f32 %v3608, %v3729
        %v3763 = vsub.f32 %v3609, %v3729
        %v3764 = vsub.f32 %v3610, %v3729
        %v3765 = vsub.f32 %v3611, %v3729
        %v3766 = vsub.f32 %v3612, %v3729
        %v3767 = vsub.f32 %v3613, %v3729
        %v3768 = vsub.f32 %v3614, %v3734
        %v3769 = vsub.f32 %v3615, %v3734
        %v3770 = vsub.f32 %v3616, %v3734
        %v3771 = vsub.f32 %v3617, %v3734
        %v3772 = vsub.f32 %v3618, %v3734
        %v3773 = vsub.f32 %v3619, %v3734
        %v3774 = vsub.f32 %v3620, %v3734
        %v3775 = vsub.f32 %v3621, %v3734
        %v3776 = vsub.f32 %v3622, %v3734
        %v3777 = vsub.f32 %v3623, %v3734
        %v3778 = vsub.f32 %v3624, %v3734
        %v3779 = vsub.f32 %v3625, %v3734
        %v3780 = vsub.f32 %v3626, %v3734
        %v3781 = vsub.f32 %v3627, %v3734
        %v3782 = vsub.f32 %v3628, %v3734
        %v3783 = vsub.f32 %v3629, %v3734
        %v3784 = vsub.f32 %v3630, %v3734
        %v3785 = vsub.f32 %v3631, %v3734
        %v3786 = vsub.f32 %v3632, %v3734
        %v3787 = vsub.f32 %v3633, %v3734
        %v3788 = vsub.f32 %v3634, %v3734
        %v3789 = vsub.f32 %v3635, %v3734
        %v3790 = vsub.f32 %v3636, %v3734
        %v3791 = vsub.f32 %v3637, %v3734
        %v3792 = vsub.f32 %v3638, %v3734
        %v3793 = vsub.f32 %v3639, %v3734
        %v3794 = vsub.f32 %v3640, %v3734
        %v3795 = vsub.f32 %v3641, %v3734
        %v3796 = vsub.f32 %v3642, %v3734
        %v3797 = vsub.f32 %v3643, %v3734
        %v3798 = vsub.f32 %v3644, %v3734
        %v3799 = vsub.f32 %v3645, %v3734
        %v3800 = vmul.f32 %v3736, 1.442695
        %v3801 = vpow.pop %v3800
        %v3802 = vmul.f32 %v3737, 1.442695
        %v3803 = vpow.pop %v3802
        %v3804 = vmul.f32 %v3738, 1.442695
        %v3805 = vpow.pop %v3804
        %v3806 = vmul.f32 %v3739, 1.442695
        %v3807 = vpow.pop %v3806
        %v3808 = vmul.f32 %v3740, 1.442695
        %v3809 = vpow.pop %v3808
        %v3810 = vmul.f32 %v3741, 1.442695
        %v3811 = vpow.pop %v3810
        %v3812 = vmul.f32 %v3742, 1.442695
        %v3813 = vpow.pop %v3812
        %v3814 = vmul.f32 %v3743, 1.442695
        %v3815 = vpow.pop %v3814
        %v3816 = vmul.f32 %v3744, 1.442695
        %v3817 = vpow.pop %v3816
        %v3818 = vmul.f32 %v3745, 1.442695
        %v3819 = vpow.pop %v3818
        %v3820 = vmul.f32 %v3746, 1.442695
        %v3821 = vpow.pop %v3820
        %v3822 = vmul.f32 %v3747, 1.442695
        %v3823 = vpow.pop %v3822
        %v3824 = vmul.f32 %v3748, 1.442695
        %v3825 = vpow.pop %v3824
        %v3826 = vmul.f32 %v3749, 1.442695
        %v3827 = vpow.pop %v3826
        %v3828 = vmul.f32 %v3750, 1.442695
        %v3829 = vpow.pop %v3828
        %v3830 = vmul.f32 %v3751, 1.442695
        %v3831 = vpow.pop %v3830
        %v3832 = vmul.f32 %v3752, 1.442695
        %v3833 = vpow.pop %v3832
        %v3834 = vmul.f32 %v3753, 1.442695
        %v3835 = vpow.pop %v3834
        %v3836 = vmul.f32 %v3754, 1.442695
        %v3837 = vpow.pop %v3836
        %v3838 = vmul.f32 %v3755, 1.442695
        %v3839 = vpow.pop %v3838
        %v3840 = vmul.f32 %v3756, 1.442695
        %v3841 = vpow.pop %v3840
        %v3842 = vmul.f32 %v3757, 1.442695
        %v3843 = vpow.pop %v3842
        %v3844 = vmul.f32 %v3758, 1.442695
        %v3845 = vpow.pop %v3844
        %v3846 = vmul.f32 %v3759, 1.442695
        %v3847 = vpow.pop %v3846
        %v3848 = vmul.f32 %v3760, 1.442695
        %v3849 = vpow.pop %v3848
        %v3850 = vmul.f32 %v3761, 1.442695
        %v3851 = vpow.pop %v3850
        %v3852 = vmul.f32 %v3762, 1.442695
        %v3853 = vpow.pop %v3852
        %v3854 = vmul.f32 %v3763, 1.442695
        %v3855 = vpow.pop %v3854
        %v3856 = vmul.f32 %v3764, 1.442695
        %v3857 = vpow.pop %v3856
        %v3858 = vmul.f32 %v3765, 1.442695
        %v3859 = vpow.pop %v3858
        %v3860 = vmul.f32 %v3766, 1.442695
        %v3861 = vpow.pop %v3860
        %v3862 = vmul.f32 %v3767, 1.442695
        %v3863 = vpow.pop %v3862
        %v3864 = vmul.f32 %v3768, 1.442695
        %v3865 = vpow.pop %v3864
        %v3866 = vmul.f32 %v3769, 1.442695
        %v3867 = vpow.pop %v3866
        %v3868 = vmul.f32 %v3770, 1.442695
        %v3869 = vpow.pop %v3868
        %v3870 = vmul.f32 %v3771, 1.442695
        %v3871 = vpow.pop %v3870
        %v3872 = vmul.f32 %v3772, 1.442695
        %v3873 = vpow.pop %v3872
        %v3874 = vmul.f32 %v3773, 1.442695
        %v3875 = vpow.pop %v3874
        %v3876 = vmul.f32 %v3774, 1.442695
        %v3877 = vpow.pop %v3876
        %v3878 = vmul.f32 %v3775, 1.442695
        %v3879 = vpow.pop %v3878
        %v3880 = vmul.f32 %v3776, 1.442695
        %v3881 = vpow.pop %v3880
        %v3882 = vmul.f32 %v3777, 1.442695
        %v3883 = vpow.pop %v3882
        %v3884 = vmul.f32 %v3778, 1.442695
        %v3885 = vpow.pop %v3884
        %v3886 = vmul.f32 %v3779, 1.442695
        %v3887 = vpow.pop %v3886
        %v3888 = vmul.f32 %v3780, 1.442695
        %v3889 = vpow.pop %v3888
        %v3890 = vmul.f32 %v3781, 1.442695
        %v3891 = vpow.pop %v3890
        %v3892 = vmul.f32 %v3782, 1.442695
        %v3893 = vpow.pop %v3892
        %v3894 = vmul.f32 %v3783, 1.442695
        %v3895 = vpow.pop %v3894
        %v3896 = vmul.f32 %v3784, 1.442695
        %v3897 = vpow.pop %v3896
        %v3898 = vmul.f32 %v3785, 1.442695
        %v3899 = vpow.pop %v3898
        %v3900 = vmul.f32 %v3786, 1.442695
        %v3901 = vpow.pop %v3900
        %v3902 = vmul.f32 %v3787, 1.442695
        %v3903 = vpow.pop %v3902
        %v3904 = vmul.f32 %v3788, 1.442695
        %v3905 = vpow.pop %v3904
        %v3906 = vmul.f32 %v3789, 1.442695
        %v3907 = vpow.pop %v3906
        %v3908 = vmul.f32 %v3790, 1.442695
        %v3909 = vpow.pop %v3908
        %v3910 = vmul.f32 %v3791, 1.442695
        %v3911 = vpow.pop %v3910
        %v3912 = vmul.f32 %v3792, 1.442695
        %v3913 = vpow.pop %v3912
        %v3914 = vmul.f32 %v3793, 1.442695
        %v3915 = vpow.pop %v3914
        %v3916 = vmul.f32 %v3794, 1.442695
        %v3917 = vpow.pop %v3916
        %v3918 = vmul.f32 %v3795, 1.442695
        %v3919 = vpow.pop %v3918
        %v3920 = vmul.f32 %v3796, 1.442695
        %v3921 = vpow.pop %v3920
        %v3922 = vmul.f32 %v3797, 1.442695
        %v3923 = vpow.pop %v3922
        %v3924 = vmul.f32 %v3798, 1.442695
        %v3925 = vpow.pop %v3924
        %v3926 = vmul.f32 %v3799, 1.442695
        %v3927 = vpow.pop %v3926
        %v3928 = vadd.f32 %v3801, %v3803
        %v3929 = vadd.f32 %v3928, %v3805
        %v3930 = vadd.f32 %v3929, %v3807
        %v3931 = vadd.f32 %v3930, %v3809
        %v3932 = vadd.f32 %v3931, %v3811
        %v3933 = vadd.f32 %v3932, %v3813
        %v3934 = vadd.f32 %v3933, %v3815
        %v3935 = vadd.f32 %v3934, %v3817
        %v3936 = vadd.f32 %v3935, %v3819
        %v3937 = vadd.f32 %v3936, %v3821
        %v3938 = vadd.f32 %v3937, %v3823
        %v3939 = vadd.f32 %v3938, %v3825
        %v3940 = vadd.f32 %v3939, %v3827
        %v3941 = vadd.f32 %v3940, %v3829
        %v3942 = vadd.f32 %v3941, %v3831
        %v3943 = vadd.f32 %v3942, %v3833
        %v3944 = vadd.f32 %v3943, %v3835
        %v3945 = vadd.f32 %v3944, %v3837
        %v3946 = vadd.f32 %v3945, %v3839
        %v3947 = vadd.f32 %v3946, %v3841
        %v3948 = vadd.f32 %v3947, %v3843
        %v3949 = vadd.f32 %v3948, %v3845
        %v3950 = vadd.f32 %v3949, %v3847
        %v3951 = vadd.f32 %v3950, %v3849
        %v3952 = vadd.f32 %v3951, %v3851
        %v3953 = vadd.f32 %v3952, %v3853
        %v3954 = vadd.f32 %v3953, %v3855
        %v3955 = vadd.f32 %v3954, %v3857
        %v3956 = vadd.f32 %v3955, %v3859
        %v3957 = vadd.f32 %v3956, %v3861
        %v3958 = vadd.f32 %v3957, %v3863
        %3959 = vadd.xlane.f32.xlu0 %v3958
        %v3960 = vpop.xlane.xlu0 %3959
        %v3961 = vadd.f32 %v3865, %v3867
        %v3962 = vadd.f32 %v3961, %v3869
        %v3963 = vadd.f32 %v3962, %v3871
        %v3964 = vadd.f32 %v3963, %v3873
        %v3965 = vadd.f32 %v3964, %v3875
        %v3966 = vadd.f32 %v3965, %v3877
        %v3967 = vadd.f32 %v3966, %v3879
        %v3968 = vadd.f32 %v3967, %v3881
        %v3969 = vadd.f32 %v3968, %v3883
        %v3970 = vadd.f32 %v3969, %v3885
        %v3971 = vadd.f32 %v3970, %v3887
        %v3972 = vadd.f32 %v3971, %v3889
        %v3973 = vadd.f32 %v3972, %v3891
        %v3974 = vadd.f32 %v3973, %v3893
        %v3975 = vadd.f32 %v3974, %v3895
        %v3976 = vadd.f32 %v3975, %v3897
        %v3977 = vadd.f32 %v3976, %v3899
        %v3978 = vadd.f32 %v3977, %v3901
        %v3979 = vadd.f32 %v3978, %v3903
        %v3980 = vadd.f32 %v3979, %v3905
        %v3981 = vadd.f32 %v3980, %v3907
        %v3982 = vadd.f32 %v3981, %v3909
        %v3983 = vadd.f32 %v3982, %v3911
        %v3984 = vadd.f32 %v3983, %v3913
        %v3985 = vadd.f32 %v3984, %v3915
        %v3986 = vadd.f32 %v3985, %v3917
        %v3987 = vadd.f32 %v3986, %v3919
        %v3988 = vadd.f32 %v3987, %v3921
        %v3989 = vadd.f32 %v3988, %v3923
        %v3990 = vadd.f32 %v3989, %v3925
        %v3991 = vadd.f32 %v3990, %v3927
        %3992 = vadd.xlane.f32.xlu0 %v3991
        %v3993 = vpop.xlane.xlu0 %3992
        %v3994 = vadd.f32 %v3724, %v3960
        %v3995 = vadd.f32 %v3725, %v3993
        %vm3996 = vcmask 7168
        %3997 = vst.msk [vmem:[#allocation3] sm:$0xff] %vm3996, %v3994
        %3998 = vst.msk [vmem:[#allocation3 + $0x8] sm:$0xff] %vm3996, %v3995
        %3999 = vst.msk [vmem:[#allocation2] sm:$0xff] %vm3996, %v3714
        %4000 = vst.msk [vmem:[#allocation2 + $0x8] sm:$0xff] %vm3996, %v3715
        %v4001 = vld [vmem:[#allocation4] sm:$0xff]
        %v4002 = vld [vmem:[#allocation4 + $0x8] sm:$0xff]
        %4003 = vset.pattern.permute.xlu0 0
        %4004 = vperm.xlu0 %4003, %v3481
        %v4005 = vpop.permute.xlu0 %4004
        %4006 = vset.pattern.permute.xlu0 0
        %4007 = vperm.xlu0 %4006, %v3482
        %v4008 = vpop.permute.xlu0 %4007
        %vm4009 = vcmp.eq.s32.totalorder %v3518, %v4005
        %vm4010 = vcmp.eq.s32.totalorder %v3519, %v4005
        %vm4011 = vcmp.eq.s32.totalorder %v3520, %v4005
        %vm4012 = vcmp.eq.s32.totalorder %v3521, %v4005
        %vm4013 = vcmp.eq.s32.totalorder %v3522, %v4005
        %vm4014 = vcmp.eq.s32.totalorder %v3523, %v4005
        %vm4015 = vcmp.eq.s32.totalorder %v3524, %v4005
        %vm4016 = vcmp.eq.s32.totalorder %v3525, %v4005
        %vm4017 = vcmp.eq.s32.totalorder %v3526, %v4005
        %vm4018 = vcmp.eq.s32.totalorder %v3527, %v4005
        %vm4019 = vcmp.eq.s32.totalorder %v3528, %v4005
        %vm4020 = vcmp.eq.s32.totalorder %v3529, %v4005
        %vm4021 = vcmp.eq.s32.totalorder %v3530, %v4005
        %vm4022 = vcmp.eq.s32.totalorder %v3531, %v4005
        %vm4023 = vcmp.eq.s32.totalorder %v3532, %v4005
        %vm4024 = vcmp.eq.s32.totalorder %v3533, %v4005
        %vm4025 = vcmp.eq.s32.totalorder %v3534, %v4005
        %vm4026 = vcmp.eq.s32.totalorder %v3535, %v4005
        %vm4027 = vcmp.eq.s32.totalorder %v3536, %v4005
        %vm4028 = vcmp.eq.s32.totalorder %v3537, %v4005
        %vm4029 = vcmp.eq.s32.totalorder %v3538, %v4005
        %vm4030 = vcmp.eq.s32.totalorder %v3539, %v4005
        %vm4031 = vcmp.eq.s32.totalorder %v3540, %v4005
        %vm4032 = vcmp.eq.s32.totalorder %v3541, %v4005
        %vm4033 = vcmp.eq.s32.totalorder %v3542, %v4005
        %vm4034 = vcmp.eq.s32.totalorder %v3543, %v4005
        %vm4035 = vcmp.eq.s32.totalorder %v3544, %v4005
        %vm4036 = vcmp.eq.s32.totalorder %v3545, %v4005
        %vm4037 = vcmp.eq.s32.totalorder %v3546, %v4005
        %vm4038 = vcmp.eq.s32.totalorder %v3547, %v4005
        %vm4039 = vcmp.eq.s32.totalorder %v3548, %v4005
        %vm4040 = vcmp.eq.s32.totalorder %v3549, %v4005
        %vm4041 = vcmp.eq.s32.totalorder %v3518, %v4008
        %vm4042 = vcmp.eq.s32.totalorder %v3519, %v4008
        %vm4043 = vcmp.eq.s32.totalorder %v3520, %v4008
        %vm4044 = vcmp.eq.s32.totalorder %v3521, %v4008
        %vm4045 = vcmp.eq.s32.totalorder %v3522, %v4008
        %vm4046 = vcmp.eq.s32.totalorder %v3523, %v4008
        %vm4047 = vcmp.eq.s32.totalorder %v3524, %v4008
        %vm4048 = vcmp.eq.s32.totalorder %v3525, %v4008
        %vm4049 = vcmp.eq.s32.totalorder %v3526, %v4008
        %vm4050 = vcmp.eq.s32.totalorder %v3527, %v4008
        %vm4051 = vcmp.eq.s32.totalorder %v3528, %v4008
        %vm4052 = vcmp.eq.s32.totalorder %v3529, %v4008
        %vm4053 = vcmp.eq.s32.totalorder %v3530, %v4008
        %vm4054 = vcmp.eq.s32.totalorder %v3531, %v4008
        %vm4055 = vcmp.eq.s32.totalorder %v3532, %v4008
        %vm4056 = vcmp.eq.s32.totalorder %v3533, %v4008
        %vm4057 = vcmp.eq.s32.totalorder %v3534, %v4008
        %vm4058 = vcmp.eq.s32.totalorder %v3535, %v4008
        %vm4059 = vcmp.eq.s32.totalorder %v3536, %v4008
        %vm4060 = vcmp.eq.s32.totalorder %v3537, %v4008
        %vm4061 = vcmp.eq.s32.totalorder %v3538, %v4008
        %vm4062 = vcmp.eq.s32.totalorder %v3539, %v4008
        %vm4063 = vcmp.eq.s32.totalorder %v3540, %v4008
        %vm4064 = vcmp.eq.s32.totalorder %v3541, %v4008
        %vm4065 = vcmp.eq.s32.totalorder %v3542, %v4008
        %vm4066 = vcmp.eq.s32.totalorder %v3543, %v4008
        %vm4067 = vcmp.eq.s32.totalorder %v3544, %v4008
        %vm4068 = vcmp.eq.s32.totalorder %v3545, %v4008
        %vm4069 = vcmp.eq.s32.totalorder %v3546, %v4008
        %vm4070 = vcmp.eq.s32.totalorder %v3547, %v4008
        %vm4071 = vcmp.eq.s32.totalorder %v3548, %v4008
        %vm4072 = vcmp.eq.s32.totalorder %v3549, %v4008
        %v4073 = vsel %vm4009, %v2828, 0.0
        %v4074 = vsel %vm4010, %v2830, 0.0
        %v4075 = vsel %vm4011, %v2871, 0.0
        %v4076 = vsel %vm4012, %v2873, 0.0
        %v4077 = vsel %vm4013, %v2914, 0.0
        %v4078 = vsel %vm4014, %v2916, 0.0
        %v4079 = vsel %vm4015, %v2957, 0.0
        %v4080 = vsel %vm4016, %v2959, 0.0
        %v4081 = vsel %vm4017, %v3000, 0.0
        %v4082 = vsel %vm4018, %v3002, 0.0
        %v4083 = vsel %vm4019, %v3043, 0.0
        %v4084 = vsel %vm4020, %v3045, 0.0
        %v4085 = vsel %vm4021, %v3086, 0.0
        %v4086 = vsel %vm4022, %v3088, 0.0
        %v4087 = vsel %vm4023, %v3129, 0.0
        %v4088 = vsel %vm4024, %v3131, 0.0
        %v4089 = vsel %vm4025, %v3172, 0.0
        %v4090 = vsel %vm4026, %v3174, 0.0
        %v4091 = vsel %vm4027, %v3215, 0.0
        %v4092 = vsel %vm4028, %v3217, 0.0
        %v4093 = vsel %vm4029, %v3258, 0.0
        %v4094 = vsel %vm4030, %v3260, 0.0
        %v4095 = vsel %vm4031, %v3301, 0.0
        %v4096 = vsel %vm4032, %v3303, 0.0
        %v4097 = vsel %vm4033, %v3344, 0.0
        %v4098 = vsel %vm4034, %v3346, 0.0
        %v4099 = vsel %vm4035, %v3387, 0.0
        %v4100 = vsel %vm4036, %v3389, 0.0
        %v4101 = vsel %vm4037, %v3430, 0.0
        %v4102 = vsel %vm4038, %v3432, 0.0
        %v4103 = vsel %vm4039, %v3473, 0.0
        %v4104 = vsel %vm4040, %v3475, 0.0
        %v4105 = vsel %vm4041, %v2832, 0.0
        %v4106 = vsel %vm4042, %v2834, 0.0
        %v4107 = vsel %vm4043, %v2875, 0.0
        %v4108 = vsel %vm4044, %v2877, 0.0
        %v4109 = vsel %vm4045, %v2918, 0.0
        %v4110 = vsel %vm4046, %v2920, 0.0
        %v4111 = vsel %vm4047, %v2961, 0.0
        %v4112 = vsel %vm4048, %v2963, 0.0
        %v4113 = vsel %vm4049, %v3004, 0.0
        %v4114 = vsel %vm4050, %v3006, 0.0
        %v4115 = vsel %vm4051, %v3047, 0.0
        %v4116 = vsel %vm4052, %v3049, 0.0
        %v4117 = vsel %vm4053, %v3090, 0.0
        %v4118 = vsel %vm4054, %v3092, 0.0
        %v4119 = vsel %vm4055, %v3133, 0.0
        %v4120 = vsel %vm4056, %v3135, 0.0
        %v4121 = vsel %vm4057, %v3176, 0.0
        %v4122 = vsel %vm4058, %v3178, 0.0
        %v4123 = vsel %vm4059, %v3219, 0.0
        %v4124 = vsel %vm4060, %v3221, 0.0
        %v4125 = vsel %vm4061, %v3262, 0.0
        %v4126 = vsel %vm4062, %v3264, 0.0
        %v4127 = vsel %vm4063, %v3305, 0.0
        %v4128 = vsel %vm4064, %v3307, 0.0
        %v4129 = vsel %vm4065, %v3348, 0.0
        %v4130 = vsel %vm4066, %v3350, 0.0
        %v4131 = vsel %vm4067, %v3391, 0.0
        %v4132 = vsel %vm4068, %v3393, 0.0
        %v4133 = vsel %vm4069, %v3434, 0.0
        %v4134 = vsel %vm4070, %v3436, 0.0
        %v4135 = vsel %vm4071, %v3477, 0.0
        %v4136 = vsel %vm4072, %v3479, 0.0
        %v4137 = vadd.f32 %v4073, %v4074
        %v4138 = vadd.f32 %v4137, %v4075
        %v4139 = vadd.f32 %v4138, %v4076
        %v4140 = vadd.f32 %v4139, %v4077
        %v4141 = vadd.f32 %v4140, %v4078
        %v4142 = vadd.f32 %v4141, %v4079
        %v4143 = vadd.f32 %v4142, %v4080
        %v4144 = vadd.f32 %v4143, %v4081
        %v4145 = vadd.f32 %v4144, %v4082
        %v4146 = vadd.f32 %v4145, %v4083
        %v4147 = vadd.f32 %v4146, %v4084
        %v4148 = vadd.f32 %v4147, %v4085
        %v4149 = vadd.f32 %v4148, %v4086
        %v4150 = vadd.f32 %v4149, %v4087
        %v4151 = vadd.f32 %v4150, %v4088
        %v4152 = vadd.f32 %v4151, %v4089
        %v4153 = vadd.f32 %v4152, %v4090
        %v4154 = vadd.f32 %v4153, %v4091
        %v4155 = vadd.f32 %v4154, %v4092
        %v4156 = vadd.f32 %v4155, %v4093
        %v4157 = vadd.f32 %v4156, %v4094
        %v4158 = vadd.f32 %v4157, %v4095
        %v4159 = vadd.f32 %v4158, %v4096
        %v4160 = vadd.f32 %v4159, %v4097
        %v4161 = vadd.f32 %v4160, %v4098
        %v4162 = vadd.f32 %v4161, %v4099
        %v4163 = vadd.f32 %v4162, %v4100
        %v4164 = vadd.f32 %v4163, %v4101
        %v4165 = vadd.f32 %v4164, %v4102
        %v4166 = vadd.f32 %v4165, %v4103
        %v4167 = vadd.f32 %v4166, %v4104
        %4168 = vadd.xlane.f32.xlu0 %v4167
        %v4169 = vpop.xlane.xlu0 %4168
        %v4170 = vadd.f32 %v4105, %v4106
        %v4171 = vadd.f32 %v4170, %v4107
        %v4172 = vadd.f32 %v4171, %v4108
        %v4173 = vadd.f32 %v4172, %v4109
        %v4174 = vadd.f32 %v4173, %v4110
        %v4175 = vadd.f32 %v4174, %v4111
        %v4176 = vadd.f32 %v4175, %v4112
        %v4177 = vadd.f32 %v4176, %v4113
        %v4178 = vadd.f32 %v4177, %v4114
        %v4179 = vadd.f32 %v4178, %v4115
        %v4180 = vadd.f32 %v4179, %v4116
        %v4181 = vadd.f32 %v4180, %v4117
        %v4182 = vadd.f32 %v4181, %v4118
        %v4183 = vadd.f32 %v4182, %v4119
        %v4184 = vadd.f32 %v4183, %v4120
        %v4185 = vadd.f32 %v4184, %v4121
        %v4186 = vadd.f32 %v4185, %v4122
        %v4187 = vadd.f32 %v4186, %v4123
        %v4188 = vadd.f32 %v4187, %v4124
        %v4189 = vadd.f32 %v4188, %v4125
        %v4190 = vadd.f32 %v4189, %v4126
        %v4191 = vadd.f32 %v4190, %v4127
        %v4192 = vadd.f32 %v4191, %v4128
        %v4193 = vadd.f32 %v4192, %v4129
        %v4194 = vadd.f32 %v4193, %v4130
        %v4195 = vadd.f32 %v4194, %v4131
        %v4196 = vadd.f32 %v4195, %v4132
        %v4197 = vadd.f32 %v4196, %v4133
        %v4198 = vadd.f32 %v4197, %v4134
        %v4199 = vadd.f32 %v4198, %v4135
        %v4200 = vadd.f32 %v4199, %v4136
        %4201 = vadd.xlane.f32.xlu0 %v4200
        %v4202 = vpop.xlane.xlu0 %4201
        %v4203 = vadd.f32 %v4001, %v4169
        %v4204 = vadd.f32 %v4002, %v4202
        %4205 = vst.msk [vmem:[#allocation4] sm:$0xff] %vm3996, %v4203
        %4206 = vst.msk [vmem:[#allocation4 + $0x8] sm:$0xff] %vm3996, %v4204
        %p4207 = scmp.eq.s32.totalorder %s16, 7
        // Predicated region
        $region41: #{knowledge_pretrainer_forward.51} parent=35 // pred_check
          %p4208 = pneg %p4207
        $region42: #{knowledge_pretrainer_forward.51} parent=35 // pred_check_branch
          %4210 = sbr.rel (%p4208) target = $region44
        $region43: #{knowledge_pretrainer_forward.51} parent=35 // pred_region
          %v4211 = vld [vmem:[#allocation2] sm:$0xff]
          %v4212 = vld [vmem:[#allocation2 + $0x8] sm:$0xff]
          %v4213 = vld [vmem:[#allocation3] sm:$0xff]
          %v4214 = vld [vmem:[#allocation3 + $0x8] sm:$0xff]
          %v4215 = vlog2.pop %v4213
          %v4216 = vmul.f32 %v4215, 0.6931472
          %v4217 = vlog2.pop %v4214
          %v4218 = vmul.f32 %v4217, 0.6931472
          %v4219 = vadd.f32 %v4211, %v4216
          %v4220 = vadd.f32 %v4212, %v4218
          %vm4221 = vcmp.ne.s32.totalorder %v3481, 4294967196
          %vm4222 = vcmp.ne.s32.totalorder %v3482, 4294967196
          %v4223 = vsel %vm4221, 1, 0
          %v4224 = vsel %vm4222, 1, 0
          %v4225 = vcvt.s32.f32 %v4223
          %v4226 = vcvt.s32.f32 %v4224
          %v4227 = vld [vmem:[#allocation4] sm:$0xff]
          %v4228 = vld [vmem:[#allocation4 + $0x8] sm:$0xff]
          %v4229 = vsub.f32 %v4219, %v4227
          %v4230 = vsub.f32 %v4220, %v4228
          %v4231 = vmul.f32 %v4229, %v4225
          %v4232 = vmul.f32 %v4230, %v4226
          %v4233 = vsel %vm3996, %v4231, 0.0
          %v4234 = vsel %vm3996, %v4232, 0.0
          %v4235 = vadd.f32 %v4233, %v4234
          %4236 = vadd.xlane.f32.xlu0 %v4235
          %v4237 = vpop.xlane.xlu0 %4236
          %v4238 = vrot.slane %v4237, 4
          %v4239 = vadd.f32 %v4237, %v4238
          %v4240 = vrot.slane %v4239, 2
          %v4241 = vadd.f32 %v4239, %v4240
          %v4242 = vrot.slane %v4241, 1
          %v4243 = vadd.f32 %v4241, %v4242
          %s4244 = vtos %v4243
          %v4245 = vsel %vm3996, %v4225, 0.0
          %v4246 = vsel %vm3996, %v4226, 0.0
          %v4247 = vadd.f32 %v4245, %v4246
          %4248 = vadd.xlane.f32.xlu0 %v4247
          %v4249 = vpop.xlane.xlu0 %4248
          %v4250 = vrot.slane %v4249, 4
          %v4251 = vadd.f32 %v4249, %v4250
          %v4252 = vrot.slane %v4251, 2
          %v4253 = vadd.f32 %v4251, %v4252
          %v4254 = vrot.slane %v4253, 1
          %v4255 = vadd.f32 %v4253, %v4254
          %s4256 = vtos %v4255
          %s4257 = smax.f32 %s4256, 1.0
          %v4258 = vstv %s4257
          %v4259 = vrcp.pop %v4258
          %s4260 = vtos %v4259
          %s4261 = smul.f32 %s4244, %s4260
          %v4262 = vstv %s4261
          %vm4263 = vcmask 0
          %4264 = vst.msk [vmem:[#allocation5] sm:$0x1] %vm4263, %v4262
        $region44: #{knowledge_pretrainer_forward.51} parent=35 // pred_fallthru
          _
        // Predicated region
        $region45: #{knowledge_pretrainer_forward.51} parent=35 // pred_check
          %p4265 = pneg %p118
        $region46: #{knowledge_pretrainer_forward.51} parent=35 // pred_check_branch
          %4267 = sbr.rel (%p4265) target = $region48
        $region47: #{knowledge_pretrainer_forward.51} parent=35 // pred_region
          %s4269 = ssub.s32 16, 16
          %4270 = vsyncadd [#allocation6], %s4269
          %s4272 = sshll.u32 [#allocation5], 4
          %s4273 = int_to_ptr.vmem [resolvable:$true] %s4272
          %4275 = dma.vmem_to_hbm [thread:$0]  %s4273, 16, %s4, [#allocation6]
        $region48: #{knowledge_pretrainer_forward.51} parent=35 // pred_fallthru
          _
        // Predicated region
        $region49: #{knowledge_pretrainer_forward.51} parent=35 // pred_check
          %p4276 = pneg %p118
        $region50: #{knowledge_pretrainer_forward.51} parent=35 // pred_check_branch
          %4278 = sbr.rel (%p4276) target = $region52
        $region51: #{knowledge_pretrainer_forward.51} parent=35 // pred_region
          %4279 = dma.done [#allocation6], 16
        $region52: #{knowledge_pretrainer_forward.51} parent=35 // pred_fallthru
          _
      $region36: #{knowledge_pretrainer_forward.51} parent=5 // pred_fallthru
        _
      %p4280 = scmp.le.s32.totalorder 2, %s11
      // Predicated region
      $region53: #{knowledge_pretrainer_forward.51} parent=5 // pred_check
        %p4281 = pneg %p4280
      $region54: #{knowledge_pretrainer_forward.51} parent=5 // pred_check_branch
        %4283 = sbr.rel (%p4281) target = $region56
      $region55: #{knowledge_pretrainer_forward.51} parent=5 // pred_region
        %s4284 = ssub.s32 %s11, 2
      $region56: #{knowledge_pretrainer_forward.51} parent=5 // pred_fallthru
        _
    $region6: #{knowledge_pretrainer_forward.51} parent=1 // loop_footer
      %s15 = sadd.s32 1, %s11
    $region7: #{knowledge_pretrainer_forward.51} parent=1 // loop_footer_branch
      %10 = sbr.rel target = $region3
    $region8: #{knowledge_pretrainer_forward.51} parent=1 // loop_exit
      _
    %4285 = vsyncpa [#allocation6], 1
    %s4286 = scalar_lea.sflag [#allocation6], 1
    %4287 = vsyncpa %s4286, 1

</llo_original>
